<compile_context>
chip_gen: v6e
topology: v6e:2x2x1
jax: 0.10.0
libtpu: 0.0.40
codegen_flags: <defaults>
</compile_context>

<pallas_src>
import jax
import jax.numpy as jnp
import numpy as np
from jax.experimental import pallas as pl
from jax.experimental.pallas import tpu as pltpu

EPS = 1e-5  # nn.BatchNorm2d default eps


def _vmem_capacity_bytes():
    try:
        return int(pltpu.get_tpu_info().vmem_capacity_bytes)
    except Exception:
        return 64 << 20            # conservative default (v7x per-core VMEM)


def _pick_nb(N, H, W, Cp, budget_bytes):
    """Largest divisor of N whose per-step VMEM footprint fits the budget;
    stop growing once M = nb*H*W is comfortably MXU/pipeline-sized."""
    per_img = (H * W * 26 + (H + 2) * (W + 2) * 8) * Cp   # rough bytes / image
    best = 1
    for nb in range(1, N + 1):
        if N % nb:
            continue
        if nb * per_img > budget_bytes:
            break
        best = nb
        if nb * H * W >= 2048:
            break
    return best


# --------------------------------------------------------------------------- #
# Shared conv helper: zero-halo pad scratch + kw-im2col + 3 MXU matmuls.
# --------------------------------------------------------------------------- #
def _conv3x3_same(pad_ref, w_ref, vals_f32):
    """3x3 'same' conv of vals_f32 (Nb,H,W,Cp) with w_ref (3, 3*Cp, Cp) bf16.

    pad_ref: (Nb, H+2, W+2, Cp) f32 VMEM scratch. Returns f32 (Nb*H*W, Cp)."""
    Nb, H, W, Cp = vals_f32.shape
    Hp, Wp = H + 2, W + 2
    M = Nb * H * W

    # Re-zero only the 1-wide halo (interior is fully overwritten).  Done every
    # step (not pl.when(step == 0)) so each TensorCore's private scratch is
    # initialised under megacore grid sharding.
    pad_ref[:, 0:1, :, :] = jnp.zeros((Nb, 1, Wp, Cp), jnp.float32)
    pad_ref[:, Hp - 1:Hp, :, :] = jnp.zeros((Nb, 1, Wp, Cp), jnp.float32)
    pad_ref[:, 1:1 + H, 0:1, :] = jnp.zeros((Nb, H, 1, Cp), jnp.float32)
    pad_ref[:, 1:1 + H, Wp - 1:Wp, :] = jnp.zeros((Nb, H, 1, Cp), jnp.float32)
    pad_ref[:, 1:1 + H, 1:1 + W, :] = vals_f32

    # kw-im2col: 3 lane-aligned shifted views concatenated along channels,
    # cast once to bf16 for the MXU.  3 matmuls with K = 3*Cp (not 9 with Cp).
    cat = jnp.concatenate(
        [pad_ref[:, :, kw:kw + W, :] for kw in range(3)],
        axis=-1).astype(jnp.bfloat16)                   # (Nb, Hp, W, 3*Cp)

    acc = jnp.zeros((M, Cp), jnp.float32)
    for kh in range(3):
        acc = acc + jnp.dot(cat[:, kh:kh + H, :, :].reshape(M, 3 * Cp),
                            w_ref[kh], preferred_element_type=jnp.float32)
    return acc


def _block_stats(acc, M, Cp):
    """Per-block channel sum and *centered* sum of squares (Chan combine)."""
    s = jnp.sum(acc, axis=0)                       # (Cp,)
    d = acc - s * (1.0 / M)
    return s.reshape(1, 1, Cp), jnp.sum(d * d, axis=0).reshape(1, 1, Cp)


# --------------------------------------------------------------------------- #
# Pass A: conv1 + per-block channel statistics.
# --------------------------------------------------------------------------- #
def _conv1_stats_kernel(x_ref, w_ref, t1_ref, ssum_ref, ssq_ref, pad_ref):
    Nb, H, W, Cp = x_ref.shape
    M = Nb * H * W
    acc = _conv3x3_same(pad_ref, w_ref, x_ref[...])
    t1_ref[...] = acc.reshape(Nb, H, W, Cp).astype(t1_ref.dtype)   # bf16 store
    ssum_ref[...], ssq_ref[...] = _block_stats(acc, M, Cp)


# --------------------------------------------------------------------------- #
# Pass B: BN1 (global mean/rstd) + PReLU + conv2 + per-block statistics.
# --------------------------------------------------------------------------- #
def _bn_prelu_conv2_stats_kernel(t1_ref, w_ref, p_ref,
                                 t2_ref, ssum_ref, ssq_ref, pad_ref):
    Nb, H, W, Cp = t1_ref.shape
    M = Nb * H * W
    mean, rstd = p_ref[0:1, :], p_ref[1:2, :]
    gamma, beta, alpha = p_ref[2:3, :], p_ref[3:4, :], p_ref[4:5, :]

    t1 = t1_ref[...].astype(jnp.float32).reshape(M, Cp)
    y = (t1 - mean) * rstd * gamma + beta          # BN1 (f32 elementwise)
    y = jnp.where(y > 0, y, alpha * y)             # PReLU (per-channel alpha)

    acc = _conv3x3_same(pad_ref, w_ref, y.reshape(Nb, H, W, Cp))
    t2_ref[...] = acc.reshape(Nb, H, W, Cp).astype(t2_ref.dtype)   # bf16 store
    ssum_ref[...], ssq_ref[...] = _block_stats(acc, M, Cp)


# --------------------------------------------------------------------------- #
# Pass C: BN2 (global mean/rstd) + residual add (output aliases the NHWC input).
# --------------------------------------------------------------------------- #
def _bn2_residual_kernel(t2_ref, x_ref, p_ref, o_ref):
    Nb, H, W, Cp = t2_ref.shape
    M = Nb * H * W
    mean, rstd = p_ref[0:1, :], p_ref[1:2, :]
    gamma, beta = p_ref[2:3, :], p_ref[3:4, :]

    t2 = t2_ref[...].astype(jnp.float32).reshape(M, Cp)
    y = (t2 - mean) * rstd * gamma + beta
    o_ref[...] = (y + x_ref[...].reshape(M, Cp)).reshape(Nb, H, W, Cp)


# --------------------------------------------------------------------------- #
# Wrapper: PyTorch-style NCHW in / NCHW out.
# --------------------------------------------------------------------------- #
def residual_block_pallas(x_nchw, params):
    N, C, H, W = x_nchw.shape
    Cp = ((C + 127) // 128) * 128          # lane-dense channel dim
    Hp, Wp = H + 2, W + 2

    vmem_cap = _vmem_capacity_bytes()
    Nb = _pick_nb(N, H, W, Cp, vmem_cap // 3)
    G = N // Nb
    Mb = Nb * H * W

    x_nhwc = jnp.transpose(x_nchw, (0, 2, 3, 1)).astype(jnp.float32)
    xc = jnp.pad(x_nhwc, ((0, 0), (0, 0), (0, 0), (0, Cp - C)))    # channel pad

    def prep_w(w):  # HWIO (3,3,C,C) -> kw-stacked (3, 3*Cp, Cp) bf16 for im2col
        wp = jnp.pad(w.astype(jnp.float32),
                     ((0, 0), (0, 0), (0, Cp - C), (0, Cp - C)))
        return wp.reshape(3, 3 * Cp, Cp).astype(jnp.bfloat16)

    def pad_c(v):   # (C,) -> (Cp,) f32  (zero pad keeps padded channels inert)
        return jnp.pad(v.astype(jnp.float32).reshape(-1), (0, Cp - C))

    w1s, w2s = prep_w(params["w1"]), prep_w(params["w2"])

    # ---- VMEM budget from the actual per-step allocation (+ headroom) ------
    act_f32 = Nb * H * W * Cp * 4
    act_bf16 = act_f32 // 2
    pad_f32 = Nb * Hp * Wp * Cp * 4
    w_bytes = 9 * Cp * Cp * 2
    need = (2 * act_f32            # double-buffered f32 in/out block (A in, C in+out)
            + 4 * act_bf16         # double-buffered bf16 in + out blocks (pass B)
            + 2 * w_bytes          # weights (constant index_map -> no re-DMA)
            + 4 * pad_f32          # halo scratch + im2col concat temporary
            + 3 * act_f32)         # f32 accumulator / BN temporaries
    vmem_limit = int(min(max(need + (8 << 20), 32 << 20), (vmem_cap * 7) // 8))
    cparams = pltpu.CompilerParams(dimension_semantics=("parallel",),
                                   vmem_limit_bytes=vmem_limit)

    act_spec = pl.BlockSpec((Nb, H, W, Cp), lambda g: (g, 0, 0, 0))
    w_spec = pl.BlockSpec((3, 3 * Cp, Cp), lambda g: (0, 0, 0))
    stat_spec = pl.BlockSpec((1, 1, Cp), lambda g: (g, 0, 0))

    t_shape = jax.ShapeDtypeStruct((N, H, W, Cp), jnp.bfloat16)
    o_shape = jax.ShapeDtypeStruct((N, H, W, Cp), jnp.float32)
    stat_shape = jax.ShapeDtypeStruct((G, 1, Cp), jnp.float32)
    pad_scratch = pltpu.VMEM((Nb, Hp, Wp, Cp), jnp.float32)

    cnt = float(N * H * W)

    def combine_stats(s, q):       # Chan-style combine of per-block partials
        s2, q2 = s[:, 0, :], q[:, 0, :]
        mean = jnp.sum(s2, axis=0) / cnt
        bm = s2 / Mb
        var = (jnp.sum(q2, axis=0)
               + Mb * jnp.sum((bm - mean) ** 2, axis=0)) / cnt
        return mean, jax.lax.rsqrt(var + EPS)

    # ---------------- pass A : conv1 + channel statistics -------------------
    t1, s1, q1 = pl.pallas_call(
        _conv1_stats_kernel,
        out_shape=(t_shape, stat_shape, stat_shape),
        grid_spec=pltpu.PrefetchScalarGridSpec(
            num_scalar_prefetch=0, grid=(G,),
            in_specs=[act_spec, w_spec],
            out_specs=(act_spec, stat_spec, stat_spec),
            scratch_shapes=[pad_scratch]),
        compiler_params=cparams,
    )(xc, w1s)

    mean1, rstd1 = combine_stats(s1, q1)
    p1 = jnp.stack([mean1, rstd1, pad_c(params["g1"]), pad_c(params["b1"]),
                    pad_c(params["alpha"])], axis=0)                  # (5, Cp)
    p1_spec = pl.BlockSpec((5, Cp), lambda g: (0, 0))

    # -------- pass B : BN1 + PReLU + conv2 + channel statistics -------------
    t2, s2, q2 = pl.pallas_call(
        _bn_prelu_conv2_stats_kernel,
        out_shape=(t_shape, stat_shape, stat_shape),
        grid_spec=pltpu.PrefetchScalarGridSpec(
            num_scalar_prefetch=0, grid=(G,),
            in_specs=[act_spec, w_spec, p1_spec],
            out_specs=(act_spec, stat_spec, stat_spec),
            scratch_shapes=[pad_scratch]),
        compiler_params=cparams,
    )(t1, w2s, p1)

    mean2, rstd2 = combine_stats(s2, q2)
    p2 = jnp.stack([mean2, rstd2, pad_c(params["g2"]), pad_c(params["b2"])],
                   axis=0)                                            # (4, Cp)
    p2_spec = pl.BlockSpec((4, Cp), lambda g: (0, 0))

    # ---------------- pass C : BN2 + residual add ----------------------------
    out = pl.pallas_call(
        _bn2_residual_kernel,
        out_shape=o_shape,
        grid_spec=pltpu.PrefetchScalarGridSpec(
            num_scalar_prefetch=0, grid=(G,),
            in_specs=[act_spec, act_spec, p2_spec],
            out_specs=act_spec),
        compiler_params=cparams,
        input_output_aliases={1: 0},        # reuse xc's HBM buffer for the output
    )(t2, xc, p2)

    out = out[..., :C]                       # drop lane-padding channels
    return jnp.transpose(out, (0, 3, 1, 2))  # back to NCHW


# ---------------- pure-JAX reference (bf16 conv operands, f32 elsewhere) -----
def residual_block_ref(x_nchw, params):
    def conv(x, w_hwio):
        return jax.lax.conv_general_dilated(
            x.astype(jnp.bfloat16), w_hwio.astype(jnp.bfloat16),
            window_strides=(1, 1), padding="SAME",
            dimension_numbers=("NCHW", "HWIO", "NCHW"),
            preferred_element_type=jnp.float32)

    def bn(x, g, b):
        mean = jnp.mean(x, axis=(0, 2, 3), keepdims=True)
        var = jnp.mean((x - mean) ** 2, axis=(0, 2, 3), keepdims=True)
        return ((x - mean) * jax.lax.rsqrt(var + EPS)
                * g.reshape(1, -1, 1, 1) + b.reshape(1, -1, 1, 1))

    x = x_nchw.astype(jnp.float32)
    y = conv(x, params["w1"])
    y = bn(y, params["g1"], params["b1"])
    a = params["alpha"].reshape(1, -1, 1, 1)
    y = jnp.where(y > 0, y, a * y)
    y = conv(y, params["w2"])
    y = bn(y, params["g2"], params["b2"])
    return y + x


if __name__ == "__main__":
    N, C, H, W = 2, 4, 16, 16

    key = jax.random.PRNGKey(0)
    kx, kw1, kw2 = jax.random.split(key, 3)

    # Shapes per nn.Conv2d / BatchNorm2d / PReLU inits. Conv weights HWIO.
    params = {
        "w1": 0.1 * jax.random.normal(kw1, (3, 3, C, C), jnp.float32),
        "w2": 0.1 * jax.random.normal(kw2, (3, 3, C, C), jnp.float32),
        "g1": jnp.ones((C,), jnp.float32),            # BN gamma init = 1
        "b1": jnp.zeros((C,), jnp.float32),           # BN beta  init = 0
        "g2": jnp.ones((C,), jnp.float32),
        "b2": jnp.zeros((C,), jnp.float32),
        "alpha": 0.25 * jnp.ones((C,), jnp.float32),  # PReLU init = 0.25
    }

    x = jax.random.normal(kx, (N, C, H, W), jnp.float32)

    fwd = jax.jit(residual_block_pallas)
    out = jax.block_until_ready(fwd(x, params))
    ref = jax.block_until_ready(residual_block_ref(x, params))

    # Tolerance reflects bf16 matmul operands and the bf16 storage of the two
    # inter-pass activations (with f32 intermediates this passes at 3e-3).
    np.testing.assert_allclose(np.asarray(out), np.asarray(ref),
                               rtol=2e-2, atol=2e-2)

    print("KERNEL_OK")
</pallas_src>

<mosaic_0001>
module attributes {stable_mosaic.version = 11 : i64} {
  func.func @_conv1_stats_kernel(%arg0: i32, %arg1: memref<2x16x16x128xf32, #tpu.memory_space<vmem>>, %arg2: memref<3x384x128xbf16, #tpu.memory_space<vmem>>, %arg3: memref<2x16x16x128xbf16, #tpu.memory_space<vmem>>, %arg4: memref<1x1x128xf32, #tpu.memory_space<vmem>>, %arg5: memref<1x1x128xf32, #tpu.memory_space<vmem>>, %arg6: memref<2x18x18x128xf32, #tpu.memory_space<vmem>>) attributes {dimension_semantics = [#tpu.dimension_semantics<parallel>], iteration_bounds = array<i64: 1>, scalar_prefetch = 0 : i64, scratch_operands = 1 : i64, tpu.core_type = #tpu.core_type<tc>, window_params = [{transform_indices = @transform_0, window_bounds = array<i64: 2, 16, 16, 128>}, {pipeline_mode = #tpu.pipeline_mode<synchronous>, transform_indices = @transform_1, window_bounds = array<i64: 3, 384, 128>}, {transform_indices = @transform_2, window_bounds = array<i64: 2, 16, 16, 128>}, {transform_indices = @transform_3, window_bounds = array<i64: 1, 1, 128>}, {transform_indices = @transform_4, window_bounds = array<i64: 1, 1, 128>}]} {
    %c0 = arith.constant 0 : index
    %c0_0 = arith.constant 0 : index
    %c0_1 = arith.constant 0 : index
    %c0_2 = arith.constant 0 : index
    %0 = vector.load %arg1[%c0, %c0_0, %c0_1, %c0_2] : memref<2x16x16x128xf32, #tpu.memory_space<vmem>>, vector<2x16x16x128xf32>
    %cst = arith.constant 0.000000e+00 : f32
    %1 = vector.broadcast %cst : f32 to vector<2x1x18x128xf32>
    %c0_3 = arith.constant 0 : index
    %c0_4 = arith.constant 0 : index
    %c0_5 = arith.constant 0 : index
    %c0_6 = arith.constant 0 : index
    %2 = vector.load %arg6[%c0_3, %c0_4, %c0_5, %c0_6] : memref<2x18x18x128xf32, #tpu.memory_space<vmem>>, vector<2x1x18x128xf32>
    tpu.vector_store %arg6[%c0_3, %c0_4, %c0_5, %c0_6], %1 {strides = array<i32>} : memref<2x18x18x128xf32, #tpu.memory_space<vmem>>, vector<2x1x18x128xf32>,
    %cst_7 = arith.constant 0.000000e+00 : f32
    %3 = vector.broadcast %cst_7 : f32 to vector<2x1x18x128xf32>
    %c0_8 = arith.constant 0 : index
    %c17 = arith.constant 17 : index
    %c0_9 = arith.constant 0 : index
    %c0_10 = arith.constant 0 : index
    %4 = vector.load %arg6[%c0_8, %c17, %c0_9, %c0_10] : memref<2x18x18x128xf32, #tpu.memory_space<vmem>>, vector<2x1x18x128xf32>
    tpu.vector_store %arg6[%c0_8, %c17, %c0_9, %c0_10], %3 {strides = array<i32>} : memref<2x18x18x128xf32, #tpu.memory_space<vmem>>, vector<2x1x18x128xf32>,
    %cst_11 = arith.constant 0.000000e+00 : f32
    %5 = vector.broadcast %cst_11 : f32 to vector<2x16x1x128xf32>
    %c0_12 = arith.constant 0 : index
    %c1 = arith.constant 1 : index
    %c0_13 = arith.constant 0 : index
    %c0_14 = arith.constant 0 : index
    %6 = vector.load %arg6[%c0_12, %c1, %c0_13, %c0_14] : memref<2x18x18x128xf32, #tpu.memory_space<vmem>>, vector<2x16x1x128xf32>
    tpu.vector_store %arg6[%c0_12, %c1, %c0_13, %c0_14], %5 {strides = array<i32>} : memref<2x18x18x128xf32, #tpu.memory_space<vmem>>, vector<2x16x1x128xf32>,
    %cst_15 = arith.constant 0.000000e+00 : f32
    %7 = vector.broadcast %cst_15 : f32 to vector<2x16x1x128xf32>
    %c0_16 = arith.constant 0 : index
    %c1_17 = arith.constant 1 : index
    %c17_18 = arith.constant 17 : index
    %c0_19 = arith.constant 0 : index
    %8 = vector.load %arg6[%c0_16, %c1_17, %c17_18, %c0_19] : memref<2x18x18x128xf32, #tpu.memory_space<vmem>>, vector<2x16x1x128xf32>
    tpu.vector_store %arg6[%c0_16, %c1_17, %c17_18, %c0_19], %7 {strides = array<i32>} : memref<2x18x18x128xf32, #tpu.memory_space<vmem>>, vector<2x16x1x128xf32>,
    %c0_20 = arith.constant 0 : index
    %c1_21 = arith.constant 1 : index
    %c1_22 = arith.constant 1 : index
    %c0_23 = arith.constant 0 : index
    %9 = vector.load %arg6[%c0_20, %c1_21, %c1_22, %c0_23] : memref<2x18x18x128xf32, #tpu.memory_space<vmem>>, vector<2x16x16x128xf32>
    tpu.vector_store %arg6[%c0_20, %c1_21, %c1_22, %c0_23], %0 {strides = array<i32>} : memref<2x18x18x128xf32, #tpu.memory_space<vmem>>, vector<2x16x16x128xf32>,
    %c0_24 = arith.constant 0 : index
    %c0_25 = arith.constant 0 : index
    %c0_26 = arith.constant 0 : index
    %c0_27 = arith.constant 0 : index
    %10 = vector.load %arg6[%c0_24, %c0_25, %c0_26, %c0_27] : memref<2x18x18x128xf32, #tpu.memory_space<vmem>>, vector<2x18x16x128xf32>
    %c0_28 = arith.constant 0 : index
    %c0_29 = arith.constant 0 : index
    %c1_30 = arith.constant 1 : index
    %c0_31 = arith.constant 0 : index
    %11 = vector.load %arg6[%c0_28, %c0_29, %c1_30, %c0_31] : memref<2x18x18x128xf32, #tpu.memory_space<vmem>>, vector<2x18x16x128xf32>
    %c0_32 = arith.constant 0 : index
    %c0_33 = arith.constant 0 : index
    %c2 = arith.constant 2 : index
    %c0_34 = arith.constant 0 : index
    %12 = vector.load %arg6[%c0_32, %c0_33, %c2, %c0_34] : memref<2x18x18x128xf32, #tpu.memory_space<vmem>>, vector<2x18x16x128xf32>
    %13 = tpu.concatenate %10, %11, %12 in 3 : vector<2x18x16x128xf32>, vector<2x18x16x128xf32>, vector<2x18x16x128xf32> -> vector<2x18x16x384xf32>
    %14 = arith.truncf %13 : vector<2x18x16x384xf32> to vector<2x18x16x384xbf16>
    %cst_35 = arith.constant 0.000000e+00 : f32
    %15 = vector.broadcast %cst_35 : f32 to vector<512x128xf32>
    %16 = vector.extract_strided_slice %14 {offsets = [0, 0, 0, 0], sizes = [2, 16, 16, 384], strides = [1, 1, 1, 1]} : vector<2x18x16x384xbf16> to vector<2x16x16x384xbf16>
    %17 = vector.shape_cast %16 : vector<2x16x16x384xbf16> to vector<512x384xbf16>
    %c0_36 = arith.constant 0 : index
    %c0_37 = arith.constant 0 : index
    %c0_38 = arith.constant 0 : index
    %18 = vector.load %arg2[%c0_36, %c0_37, %c0_38] : memref<3x384x128xbf16, #tpu.memory_space<vmem>>, vector<1x384x128xbf16>
    %19 = vector.shape_cast %18 : vector<1x384x128xbf16> to vector<384x128xbf16>
    %cst_39 = arith.constant dense<0.000000e+00> : vector<512x128xf32>
    %20 = tpu.matmul %17, %19, %cst_39 {dimension_numbers = #tpu.dot_dimension_numbers<[1], [0], [0], [1], [0, 0, 1, 1], [], []>} : vector<512x384xbf16>, vector<384x128xbf16>, vector<512x128xf32> -> vector<512x128xf32>
    %21 = arith.addf %15, %20 : vector<512x128xf32>
    %22 = vector.extract_strided_slice %14 {offsets = [0, 1, 0, 0], sizes = [2, 16, 16, 384], strides = [1, 1, 1, 1]} : vector<2x18x16x384xbf16> to vector<2x16x16x384xbf16>
    %23 = vector.shape_cast %22 : vector<2x16x16x384xbf16> to vector<512x384xbf16>
    %c1_40 = arith.constant 1 : index
    %c0_41 = arith.constant 0 : index
    %c0_42 = arith.constant 0 : index
    %24 = vector.load %arg2[%c1_40, %c0_41, %c0_42] : memref<3x384x128xbf16, #tpu.memory_space<vmem>>, vector<1x384x128xbf16>
    %25 = vector.shape_cast %24 : vector<1x384x128xbf16> to vector<384x128xbf16>
    %cst_43 = arith.constant dense<0.000000e+00> : vector<512x128xf32>
    %26 = tpu.matmul %23, %25, %cst_43 {dimension_numbers = #tpu.dot_dimension_numbers<[1], [0], [0], [1], [0, 0, 1, 1], [], []>} : vector<512x384xbf16>, vector<384x128xbf16>, vector<512x128xf32> -> vector<512x128xf32>
    %27 = arith.addf %21, %26 : vector<512x128xf32>
    %28 = vector.extract_strided_slice %14 {offsets = [0, 2, 0, 0], sizes = [2, 16, 16, 384], strides = [1, 1, 1, 1]} : vector<2x18x16x384xbf16> to vector<2x16x16x384xbf16>
    %29 = vector.shape_cast %28 : vector<2x16x16x384xbf16> to vector<512x384xbf16>
    %c2_44 = arith.constant 2 : index
    %c0_45 = arith.constant 0 : index
    %c0_46 = arith.constant 0 : index
    %30 = vector.load %arg2[%c2_44, %c0_45, %c0_46] : memref<3x384x128xbf16, #tpu.memory_space<vmem>>, vector<1x384x128xbf16>
    %31 = vector.shape_cast %30 : vector<1x384x128xbf16> to vector<384x128xbf16>
    %cst_47 = arith.constant dense<0.000000e+00> : vector<512x128xf32>
    %32 = tpu.matmul %29, %31, %cst_47 {dimension_numbers = #tpu.dot_dimension_numbers<[1], [0], [0], [1], [0, 0, 1, 1], [], []>} : vector<512x384xbf16>, vector<384x128xbf16>, vector<512x128xf32> -> vector<512x128xf32>
    %33 = arith.addf %27, %32 : vector<512x128xf32>
    %34 = vector.shape_cast %33 : vector<512x128xf32> to vector<2x16x16x128xf32>
    %35 = arith.truncf %34 : vector<2x16x16x128xf32> to vector<2x16x16x128xbf16>
    %c0_48 = arith.constant 0 : index
    %c0_49 = arith.constant 0 : index
    %c0_50 = arith.constant 0 : index
    %c0_51 = arith.constant 0 : index
    %36 = vector.load %arg3[%c0_48, %c0_49, %c0_50, %c0_51] : memref<2x16x16x128xbf16, #tpu.memory_space<vmem>>, vector<2x16x16x128xbf16>
    tpu.vector_store %arg3[%c0_48, %c0_49, %c0_50, %c0_51], %35 {strides = array<i32>} : memref<2x16x16x128xbf16, #tpu.memory_space<vmem>>, vector<2x16x16x128xbf16>,
    %cst_52 = arith.constant dense<0.000000e+00> : vector<128xf32>
    %37 = vector.multi_reduction <add>, %33, %cst_52 [0] : vector<512x128xf32> to vector<128xf32>
    %cst_53 = arith.constant 0.001953125 : f32
    %38 = vector.broadcast %cst_53 : f32 to vector<128xf32>
    %39 = arith.mulf %37, %38 : vector<128xf32>
    %40 = vector.shape_cast %39 : vector<128xf32> to vector<1x128xf32>
    %41 = vector.broadcast %40 : vector<1x128xf32> to vector<512x128xf32>
    %42 = arith.subf %33, %41 : vector<512x128xf32>
    %43 = vector.shape_cast %37 : vector<128xf32> to vector<1x1x128xf32>
    %44 = arith.mulf %42, %42 : vector<512x128xf32>
    %cst_54 = arith.constant dense<0.000000e+00> : vector<128xf32>
    %45 = vector.multi_reduction <add>, %44, %cst_54 [0] : vector<512x128xf32> to vector<128xf32>
    %46 = vector.shape_cast %45 : vector<128xf32> to vector<1x1x128xf32>
    %c0_55 = arith.constant 0 : index
    %c0_56 = arith.constant 0 : index
    %c0_57 = arith.constant 0 : index
    %47 = vector.load %arg4[%c0_55, %c0_56, %c0_57] : memref<1x1x128xf32, #tpu.memory_space<vmem>>, vector<1x1x128xf32>
    tpu.vector_store %arg4[%c0_55, %c0_56, %c0_57], %43 {strides = array<i32>} : memref<1x1x128xf32, #tpu.memory_space<vmem>>, vector<1x1x128xf32>,
    %c0_58 = arith.constant 0 : index
    %c0_59 = arith.constant 0 : index
    %c0_60 = arith.constant 0 : index
    %48 = vector.load %arg5[%c0_58, %c0_59, %c0_60] : memref<1x1x128xf32, #tpu.memory_space<vmem>>, vector<1x1x128xf32>
    tpu.vector_store %arg5[%c0_58, %c0_59, %c0_60], %46 {strides = array<i32>} : memref<1x1x128xf32, #tpu.memory_space<vmem>>, vector<1x1x128xf32>,
    return
  }
  func.func @transform_0(%arg0: i32) -> (i32, i32, i32, i32) {
    %c0_i32 = arith.constant 0 : i32
    %c0_i32_0 = arith.constant 0 : i32
    %c0_i32_1 = arith.constant 0 : i32
    %c0_i32_2 = arith.constant 0 : i32
    return %arg0, %c0_i32, %c0_i32_0, %c0_i32_1 : i32, i32, i32, i32
  }
  func.func @transform_1(%arg0: i32) -> (i32, i32, i32) {
    %c0_i32 = arith.constant 0 : i32
    %c0_i32_0 = arith.constant 0 : i32
    %c0_i32_1 = arith.constant 0 : i32
    %c0_i32_2 = arith.constant 0 : i32
    return %c0_i32, %c0_i32_0, %c0_i32_1 : i32, i32, i32
  }
  func.func @transform_2(%arg0: i32) -> (i32, i32, i32, i32) {
    %c0_i32 = arith.constant 0 : i32
    %c0_i32_0 = arith.constant 0 : i32
    %c0_i32_1 = arith.constant 0 : i32
    %c0_i32_2 = arith.constant 0 : i32
    return %arg0, %c0_i32, %c0_i32_0, %c0_i32_1 : i32, i32, i32, i32
  }
  func.func @transform_3(%arg0: i32) -> (i32, i32, i32) {
    %c0_i32 = arith.constant 0 : i32
    %c0_i32_0 = arith.constant 0 : i32
    %c0_i32_1 = arith.constant 0 : i32
    return %arg0, %c0_i32, %c0_i32_0 : i32, i32, i32
  }
  func.func @transform_4(%arg0: i32) -> (i32, i32, i32) {
    %c0_i32 = arith.constant 0 : i32
    %c0_i32_0 = arith.constant 0 : i32
    %c0_i32_1 = arith.constant 0 : i32
    return %arg0, %c0_i32, %c0_i32_0 : i32, i32, i32
  }
}

module attributes {stable_mosaic.version = 11 : i64} {
  func.func @_bn2_residual_kernel(%arg0: i32, %arg1: memref<2x16x16x128xbf16, #tpu.memory_space<vmem>>, %arg2: memref<2x16x16x128xf32, #tpu.memory_space<vmem>>, %arg3: memref<4x128xf32, #tpu.memory_space<vmem>>, %arg4: memref<2x16x16x128xf32, #tpu.memory_space<vmem>>) attributes {dimension_semantics = [#tpu.dimension_semantics<parallel>], iteration_bounds = array<i64: 1>, scalar_prefetch = 0 : i64, scratch_operands = 0 : i64, tpu.core_type = #tpu.core_type<tc>, window_params = [{transform_indices = @transform_0, window_bounds = array<i64: 2, 16, 16, 128>}, {transform_indices = @transform_1, window_bounds = array<i64: 2, 16, 16, 128>}, {pipeline_mode = #tpu.pipeline_mode<synchronous>, transform_indices = @transform_2, window_bounds = array<i64: 4, 128>}, {transform_indices = @transform_3, window_bounds = array<i64: 2, 16, 16, 128>}]} {
    %c0 = arith.constant 0 : index
    %c0_0 = arith.constant 0 : index
    %0 = vector.load %arg3[%c0, %c0_0] : memref<4x128xf32, #tpu.memory_space<vmem>>, vector<1x128xf32>
    %c1 = arith.constant 1 : index
    %c0_1 = arith.constant 0 : index
    %1 = vector.load %arg3[%c1, %c0_1] : memref<4x128xf32, #tpu.memory_space<vmem>>, vector<1x128xf32>
    %c2 = arith.constant 2 : index
    %c0_2 = arith.constant 0 : index
    %2 = vector.load %arg3[%c2, %c0_2] : memref<4x128xf32, #tpu.memory_space<vmem>>, vector<1x128xf32>
    %c3 = arith.constant 3 : index
    %c0_3 = arith.constant 0 : index
    %3 = vector.load %arg3[%c3, %c0_3] : memref<4x128xf32, #tpu.memory_space<vmem>>, vector<1x128xf32>
    %c0_4 = arith.constant 0 : index
    %c0_5 = arith.constant 0 : index
    %c0_6 = arith.constant 0 : index
    %c0_7 = arith.constant 0 : index
    %4 = vector.load %arg1[%c0_4, %c0_5, %c0_6, %c0_7] : memref<2x16x16x128xbf16, #tpu.memory_space<vmem>>, vector<2x16x16x128xbf16>
    %5 = arith.extf %4 : vector<2x16x16x128xbf16> to vector<2x16x16x128xf32>
    %6 = vector.shape_cast %5 : vector<2x16x16x128xf32> to vector<512x128xf32>
    %7 = vector.broadcast %0 : vector<1x128xf32> to vector<512x128xf32>
    %8 = arith.subf %6, %7 : vector<512x128xf32>
    %9 = vector.broadcast %1 : vector<1x128xf32> to vector<512x128xf32>
    %10 = arith.mulf %8, %9 : vector<512x128xf32>
    %11 = vector.broadcast %2 : vector<1x128xf32> to vector<512x128xf32>
    %12 = arith.mulf %10, %11 : vector<512x128xf32>
    %13 = vector.broadcast %3 : vector<1x128xf32> to vector<512x128xf32>
    %14 = arith.addf %12, %13 : vector<512x128xf32>
    %c0_8 = arith.constant 0 : index
    %c0_9 = arith.constant 0 : index
    %c0_10 = arith.constant 0 : index
    %c0_11 = arith.constant 0 : index
    %15 = vector.load %arg2[%c0_8, %c0_9, %c0_10, %c0_11] : memref<2x16x16x128xf32, #tpu.memory_space<vmem>>, vector<2x16x16x128xf32>
    %16 = vector.shape_cast %15 : vector<2x16x16x128xf32> to vector<512x128xf32>
    %17 = arith.addf %14, %16 : vector<512x128xf32>
    %18 = vector.shape_cast %17 : vector<512x128xf32> to vector<2x16x16x128xf32>
    %c0_12 = arith.constant 0 : index
    %c0_13 = arith.constant 0 : index
    %c0_14 = arith.constant 0 : index
    %c0_15 = arith.constant 0 : index
    %19 = vector.load %arg4[%c0_12, %c0_13, %c0_14, %c0_15] : memref<2x16x16x128xf32, #tpu.memory_space<vmem>>, vector<2x16x16x128xf32>
    tpu.vector_store %arg4[%c0_12, %c0_13, %c0_14, %c0_15], %18 {strides = array<i32>} : memref<2x16x16x128xf32, #tpu.memory_space<vmem>>, vector<2x16x16x128xf32>,
    return
  }
  func.func @transform_0(%arg0: i32) -> (i32, i32, i32, i32) {
    %c0_i32 = arith.constant 0 : i32
    %c0_i32_0 = arith.constant 0 : i32
    %c0_i32_1 = arith.constant 0 : i32
    %c0_i32_2 = arith.constant 0 : i32
    return %arg0, %c0_i32, %c0_i32_0, %c0_i32_1 : i32, i32, i32, i32
  }
  func.func @transform_1(%arg0: i32) -> (i32, i32, i32, i32) {
    %c0_i32 = arith.constant 0 : i32
    %c0_i32_0 = arith.constant 0 : i32
    %c0_i32_1 = arith.constant 0 : i32
    %c0_i32_2 = arith.constant 0 : i32
    return %arg0, %c0_i32, %c0_i32_0, %c0_i32_1 : i32, i32, i32, i32
  }
  func.func @transform_2(%arg0: i32) -> (i32, i32) {
    %c0_i32 = arith.constant 0 : i32
    %c0_i32_0 = arith.constant 0 : i32
    %c0_i32_1 = arith.constant 0 : i32
    return %c0_i32, %c0_i32_0 : i32, i32
  }
  func.func @transform_3(%arg0: i32) -> (i32, i32, i32, i32) {
    %c0_i32 = arith.constant 0 : i32
    %c0_i32_0 = arith.constant 0 : i32
    %c0_i32_1 = arith.constant 0 : i32
    %c0_i32_2 = arith.constant 0 : i32
    return %arg0, %c0_i32, %c0_i32_0, %c0_i32_1 : i32, i32, i32, i32
  }
}

module attributes {stable_mosaic.version = 11 : i64} {
  func.func @_bn_prelu_conv2_stats_kernel(%arg0: i32, %arg1: memref<2x16x16x128xbf16, #tpu.memory_space<vmem>>, %arg2: memref<3x384x128xbf16, #tpu.memory_space<vmem>>, %arg3: memref<5x128xf32, #tpu.memory_space<vmem>>, %arg4: memref<2x16x16x128xbf16, #tpu.memory_space<vmem>>, %arg5: memref<1x1x128xf32, #tpu.memory_space<vmem>>, %arg6: memref<1x1x128xf32, #tpu.memory_space<vmem>>, %arg7: memref<2x18x18x128xf32, #tpu.memory_space<vmem>>) attributes {dimension_semantics = [#tpu.dimension_semantics<parallel>], iteration_bounds = array<i64: 1>, scalar_prefetch = 0 : i64, scratch_operands = 1 : i64, tpu.core_type = #tpu.core_type<tc>, window_params = [{transform_indices = @transform_0, window_bounds = array<i64: 2, 16, 16, 128>}, {pipeline_mode = #tpu.pipeline_mode<synchronous>, transform_indices = @transform_1, window_bounds = array<i64: 3, 384, 128>}, {pipeline_mode = #tpu.pipeline_mode<synchronous>, transform_indices = @transform_2, window_bounds = array<i64: 5, 128>}, {transform_indices = @transform_3, window_bounds = array<i64: 2, 16, 16, 128>}, {transform_indices = @transform_4, window_bounds = array<i64: 1, 1, 128>}, {transform_indices = @transform_5, window_bounds = array<i64: 1, 1, 128>}]} {
    %c0 = arith.constant 0 : index
    %c0_0 = arith.constant 0 : index
    %0 = vector.load %arg3[%c0, %c0_0] : memref<5x128xf32, #tpu.memory_space<vmem>>, vector<1x128xf32>
    %c1 = arith.constant 1 : index
    %c0_1 = arith.constant 0 : index
    %1 = vector.load %arg3[%c1, %c0_1] : memref<5x128xf32, #tpu.memory_space<vmem>>, vector<1x128xf32>
    %c2 = arith.constant 2 : index
    %c0_2 = arith.constant 0 : index
    %2 = vector.load %arg3[%c2, %c0_2] : memref<5x128xf32, #tpu.memory_space<vmem>>, vector<1x128xf32>
    %c3 = arith.constant 3 : index
    %c0_3 = arith.constant 0 : index
    %3 = vector.load %arg3[%c3, %c0_3] : memref<5x128xf32, #tpu.memory_space<vmem>>, vector<1x128xf32>
    %c4 = arith.constant 4 : index
    %c0_4 = arith.constant 0 : index
    %4 = vector.load %arg3[%c4, %c0_4] : memref<5x128xf32, #tpu.memory_space<vmem>>, vector<1x128xf32>
    %c0_5 = arith.constant 0 : index
    %c0_6 = arith.constant 0 : index
    %c0_7 = arith.constant 0 : index
    %c0_8 = arith.constant 0 : index
    %5 = vector.load %arg1[%c0_5, %c0_6, %c0_7, %c0_8] : memref<2x16x16x128xbf16, #tpu.memory_space<vmem>>, vector<2x16x16x128xbf16>
    %6 = arith.extf %5 : vector<2x16x16x128xbf16> to vector<2x16x16x128xf32>
    %7 = vector.shape_cast %6 : vector<2x16x16x128xf32> to vector<512x128xf32>
    %8 = vector.broadcast %0 : vector<1x128xf32> to vector<512x128xf32>
    %9 = arith.subf %7, %8 : vector<512x128xf32>
    %10 = vector.broadcast %1 : vector<1x128xf32> to vector<512x128xf32>
    %11 = arith.mulf %9, %10 : vector<512x128xf32>
    %12 = vector.broadcast %2 : vector<1x128xf32> to vector<512x128xf32>
    %13 = arith.mulf %11, %12 : vector<512x128xf32>
    %14 = vector.broadcast %3 : vector<1x128xf32> to vector<512x128xf32>
    %15 = arith.addf %13, %14 : vector<512x128xf32>
    %cst = arith.constant 0.000000e+00 : f32
    %16 = vector.broadcast %cst : f32 to vector<512x128xf32>
    %17 = arith.cmpf ogt, %15, %16 : vector<512x128xf32>
    %18 = vector.broadcast %4 : vector<1x128xf32> to vector<512x128xf32>
    %19 = arith.mulf %18, %15 : vector<512x128xf32>
    %20 = arith.select %17, %15, %19 : vector<512x128xi1>, vector<512x128xf32>
    %21 = vector.shape_cast %20 : vector<512x128xf32> to vector<2x16x16x128xf32>
    %cst_9 = arith.constant 0.000000e+00 : f32
    %22 = vector.broadcast %cst_9 : f32 to vector<2x1x18x128xf32>
    %c0_10 = arith.constant 0 : index
    %c0_11 = arith.constant 0 : index
    %c0_12 = arith.constant 0 : index
    %c0_13 = arith.constant 0 : index
    %23 = vector.load %arg7[%c0_10, %c0_11, %c0_12, %c0_13] : memref<2x18x18x128xf32, #tpu.memory_space<vmem>>, vector<2x1x18x128xf32>
    tpu.vector_store %arg7[%c0_10, %c0_11, %c0_12, %c0_13], %22 {strides = array<i32>} : memref<2x18x18x128xf32, #tpu.memory_space<vmem>>, vector<2x1x18x128xf32>,
    %cst_14 = arith.constant 0.000000e+00 : f32
    %24 = vector.broadcast %cst_14 : f32 to vector<2x1x18x128xf32>
    %c0_15 = arith.constant 0 : index
    %c17 = arith.constant 17 : index
    %c0_16 = arith.constant 0 : index
    %c0_17 = arith.constant 0 : index
    %25 = vector.load %arg7[%c0_15, %c17, %c0_16, %c0_17] : memref<2x18x18x128xf32, #tpu.memory_space<vmem>>, vector<2x1x18x128xf32>
    tpu.vector_store %arg7[%c0_15, %c17, %c0_16, %c0_17], %24 {strides = array<i32>} : memref<2x18x18x128xf32, #tpu.memory_space<vmem>>, vector<2x1x18x128xf32>,
    %cst_18 = arith.constant 0.000000e+00 : f32
    %26 = vector.broadcast %cst_18 : f32 to vector<2x16x1x128xf32>
    %c0_19 = arith.constant 0 : index
    %c1_20 = arith.constant 1 : index
    %c0_21 = arith.constant 0 : index
    %c0_22 = arith.constant 0 : index
    %27 = vector.load %arg7[%c0_19, %c1_20, %c0_21, %c0_22] : memref<2x18x18x128xf32, #tpu.memory_space<vmem>>, vector<2x16x1x128xf32>
    tpu.vector_store %arg7[%c0_19, %c1_20, %c0_21, %c0_22], %26 {strides = array<i32>} : memref<2x18x18x128xf32, #tpu.memory_space<vmem>>, vector<2x16x1x128xf32>,
    %cst_23 = arith.constant 0.000000e+00 : f32
    %28 = vector.broadcast %cst_23 : f32 to vector<2x16x1x128xf32>
    %c0_24 = arith.constant 0 : index
    %c1_25 = arith.constant 1 : index
    %c17_26 = arith.constant 17 : index
    %c0_27 = arith.constant 0 : index
    %29 = vector.load %arg7[%c0_24, %c1_25, %c17_26, %c0_27] : memref<2x18x18x128xf32, #tpu.memory_space<vmem>>, vector<2x16x1x128xf32>
    tpu.vector_store %arg7[%c0_24, %c1_25, %c17_26, %c0_27], %28 {strides = array<i32>} : memref<2x18x18x128xf32, #tpu.memory_space<vmem>>, vector<2x16x1x128xf32>,
    %c0_28 = arith.constant 0 : index
    %c1_29 = arith.constant 1 : index
    %c1_30 = arith.constant 1 : index
    %c0_31 = arith.constant 0 : index
    %30 = vector.load %arg7[%c0_28, %c1_29, %c1_30, %c0_31] : memref<2x18x18x128xf32, #tpu.memory_space<vmem>>, vector<2x16x16x128xf32>
    tpu.vector_store %arg7[%c0_28, %c1_29, %c1_30, %c0_31], %21 {strides = array<i32>} : memref<2x18x18x128xf32, #tpu.memory_space<vmem>>, vector<2x16x16x128xf32>,
    %c0_32 = arith.constant 0 : index
    %c0_33 = arith.constant 0 : index
    %c0_34 = arith.constant 0 : index
    %c0_35 = arith.constant 0 : index
    %31 = vector.load %arg7[%c0_32, %c0_33, %c0_34, %c0_35] : memref<2x18x18x128xf32, #tpu.memory_space<vmem>>, vector<2x18x16x128xf32>
    %c0_36 = arith.constant 0 : index
    %c0_37 = arith.constant 0 : index
    %c1_38 = arith.constant 1 : index
    %c0_39 = arith.constant 0 : index
    %32 = vector.load %arg7[%c0_36, %c0_37, %c1_38, %c0_39] : memref<2x18x18x128xf32, #tpu.memory_space<vmem>>, vector<2x18x16x128xf32>
    %c0_40 = arith.constant 0 : index
    %c0_41 = arith.constant 0 : index
    %c2_42 = arith.constant 2 : index
    %c0_43 = arith.constant 0 : index
    %33 = vector.load %arg7[%c0_40, %c0_41, %c2_42, %c0_43] : memref<2x18x18x128xf32, #tpu.memory_space<vmem>>, vector<2x18x16x128xf32>
    %34 = tpu.concatenate %31, %32, %33 in 3 : vector<2x18x16x128xf32>, vector<2x18x16x128xf32>, vector<2x18x16x128xf32> -> vector<2x18x16x384xf32>
    %35 = arith.truncf %34 : vector<2x18x16x384xf32> to vector<2x18x16x384xbf16>
    %cst_44 = arith.constant 0.000000e+00 : f32
    %36 = vector.broadcast %cst_44 : f32 to vector<512x128xf32>
    %37 = vector.extract_strided_slice %35 {offsets = [0, 0, 0, 0], sizes = [2, 16, 16, 384], strides = [1, 1, 1, 1]} : vector<2x18x16x384xbf16> to vector<2x16x16x384xbf16>
    %38 = vector.shape_cast %37 : vector<2x16x16x384xbf16> to vector<512x384xbf16>
    %c0_45 = arith.constant 0 : index
    %c0_46 = arith.constant 0 : index
    %c0_47 = arith.constant 0 : index
    %39 = vector.load %arg2[%c0_45, %c0_46, %c0_47] : memref<3x384x128xbf16, #tpu.memory_space<vmem>>, vector<1x384x128xbf16>
    %40 = vector.shape_cast %39 : vector<1x384x128xbf16> to vector<384x128xbf16>
    %cst_48 = arith.constant dense<0.000000e+00> : vector<512x128xf32>
    %41 = tpu.matmul %38, %40, %cst_48 {dimension_numbers = #tpu.dot_dimension_numbers<[1], [0], [0], [1], [0, 0, 1, 1], [], []>} : vector<512x384xbf16>, vector<384x128xbf16>, vector<512x128xf32> -> vector<512x128xf32>
    %42 = arith.addf %36, %41 : vector<512x128xf32>
    %43 = vector.extract_strided_slice %35 {offsets = [0, 1, 0, 0], sizes = [2, 16, 16, 384], strides = [1, 1, 1, 1]} : vector<2x18x16x384xbf16> to vector<2x16x16x384xbf16>
    %44 = vector.shape_cast %43 : vector<2x16x16x384xbf16> to vector<512x384xbf16>
    %c1_49 = arith.constant 1 : index
    %c0_50 = arith.constant 0 : index
    %c0_51 = arith.constant 0 : index
    %45 = vector.load %arg2[%c1_49, %c0_50, %c0_51] : memref<3x384x128xbf16, #tpu.memory_space<vmem>>, vector<1x384x128xbf16>
    %46 = vector.shape_cast %45 : vector<1x384x128xbf16> to vector<384x128xbf16>
    %cst_52 = arith.constant dense<0.000000e+00> : vector<512x128xf32>
    %47 = tpu.matmul %44, %46, %cst_52 {dimension_numbers = #tpu.dot_dimension_numbers<[1], [0], [0], [1], [0, 0, 1, 1], [], []>} : vector<512x384xbf16>, vector<384x128xbf16>, vector<512x128xf32> -> vector<512x128xf32>
    %48 = arith.addf %42, %47 : vector<512x128xf32>
    %49 = vector.extract_strided_slice %35 {offsets = [0, 2, 0, 0], sizes = [2, 16, 16, 384], strides = [1, 1, 1, 1]} : vector<2x18x16x384xbf16> to vector<2x16x16x384xbf16>
    %50 = vector.shape_cast %49 : vector<2x16x16x384xbf16> to vector<512x384xbf16>
    %c2_53 = arith.constant 2 : index
    %c0_54 = arith.constant 0 : index
    %c0_55 = arith.constant 0 : index
    %51 = vector.load %arg2[%c2_53, %c0_54, %c0_55] : memref<3x384x128xbf16, #tpu.memory_space<vmem>>, vector<1x384x128xbf16>
    %52 = vector.shape_cast %51 : vector<1x384x128xbf16> to vector<384x128xbf16>
    %cst_56 = arith.constant dense<0.000000e+00> : vector<512x128xf32>
    %53 = tpu.matmul %50, %52, %cst_56 {dimension_numbers = #tpu.dot_dimension_numbers<[1], [0], [0], [1], [0, 0, 1, 1], [], []>} : vector<512x384xbf16>, vector<384x128xbf16>, vector<512x128xf32> -> vector<512x128xf32>
    %54 = arith.addf %48, %53 : vector<512x128xf32>
    %55 = vector.shape_cast %54 : vector<512x128xf32> to vector<2x16x16x128xf32>
    %56 = arith.truncf %55 : vector<2x16x16x128xf32> to vector<2x16x16x128xbf16>
    %c0_57 = arith.constant 0 : index
    %c0_58 = arith.constant 0 : index
    %c0_59 = arith.constant 0 : index
    %c0_60 = arith.constant 0 : index
    %57 = vector.load %arg4[%c0_57, %c0_58, %c0_59, %c0_60] : memref<2x16x16x128xbf16, #tpu.memory_space<vmem>>, vector<2x16x16x128xbf16>
    tpu.vector_store %arg4[%c0_57, %c0_58, %c0_59, %c0_60], %56 {strides = array<i32>} : memref<2x16x16x128xbf16, #tpu.memory_space<vmem>>, vector<2x16x16x128xbf16>,
    %cst_61 = arith.constant dense<0.000000e+00> : vector<128xf32>
    %58 = vector.multi_reduction <add>, %54, %cst_61 [0] : vector<512x128xf32> to vector<128xf32>
    %cst_62 = arith.constant 0.001953125 : f32
    %59 = vector.broadcast %cst_62 : f32 to vector<128xf32>
    %60 = arith.mulf %58, %59 : vector<128xf32>
    %61 = vector.shape_cast %60 : vector<128xf32> to vector<1x128xf32>
    %62 = vector.broadcast %61 : vector<1x128xf32> to vector<512x128xf32>
    %63 = arith.subf %54, %62 : vector<512x128xf32>
    %64 = vector.shape_cast %58 : vector<128xf32> to vector<1x1x128xf32>
    %65 = arith.mulf %63, %63 : vector<512x128xf32>
    %cst_63 = arith.constant dense<0.000000e+00> : vector<128xf32>
    %66 = vector.multi_reduction <add>, %65, %cst_63 [0] : vector<512x128xf32> to vector<128xf32>
    %67 = vector.shape_cast %66 : vector<128xf32> to vector<1x1x128xf32>
    %c0_64 = arith.constant 0 : index
    %c0_65 = arith.constant 0 : index
    %c0_66 = arith.constant 0 : index
    %68 = vector.load %arg5[%c0_64, %c0_65, %c0_66] : memref<1x1x128xf32, #tpu.memory_space<vmem>>, vector<1x1x128xf32>
    tpu.vector_store %arg5[%c0_64, %c0_65, %c0_66], %64 {strides = array<i32>} : memref<1x1x128xf32, #tpu.memory_space<vmem>>, vector<1x1x128xf32>,
    %c0_67 = arith.constant 0 : index
    %c0_68 = arith.constant 0 : index
    %c0_69 = arith.constant 0 : index
    %69 = vector.load %arg6[%c0_67, %c0_68, %c0_69] : memref<1x1x128xf32, #tpu.memory_space<vmem>>, vector<1x1x128xf32>
    tpu.vector_store %arg6[%c0_67, %c0_68, %c0_69], %67 {strides = array<i32>} : memref<1x1x128xf32, #tpu.memory_space<vmem>>, vector<1x1x128xf32>,
    return
  }
  func.func @transform_0(%arg0: i32) -> (i32, i32, i32, i32) {
    %c0_i32 = arith.constant 0 : i32
    %c0_i32_0 = arith.constant 0 : i32
    %c0_i32_1 = arith.constant 0 : i32
    %c0_i32_2 = arith.constant 0 : i32
    return %arg0, %c0_i32, %c0_i32_0, %c0_i32_1 : i32, i32, i32, i32
  }
  func.func @transform_1(%arg0: i32) -> (i32, i32, i32) {
    %c0_i32 = arith.constant 0 : i32
    %c0_i32_0 = arith.constant 0 : i32
    %c0_i32_1 = arith.constant 0 : i32
    %c0_i32_2 = arith.constant 0 : i32
    return %c0_i32, %c0_i32_0, %c0_i32_1 : i32, i32, i32
  }
  func.func @transform_2(%arg0: i32) -> (i32, i32) {
    %c0_i32 = arith.constant 0 : i32
    %c0_i32_0 = arith.constant 0 : i32
    %c0_i32_1 = arith.constant 0 : i32
    return %c0_i32, %c0_i32_0 : i32, i32
  }
  func.func @transform_3(%arg0: i32) -> (i32, i32, i32, i32) {
    %c0_i32 = arith.constant 0 : i32
    %c0_i32_0 = arith.constant 0 : i32
    %c0_i32_1 = arith.constant 0 : i32
    %c0_i32_2 = arith.constant 0 : i32
    return %arg0, %c0_i32, %c0_i32_0, %c0_i32_1 : i32, i32, i32, i32
  }
  func.func @transform_4(%arg0: i32) -> (i32, i32, i32) {
    %c0_i32 = arith.constant 0 : i32
    %c0_i32_0 = arith.constant 0 : i32
    %c0_i32_1 = arith.constant 0 : i32
    return %arg0, %c0_i32, %c0_i32_0 : i32, i32, i32
  }
  func.func @transform_5(%arg0: i32) -> (i32, i32, i32) {
    %c0_i32 = arith.constant 0 : i32
    %c0_i32_0 = arith.constant 0 : i32
    %c0_i32_1 = arith.constant 0 : i32
    return %arg0, %c0_i32, %c0_i32_0 : i32, i32, i32
  }
}

</mosaic_0001>

<llo_original>
// kernel: residual_block_pallas.5
$region0: #{residual_block_pallas.5}
  #allocation0 [shape = 'u32[]', space=smem, size = 0x4, offset = 0x4, fixed_abs, tag = 'smem constant byte address 0x4 - core index']
  #allocation1 [shape = 'u32[144,128]{1,0:T(1,128)}', space=vmem, size = 0x12000, scoped, tag = 'internal scratch']
  %s0 = inlined_call_operand.vmem [shape: bf16[2,16,16,128], index: 0, kind: input, shape index: {}]
  %s1 = inlined_call_operand.vmem [shape: f32[2,16,16,128], index: 1, kind: input, shape index: {}, may-alias: {1,3}]
  %s2 = inlined_call_operand.vmem [shape: f32[4,128], index: 2, kind: input, shape index: {}]
  %s3 = inlined_call_operand.vmem [shape: f32[2,16,16,128], index: 3, kind: output, shape index: {}, may-alias: {1,3}]
  %s4 = sld [smem:[#allocation0]]
  $region22: #{residual_block_pallas.5} parent=0
    _
  %s6 = ssub.s32 1, %s4
  %s7 = scalar_select 0, %s6, %s4
  // Predicated region
  $region2: #{residual_block_pallas.5} parent=0 // pred_check
    _
  $region3: #{residual_block_pallas.5} parent=0 // pred_check_branch
    %9 = sbr.rel (0) target = $region5
  $region4: #{residual_block_pallas.5} parent=0 // pred_region
    _
  $region5: #{residual_block_pallas.5} parent=0 // pred_fallthru
    _
  // Predicated region
  $region6: #{residual_block_pallas.5} parent=0 // pred_check
    _
  $region7: #{residual_block_pallas.5} parent=0 // pred_check_branch
    %11 = sbr.rel (0) target = $region9
  $region8: #{residual_block_pallas.5} parent=0 // pred_region
    _
  $region9: #{residual_block_pallas.5} parent=0 // pred_fallthru
    _
  // Predicated region
  $region10: #{residual_block_pallas.5} parent=0 // pred_check
    _
  $region11: #{residual_block_pallas.5} parent=0 // pred_check_branch
    %13 = sbr.rel (0) target = $region13
  $region12: #{residual_block_pallas.5} parent=0 // pred_region
    _
  $region13: #{residual_block_pallas.5} parent=0 // pred_fallthru
    _
  %v14 = vld [vmem:[%s2] sm:$0x1]
  %v15 = vld [vmem:[%s2 + $0x1] sm:$0x1]
  %v16 = vld [vmem:[%s2 + $0x2] sm:$0x1]
  %v17 = vld [vmem:[%s2 + $0x3] sm:$0x1]
  %v18 = vld [vmem:[%s0] sm:$0xf]
  %v19 = vld [vmem:[%s0 + $0x4] sm:$0xf]
  %v20 = vld [vmem:[%s0 + $0x8] sm:$0xf]
  %v21 = vld [vmem:[%s0 + $0xc] sm:$0xf]
  %v22 = vld [vmem:[%s0 + $0x10] sm:$0xf]
  %v23 = vld [vmem:[%s0 + $0x14] sm:$0xf]
  %v24 = vld [vmem:[%s0 + $0x18] sm:$0xf]
  %v25 = vld [vmem:[%s0 + $0x1c] sm:$0xf]
  %v26 = vld [vmem:[%s0 + $0x20] sm:$0xf]
  %v27 = vld [vmem:[%s0 + $0x24] sm:$0xf]
  %v28 = vld [vmem:[%s0 + $0x28] sm:$0xf]
  %v29 = vld [vmem:[%s0 + $0x2c] sm:$0xf]
  %v30 = vld [vmem:[%s0 + $0x30] sm:$0xf]
  %v31 = vld [vmem:[%s0 + $0x34] sm:$0xf]
  %v32 = vld [vmem:[%s0 + $0x38] sm:$0xf]
  %v33 = vld [vmem:[%s0 + $0x3c] sm:$0xf]
  %v34 = vld [vmem:[%s0 + $0x40] sm:$0xf]
  %v35 = vld [vmem:[%s0 + $0x44] sm:$0xf]
  %v36 = vld [vmem:[%s0 + $0x48] sm:$0xf]
  %v37 = vld [vmem:[%s0 + $0x4c] sm:$0xf]
  %v38 = vld [vmem:[%s0 + $0x50] sm:$0xf]
  %v39 = vld [vmem:[%s0 + $0x54] sm:$0xf]
  %v40 = vld [vmem:[%s0 + $0x58] sm:$0xf]
  %v41 = vld [vmem:[%s0 + $0x5c] sm:$0xf]
  %v42 = vld [vmem:[%s0 + $0x60] sm:$0xf]
  %v43 = vld [vmem:[%s0 + $0x64] sm:$0xf]
  %v44 = vld [vmem:[%s0 + $0x68] sm:$0xf]
  %v45 = vld [vmem:[%s0 + $0x6c] sm:$0xf]
  %v46 = vld [vmem:[%s0 + $0x70] sm:$0xf]
  %v47 = vld [vmem:[%s0 + $0x74] sm:$0xf]
  %v48 = vld [vmem:[%s0 + $0x78] sm:$0xf]
  %v49 = vld [vmem:[%s0 + $0x7c] sm:$0xf]
  %v50 = vld [vmem:[%s0 + $0x80] sm:$0xf]
  %v51 = vld [vmem:[%s0 + $0x84] sm:$0xf]
  %v52 = vld [vmem:[%s0 + $0x88] sm:$0xf]
  %v53 = vld [vmem:[%s0 + $0x8c] sm:$0xf]
  %v54 = vld [vmem:[%s0 + $0x90] sm:$0xf]
  %v55 = vld [vmem:[%s0 + $0x94] sm:$0xf]
  %v56 = vld [vmem:[%s0 + $0x98] sm:$0xf]
  %v57 = vld [vmem:[%s0 + $0x9c] sm:$0xf]
  %v58 = vld [vmem:[%s0 + $0xa0] sm:$0xf]
  %v59 = vld [vmem:[%s0 + $0xa4] sm:$0xf]
  %v60 = vld [vmem:[%s0 + $0xa8] sm:$0xf]
  %v61 = vld [vmem:[%s0 + $0xac] sm:$0xf]
  %v62 = vld [vmem:[%s0 + $0xb0] sm:$0xf]
  %v63 = vld [vmem:[%s0 + $0xb4] sm:$0xf]
  %v64 = vld [vmem:[%s0 + $0xb8] sm:$0xf]
  %v65 = vld [vmem:[%s0 + $0xbc] sm:$0xf]
  %v66 = vld [vmem:[%s0 + $0xc0] sm:$0xf]
  %v67 = vld [vmem:[%s0 + $0xc4] sm:$0xf]
  %v68 = vld [vmem:[%s0 + $0xc8] sm:$0xf]
  %v69 = vld [vmem:[%s0 + $0xcc] sm:$0xf]
  %v70 = vld [vmem:[%s0 + $0xd0] sm:$0xf]
  %v71 = vld [vmem:[%s0 + $0xd4] sm:$0xf]
  %v72 = vld [vmem:[%s0 + $0xd8] sm:$0xf]
  %v73 = vld [vmem:[%s0 + $0xdc] sm:$0xf]
  %v74 = vld [vmem:[%s0 + $0xe0] sm:$0xf]
  %v75 = vld [vmem:[%s0 + $0xe4] sm:$0xf]
  %v76 = vld [vmem:[%s0 + $0xe8] sm:$0xf]
  %v77 = vld [vmem:[%s0 + $0xec] sm:$0xf]
  %v78 = vld [vmem:[%s0 + $0xf0] sm:$0xf]
  %v79 = vld [vmem:[%s0 + $0xf4] sm:$0xf]
  %v80 = vld [vmem:[%s0 + $0xf8] sm:$0xf]
  %v81 = vld [vmem:[%s0 + $0xfc] sm:$0xf]
  %v82 = vunpack.c.l.bf16 %v18
  %v83 = vunpack.c.l.bf16 %v19
  %v84 = vunpack.c.l.bf16 %v20
  %v85 = vunpack.c.l.bf16 %v21
  %v86 = vunpack.c.l.bf16 %v22
  %v87 = vunpack.c.l.bf16 %v23
  %v88 = vunpack.c.l.bf16 %v24
  %v89 = vunpack.c.l.bf16 %v25
  %v90 = vunpack.c.l.bf16 %v26
  %v91 = vunpack.c.l.bf16 %v27
  %v92 = vunpack.c.l.bf16 %v28
  %v93 = vunpack.c.l.bf16 %v29
  %v94 = vunpack.c.l.bf16 %v30
  %v95 = vunpack.c.l.bf16 %v31
  %v96 = vunpack.c.l.bf16 %v32
  %v97 = vunpack.c.l.bf16 %v33
  %v98 = vunpack.c.l.bf16 %v34
  %v99 = vunpack.c.l.bf16 %v35
  %v100 = vunpack.c.l.bf16 %v36
  %v101 = vunpack.c.l.bf16 %v37
  %v102 = vunpack.c.l.bf16 %v38
  %v103 = vunpack.c.l.bf16 %v39
  %v104 = vunpack.c.l.bf16 %v40
  %v105 = vunpack.c.l.bf16 %v41
  %v106 = vunpack.c.l.bf16 %v42
  %v107 = vunpack.c.l.bf16 %v43
  %v108 = vunpack.c.l.bf16 %v44
  %v109 = vunpack.c.l.bf16 %v45
  %v110 = vunpack.c.l.bf16 %v46
  %v111 = vunpack.c.l.bf16 %v47
  %v112 = vunpack.c.l.bf16 %v48
  %v113 = vunpack.c.l.bf16 %v49
  %v114 = vunpack.c.l.bf16 %v50
  %v115 = vunpack.c.l.bf16 %v51
  %v116 = vunpack.c.l.bf16 %v52
  %v117 = vunpack.c.l.bf16 %v53
  %v118 = vunpack.c.l.bf16 %v54
  %v119 = vunpack.c.l.bf16 %v55
  %v120 = vunpack.c.l.bf16 %v56
  %v121 = vunpack.c.l.bf16 %v57
  %v122 = vunpack.c.l.bf16 %v58
  %v123 = vunpack.c.l.bf16 %v59
  %v124 = vunpack.c.l.bf16 %v60
  %v125 = vunpack.c.l.bf16 %v61
  %v126 = vunpack.c.l.bf16 %v62
  %v127 = vunpack.c.l.bf16 %v63
  %v128 = vunpack.c.l.bf16 %v64
  %v129 = vunpack.c.l.bf16 %v65
  %v130 = vunpack.c.l.bf16 %v66
  %v131 = vunpack.c.l.bf16 %v67
  %v132 = vunpack.c.l.bf16 %v68
  %v133 = vunpack.c.l.bf16 %v69
  %v134 = vunpack.c.l.bf16 %v70
  %v135 = vunpack.c.l.bf16 %v71
  %v136 = vunpack.c.l.bf16 %v72
  %v137 = vunpack.c.l.bf16 %v73
  %v138 = vunpack.c.l.bf16 %v74
  %v139 = vunpack.c.l.bf16 %v75
  %v140 = vunpack.c.l.bf16 %v76
  %v141 = vunpack.c.l.bf16 %v77
  %v142 = vunpack.c.l.bf16 %v78
  %v143 = vunpack.c.l.bf16 %v79
  %v144 = vunpack.c.l.bf16 %v80
  %v145 = vunpack.c.l.bf16 %v81
  %v146 = vlaneseq
  %v147 = vshrl.u32 %v146, 7
  %v148 = vsub.s32 0, %v147
  %v149 = vrot.slane %v14, %v148
  %v150 = vsub.f32 %v82, %v149
  %v151 = vsub.f32 %v83, %v149
  %v152 = vsub.f32 %v84, %v149
  %v153 = vsub.f32 %v85, %v149
  %v154 = vsub.f32 %v86, %v149
  %v155 = vsub.f32 %v87, %v149
  %v156 = vsub.f32 %v88, %v149
  %v157 = vsub.f32 %v89, %v149
  %v158 = vsub.f32 %v90, %v149
  %v159 = vsub.f32 %v91, %v149
  %v160 = vsub.f32 %v92, %v149
  %v161 = vsub.f32 %v93, %v149
  %v162 = vsub.f32 %v94, %v149
  %v163 = vsub.f32 %v95, %v149
  %v164 = vsub.f32 %v96, %v149
  %v165 = vsub.f32 %v97, %v149
  %v166 = vsub.f32 %v98, %v149
  %v167 = vsub.f32 %v99, %v149
  %v168 = vsub.f32 %v100, %v149
  %v169 = vsub.f32 %v101, %v149
  %v170 = vsub.f32 %v102, %v149
  %v171 = vsub.f32 %v103, %v149
  %v172 = vsub.f32 %v104, %v149
  %v173 = vsub.f32 %v105, %v149
  %v174 = vsub.f32 %v106, %v149
  %v175 = vsub.f32 %v107, %v149
  %v176 = vsub.f32 %v108, %v149
  %v177 = vsub.f32 %v109, %v149
  %v178 = vsub.f32 %v110, %v149
  %v179 = vsub.f32 %v111, %v149
  %v180 = vsub.f32 %v112, %v149
  %v181 = vsub.f32 %v113, %v149
  %v182 = vsub.f32 %v114, %v149
  %v183 = vsub.f32 %v115, %v149
  %v184 = vsub.f32 %v116, %v149
  %v185 = vsub.f32 %v117, %v149
  %v186 = vsub.f32 %v118, %v149
  %v187 = vsub.f32 %v119, %v149
  %v188 = vsub.f32 %v120, %v149
  %v189 = vsub.f32 %v121, %v149
  %v190 = vsub.f32 %v122, %v149
  %v191 = vsub.f32 %v123, %v149
  %v192 = vsub.f32 %v124, %v149
  %v193 = vsub.f32 %v125, %v149
  %v194 = vsub.f32 %v126, %v149
  %v195 = vsub.f32 %v127, %v149
  %v196 = vsub.f32 %v128, %v149
  %v197 = vsub.f32 %v129, %v149
  %v198 = vsub.f32 %v130, %v149
  %v199 = vsub.f32 %v131, %v149
  %v200 = vsub.f32 %v132, %v149
  %v201 = vsub.f32 %v133, %v149
  %v202 = vsub.f32 %v134, %v149
  %v203 = vsub.f32 %v135, %v149
  %v204 = vsub.f32 %v136, %v149
  %v205 = vsub.f32 %v137, %v149
  %v206 = vsub.f32 %v138, %v149
  %v207 = vsub.f32 %v139, %v149
  %v208 = vsub.f32 %v140, %v149
  %v209 = vsub.f32 %v141, %v149
  %v210 = vsub.f32 %v142, %v149
  %v211 = vsub.f32 %v143, %v149
  %v212 = vsub.f32 %v144, %v149
  %v213 = vsub.f32 %v145, %v149
  %v214 = vlaneseq
  %v215 = vshrl.u32 %v214, 7
  %v216 = vsub.s32 0, %v215
  %v217 = vrot.slane %v15, %v216
  %v218 = vmul.f32 %v150, %v217
  %v219 = vmul.f32 %v151, %v217
  %v220 = vmul.f32 %v152, %v217
  %v221 = vmul.f32 %v153, %v217
  %v222 = vmul.f32 %v154, %v217
  %v223 = vmul.f32 %v155, %v217
  %v224 = vmul.f32 %v156, %v217
  %v225 = vmul.f32 %v157, %v217
  %v226 = vmul.f32 %v158, %v217
  %v227 = vmul.f32 %v159, %v217
  %v228 = vmul.f32 %v160, %v217
  %v229 = vmul.f32 %v161, %v217
  %v230 = vmul.f32 %v162, %v217
  %v231 = vmul.f32 %v163, %v217
  %v232 = vmul.f32 %v164, %v217
  %v233 = vmul.f32 %v165, %v217
  %v234 = vmul.f32 %v166, %v217
  %v235 = vmul.f32 %v167, %v217
  %v236 = vmul.f32 %v168, %v217
  %v237 = vmul.f32 %v169, %v217
  %v238 = vmul.f32 %v170, %v217
  %v239 = vmul.f32 %v171, %v217
  %v240 = vmul.f32 %v172, %v217
  %v241 = vmul.f32 %v173, %v217
  %v242 = vmul.f32 %v174, %v217
  %v243 = vmul.f32 %v175, %v217
  %v244 = vmul.f32 %v176, %v217
  %v245 = vmul.f32 %v177, %v217
  %v246 = vmul.f32 %v178, %v217
  %v247 = vmul.f32 %v179, %v217
  %v248 = vmul.f32 %v180, %v217
  %v249 = vmul.f32 %v181, %v217
  %v250 = vmul.f32 %v182, %v217
  %v251 = vmul.f32 %v183, %v217
  %v252 = vmul.f32 %v184, %v217
  %v253 = vmul.f32 %v185, %v217
  %v254 = vmul.f32 %v186, %v217
  %v255 = vmul.f32 %v187, %v217
  %v256 = vmul.f32 %v188, %v217
  %v257 = vmul.f32 %v189, %v217
  %v258 = vmul.f32 %v190, %v217
  %v259 = vmul.f32 %v191, %v217
  %v260 = vmul.f32 %v192, %v217
  %v261 = vmul.f32 %v193, %v217
  %v262 = vmul.f32 %v194, %v217
  %v263 = vmul.f32 %v195, %v217
  %v264 = vmul.f32 %v196, %v217
  %v265 = vmul.f32 %v197, %v217
  %v266 = vmul.f32 %v198, %v217
  %v267 = vmul.f32 %v199, %v217
  %v268 = vmul.f32 %v200, %v217
  %v269 = vmul.f32 %v201, %v217
  %v270 = vmul.f32 %v202, %v217
  %v271 = vmul.f32 %v203, %v217
  %v272 = vmul.f32 %v204, %v217
  %v273 = vmul.f32 %v205, %v217
  %v274 = vmul.f32 %v206, %v217
  %v275 = vmul.f32 %v207, %v217
  %v276 = vmul.f32 %v208, %v217
  %v277 = vmul.f32 %v209, %v217
  %v278 = vmul.f32 %v210, %v217
  %v279 = vmul.f32 %v211, %v217
  %v280 = vmul.f32 %v212, %v217
  %v281 = vmul.f32 %v213, %v217
  %v282 = vlaneseq
  %v283 = vshrl.u32 %v282, 7
  %v284 = vsub.s32 0, %v283
  %v285 = vrot.slane %v16, %v284
  %v286 = vmul.f32 %v218, %v285
  %v287 = vmul.f32 %v219, %v285
  %v288 = vmul.f32 %v220, %v285
  %v289 = vmul.f32 %v221, %v285
  %v290 = vmul.f32 %v222, %v285
  %v291 = vmul.f32 %v223, %v285
  %v292 = vmul.f32 %v224, %v285
  %v293 = vmul.f32 %v225, %v285
  %v294 = vmul.f32 %v226, %v285
  %v295 = vmul.f32 %v227, %v285
  %v296 = vmul.f32 %v228, %v285
  %v297 = vmul.f32 %v229, %v285
  %v298 = vmul.f32 %v230, %v285
  %v299 = vmul.f32 %v231, %v285
  %v300 = vmul.f32 %v232, %v285
  %v301 = vmul.f32 %v233, %v285
  %v302 = vmul.f32 %v234, %v285
  %v303 = vmul.f32 %v235, %v285
  %v304 = vmul.f32 %v236, %v285
  %v305 = vmul.f32 %v237, %v285
  %v306 = vmul.f32 %v238, %v285
  %v307 = vmul.f32 %v239, %v285
  %v308 = vmul.f32 %v240, %v285
  %v309 = vmul.f32 %v241, %v285
  %v310 = vmul.f32 %v242, %v285
  %v311 = vmul.f32 %v243, %v285
  %v312 = vmul.f32 %v244, %v285
  %v313 = vmul.f32 %v245, %v285
  %v314 = vmul.f32 %v246, %v285
  %v315 = vmul.f32 %v247, %v285
  %v316 = vmul.f32 %v248, %v285
  %v317 = vmul.f32 %v249, %v285
  %v318 = vmul.f32 %v250, %v285
  %v319 = vmul.f32 %v251, %v285
  %v320 = vmul.f32 %v252, %v285
  %v321 = vmul.f32 %v253, %v285
  %v322 = vmul.f32 %v254, %v285
  %v323 = vmul.f32 %v255, %v285
  %v324 = vmul.f32 %v256, %v285
  %v325 = vmul.f32 %v257, %v285
  %v326 = vmul.f32 %v258, %v285
  %v327 = vmul.f32 %v259, %v285
  %v328 = vmul.f32 %v260, %v285
  %v329 = vmul.f32 %v261, %v285
  %v330 = vmul.f32 %v262, %v285
  %v331 = vmul.f32 %v263, %v285
  %v332 = vmul.f32 %v264, %v285
  %v333 = vmul.f32 %v265, %v285
  %v334 = vmul.f32 %v266, %v285
  %v335 = vmul.f32 %v267, %v285
  %v336 = vmul.f32 %v268, %v285
  %v337 = vmul.f32 %v269, %v285
  %v338 = vmul.f32 %v270, %v285
  %v339 = vmul.f32 %v271, %v285
  %v340 = vmul.f32 %v272, %v285
  %v341 = vmul.f32 %v273, %v285
  %v342 = vmul.f32 %v274, %v285
  %v343 = vmul.f32 %v275, %v285
  %v344 = vmul.f32 %v276, %v285
  %v345 = vmul.f32 %v277, %v285
  %v346 = vmul.f32 %v278, %v285
  %v347 = vmul.f32 %v279, %v285
  %v348 = vmul.f32 %v280, %v285
  %v349 = vmul.f32 %v281, %v285
  %v350 = vlaneseq
  %v351 = vshrl.u32 %v350, 7
  %v352 = vsub.s32 0, %v351
  %v353 = vrot.slane %v17, %v352
  %v354 = vadd.f32 %v286, %v353
  %v355 = vadd.f32 %v287, %v353
  %v356 = vadd.f32 %v288, %v353
  %v357 = vadd.f32 %v289, %v353
  %v358 = vadd.f32 %v290, %v353
  %v359 = vadd.f32 %v291, %v353
  %v360 = vadd.f32 %v292, %v353
  %v361 = vadd.f32 %v293, %v353
  %v362 = vadd.f32 %v294, %v353
  %v363 = vadd.f32 %v295, %v353
  %v364 = vadd.f32 %v296, %v353
  %v365 = vadd.f32 %v297, %v353
  %v366 = vadd.f32 %v298, %v353
  %v367 = vadd.f32 %v299, %v353
  %v368 = vadd.f32 %v300, %v353
  %v369 = vadd.f32 %v301, %v353
  %v370 = vadd.f32 %v302, %v353
  %v371 = vadd.f32 %v303, %v353
  %v372 = vadd.f32 %v304, %v353
  %v373 = vadd.f32 %v305, %v353
  %v374 = vadd.f32 %v306, %v353
  %v375 = vadd.f32 %v307, %v353
  %v376 = vadd.f32 %v308, %v353
  %v377 = vadd.f32 %v309, %v353
  %v378 = vadd.f32 %v310, %v353
  %v379 = vadd.f32 %v311, %v353
  %v380 = vadd.f32 %v312, %v353
  %v381 = vadd.f32 %v313, %v353
  %v382 = vadd.f32 %v314, %v353
  %v383 = vadd.f32 %v315, %v353
  %v384 = vadd.f32 %v316, %v353
  %v385 = vadd.f32 %v317, %v353
  %v386 = vadd.f32 %v318, %v353
  %v387 = vadd.f32 %v319, %v353
  %v388 = vadd.f32 %v320, %v353
  %v389 = vadd.f32 %v321, %v353
  %v390 = vadd.f32 %v322, %v353
  %v391 = vadd.f32 %v323, %v353
  %v392 = vadd.f32 %v324, %v353
  %v393 = vadd.f32 %v325, %v353
  %v394 = vadd.f32 %v326, %v353
  %v395 = vadd.f32 %v327, %v353
  %v396 = vadd.f32 %v328, %v353
  %v397 = vadd.f32 %v329, %v353
  %v398 = vadd.f32 %v330, %v353
  %v399 = vadd.f32 %v331, %v353
  %v400 = vadd.f32 %v332, %v353
  %v401 = vadd.f32 %v333, %v353
  %v402 = vadd.f32 %v334, %v353
  %v403 = vadd.f32 %v335, %v353
  %v404 = vadd.f32 %v336, %v353
  %v405 = vadd.f32 %v337, %v353
  %v406 = vadd.f32 %v338, %v353
  %v407 = vadd.f32 %v339, %v353
  %v408 = vadd.f32 %v340, %v353
  %v409 = vadd.f32 %v341, %v353
  %v410 = vadd.f32 %v342, %v353
  %v411 = vadd.f32 %v343, %v353
  %v412 = vadd.f32 %v344, %v353
  %v413 = vadd.f32 %v345, %v353
  %v414 = vadd.f32 %v346, %v353
  %v415 = vadd.f32 %v347, %v353
  %v416 = vadd.f32 %v348, %v353
  %v417 = vadd.f32 %v349, %v353
  %v418 = vld [vmem:[%s1] sm:$0xff]
  %v419 = vld [vmem:[%s1 + $0x8] sm:$0xff]
  %v420 = vld [vmem:[%s1 + $0x10] sm:$0xff]
  %v421 = vld [vmem:[%s1 + $0x18] sm:$0xff]
  %v422 = vld [vmem:[%s1 + $0x20] sm:$0xff]
  %v423 = vld [vmem:[%s1 + $0x28] sm:$0xff]
  %v424 = vld [vmem:[%s1 + $0x30] sm:$0xff]
  %v425 = vld [vmem:[%s1 + $0x38] sm:$0xff]
  %v426 = vld [vmem:[%s1 + $0x40] sm:$0xff]
  %v427 = vld [vmem:[%s1 + $0x48] sm:$0xff]
  %v428 = vld [vmem:[%s1 + $0x50] sm:$0xff]
  %v429 = vld [vmem:[%s1 + $0x58] sm:$0xff]
  %v430 = vld [vmem:[%s1 + $0x60] sm:$0xff]
  %v431 = vld [vmem:[%s1 + $0x68] sm:$0xff]
  %v432 = vld [vmem:[%s1 + $0x70] sm:$0xff]
  %v433 = vld [vmem:[%s1 + $0x78] sm:$0xff]
  %v434 = vld [vmem:[%s1 + $0x80] sm:$0xff]
  %v435 = vld [vmem:[%s1 + $0x88] sm:$0xff]
  %v436 = vld [vmem:[%s1 + $0x90] sm:$0xff]
  %v437 = vld [vmem:[%s1 + $0x98] sm:$0xff]
  %v438 = vld [vmem:[%s1 + $0xa0] sm:$0xff]
  %v439 = vld [vmem:[%s1 + $0xa8] sm:$0xff]
  %v440 = vld [vmem:[%s1 + $0xb0] sm:$0xff]
  %v441 = vld [vmem:[%s1 + $0xb8] sm:$0xff]
  %v442 = vld [vmem:[%s1 + $0xc0] sm:$0xff]
  %v443 = vld [vmem:[%s1 + $0xc8] sm:$0xff]
  %v444 = vld [vmem:[%s1 + $0xd0] sm:$0xff]
  %v445 = vld [vmem:[%s1 + $0xd8] sm:$0xff]
  %v446 = vld [vmem:[%s1 + $0xe0] sm:$0xff]
  %v447 = vld [vmem:[%s1 + $0xe8] sm:$0xff]
  %v448 = vld [vmem:[%s1 + $0xf0] sm:$0xff]
  %v449 = vld [vmem:[%s1 + $0xf8] sm:$0xff]
  %v450 = vld [vmem:[%s1 + $0x100] sm:$0xff]
  %v451 = vld [vmem:[%s1 + $0x108] sm:$0xff]
  %v452 = vld [vmem:[%s1 + $0x110] sm:$0xff]
  %v453 = vld [vmem:[%s1 + $0x118] sm:$0xff]
  %v454 = vld [vmem:[%s1 + $0x120] sm:$0xff]
  %v455 = vld [vmem:[%s1 + $0x128] sm:$0xff]
  %v456 = vld [vmem:[%s1 + $0x130] sm:$0xff]
  %v457 = vld [vmem:[%s1 + $0x138] sm:$0xff]
  %v458 = vld [vmem:[%s1 + $0x140] sm:$0xff]
  %v459 = vld [vmem:[%s1 + $0x148] sm:$0xff]
  %v460 = vld [vmem:[%s1 + $0x150] sm:$0xff]
  %v461 = vld [vmem:[%s1 + $0x158] sm:$0xff]
  %v462 = vld [vmem:[%s1 + $0x160] sm:$0xff]
  %v463 = vld [vmem:[%s1 + $0x168] sm:$0xff]
  %v464 = vld [vmem:[%s1 + $0x170] sm:$0xff]
  %v465 = vld [vmem:[%s1 + $0x178] sm:$0xff]
  %v466 = vld [vmem:[%s1 + $0x180] sm:$0xff]
  %v467 = vld [vmem:[%s1 + $0x188] sm:$0xff]
  %v468 = vld [vmem:[%s1 + $0x190] sm:$0xff]
  %v469 = vld [vmem:[%s1 + $0x198] sm:$0xff]
  %v470 = vld [vmem:[%s1 + $0x1a0] sm:$0xff]
  %v471 = vld [vmem:[%s1 + $0x1a8] sm:$0xff]
  %v472 = vld [vmem:[%s1 + $0x1b0] sm:$0xff]
  %v473 = vld [vmem:[%s1 + $0x1b8] sm:$0xff]
  %v474 = vld [vmem:[%s1 + $0x1c0] sm:$0xff]
  %v475 = vld [vmem:[%s1 + $0x1c8] sm:$0xff]
  %v476 = vld [vmem:[%s1 + $0x1d0] sm:$0xff]
  %v477 = vld [vmem:[%s1 + $0x1d8] sm:$0xff]
  %v478 = vld [vmem:[%s1 + $0x1e0] sm:$0xff]
  %v479 = vld [vmem:[%s1 + $0x1e8] sm:$0xff]
  %v480 = vld [vmem:[%s1 + $0x1f0] sm:$0xff]
  %v481 = vld [vmem:[%s1 + $0x1f8] sm:$0xff]
  %v482 = vadd.f32 %v354, %v418
  %v483 = vadd.f32 %v355, %v419
  %v484 = vadd.f32 %v356, %v420
  %v485 = vadd.f32 %v357, %v421
  %v486 = vadd.f32 %v358, %v422
  %v487 = vadd.f32 %v359, %v423
  %v488 = vadd.f32 %v360, %v424
  %v489 = vadd.f32 %v361, %v425
  %v490 = vadd.f32 %v362, %v426
  %v491 = vadd.f32 %v363, %v427
  %v492 = vadd.f32 %v364, %v428
  %v493 = vadd.f32 %v365, %v429
  %v494 = vadd.f32 %v366, %v430
  %v495 = vadd.f32 %v367, %v431
  %v496 = vadd.f32 %v368, %v432
  %v497 = vadd.f32 %v369, %v433
  %v498 = vadd.f32 %v370, %v434
  %v499 = vadd.f32 %v371, %v435
  %v500 = vadd.f32 %v372, %v436
  %v501 = vadd.f32 %v373, %v437
  %v502 = vadd.f32 %v374, %v438
  %v503 = vadd.f32 %v375, %v439
  %v504 = vadd.f32 %v376, %v440
  %v505 = vadd.f32 %v377, %v441
  %v506 = vadd.f32 %v378, %v442
  %v507 = vadd.f32 %v379, %v443
  %v508 = vadd.f32 %v380, %v444
  %v509 = vadd.f32 %v381, %v445
  %v510 = vadd.f32 %v382, %v446
  %v511 = vadd.f32 %v383, %v447
  %v512 = vadd.f32 %v384, %v448
  %v513 = vadd.f32 %v385, %v449
  %v514 = vadd.f32 %v386, %v450
  %v515 = vadd.f32 %v387, %v451
  %v516 = vadd.f32 %v388, %v452
  %v517 = vadd.f32 %v389, %v453
  %v518 = vadd.f32 %v390, %v454
  %v519 = vadd.f32 %v391, %v455
  %v520 = vadd.f32 %v392, %v456
  %v521 = vadd.f32 %v393, %v457
  %v522 = vadd.f32 %v394, %v458
  %v523 = vadd.f32 %v395, %v459
  %v524 = vadd.f32 %v396, %v460
  %v525 = vadd.f32 %v397, %v461
  %v526 = vadd.f32 %v398, %v462
  %v527 = vadd.f32 %v399, %v463
  %v528 = vadd.f32 %v400, %v464
  %v529 = vadd.f32 %v401, %v465
  %v530 = vadd.f32 %v402, %v466
  %v531 = vadd.f32 %v403, %v467
  %v532 = vadd.f32 %v404, %v468
  %v533 = vadd.f32 %v405, %v469
  %v534 = vadd.f32 %v406, %v470
  %v535 = vadd.f32 %v407, %v471
  %v536 = vadd.f32 %v408, %v472
  %v537 = vadd.f32 %v409, %v473
  %v538 = vadd.f32 %v410, %v474
  %v539 = vadd.f32 %v411, %v475
  %v540 = vadd.f32 %v412, %v476
  %v541 = vadd.f32 %v413, %v477
  %v542 = vadd.f32 %v414, %v478
  %v543 = vadd.f32 %v415, %v479
  %v544 = vadd.f32 %v416, %v480
  %v545 = vadd.f32 %v417, %v481
  %546 = vst [vmem:[%s3] sm:$0xff] %v482
  %547 = vst [vmem:[%s3 + $0x8] sm:$0xff] %v483
  %548 = vst [vmem:[%s3 + $0x10] sm:$0xff] %v484
  %549 = vst [vmem:[%s3 + $0x18] sm:$0xff] %v485
  %550 = vst [vmem:[%s3 + $0x20] sm:$0xff] %v486
  %551 = vst [vmem:[%s3 + $0x28] sm:$0xff] %v487
  %552 = vst [vmem:[%s3 + $0x30] sm:$0xff] %v488
  %553 = vst [vmem:[%s3 + $0x38] sm:$0xff] %v489
  %554 = vst [vmem:[%s3 + $0x40] sm:$0xff] %v490
  %555 = vst [vmem:[%s3 + $0x48] sm:$0xff] %v491
  %556 = vst [vmem:[%s3 + $0x50] sm:$0xff] %v492
  %557 = vst [vmem:[%s3 + $0x58] sm:$0xff] %v493
  %558 = vst [vmem:[%s3 + $0x60] sm:$0xff] %v494
  %559 = vst [vmem:[%s3 + $0x68] sm:$0xff] %v495
  %560 = vst [vmem:[%s3 + $0x70] sm:$0xff] %v496
  %561 = vst [vmem:[%s3 + $0x78] sm:$0xff] %v497
  %562 = vst [vmem:[%s3 + $0x80] sm:$0xff] %v498
  %563 = vst [vmem:[%s3 + $0x88] sm:$0xff] %v499
  %564 = vst [vmem:[%s3 + $0x90] sm:$0xff] %v500
  %565 = vst [vmem:[%s3 + $0x98] sm:$0xff] %v501
  %566 = vst [vmem:[%s3 + $0xa0] sm:$0xff] %v502
  %567 = vst [vmem:[%s3 + $0xa8] sm:$0xff] %v503
  %568 = vst [vmem:[%s3 + $0xb0] sm:$0xff] %v504
  %569 = vst [vmem:[%s3 + $0xb8] sm:$0xff] %v505
  %570 = vst [vmem:[%s3 + $0xc0] sm:$0xff] %v506
  %571 = vst [vmem:[%s3 + $0xc8] sm:$0xff] %v507
  %572 = vst [vmem:[%s3 + $0xd0] sm:$0xff] %v508
  %573 = vst [vmem:[%s3 + $0xd8] sm:$0xff] %v509
  %574 = vst [vmem:[%s3 + $0xe0] sm:$0xff] %v510
  %575 = vst [vmem:[%s3 + $0xe8] sm:$0xff] %v511
  %576 = vst [vmem:[%s3 + $0xf0] sm:$0xff] %v512
  %577 = vst [vmem:[%s3 + $0xf8] sm:$0xff] %v513
  %578 = vst [vmem:[%s3 + $0x100] sm:$0xff] %v514
  %579 = vst [vmem:[%s3 + $0x108] sm:$0xff] %v515
  %580 = vst [vmem:[%s3 + $0x110] sm:$0xff] %v516
  %581 = vst [vmem:[%s3 + $0x118] sm:$0xff] %v517
  %582 = vst [vmem:[%s3 + $0x120] sm:$0xff] %v518
  %583 = vst [vmem:[%s3 + $0x128] sm:$0xff] %v519
  %584 = vst [vmem:[%s3 + $0x130] sm:$0xff] %v520
  %585 = vst [vmem:[%s3 + $0x138] sm:$0xff] %v521
  %586 = vst [vmem:[%s3 + $0x140] sm:$0xff] %v522
  %587 = vst [vmem:[%s3 + $0x148] sm:$0xff] %v523
  %588 = vst [vmem:[%s3 + $0x150] sm:$0xff] %v524
  %589 = vst [vmem:[%s3 + $0x158] sm:$0xff] %v525
  %590 = vst [vmem:[%s3 + $0x160] sm:$0xff] %v526
  %591 = vst [vmem:[%s3 + $0x168] sm:$0xff] %v527
  %592 = vst [vmem:[%s3 + $0x170] sm:$0xff] %v528
  %593 = vst [vmem:[%s3 + $0x178] sm:$0xff] %v529
  %594 = vst [vmem:[%s3 + $0x180] sm:$0xff] %v530
  %595 = vst [vmem:[%s3 + $0x188] sm:$0xff] %v531
  %596 = vst [vmem:[%s3 + $0x190] sm:$0xff] %v532
  %597 = vst [vmem:[%s3 + $0x198] sm:$0xff] %v533
  %598 = vst [vmem:[%s3 + $0x1a0] sm:$0xff] %v534
  %599 = vst [vmem:[%s3 + $0x1a8] sm:$0xff] %v535
  %600 = vst [vmem:[%s3 + $0x1b0] sm:$0xff] %v536
  %601 = vst [vmem:[%s3 + $0x1b8] sm:$0xff] %v537
  %602 = vst [vmem:[%s3 + $0x1c0] sm:$0xff] %v538
  %603 = vst [vmem:[%s3 + $0x1c8] sm:$0xff] %v539
  %604 = vst [vmem:[%s3 + $0x1d0] sm:$0xff] %v540
  %605 = vst [vmem:[%s3 + $0x1d8] sm:$0xff] %v541
  %606 = vst [vmem:[%s3 + $0x1e0] sm:$0xff] %v542
  %607 = vst [vmem:[%s3 + $0x1e8] sm:$0xff] %v543
  %608 = vst [vmem:[%s3 + $0x1f0] sm:$0xff] %v544
  %609 = vst [vmem:[%s3 + $0x1f8] sm:$0xff] %v545
  // Predicated region
  $region14: #{residual_block_pallas.5} parent=0 // pred_check
    _
  $region15: #{residual_block_pallas.5} parent=0 // pred_check_branch
    %611 = sbr.rel (0) target = $region17
  $region16: #{residual_block_pallas.5} parent=0 // pred_region
    _
  $region17: #{residual_block_pallas.5} parent=0 // pred_fallthru
    _
  // Predicated region
  $region18: #{residual_block_pallas.5} parent=0 // pred_check
    _
  $region19: #{residual_block_pallas.5} parent=0 // pred_check_branch
    %613 = sbr.rel (0) target = $region21
  $region20: #{residual_block_pallas.5} parent=0 // pred_region
    _
  $region21: #{residual_block_pallas.5} parent=0 // pred_fallthru
    _

// kernel: residual_block_pallas.3
$region0: #{residual_block_pallas.3}
  #allocation0 [shape = 'u32[]', space=smem, size = 0x4, offset = 0x4, fixed_abs, tag = 'smem constant byte address 0x4 - core index']
  #allocation1 [shape = 'u32[144,128]{1,0:T(1,128)}', space=vmem, size = 0x12000, scoped, tag = 'internal scratch']
  #allocation2 [shape = 'f32[2,18,18,128]{3,2,1,0:T(8,128)}', space=vmem, size = 0x6c000, scoped, tag = 'scratch operand']
  %s0 = inlined_call_operand.vmem [shape: f32[2,16,16,128], index: 0, kind: input, shape index: {}]
  %s1 = inlined_call_operand.vmem [shape: bf16[3,384,128], index: 1, kind: input, shape index: {}]
  %s2 = inlined_call_operand.vmem [shape: bf16[2,16,16,128], index: 2, kind: output, shape index: {0}]
  %s3 = inlined_call_operand.vmem [shape: f32[1,1,128], index: 3, kind: output, shape index: {1}]
  %s4 = inlined_call_operand.vmem [shape: f32[1,1,128], index: 4, kind: output, shape index: {2}]
  %5 = xla_tuple %s2, %s3, %s4
  %s6 = sld [smem:[#allocation0]]
  $region34: #{residual_block_pallas.3} parent=0
    _
  %s8 = ssub.s32 1, %s6
  %s9 = scalar_select 0, %s8, %s6
  // Predicated region
  $region2: #{residual_block_pallas.3} parent=0 // pred_check
    _
  $region3: #{residual_block_pallas.3} parent=0 // pred_check_branch
    %11 = sbr.rel (0) target = $region5
  $region4: #{residual_block_pallas.3} parent=0 // pred_region
    _
  $region5: #{residual_block_pallas.3} parent=0 // pred_fallthru
    _
  // Predicated region
  $region6: #{residual_block_pallas.3} parent=0 // pred_check
    _
  $region7: #{residual_block_pallas.3} parent=0 // pred_check_branch
    %13 = sbr.rel (0) target = $region9
  $region8: #{residual_block_pallas.3} parent=0 // pred_region
    _
  $region9: #{residual_block_pallas.3} parent=0 // pred_fallthru
    _
  %v15 = vld [vmem:[%s0] sm:$0xff]
  %v16 = vld [vmem:[%s0 + $0x8] sm:$0xff]
  %v17 = vld [vmem:[%s0 + $0x10] sm:$0xff]
  %v18 = vld [vmem:[%s0 + $0x18] sm:$0xff]
  %v19 = vld [vmem:[%s0 + $0x20] sm:$0xff]
  %v20 = vld [vmem:[%s0 + $0x28] sm:$0xff]
  %v21 = vld [vmem:[%s0 + $0x30] sm:$0xff]
  %v22 = vld [vmem:[%s0 + $0x38] sm:$0xff]
  %v23 = vld [vmem:[%s0 + $0x40] sm:$0xff]
  %v24 = vld [vmem:[%s0 + $0x48] sm:$0xff]
  %v25 = vld [vmem:[%s0 + $0x50] sm:$0xff]
  %v26 = vld [vmem:[%s0 + $0x58] sm:$0xff]
  %v27 = vld [vmem:[%s0 + $0x60] sm:$0xff]
  %v28 = vld [vmem:[%s0 + $0x68] sm:$0xff]
  %v29 = vld [vmem:[%s0 + $0x70] sm:$0xff]
  %v30 = vld [vmem:[%s0 + $0x78] sm:$0xff]
  %v31 = vld [vmem:[%s0 + $0x80] sm:$0xff]
  %v32 = vld [vmem:[%s0 + $0x88] sm:$0xff]
  %v33 = vld [vmem:[%s0 + $0x90] sm:$0xff]
  %v34 = vld [vmem:[%s0 + $0x98] sm:$0xff]
  %v35 = vld [vmem:[%s0 + $0xa0] sm:$0xff]
  %v36 = vld [vmem:[%s0 + $0xa8] sm:$0xff]
  %v37 = vld [vmem:[%s0 + $0xb0] sm:$0xff]
  %v38 = vld [vmem:[%s0 + $0xb8] sm:$0xff]
  %v39 = vld [vmem:[%s0 + $0xc0] sm:$0xff]
  %v40 = vld [vmem:[%s0 + $0xc8] sm:$0xff]
  %v41 = vld [vmem:[%s0 + $0xd0] sm:$0xff]
  %v42 = vld [vmem:[%s0 + $0xd8] sm:$0xff]
  %v43 = vld [vmem:[%s0 + $0xe0] sm:$0xff]
  %v44 = vld [vmem:[%s0 + $0xe8] sm:$0xff]
  %v45 = vld [vmem:[%s0 + $0xf0] sm:$0xff]
  %v46 = vld [vmem:[%s0 + $0xf8] sm:$0xff]
  %v47 = vld [vmem:[%s0 + $0x100] sm:$0xff]
  %v48 = vld [vmem:[%s0 + $0x108] sm:$0xff]
  %v49 = vld [vmem:[%s0 + $0x110] sm:$0xff]
  %v50 = vld [vmem:[%s0 + $0x118] sm:$0xff]
  %v51 = vld [vmem:[%s0 + $0x120] sm:$0xff]
  %v52 = vld [vmem:[%s0 + $0x128] sm:$0xff]
  %v53 = vld [vmem:[%s0 + $0x130] sm:$0xff]
  %v54 = vld [vmem:[%s0 + $0x138] sm:$0xff]
  %v55 = vld [vmem:[%s0 + $0x140] sm:$0xff]
  %v56 = vld [vmem:[%s0 + $0x148] sm:$0xff]
  %v57 = vld [vmem:[%s0 + $0x150] sm:$0xff]
  %v58 = vld [vmem:[%s0 + $0x158] sm:$0xff]
  %v59 = vld [vmem:[%s0 + $0x160] sm:$0xff]
  %v60 = vld [vmem:[%s0 + $0x168] sm:$0xff]
  %v61 = vld [vmem:[%s0 + $0x170] sm:$0xff]
  %v62 = vld [vmem:[%s0 + $0x178] sm:$0xff]
  %v63 = vld [vmem:[%s0 + $0x180] sm:$0xff]
  %v64 = vld [vmem:[%s0 + $0x188] sm:$0xff]
  %v65 = vld [vmem:[%s0 + $0x190] sm:$0xff]
  %v66 = vld [vmem:[%s0 + $0x198] sm:$0xff]
  %v67 = vld [vmem:[%s0 + $0x1a0] sm:$0xff]
  %v68 = vld [vmem:[%s0 + $0x1a8] sm:$0xff]
  %v69 = vld [vmem:[%s0 + $0x1b0] sm:$0xff]
  %v70 = vld [vmem:[%s0 + $0x1b8] sm:$0xff]
  %v71 = vld [vmem:[%s0 + $0x1c0] sm:$0xff]
  %v72 = vld [vmem:[%s0 + $0x1c8] sm:$0xff]
  %v73 = vld [vmem:[%s0 + $0x1d0] sm:$0xff]
  %v74 = vld [vmem:[%s0 + $0x1d8] sm:$0xff]
  %v75 = vld [vmem:[%s0 + $0x1e0] sm:$0xff]
  %v76 = vld [vmem:[%s0 + $0x1e8] sm:$0xff]
  %v77 = vld [vmem:[%s0 + $0x1f0] sm:$0xff]
  %v78 = vld [vmem:[%s0 + $0x1f8] sm:$0xff]
  %79 = vst [vmem:[#allocation2] sm:$0xff] 0.0
  %80 = vst [vmem:[#allocation2 + $0x8] sm:$0xff] 0.0
  %81 = vst [vmem:[#allocation2 + $0x10] sm:$0x3] 0.0
  %82 = vst [vmem:[#allocation2 + $0x1b0] sm:$0xff] 0.0
  %83 = vst [vmem:[#allocation2 + $0x1b8] sm:$0xff] 0.0
  %84 = vst [vmem:[#allocation2 + $0x1c0] sm:$0x3] 0.0
  %s85 = scalar_lea.vmem [#allocation2], 408
  %86 = vst [vmem:[%s85] sm:$0xff] 0.0
  %87 = vst [vmem:[%s85 + $0x8] sm:$0xff] 0.0
  %88 = vst [vmem:[%s85 + $0x10] sm:$0x3] 0.0
  %89 = vst [vmem:[%s85 + $0x1b0] sm:$0xff] 0.0
  %90 = vst [vmem:[%s85 + $0x1b8] sm:$0xff] 0.0
  %91 = vst [vmem:[%s85 + $0x1c0] sm:$0x3] 0.0
  %s92 = scalar_lea.vmem [#allocation2], 24
  %93 = vst [vmem:[%s92] sm:$0x1] 0.0
  %94 = vst [vmem:[%s92 + $0x18] sm:$0x1] 0.0
  %95 = vst [vmem:[%s92 + $0x30] sm:$0x1] 0.0
  %96 = vst [vmem:[%s92 + $0x48] sm:$0x1] 0.0
  %97 = vst [vmem:[%s92 + $0x60] sm:$0x1] 0.0
  %98 = vst [vmem:[%s92 + $0x78] sm:$0x1] 0.0
  %99 = vst [vmem:[%s92 + $0x90] sm:$0x1] 0.0
  %100 = vst [vmem:[%s92 + $0xa8] sm:$0x1] 0.0
  %101 = vst [vmem:[%s92 + $0xc0] sm:$0x1] 0.0
  %102 = vst [vmem:[%s92 + $0xd8] sm:$0x1] 0.0
  %103 = vst [vmem:[%s92 + $0xf0] sm:$0x1] 0.0
  %104 = vst [vmem:[%s92 + $0x108] sm:$0x1] 0.0
  %105 = vst [vmem:[%s92 + $0x120] sm:$0x1] 0.0
  %106 = vst [vmem:[%s92 + $0x138] sm:$0x1] 0.0
  %107 = vst [vmem:[%s92 + $0x150] sm:$0x1] 0.0
  %108 = vst [vmem:[%s92 + $0x168] sm:$0x1] 0.0
  %109 = vst [vmem:[%s92 + $0x1b0] sm:$0x1] 0.0
  %110 = vst [vmem:[%s92 + $0x1c8] sm:$0x1] 0.0
  %111 = vst [vmem:[%s92 + $0x1e0] sm:$0x1] 0.0
  %112 = vst [vmem:[%s92 + $0x1f8] sm:$0x1] 0.0
  %113 = vst [vmem:[%s92 + $0x210] sm:$0x1] 0.0
  %114 = vst [vmem:[%s92 + $0x228] sm:$0x1] 0.0
  %115 = vst [vmem:[%s92 + $0x240] sm:$0x1] 0.0
  %116 = vst [vmem:[%s92 + $0x258] sm:$0x1] 0.0
  %117 = vst [vmem:[%s92 + $0x270] sm:$0x1] 0.0
  %118 = vst [vmem:[%s92 + $0x288] sm:$0x1] 0.0
  %119 = vst [vmem:[%s92 + $0x2a0] sm:$0x1] 0.0
  %120 = vst [vmem:[%s92 + $0x2b8] sm:$0x1] 0.0
  %121 = vst [vmem:[%s92 + $0x2d0] sm:$0x1] 0.0
  %122 = vst [vmem:[%s92 + $0x2e8] sm:$0x1] 0.0
  %123 = vst [vmem:[%s92 + $0x300] sm:$0x1] 0.0
  %124 = vst [vmem:[%s92 + $0x318] sm:$0x1] 0.0
  %125 = vst [vmem:[%s92 + $0x11] sm:$0x1] 0.0
  %126 = vst [vmem:[%s92 + $0x29] sm:$0x1] 0.0
  %127 = vst [vmem:[%s92 + $0x41] sm:$0x1] 0.0
  %128 = vst [vmem:[%s92 + $0x59] sm:$0x1] 0.0
  %129 = vst [vmem:[%s92 + $0x71] sm:$0x1] 0.0
  %130 = vst [vmem:[%s92 + $0x89] sm:$0x1] 0.0
  %131 = vst [vmem:[%s92 + $0xa1] sm:$0x1] 0.0
  %132 = vst [vmem:[%s92 + $0xb9] sm:$0x1] 0.0
  %133 = vst [vmem:[%s92 + $0xd1] sm:$0x1] 0.0
  %134 = vst [vmem:[%s92 + $0xe9] sm:$0x1] 0.0
  %135 = vst [vmem:[%s92 + $0x101] sm:$0x1] 0.0
  %136 = vst [vmem:[%s92 + $0x119] sm:$0x1] 0.0
  %137 = vst [vmem:[%s92 + $0x131] sm:$0x1] 0.0
  %138 = vst [vmem:[%s92 + $0x149] sm:$0x1] 0.0
  %139 = vst [vmem:[%s92 + $0x161] sm:$0x1] 0.0
  %140 = vst [vmem:[%s92 + $0x179] sm:$0x1] 0.0
  %141 = vst [vmem:[%s92 + $0x1c1] sm:$0x1] 0.0
  %142 = vst [vmem:[%s92 + $0x1d9] sm:$0x1] 0.0
  %143 = vst [vmem:[%s92 + $0x1f1] sm:$0x1] 0.0
  %144 = vst [vmem:[%s92 + $0x209] sm:$0x1] 0.0
  %145 = vst [vmem:[%s92 + $0x221] sm:$0x1] 0.0
  %146 = vst [vmem:[%s92 + $0x239] sm:$0x1] 0.0
  %147 = vst [vmem:[%s92 + $0x251] sm:$0x1] 0.0
  %148 = vst [vmem:[%s92 + $0x269] sm:$0x1] 0.0
  %149 = vst [vmem:[%s92 + $0x281] sm:$0x1] 0.0
  %150 = vst [vmem:[%s92 + $0x299] sm:$0x1] 0.0
  %151 = vst [vmem:[%s92 + $0x2b1] sm:$0x1] 0.0
  %152 = vst [vmem:[%s92 + $0x2c9] sm:$0x1] 0.0
  %153 = vst [vmem:[%s92 + $0x2e1] sm:$0x1] 0.0
  %154 = vst [vmem:[%s92 + $0x2f9] sm:$0x1] 0.0
  %155 = vst [vmem:[%s92 + $0x311] sm:$0x1] 0.0
  %156 = vst [vmem:[%s92 + $0x329] sm:$0x1] 0.0
  %157 = vst [vmem:[%s92 + $0x1] sm:$0xff] %v15
  %158 = vst [vmem:[%s92 + $0x9] sm:$0xff] %v16
  %159 = vst [vmem:[%s92 + $0x19] sm:$0xff] %v17
  %160 = vst [vmem:[%s92 + $0x21] sm:$0xff] %v18
  %161 = vst [vmem:[%s92 + $0x31] sm:$0xff] %v19
  %162 = vst [vmem:[%s92 + $0x39] sm:$0xff] %v20
  %163 = vst [vmem:[%s92 + $0x49] sm:$0xff] %v21
  %164 = vst [vmem:[%s92 + $0x51] sm:$0xff] %v22
  %165 = vst [vmem:[%s92 + $0x61] sm:$0xff] %v23
  %166 = vst [vmem:[%s92 + $0x69] sm:$0xff] %v24
  %167 = vst [vmem:[%s92 + $0x79] sm:$0xff] %v25
  %168 = vst [vmem:[%s92 + $0x81] sm:$0xff] %v26
  %169 = vst [vmem:[%s92 + $0x91] sm:$0xff] %v27
  %170 = vst [vmem:[%s92 + $0x99] sm:$0xff] %v28
  %171 = vst [vmem:[%s92 + $0xa9] sm:$0xff] %v29
  %172 = vst [vmem:[%s92 + $0xb1] sm:$0xff] %v30
  %173 = vst [vmem:[%s92 + $0xc1] sm:$0xff] %v31
  %174 = vst [vmem:[%s92 + $0xc9] sm:$0xff] %v32
  %175 = vst [vmem:[%s92 + $0xd9] sm:$0xff] %v33
  %176 = vst [vmem:[%s92 + $0xe1] sm:$0xff] %v34
  %177 = vst [vmem:[%s92 + $0xf1] sm:$0xff] %v35
  %178 = vst [vmem:[%s92 + $0xf9] sm:$0xff] %v36
  %179 = vst [vmem:[%s92 + $0x109] sm:$0xff] %v37
  %180 = vst [vmem:[%s92 + $0x111] sm:$0xff] %v38
  %181 = vst [vmem:[%s92 + $0x121] sm:$0xff] %v39
  %182 = vst [vmem:[%s92 + $0x129] sm:$0xff] %v40
  %183 = vst [vmem:[%s92 + $0x139] sm:$0xff] %v41
  %184 = vst [vmem:[%s92 + $0x141] sm:$0xff] %v42
  %185 = vst [vmem:[%s92 + $0x151] sm:$0xff] %v43
  %186 = vst [vmem:[%s92 + $0x159] sm:$0xff] %v44
  %187 = vst [vmem:[%s92 + $0x169] sm:$0xff] %v45
  %188 = vst [vmem:[%s92 + $0x171] sm:$0xff] %v46
  %189 = vst [vmem:[%s92 + $0x1b1] sm:$0xff] %v47
  %190 = vst [vmem:[%s92 + $0x1b9] sm:$0xff] %v48
  %191 = vst [vmem:[%s92 + $0x1c9] sm:$0xff] %v49
  %192 = vst [vmem:[%s92 + $0x1d1] sm:$0xff] %v50
  %193 = vst [vmem:[%s92 + $0x1e1] sm:$0xff] %v51
  %194 = vst [vmem:[%s92 + $0x1e9] sm:$0xff] %v52
  %195 = vst [vmem:[%s92 + $0x1f9] sm:$0xff] %v53
  %196 = vst [vmem:[%s92 + $0x201] sm:$0xff] %v54
  %197 = vst [vmem:[%s92 + $0x211] sm:$0xff] %v55
  %198 = vst [vmem:[%s92 + $0x219] sm:$0xff] %v56
  %199 = vst [vmem:[%s92 + $0x229] sm:$0xff] %v57
  %200 = vst [vmem:[%s92 + $0x231] sm:$0xff] %v58
  %201 = vst [vmem:[%s92 + $0x241] sm:$0xff] %v59
  %202 = vst [vmem:[%s92 + $0x249] sm:$0xff] %v60
  %203 = vst [vmem:[%s92 + $0x259] sm:$0xff] %v61
  %204 = vst [vmem:[%s92 + $0x261] sm:$0xff] %v62
  %205 = vst [vmem:[%s92 + $0x271] sm:$0xff] %v63
  %206 = vst [vmem:[%s92 + $0x279] sm:$0xff] %v64
  %207 = vst [vmem:[%s92 + $0x289] sm:$0xff] %v65
  %208 = vst [vmem:[%s92 + $0x291] sm:$0xff] %v66
  %209 = vst [vmem:[%s92 + $0x2a1] sm:$0xff] %v67
  %210 = vst [vmem:[%s92 + $0x2a9] sm:$0xff] %v68
  %211 = vst [vmem:[%s92 + $0x2b9] sm:$0xff] %v69
  %212 = vst [vmem:[%s92 + $0x2c1] sm:$0xff] %v70
  %213 = vst [vmem:[%s92 + $0x2d1] sm:$0xff] %v71
  %214 = vst [vmem:[%s92 + $0x2d9] sm:$0xff] %v72
  %215 = vst [vmem:[%s92 + $0x2e9] sm:$0xff] %v73
  %216 = vst [vmem:[%s92 + $0x2f1] sm:$0xff] %v74
  %217 = vst [vmem:[%s92 + $0x301] sm:$0xff] %v75
  %218 = vst [vmem:[%s92 + $0x309] sm:$0xff] %v76
  %219 = vst [vmem:[%s92 + $0x319] sm:$0xff] %v77
  %220 = vst [vmem:[%s92 + $0x321] sm:$0xff] %v78
  %v221 = vld [vmem:[#allocation2] sm:$0xff]
  %v222 = vld [vmem:[#allocation2 + $0x8] sm:$0xff]
  %v223 = vld [vmem:[#allocation2 + $0x18] sm:$0xff]
  %v224 = vld [vmem:[#allocation2 + $0x20] sm:$0xff]
  %v225 = vld [vmem:[#allocation2 + $0x30] sm:$0xff]
  %v226 = vld [vmem:[#allocation2 + $0x38] sm:$0xff]
  %v227 = vld [vmem:[#allocation2 + $0x48] sm:$0xff]
  %v228 = vld [vmem:[#allocation2 + $0x50] sm:$0xff]
  %v229 = vld [vmem:[#allocation2 + $0x60] sm:$0xff]
  %v230 = vld [vmem:[#allocation2 + $0x68] sm:$0xff]
  %v231 = vld [vmem:[#allocation2 + $0x78] sm:$0xff]
  %v232 = vld [vmem:[#allocation2 + $0x80] sm:$0xff]
  %v233 = vld [vmem:[#allocation2 + $0x90] sm:$0xff]
  %v234 = vld [vmem:[#allocation2 + $0x98] sm:$0xff]
  %v235 = vld [vmem:[#allocation2 + $0xa8] sm:$0xff]
  %v236 = vld [vmem:[#allocation2 + $0xb0] sm:$0xff]
  %v237 = vld [vmem:[#allocation2 + $0xc0] sm:$0xff]
  %v238 = vld [vmem:[#allocation2 + $0xc8] sm:$0xff]
  %v239 = vld [vmem:[#allocation2 + $0xd8] sm:$0xff]
  %v240 = vld [vmem:[#allocation2 + $0xe0] sm:$0xff]
  %v241 = vld [vmem:[#allocation2 + $0xf0] sm:$0xff]
  %v242 = vld [vmem:[#allocation2 + $0xf8] sm:$0xff]
  %v243 = vld [vmem:[#allocation2 + $0x108] sm:$0xff]
  %v244 = vld [vmem:[#allocation2 + $0x110] sm:$0xff]
  %v245 = vld [vmem:[#allocation2 + $0x120] sm:$0xff]
  %v246 = vld [vmem:[#allocation2 + $0x128] sm:$0xff]
  %v247 = vld [vmem:[#allocation2 + $0x138] sm:$0xff]
  %v248 = vld [vmem:[#allocation2 + $0x140] sm:$0xff]
  %v249 = vld [vmem:[#allocation2 + $0x150] sm:$0xff]
  %v250 = vld [vmem:[#allocation2 + $0x158] sm:$0xff]
  %v251 = vld [vmem:[#allocation2 + $0x168] sm:$0xff]
  %v252 = vld [vmem:[#allocation2 + $0x170] sm:$0xff]
  %v253 = vld [vmem:[#allocation2 + $0x180] sm:$0xff]
  %v254 = vld [vmem:[#allocation2 + $0x188] sm:$0xff]
  %v255 = vld [vmem:[#allocation2 + $0x198] sm:$0xff]
  %v256 = vld [vmem:[#allocation2 + $0x1a0] sm:$0xff]
  %v257 = vld [vmem:[#allocation2 + $0x1b0] sm:$0xff]
  %v258 = vld [vmem:[#allocation2 + $0x1b8] sm:$0xff]
  %v259 = vld [vmem:[#allocation2 + $0x1c8] sm:$0xff]
  %v260 = vld [vmem:[#allocation2 + $0x1d0] sm:$0xff]
  %v261 = vld [vmem:[#allocation2 + $0x1e0] sm:$0xff]
  %v262 = vld [vmem:[#allocation2 + $0x1e8] sm:$0xff]
  %v263 = vld [vmem:[#allocation2 + $0x1f8] sm:$0xff]
  %v264 = vld [vmem:[#allocation2 + $0x200] sm:$0xff]
  %v265 = vld [vmem:[#allocation2 + $0x210] sm:$0xff]
  %v266 = vld [vmem:[#allocation2 + $0x218] sm:$0xff]
  %v267 = vld [vmem:[#allocation2 + $0x228] sm:$0xff]
  %v268 = vld [vmem:[#allocation2 + $0x230] sm:$0xff]
  %v269 = vld [vmem:[#allocation2 + $0x240] sm:$0xff]
  %v270 = vld [vmem:[#allocation2 + $0x248] sm:$0xff]
  %v271 = vld [vmem:[#allocation2 + $0x258] sm:$0xff]
  %v272 = vld [vmem:[#allocation2 + $0x260] sm:$0xff]
  %v273 = vld [vmem:[#allocation2 + $0x270] sm:$0xff]
  %v274 = vld [vmem:[#allocation2 + $0x278] sm:$0xff]
  %v275 = vld [vmem:[#allocation2 + $0x288] sm:$0xff]
  %v276 = vld [vmem:[#allocation2 + $0x290] sm:$0xff]
  %v277 = vld [vmem:[#allocation2 + $0x2a0] sm:$0xff]
  %v278 = vld [vmem:[#allocation2 + $0x2a8] sm:$0xff]
  %v279 = vld [vmem:[#allocation2 + $0x2b8] sm:$0xff]
  %v280 = vld [vmem:[#allocation2 + $0x2c0] sm:$0xff]
  %v281 = vld [vmem:[#allocation2 + $0x2d0] sm:$0xff]
  %v282 = vld [vmem:[#allocation2 + $0x2d8] sm:$0xff]
  %v283 = vld [vmem:[#allocation2 + $0x2e8] sm:$0xff]
  %v284 = vld [vmem:[#allocation2 + $0x2f0] sm:$0xff]
  %v285 = vld [vmem:[#allocation2 + $0x300] sm:$0xff]
  %v286 = vld [vmem:[#allocation2 + $0x308] sm:$0xff]
  %v287 = vld [vmem:[#allocation2 + $0x318] sm:$0xff]
  %v288 = vld [vmem:[#allocation2 + $0x320] sm:$0xff]
  %v289 = vld [vmem:[#allocation2 + $0x330] sm:$0xff]
  %v290 = vld [vmem:[#allocation2 + $0x338] sm:$0xff]
  %v291 = vld [vmem:[#allocation2 + $0x348] sm:$0xff]
  %v292 = vld [vmem:[#allocation2 + $0x350] sm:$0xff]
  %v293 = vld [vmem:[#allocation2 + $0x1] sm:$0xff]
  %v294 = vld [vmem:[#allocation2 + $0x9] sm:$0xff]
  %v295 = vld [vmem:[#allocation2 + $0x19] sm:$0xff]
  %v296 = vld [vmem:[#allocation2 + $0x21] sm:$0xff]
  %v297 = vld [vmem:[#allocation2 + $0x31] sm:$0xff]
  %v298 = vld [vmem:[#allocation2 + $0x39] sm:$0xff]
  %v299 = vld [vmem:[#allocation2 + $0x49] sm:$0xff]
  %v300 = vld [vmem:[#allocation2 + $0x51] sm:$0xff]
  %v301 = vld [vmem:[#allocation2 + $0x61] sm:$0xff]
  %v302 = vld [vmem:[#allocation2 + $0x69] sm:$0xff]
  %v303 = vld [vmem:[#allocation2 + $0x79] sm:$0xff]
  %v304 = vld [vmem:[#allocation2 + $0x81] sm:$0xff]
  %v305 = vld [vmem:[#allocation2 + $0x91] sm:$0xff]
  %v306 = vld [vmem:[#allocation2 + $0x99] sm:$0xff]
  %v307 = vld [vmem:[#allocation2 + $0xa9] sm:$0xff]
  %v308 = vld [vmem:[#allocation2 + $0xb1] sm:$0xff]
  %v309 = vld [vmem:[#allocation2 + $0xc1] sm:$0xff]
  %v310 = vld [vmem:[#allocation2 + $0xc9] sm:$0xff]
  %v311 = vld [vmem:[#allocation2 + $0xd9] sm:$0xff]
  %v312 = vld [vmem:[#allocation2 + $0xe1] sm:$0xff]
  %v313 = vld [vmem:[#allocation2 + $0xf1] sm:$0xff]
  %v314 = vld [vmem:[#allocation2 + $0xf9] sm:$0xff]
  %v315 = vld [vmem:[#allocation2 + $0x109] sm:$0xff]
  %v316 = vld [vmem:[#allocation2 + $0x111] sm:$0xff]
  %v317 = vld [vmem:[#allocation2 + $0x121] sm:$0xff]
  %v318 = vld [vmem:[#allocation2 + $0x129] sm:$0xff]
  %v319 = vld [vmem:[#allocation2 + $0x139] sm:$0xff]
  %v320 = vld [vmem:[#allocation2 + $0x141] sm:$0xff]
  %v321 = vld [vmem:[#allocation2 + $0x151] sm:$0xff]
  %v322 = vld [vmem:[#allocation2 + $0x159] sm:$0xff]
  %v323 = vld [vmem:[#allocation2 + $0x169] sm:$0xff]
  %v324 = vld [vmem:[#allocation2 + $0x171] sm:$0xff]
  %v325 = vld [vmem:[#allocation2 + $0x181] sm:$0xff]
  %v326 = vld [vmem:[#allocation2 + $0x189] sm:$0xff]
  %v327 = vld [vmem:[#allocation2 + $0x199] sm:$0xff]
  %v328 = vld [vmem:[#allocation2 + $0x1a1] sm:$0xff]
  %v329 = vld [vmem:[#allocation2 + $0x1b1] sm:$0xff]
  %v330 = vld [vmem:[#allocation2 + $0x1b9] sm:$0xff]
  %v331 = vld [vmem:[#allocation2 + $0x1c9] sm:$0xff]
  %v332 = vld [vmem:[#allocation2 + $0x1d1] sm:$0xff]
  %v333 = vld [vmem:[#allocation2 + $0x1e1] sm:$0xff]
  %v334 = vld [vmem:[#allocation2 + $0x1e9] sm:$0xff]
  %v335 = vld [vmem:[#allocation2 + $0x1f9] sm:$0xff]
  %v336 = vld [vmem:[#allocation2 + $0x201] sm:$0xff]
  %v337 = vld [vmem:[#allocation2 + $0x211] sm:$0xff]
  %v338 = vld [vmem:[#allocation2 + $0x219] sm:$0xff]
  %v339 = vld [vmem:[#allocation2 + $0x229] sm:$0xff]
  %v340 = vld [vmem:[#allocation2 + $0x231] sm:$0xff]
  %v341 = vld [vmem:[#allocation2 + $0x241] sm:$0xff]
  %v342 = vld [vmem:[#allocation2 + $0x249] sm:$0xff]
  %v343 = vld [vmem:[#allocation2 + $0x259] sm:$0xff]
  %v344 = vld [vmem:[#allocation2 + $0x261] sm:$0xff]
  %v345 = vld [vmem:[#allocation2 + $0x271] sm:$0xff]
  %v346 = vld [vmem:[#allocation2 + $0x279] sm:$0xff]
  %v347 = vld [vmem:[#allocation2 + $0x289] sm:$0xff]
  %v348 = vld [vmem:[#allocation2 + $0x291] sm:$0xff]
  %v349 = vld [vmem:[#allocation2 + $0x2a1] sm:$0xff]
  %v350 = vld [vmem:[#allocation2 + $0x2a9] sm:$0xff]
  %v351 = vld [vmem:[#allocation2 + $0x2b9] sm:$0xff]
  %v352 = vld [vmem:[#allocation2 + $0x2c1] sm:$0xff]
  %v353 = vld [vmem:[#allocation2 + $0x2d1] sm:$0xff]
  %v354 = vld [vmem:[#allocation2 + $0x2d9] sm:$0xff]
  %v355 = vld [vmem:[#allocation2 + $0x2e9] sm:$0xff]
  %v356 = vld [vmem:[#allocation2 + $0x2f1] sm:$0xff]
  %v357 = vld [vmem:[#allocation2 + $0x301] sm:$0xff]
  %v358 = vld [vmem:[#allocation2 + $0x309] sm:$0xff]
  %v359 = vld [vmem:[#allocation2 + $0x319] sm:$0xff]
  %v360 = vld [vmem:[#allocation2 + $0x321] sm:$0xff]
  %v361 = vld [vmem:[#allocation2 + $0x331] sm:$0xff]
  %v362 = vld [vmem:[#allocation2 + $0x339] sm:$0xff]
  %v363 = vld [vmem:[#allocation2 + $0x349] sm:$0xff]
  %v364 = vld [vmem:[#allocation2 + $0x351] sm:$0xff]
  %v365 = vld [vmem:[#allocation2 + $0x2] sm:$0xff]
  %v366 = vld [vmem:[#allocation2 + $0xa] sm:$0xff]
  %v367 = vld [vmem:[#allocation2 + $0x1a] sm:$0xff]
  %v368 = vld [vmem:[#allocation2 + $0x22] sm:$0xff]
  %v369 = vld [vmem:[#allocation2 + $0x32] sm:$0xff]
  %v370 = vld [vmem:[#allocation2 + $0x3a] sm:$0xff]
  %v371 = vld [vmem:[#allocation2 + $0x4a] sm:$0xff]
  %v372 = vld [vmem:[#allocation2 + $0x52] sm:$0xff]
  %v373 = vld [vmem:[#allocation2 + $0x62] sm:$0xff]
  %v374 = vld [vmem:[#allocation2 + $0x6a] sm:$0xff]
  %v375 = vld [vmem:[#allocation2 + $0x7a] sm:$0xff]
  %v376 = vld [vmem:[#allocation2 + $0x82] sm:$0xff]
  %v377 = vld [vmem:[#allocation2 + $0x92] sm:$0xff]
  %v378 = vld [vmem:[#allocation2 + $0x9a] sm:$0xff]
  %v379 = vld [vmem:[#allocation2 + $0xaa] sm:$0xff]
  %v380 = vld [vmem:[#allocation2 + $0xb2] sm:$0xff]
  %v381 = vld [vmem:[#allocation2 + $0xc2] sm:$0xff]
  %v382 = vld [vmem:[#allocation2 + $0xca] sm:$0xff]
  %v383 = vld [vmem:[#allocation2 + $0xda] sm:$0xff]
  %v384 = vld [vmem:[#allocation2 + $0xe2] sm:$0xff]
  %v385 = vld [vmem:[#allocation2 + $0xf2] sm:$0xff]
  %v386 = vld [vmem:[#allocation2 + $0xfa] sm:$0xff]
  %v387 = vld [vmem:[#allocation2 + $0x10a] sm:$0xff]
  %v388 = vld [vmem:[#allocation2 + $0x112] sm:$0xff]
  %v389 = vld [vmem:[#allocation2 + $0x122] sm:$0xff]
  %v390 = vld [vmem:[#allocation2 + $0x12a] sm:$0xff]
  %v391 = vld [vmem:[#allocation2 + $0x13a] sm:$0xff]
  %v392 = vld [vmem:[#allocation2 + $0x142] sm:$0xff]
  %v393 = vld [vmem:[#allocation2 + $0x152] sm:$0xff]
  %v394 = vld [vmem:[#allocation2 + $0x15a] sm:$0xff]
  %v395 = vld [vmem:[#allocation2 + $0x16a] sm:$0xff]
  %v396 = vld [vmem:[#allocation2 + $0x172] sm:$0xff]
  %v397 = vld [vmem:[#allocation2 + $0x182] sm:$0xff]
  %v398 = vld [vmem:[#allocation2 + $0x18a] sm:$0xff]
  %v399 = vld [vmem:[#allocation2 + $0x19a] sm:$0xff]
  %v400 = vld [vmem:[#allocation2 + $0x1a2] sm:$0xff]
  %v401 = vld [vmem:[#allocation2 + $0x1b2] sm:$0xff]
  %v402 = vld [vmem:[#allocation2 + $0x1ba] sm:$0xff]
  %v403 = vld [vmem:[#allocation2 + $0x1ca] sm:$0xff]
  %v404 = vld [vmem:[#allocation2 + $0x1d2] sm:$0xff]
  %v405 = vld [vmem:[#allocation2 + $0x1e2] sm:$0xff]
  %v406 = vld [vmem:[#allocation2 + $0x1ea] sm:$0xff]
  %v407 = vld [vmem:[#allocation2 + $0x1fa] sm:$0xff]
  %v408 = vld [vmem:[#allocation2 + $0x202] sm:$0xff]
  %v409 = vld [vmem:[#allocation2 + $0x212] sm:$0xff]
  %v410 = vld [vmem:[#allocation2 + $0x21a] sm:$0xff]
  %v411 = vld [vmem:[#allocation2 + $0x22a] sm:$0xff]
  %v412 = vld [vmem:[#allocation2 + $0x232] sm:$0xff]
  %v413 = vld [vmem:[#allocation2 + $0x242] sm:$0xff]
  %v414 = vld [vmem:[#allocation2 + $0x24a] sm:$0xff]
  %v415 = vld [vmem:[#allocation2 + $0x25a] sm:$0xff]
  %v416 = vld [vmem:[#allocation2 + $0x262] sm:$0xff]
  %v417 = vld [vmem:[#allocation2 + $0x272] sm:$0xff]
  %v418 = vld [vmem:[#allocation2 + $0x27a] sm:$0xff]
  %v419 = vld [vmem:[#allocation2 + $0x28a] sm:$0xff]
  %v420 = vld [vmem:[#allocation2 + $0x292] sm:$0xff]
  %v421 = vld [vmem:[#allocation2 + $0x2a2] sm:$0xff]
  %v422 = vld [vmem:[#allocation2 + $0x2aa] sm:$0xff]
  %v423 = vld [vmem:[#allocation2 + $0x2ba] sm:$0xff]
  %v424 = vld [vmem:[#allocation2 + $0x2c2] sm:$0xff]
  %v425 = vld [vmem:[#allocation2 + $0x2d2] sm:$0xff]
  %v426 = vld [vmem:[#allocation2 + $0x2da] sm:$0xff]
  %v427 = vld [vmem:[#allocation2 + $0x2ea] sm:$0xff]
  %v428 = vld [vmem:[#allocation2 + $0x2f2] sm:$0xff]
  %v429 = vld [vmem:[#allocation2 + $0x302] sm:$0xff]
  %v430 = vld [vmem:[#allocation2 + $0x30a] sm:$0xff]
  %v431 = vld [vmem:[#allocation2 + $0x31a] sm:$0xff]
  %v432 = vld [vmem:[#allocation2 + $0x322] sm:$0xff]
  %v433 = vld [vmem:[#allocation2 + $0x332] sm:$0xff]
  %v434 = vld [vmem:[#allocation2 + $0x33a] sm:$0xff]
  %v435 = vld [vmem:[#allocation2 + $0x34a] sm:$0xff]
  %v436 = vld [vmem:[#allocation2 + $0x352] sm:$0xff]
  %v437 = vpack.c.bf16 %v222, %v221
  %v438 = vpack.c.bf16 %v294, %v293
  %v439 = vpack.c.bf16 %v366, %v365
  %v440 = vpack.c.bf16 %v224, %v223
  %v441 = vpack.c.bf16 %v296, %v295
  %v442 = vpack.c.bf16 %v368, %v367
  %v443 = vpack.c.bf16 %v226, %v225
  %v444 = vpack.c.bf16 %v298, %v297
  %v445 = vpack.c.bf16 %v370, %v369
  %v446 = vpack.c.bf16 %v228, %v227
  %v447 = vpack.c.bf16 %v300, %v299
  %v448 = vpack.c.bf16 %v372, %v371
  %v449 = vpack.c.bf16 %v230, %v229
  %v450 = vpack.c.bf16 %v302, %v301
  %v451 = vpack.c.bf16 %v374, %v373
  %v452 = vpack.c.bf16 %v232, %v231
  %v453 = vpack.c.bf16 %v304, %v303
  %v454 = vpack.c.bf16 %v376, %v375
  %v455 = vpack.c.bf16 %v234, %v233
  %v456 = vpack.c.bf16 %v306, %v305
  %v457 = vpack.c.bf16 %v378, %v377
  %v458 = vpack.c.bf16 %v236, %v235
  %v459 = vpack.c.bf16 %v308, %v307
  %v460 = vpack.c.bf16 %v380, %v379
  %v461 = vpack.c.bf16 %v238, %v237
  %v462 = vpack.c.bf16 %v310, %v309
  %v463 = vpack.c.bf16 %v382, %v381
  %v464 = vpack.c.bf16 %v240, %v239
  %v465 = vpack.c.bf16 %v312, %v311
  %v466 = vpack.c.bf16 %v384, %v383
  %v467 = vpack.c.bf16 %v242, %v241
  %v468 = vpack.c.bf16 %v314, %v313
  %v469 = vpack.c.bf16 %v386, %v385
  %v470 = vpack.c.bf16 %v244, %v243
  %v471 = vpack.c.bf16 %v316, %v315
  %v472 = vpack.c.bf16 %v388, %v387
  %v473 = vpack.c.bf16 %v246, %v245
  %v474 = vpack.c.bf16 %v318, %v317
  %v475 = vpack.c.bf16 %v390, %v389
  %v476 = vpack.c.bf16 %v248, %v247
  %v477 = vpack.c.bf16 %v320, %v319
  %v478 = vpack.c.bf16 %v392, %v391
  %v479 = vpack.c.bf16 %v250, %v249
  %v480 = vpack.c.bf16 %v322, %v321
  %v481 = vpack.c.bf16 %v394, %v393
  %v482 = vpack.c.bf16 %v252, %v251
  %v483 = vpack.c.bf16 %v324, %v323
  %v484 = vpack.c.bf16 %v396, %v395
  %v485 = vpack.c.bf16 %v254, %v253
  %v486 = vpack.c.bf16 %v326, %v325
  %v487 = vpack.c.bf16 %v398, %v397
  %v488 = vpack.c.bf16 %v256, %v255
  %v489 = vpack.c.bf16 %v328, %v327
  %v490 = vpack.c.bf16 %v400, %v399
  %v491 = vpack.c.bf16 %v258, %v257
  %v492 = vpack.c.bf16 %v330, %v329
  %v493 = vpack.c.bf16 %v402, %v401
  %v494 = vpack.c.bf16 %v260, %v259
  %v495 = vpack.c.bf16 %v332, %v331
  %v496 = vpack.c.bf16 %v404, %v403
  %v497 = vpack.c.bf16 %v262, %v261
  %v498 = vpack.c.bf16 %v334, %v333
  %v499 = vpack.c.bf16 %v406, %v405
  %v500 = vpack.c.bf16 %v264, %v263
  %v501 = vpack.c.bf16 %v336, %v335
  %v502 = vpack.c.bf16 %v408, %v407
  %v503 = vpack.c.bf16 %v266, %v265
  %v504 = vpack.c.bf16 %v338, %v337
  %v505 = vpack.c.bf16 %v410, %v409
  %v506 = vpack.c.bf16 %v268, %v267
  %v507 = vpack.c.bf16 %v340, %v339
  %v508 = vpack.c.bf16 %v412, %v411
  %v509 = vpack.c.bf16 %v270, %v269
  %v510 = vpack.c.bf16 %v342, %v341
  %v511 = vpack.c.bf16 %v414, %v413
  %v512 = vpack.c.bf16 %v272, %v271
  %v513 = vpack.c.bf16 %v344, %v343
  %v514 = vpack.c.bf16 %v416, %v415
  %v515 = vpack.c.bf16 %v274, %v273
  %v516 = vpack.c.bf16 %v346, %v345
  %v517 = vpack.c.bf16 %v418, %v417
  %v518 = vpack.c.bf16 %v276, %v275
  %v519 = vpack.c.bf16 %v348, %v347
  %v520 = vpack.c.bf16 %v420, %v419
  %v521 = vpack.c.bf16 %v278, %v277
  %v522 = vpack.c.bf16 %v350, %v349
  %v523 = vpack.c.bf16 %v422, %v421
  %v524 = vpack.c.bf16 %v280, %v279
  %v525 = vpack.c.bf16 %v352, %v351
  %v526 = vpack.c.bf16 %v424, %v423
  %v527 = vpack.c.bf16 %v282, %v281
  %v528 = vpack.c.bf16 %v354, %v353
  %v529 = vpack.c.bf16 %v426, %v425
  %v530 = vpack.c.bf16 %v284, %v283
  %v531 = vpack.c.bf16 %v356, %v355
  %v532 = vpack.c.bf16 %v428, %v427
  %v533 = vpack.c.bf16 %v286, %v285
  %v534 = vpack.c.bf16 %v358, %v357
  %v535 = vpack.c.bf16 %v430, %v429
  %v536 = vpack.c.bf16 %v288, %v287
  %v537 = vpack.c.bf16 %v360, %v359
  %v538 = vpack.c.bf16 %v432, %v431
  %v539 = vpack.c.bf16 %v290, %v289
  %v540 = vpack.c.bf16 %v362, %v361
  %v541 = vpack.c.bf16 %v434, %v433
  %v542 = vpack.c.bf16 %v292, %v291
  %v543 = vpack.c.bf16 %v364, %v363
  %v544 = vpack.c.bf16 %v436, %v435
  %v545 = vld [vmem:[%s1] sm:$0xf]
  %v546 = vld [vmem:[%s1 + $0x4] sm:$0xf]
  %v547 = vld [vmem:[%s1 + $0x8] sm:$0xf]
  %v548 = vld [vmem:[%s1 + $0xc] sm:$0xf]
  %v549 = vld [vmem:[%s1 + $0x10] sm:$0xf]
  %v550 = vld [vmem:[%s1 + $0x14] sm:$0xf]
  %v551 = vld [vmem:[%s1 + $0x18] sm:$0xf]
  %v552 = vld [vmem:[%s1 + $0x1c] sm:$0xf]
  %v553 = vld [vmem:[%s1 + $0x20] sm:$0xf]
  %v554 = vld [vmem:[%s1 + $0x24] sm:$0xf]
  %v555 = vld [vmem:[%s1 + $0x28] sm:$0xf]
  %v556 = vld [vmem:[%s1 + $0x2c] sm:$0xf]
  %v557 = vld [vmem:[%s1 + $0x30] sm:$0xf]
  %v558 = vld [vmem:[%s1 + $0x34] sm:$0xf]
  %v559 = vld [vmem:[%s1 + $0x38] sm:$0xf]
  %v560 = vld [vmem:[%s1 + $0x3c] sm:$0xf]
  %v561 = vld [vmem:[%s1 + $0x40] sm:$0xf]
  %v562 = vld [vmem:[%s1 + $0x44] sm:$0xf]
  %v563 = vld [vmem:[%s1 + $0x48] sm:$0xf]
  %v564 = vld [vmem:[%s1 + $0x4c] sm:$0xf]
  %v565 = vld [vmem:[%s1 + $0x50] sm:$0xf]
  %v566 = vld [vmem:[%s1 + $0x54] sm:$0xf]
  %v567 = vld [vmem:[%s1 + $0x58] sm:$0xf]
  %v568 = vld [vmem:[%s1 + $0x5c] sm:$0xf]
  %v569 = vld [vmem:[%s1 + $0x60] sm:$0xf]
  %v570 = vld [vmem:[%s1 + $0x64] sm:$0xf]
  %v571 = vld [vmem:[%s1 + $0x68] sm:$0xf]
  %v572 = vld [vmem:[%s1 + $0x6c] sm:$0xf]
  %v573 = vld [vmem:[%s1 + $0x70] sm:$0xf]
  %v574 = vld [vmem:[%s1 + $0x74] sm:$0xf]
  %v575 = vld [vmem:[%s1 + $0x78] sm:$0xf]
  %v576 = vld [vmem:[%s1 + $0x7c] sm:$0xf]
  %v577 = vld [vmem:[%s1 + $0x80] sm:$0xf]
  %v578 = vld [vmem:[%s1 + $0x84] sm:$0xf]
  %v579 = vld [vmem:[%s1 + $0x88] sm:$0xf]
  %v580 = vld [vmem:[%s1 + $0x8c] sm:$0xf]
  %v581 = vld [vmem:[%s1 + $0x90] sm:$0xf]
  %v582 = vld [vmem:[%s1 + $0x94] sm:$0xf]
  %v583 = vld [vmem:[%s1 + $0x98] sm:$0xf]
  %v584 = vld [vmem:[%s1 + $0x9c] sm:$0xf]
  %v585 = vld [vmem:[%s1 + $0xa0] sm:$0xf]
  %v586 = vld [vmem:[%s1 + $0xa4] sm:$0xf]
  %v587 = vld [vmem:[%s1 + $0xa8] sm:$0xf]
  %v588 = vld [vmem:[%s1 + $0xac] sm:$0xf]
  %v589 = vld [vmem:[%s1 + $0xb0] sm:$0xf]
  %v590 = vld [vmem:[%s1 + $0xb4] sm:$0xf]
  %v591 = vld [vmem:[%s1 + $0xb8] sm:$0xf]
  %v592 = vld [vmem:[%s1 + $0xbc] sm:$0xf]
  %s593 = scalar_lea.vmem %s1, 192
  %v594 = vld [vmem:[%s593] sm:$0xf]
  %v595 = vld [vmem:[%s593 + $0x4] sm:$0xf]
  %v596 = vld [vmem:[%s593 + $0x8] sm:$0xf]
  %v597 = vld [vmem:[%s593 + $0xc] sm:$0xf]
  %v598 = vld [vmem:[%s593 + $0x10] sm:$0xf]
  %v599 = vld [vmem:[%s593 + $0x14] sm:$0xf]
  %v600 = vld [vmem:[%s593 + $0x18] sm:$0xf]
  %v601 = vld [vmem:[%s593 + $0x1c] sm:$0xf]
  %v602 = vld [vmem:[%s593 + $0x20] sm:$0xf]
  %v603 = vld [vmem:[%s593 + $0x24] sm:$0xf]
  %v604 = vld [vmem:[%s593 + $0x28] sm:$0xf]
  %v605 = vld [vmem:[%s593 + $0x2c] sm:$0xf]
  %v606 = vld [vmem:[%s593 + $0x30] sm:$0xf]
  %v607 = vld [vmem:[%s593 + $0x34] sm:$0xf]
  %v608 = vld [vmem:[%s593 + $0x38] sm:$0xf]
  %v609 = vld [vmem:[%s593 + $0x3c] sm:$0xf]
  %v610 = vld [vmem:[%s593 + $0x40] sm:$0xf]
  %v611 = vld [vmem:[%s593 + $0x44] sm:$0xf]
  %v612 = vld [vmem:[%s593 + $0x48] sm:$0xf]
  %v613 = vld [vmem:[%s593 + $0x4c] sm:$0xf]
  %v614 = vld [vmem:[%s593 + $0x50] sm:$0xf]
  %v615 = vld [vmem:[%s593 + $0x54] sm:$0xf]
  %v616 = vld [vmem:[%s593 + $0x58] sm:$0xf]
  %v617 = vld [vmem:[%s593 + $0x5c] sm:$0xf]
  %v618 = vld [vmem:[%s593 + $0x60] sm:$0xf]
  %v619 = vld [vmem:[%s593 + $0x64] sm:$0xf]
  %v620 = vld [vmem:[%s593 + $0x68] sm:$0xf]
  %v621 = vld [vmem:[%s593 + $0x6c] sm:$0xf]
  %v622 = vld [vmem:[%s593 + $0x70] sm:$0xf]
  %v623 = vld [vmem:[%s593 + $0x74] sm:$0xf]
  %v624 = vld [vmem:[%s593 + $0x78] sm:$0xf]
  %v625 = vld [vmem:[%s593 + $0x7c] sm:$0xf]
  %v626 = vld [vmem:[%s593 + $0x80] sm:$0xf]
  %v627 = vld [vmem:[%s593 + $0x84] sm:$0xf]
  %v628 = vld [vmem:[%s593 + $0x88] sm:$0xf]
  %v629 = vld [vmem:[%s593 + $0x8c] sm:$0xf]
  %v630 = vld [vmem:[%s593 + $0x90] sm:$0xf]
  %v631 = vld [vmem:[%s593 + $0x94] sm:$0xf]
  %v632 = vld [vmem:[%s593 + $0x98] sm:$0xf]
  %v633 = vld [vmem:[%s593 + $0x9c] sm:$0xf]
  %v634 = vld [vmem:[%s593 + $0xa0] sm:$0xf]
  %v635 = vld [vmem:[%s593 + $0xa4] sm:$0xf]
  %v636 = vld [vmem:[%s593 + $0xa8] sm:$0xf]
  %v637 = vld [vmem:[%s593 + $0xac] sm:$0xf]
  %v638 = vld [vmem:[%s593 + $0xb0] sm:$0xf]
  %v639 = vld [vmem:[%s593 + $0xb4] sm:$0xf]
  %v640 = vld [vmem:[%s593 + $0xb8] sm:$0xf]
  %v641 = vld [vmem:[%s593 + $0xbc] sm:$0xf]
  %v690 = vunpack.c.l.b16 %v594
  %v691 = vunpack.c.l.b16 %v595
  %v692 = vunpack.c.l.b16 %v596
  %v693 = vunpack.c.l.b16 %v597
  %v694 = vunpack.c.l.b16 %v598
  %v695 = vunpack.c.l.b16 %v599
  %v696 = vunpack.c.l.b16 %v600
  %v697 = vunpack.c.l.b16 %v601
  %v698 = vunpack.c.l.b16 %v602
  %v699 = vunpack.c.l.b16 %v603
  %v700 = vunpack.c.l.b16 %v604
  %v701 = vunpack.c.l.b16 %v605
  %v702 = vunpack.c.l.b16 %v606
  %v703 = vunpack.c.l.b16 %v607
  %v704 = vunpack.c.l.b16 %v608
  %v705 = vunpack.c.l.b16 %v609
  %v706 = vunpack.c.l.b16 %v610
  %v707 = vunpack.c.l.b16 %v611
  %v708 = vunpack.c.l.b16 %v612
  %v709 = vunpack.c.l.b16 %v613
  %v710 = vunpack.c.l.b16 %v614
  %v711 = vunpack.c.l.b16 %v615
  %v712 = vunpack.c.l.b16 %v616
  %v713 = vunpack.c.l.b16 %v617
  %v714 = vunpack.c.l.b16 %v618
  %v715 = vunpack.c.l.b16 %v619
  %v716 = vunpack.c.l.b16 %v620
  %v717 = vunpack.c.l.b16 %v621
  %v718 = vunpack.c.l.b16 %v622
  %v719 = vunpack.c.l.b16 %v623
  %v720 = vunpack.c.l.b16 %v624
  %v721 = vunpack.c.l.b16 %v625
  %v722 = vunpack.c.l.b16 %v626
  %v723 = vunpack.c.l.b16 %v627
  %v724 = vunpack.c.l.b16 %v628
  %v725 = vunpack.c.l.b16 %v629
  %v726 = vunpack.c.l.b16 %v630
  %v727 = vunpack.c.l.b16 %v631
  %v728 = vunpack.c.l.b16 %v632
  %v729 = vunpack.c.l.b16 %v633
  %v730 = vunpack.c.l.b16 %v634
  %v731 = vunpack.c.l.b16 %v635
  %v732 = vunpack.c.l.b16 %v636
  %v733 = vunpack.c.l.b16 %v637
  %v734 = vunpack.c.l.b16 %v638
  %v735 = vunpack.c.l.b16 %v639
  %v736 = vunpack.c.l.b16 %v640
  %v737 = vunpack.c.l.b16 %v641
  %v738 = vpack.c.b16 %v691, %v690
  %v739 = vpack.c.b16 %v693, %v692
  %v740 = vpack.c.b16 %v695, %v694
  %v741 = vpack.c.b16 %v697, %v696
  %v742 = vpack.c.b16 %v699, %v698
  %v743 = vpack.c.b16 %v701, %v700
  %v744 = vpack.c.b16 %v703, %v702
  %v745 = vpack.c.b16 %v705, %v704
  %v746 = vpack.c.b16 %v707, %v706
  %v747 = vpack.c.b16 %v709, %v708
  %v748 = vpack.c.b16 %v711, %v710
  %v749 = vpack.c.b16 %v713, %v712
  %v750 = vpack.c.b16 %v715, %v714
  %v751 = vpack.c.b16 %v717, %v716
  %v752 = vpack.c.b16 %v719, %v718
  %v753 = vpack.c.b16 %v721, %v720
  %v754 = vpack.c.b16 %v723, %v722
  %v755 = vpack.c.b16 %v725, %v724
  %v756 = vpack.c.b16 %v727, %v726
  %v757 = vpack.c.b16 %v729, %v728
  %v758 = vpack.c.b16 %v731, %v730
  %v759 = vpack.c.b16 %v733, %v732
  %v760 = vpack.c.b16 %v735, %v734
  %v761 = vpack.c.b16 %v737, %v736
  %786 = vmatprep.subr.bf16.mxu0 0
  %787 = vmatpush1.bf16.msra.mxu0 %v745
  %788 = vmatprep.subr.bf16.mxu0 0
  %789 = vmatpush1.bf16.msra.mxu0 %v744
  %790 = vmatprep.subr.bf16.mxu0 0
  %791 = vmatpush1.bf16.msra.mxu0 %v743
  %792 = vmatprep.subr.bf16.mxu0 0
  %793 = vmatpush1.bf16.msra.mxu0 %v742
  %794 = vmatprep.subr.bf16.mxu0 0
  %795 = vmatpush1.bf16.msra.mxu0 %v741
  %796 = vmatprep.subr.bf16.mxu0 0
  %797 = vmatpush1.bf16.msra.mxu0 %v740
  %798 = vmatprep.subr.bf16.mxu0 0
  %799 = vmatpush1.bf16.msra.mxu0 %v739
  %800 = vmatprep.subr.bf16.mxu0 0
  %801 = vmatpush1.bf16.msra.mxu0 %v738
  %802 = vmatprep.subr.bf16.mxu0 0
  %803 = vmatpush2.bf16.msra.mxu0 %v753
  %804 = vmatprep.subr.bf16.mxu0 0
  %805 = vmatpush2.bf16.msra.mxu0 %v752
  %806 = vmatprep.subr.bf16.mxu0 0
  %807 = vmatpush2.bf16.msra.mxu0 %v751
  %808 = vmatprep.subr.bf16.mxu0 0
  %809 = vmatpush2.bf16.msra.mxu0 %v750
  %810 = vmatprep.subr.bf16.mxu0 0
  %811 = vmatpush2.bf16.msra.mxu0 %v749
  %812 = vmatprep.subr.bf16.mxu0 0
  %813 = vmatpush2.bf16.msra.mxu0 %v748
  %814 = vmatprep.subr.bf16.mxu0 0
  %815 = vmatpush2.bf16.msra.mxu0 %v747
  %816 = vmatprep.subr.bf16.mxu0 0
  %817 = vmatpush2.bf16.msra.mxu0 %v746
  %818 = vmatprep.mubr.bf16.mxu0 %v441
  %819 = vmatmul.mubr.bf16.gmra.mxu0 %v440
  %v820 = vpop.f32.mrf.mxu0
  %v821 = vadd.f32 0.0, %v820
  %v822 = vpop.f32.mrf.mxu0
  %v823 = vpop.f32.mrf.mxu0
  %v824 = vadd.f32 0.0, %v823
  %v825 = vpop.f32.mrf.mxu0
  %826 = vmatprep.mubr.bf16.mxu0 %v444
  %827 = vmatmul.mubr.bf16.gmra.mxu0 %v443
  %v828 = vpop.f32.mrf.mxu0
  %v829 = vadd.f32 0.0, %v828
  %v830 = vpop.f32.mrf.mxu0
  %v831 = vpop.f32.mrf.mxu0
  %v832 = vadd.f32 0.0, %v831
  %v833 = vpop.f32.mrf.mxu0
  %834 = vmatprep.mubr.bf16.mxu0 %v447
  %835 = vmatmul.mubr.bf16.gmra.mxu0 %v446
  %v836 = vpop.f32.mrf.mxu0
  %v837 = vadd.f32 0.0, %v836
  %v838 = vpop.f32.mrf.mxu0
  %v839 = vpop.f32.mrf.mxu0
  %v840 = vadd.f32 0.0, %v839
  %v841 = vpop.f32.mrf.mxu0
  %842 = vmatprep.mubr.bf16.mxu0 %v450
  %843 = vmatmul.mubr.bf16.gmra.mxu0 %v449
  %v844 = vpop.f32.mrf.mxu0
  %v845 = vadd.f32 0.0, %v844
  %v846 = vpop.f32.mrf.mxu0
  %v847 = vpop.f32.mrf.mxu0
  %v848 = vadd.f32 0.0, %v847
  %v849 = vpop.f32.mrf.mxu0
  %850 = vmatprep.mubr.bf16.mxu0 %v453
  %851 = vmatmul.mubr.bf16.gmra.mxu0 %v452
  %v852 = vpop.f32.mrf.mxu0
  %v853 = vadd.f32 0.0, %v852
  %v854 = vpop.f32.mrf.mxu0
  %v855 = vpop.f32.mrf.mxu0
  %v856 = vadd.f32 0.0, %v855
  %v857 = vpop.f32.mrf.mxu0
  %858 = vmatprep.mubr.bf16.mxu0 %v456
  %859 = vmatmul.mubr.bf16.gmra.mxu0 %v455
  %v860 = vpop.f32.mrf.mxu0
  %v861 = vadd.f32 0.0, %v860
  %v862 = vpop.f32.mrf.mxu0
  %v863 = vpop.f32.mrf.mxu0
  %v864 = vadd.f32 0.0, %v863
  %v865 = vpop.f32.mrf.mxu0
  %866 = vmatprep.mubr.bf16.mxu0 %v459
  %867 = vmatmul.mubr.bf16.gmra.mxu0 %v458
  %v868 = vpop.f32.mrf.mxu0
  %v869 = vadd.f32 0.0, %v868
  %v870 = vpop.f32.mrf.mxu0
  %v871 = vpop.f32.mrf.mxu0
  %v872 = vadd.f32 0.0, %v871
  %v873 = vpop.f32.mrf.mxu0
  %874 = vmatprep.mubr.bf16.mxu0 %v462
  %875 = vmatmul.mubr.bf16.gmra.mxu0 %v461
  %v876 = vpop.f32.mrf.mxu0
  %v877 = vadd.f32 0.0, %v876
  %v878 = vpop.f32.mrf.mxu0
  %v879 = vpop.f32.mrf.mxu0
  %v880 = vadd.f32 0.0, %v879
  %v881 = vpop.f32.mrf.mxu0
  %882 = vmatprep.mubr.bf16.mxu0 %v465
  %883 = vmatmul.mubr.bf16.gmra.mxu0 %v464
  %v884 = vpop.f32.mrf.mxu0
  %v885 = vadd.f32 0.0, %v884
  %v886 = vpop.f32.mrf.mxu0
  %v887 = vpop.f32.mrf.mxu0
  %v888 = vadd.f32 0.0, %v887
  %v889 = vpop.f32.mrf.mxu0
  %890 = vmatprep.mubr.bf16.mxu0 %v468
  %891 = vmatmul.mubr.bf16.gmra.mxu0 %v467
  %v892 = vpop.f32.mrf.mxu0
  %v893 = vadd.f32 0.0, %v892
  %v894 = vpop.f32.mrf.mxu0
  %v895 = vpop.f32.mrf.mxu0
  %v896 = vadd.f32 0.0, %v895
  %v897 = vpop.f32.mrf.mxu0
  %898 = vmatprep.mubr.bf16.mxu0 %v471
  %899 = vmatmul.mubr.bf16.gmra.mxu0 %v470
  %v900 = vpop.f32.mrf.mxu0
  %v901 = vadd.f32 0.0, %v900
  %v902 = vpop.f32.mrf.mxu0
  %v903 = vpop.f32.mrf.mxu0
  %v904 = vadd.f32 0.0, %v903
  %v905 = vpop.f32.mrf.mxu0
  %906 = vmatprep.mubr.bf16.mxu0 %v474
  %907 = vmatmul.mubr.bf16.gmra.mxu0 %v473
  %v908 = vpop.f32.mrf.mxu0
  %v909 = vadd.f32 0.0, %v908
  %v910 = vpop.f32.mrf.mxu0
  %v911 = vpop.f32.mrf.mxu0
  %v912 = vadd.f32 0.0, %v911
  %v913 = vpop.f32.mrf.mxu0
  %914 = vmatprep.mubr.bf16.mxu0 %v477
  %915 = vmatmul.mubr.bf16.gmra.mxu0 %v476
  %v916 = vpop.f32.mrf.mxu0
  %v917 = vadd.f32 0.0, %v916
  %v918 = vpop.f32.mrf.mxu0
  %v919 = vpop.f32.mrf.mxu0
  %v920 = vadd.f32 0.0, %v919
  %v921 = vpop.f32.mrf.mxu0
  %922 = vmatprep.mubr.bf16.mxu0 %v480
  %923 = vmatmul.mubr.bf16.gmra.mxu0 %v479
  %v924 = vpop.f32.mrf.mxu0
  %v925 = vadd.f32 0.0, %v924
  %v926 = vpop.f32.mrf.mxu0
  %v927 = vpop.f32.mrf.mxu0
  %v928 = vadd.f32 0.0, %v927
  %v929 = vpop.f32.mrf.mxu0
  %930 = vmatprep.mubr.bf16.mxu0 %v483
  %931 = vmatmul.mubr.bf16.gmra.mxu0 %v482
  %v932 = vpop.f32.mrf.mxu0
  %v933 = vadd.f32 0.0, %v932
  %v934 = vpop.f32.mrf.mxu0
  %v935 = vpop.f32.mrf.mxu0
  %v936 = vadd.f32 0.0, %v935
  %v937 = vpop.f32.mrf.mxu0
  %938 = vmatprep.mubr.bf16.mxu0 %v486
  %939 = vmatmul.mubr.bf16.gmra.mxu0 %v485
  %v940 = vpop.f32.mrf.mxu0
  %v941 = vadd.f32 0.0, %v940
  %v942 = vpop.f32.mrf.mxu0
  %v943 = vpop.f32.mrf.mxu0
  %v944 = vadd.f32 0.0, %v943
  %v945 = vpop.f32.mrf.mxu0
  %946 = vmatprep.mubr.bf16.mxu0 %v495
  %947 = vmatmul.mubr.bf16.gmra.mxu0 %v494
  %v948 = vpop.f32.mrf.mxu0
  %v949 = vadd.f32 0.0, %v948
  %v950 = vpop.f32.mrf.mxu0
  %v951 = vpop.f32.mrf.mxu0
  %v952 = vadd.f32 0.0, %v951
  %v953 = vpop.f32.mrf.mxu0
  %954 = vmatprep.mubr.bf16.mxu0 %v498
  %955 = vmatmul.mubr.bf16.gmra.mxu0 %v497
  %v956 = vpop.f32.mrf.mxu0
  %v957 = vadd.f32 0.0, %v956
  %v958 = vpop.f32.mrf.mxu0
  %v959 = vpop.f32.mrf.mxu0
  %v960 = vadd.f32 0.0, %v959
  %v961 = vpop.f32.mrf.mxu0
  %962 = vmatprep.mubr.bf16.mxu0 %v501
  %963 = vmatmul.mubr.bf16.gmra.mxu0 %v500
  %v964 = vpop.f32.mrf.mxu0
  %v965 = vadd.f32 0.0, %v964
  %v966 = vpop.f32.mrf.mxu0
  %v967 = vpop.f32.mrf.mxu0
  %v968 = vadd.f32 0.0, %v967
  %v969 = vpop.f32.mrf.mxu0
  %970 = vmatprep.mubr.bf16.mxu0 %v504
  %971 = vmatmul.mubr.bf16.gmra.mxu0 %v503
  %v972 = vpop.f32.mrf.mxu0
  %v973 = vadd.f32 0.0, %v972
  %v974 = vpop.f32.mrf.mxu0
  %v975 = vpop.f32.mrf.mxu0
  %v976 = vadd.f32 0.0, %v975
  %v977 = vpop.f32.mrf.mxu0
  %978 = vmatprep.mubr.bf16.mxu0 %v507
  %979 = vmatmul.mubr.bf16.gmra.mxu0 %v506
  %v980 = vpop.f32.mrf.mxu0
  %v981 = vadd.f32 0.0, %v980
  %v982 = vpop.f32.mrf.mxu0
  %v983 = vpop.f32.mrf.mxu0
  %v984 = vadd.f32 0.0, %v983
  %v985 = vpop.f32.mrf.mxu0
  %986 = vmatprep.mubr.bf16.mxu0 %v510
  %987 = vmatmul.mubr.bf16.gmra.mxu0 %v509
  %v988 = vpop.f32.mrf.mxu0
  %v989 = vadd.f32 0.0, %v988
  %v990 = vpop.f32.mrf.mxu0
  %v991 = vpop.f32.mrf.mxu0
  %v992 = vadd.f32 0.0, %v991
  %v993 = vpop.f32.mrf.mxu0
  %994 = vmatprep.mubr.bf16.mxu0 %v513
  %995 = vmatmul.mubr.bf16.gmra.mxu0 %v512
  %v996 = vpop.f32.mrf.mxu0
  %v997 = vadd.f32 0.0, %v996
  %v998 = vpop.f32.mrf.mxu0
  %v999 = vpop.f32.mrf.mxu0
  %v1000 = vadd.f32 0.0, %v999
  %v1001 = vpop.f32.mrf.mxu0
  %1002 = vmatprep.mubr.bf16.mxu0 %v516
  %1003 = vmatmul.mubr.bf16.gmra.mxu0 %v515
  %v1004 = vpop.f32.mrf.mxu0
  %v1005 = vadd.f32 0.0, %v1004
  %v1006 = vpop.f32.mrf.mxu0
  %v1007 = vpop.f32.mrf.mxu0
  %v1008 = vadd.f32 0.0, %v1007
  %v1009 = vpop.f32.mrf.mxu0
  %1010 = vmatprep.mubr.bf16.mxu0 %v519
  %1011 = vmatmul.mubr.bf16.gmra.mxu0 %v518
  %v1012 = vpop.f32.mrf.mxu0
  %v1013 = vadd.f32 0.0, %v1012
  %v1014 = vpop.f32.mrf.mxu0
  %v1015 = vpop.f32.mrf.mxu0
  %v1016 = vadd.f32 0.0, %v1015
  %v1017 = vpop.f32.mrf.mxu0
  %1018 = vmatprep.mubr.bf16.mxu0 %v522
  %1019 = vmatmul.mubr.bf16.gmra.mxu0 %v521
  %v1020 = vpop.f32.mrf.mxu0
  %v1021 = vadd.f32 0.0, %v1020
  %v1022 = vpop.f32.mrf.mxu0
  %v1023 = vpop.f32.mrf.mxu0
  %v1024 = vadd.f32 0.0, %v1023
  %v1025 = vpop.f32.mrf.mxu0
  %1026 = vmatprep.mubr.bf16.mxu0 %v525
  %1027 = vmatmul.mubr.bf16.gmra.mxu0 %v524
  %v1028 = vpop.f32.mrf.mxu0
  %v1029 = vadd.f32 0.0, %v1028
  %v1030 = vpop.f32.mrf.mxu0
  %v1031 = vpop.f32.mrf.mxu0
  %v1032 = vadd.f32 0.0, %v1031
  %v1033 = vpop.f32.mrf.mxu0
  %1034 = vmatprep.mubr.bf16.mxu0 %v528
  %1035 = vmatmul.mubr.bf16.gmra.mxu0 %v527
  %v1036 = vpop.f32.mrf.mxu0
  %v1037 = vadd.f32 0.0, %v1036
  %v1038 = vpop.f32.mrf.mxu0
  %v1039 = vpop.f32.mrf.mxu0
  %v1040 = vadd.f32 0.0, %v1039
  %v1041 = vpop.f32.mrf.mxu0
  %1042 = vmatprep.mubr.bf16.mxu0 %v531
  %1043 = vmatmul.mubr.bf16.gmra.mxu0 %v530
  %v1044 = vpop.f32.mrf.mxu0
  %v1045 = vadd.f32 0.0, %v1044
  %v1046 = vpop.f32.mrf.mxu0
  %v1047 = vpop.f32.mrf.mxu0
  %v1048 = vadd.f32 0.0, %v1047
  %v1049 = vpop.f32.mrf.mxu0
  %1050 = vmatprep.mubr.bf16.mxu0 %v534
  %1051 = vmatmul.mubr.bf16.gmra.mxu0 %v533
  %v1052 = vpop.f32.mrf.mxu0
  %v1053 = vadd.f32 0.0, %v1052
  %v1054 = vpop.f32.mrf.mxu0
  %v1055 = vpop.f32.mrf.mxu0
  %v1056 = vadd.f32 0.0, %v1055
  %v1057 = vpop.f32.mrf.mxu0
  %1058 = vmatprep.mubr.bf16.mxu0 %v537
  %1059 = vmatmul.mubr.bf16.gmra.mxu0 %v536
  %v1060 = vpop.f32.mrf.mxu0
  %v1061 = vadd.f32 0.0, %v1060
  %v1062 = vpop.f32.mrf.mxu0
  %v1063 = vpop.f32.mrf.mxu0
  %v1064 = vadd.f32 0.0, %v1063
  %v1065 = vpop.f32.mrf.mxu0
  %1066 = vmatprep.mubr.bf16.mxu0 %v540
  %1067 = vmatmul.mubr.bf16.gmra.mxu0 %v539
  %v1068 = vpop.f32.mrf.mxu0
  %v1069 = vadd.f32 0.0, %v1068
  %v1070 = vpop.f32.mrf.mxu0
  %v1071 = vpop.f32.mrf.mxu0
  %v1072 = vadd.f32 0.0, %v1071
  %v1073 = vpop.f32.mrf.mxu0
  %1074 = vdwg.mxu0
  %1075 = vmatprep.subr.bf16.mxu0 0
  %1076 = vmatpush1.bf16.msra.mxu0 %v761
  %1077 = vmatprep.subr.bf16.mxu0 0
  %1078 = vmatpush1.bf16.msra.mxu0 %v760
  %1079 = vmatprep.subr.bf16.mxu0 0
  %1080 = vmatpush1.bf16.msra.mxu0 %v759
  %1081 = vmatprep.subr.bf16.mxu0 0
  %1082 = vmatpush1.bf16.msra.mxu0 %v758
  %1083 = vmatprep.subr.bf16.mxu0 0
  %1084 = vmatpush1.bf16.msra.mxu0 %v757
  %1085 = vmatprep.subr.bf16.mxu0 0
  %1086 = vmatpush1.bf16.msra.mxu0 %v756
  %1087 = vmatprep.subr.bf16.mxu0 0
  %1088 = vmatpush1.bf16.msra.mxu0 %v755
  %1089 = vmatprep.subr.bf16.mxu0 0
  %1090 = vmatpush1.bf16.msra.mxu0 %v754
  %1091 = vmatprep.subr.bf16.mxu0 0
  %1092 = vmatpush2.bf16.msra.mxu0 0
  %1093 = vmatprep.subr.bf16.mxu0 0
  %1094 = vmatpush2.bf16.msra.mxu0 0
  %1095 = vmatprep.subr.bf16.mxu0 0
  %1096 = vmatpush2.bf16.msra.mxu0 0
  %1097 = vmatprep.subr.bf16.mxu0 0
  %1098 = vmatpush2.bf16.msra.mxu0 0
  %1099 = vmatprep.subr.bf16.mxu0 0
  %1100 = vmatpush2.bf16.msra.mxu0 0
  %1101 = vmatprep.subr.bf16.mxu0 0
  %1102 = vmatpush2.bf16.msra.mxu0 0
  %1103 = vmatprep.subr.bf16.mxu0 0
  %1104 = vmatpush2.bf16.msra.mxu0 0
  %1105 = vmatprep.subr.bf16.mxu0 0
  %1106 = vmatpush2.bf16.msra.mxu0 0
  %1107 = vmatprep.mubr.bf16.mxu0 0
  %1108 = vmatmul.mubr.bf16.gmra.mxu0 %v442
  %v1109 = vpop.f32.mrf.mxu0
  %v1110 = vadd.f32 %v821, %v1109
  %v1111 = vpop.f32.mrf.mxu0
  %v1112 = vpop.f32.mrf.mxu0
  %v1113 = vadd.f32 %v824, %v1112
  %v1114 = vpop.f32.mrf.mxu0
  %1115 = vmatprep.mubr.bf16.mxu0 0
  %1116 = vmatmul.mubr.bf16.gmra.mxu0 %v445
  %v1117 = vpop.f32.mrf.mxu0
  %v1118 = vadd.f32 %v829, %v1117
  %v1119 = vpop.f32.mrf.mxu0
  %v1120 = vpop.f32.mrf.mxu0
  %v1121 = vadd.f32 %v832, %v1120
  %v1122 = vpop.f32.mrf.mxu0
  %1123 = vmatprep.mubr.bf16.mxu0 0
  %1124 = vmatmul.mubr.bf16.gmra.mxu0 %v448
  %v1125 = vpop.f32.mrf.mxu0
  %v1126 = vadd.f32 %v837, %v1125
  %v1127 = vpop.f32.mrf.mxu0
  %v1128 = vpop.f32.mrf.mxu0
  %v1129 = vadd.f32 %v840, %v1128
  %v1130 = vpop.f32.mrf.mxu0
  %1131 = vmatprep.mubr.bf16.mxu0 0
  %1132 = vmatmul.mubr.bf16.gmra.mxu0 %v451
  %v1133 = vpop.f32.mrf.mxu0
  %v1134 = vadd.f32 %v845, %v1133
  %v1135 = vpop.f32.mrf.mxu0
  %v1136 = vpop.f32.mrf.mxu0
  %v1137 = vadd.f32 %v848, %v1136
  %v1138 = vpop.f32.mrf.mxu0
  %1139 = vmatprep.mubr.bf16.mxu0 0
  %1140 = vmatmul.mubr.bf16.gmra.mxu0 %v454
  %v1141 = vpop.f32.mrf.mxu0
  %v1142 = vadd.f32 %v853, %v1141
  %v1143 = vpop.f32.mrf.mxu0
  %v1144 = vpop.f32.mrf.mxu0
  %v1145 = vadd.f32 %v856, %v1144
  %v1146 = vpop.f32.mrf.mxu0
  %1147 = vmatprep.mubr.bf16.mxu0 0
  %1148 = vmatmul.mubr.bf16.gmra.mxu0 %v457
  %v1149 = vpop.f32.mrf.mxu0
  %v1150 = vadd.f32 %v861, %v1149
  %v1151 = vpop.f32.mrf.mxu0
  %v1152 = vpop.f32.mrf.mxu0
  %v1153 = vadd.f32 %v864, %v1152
  %v1154 = vpop.f32.mrf.mxu0
  %1155 = vmatprep.mubr.bf16.mxu0 0
  %1156 = vmatmul.mubr.bf16.gmra.mxu0 %v460
  %v1157 = vpop.f32.mrf.mxu0
  %v1158 = vadd.f32 %v869, %v1157
  %v1159 = vpop.f32.mrf.mxu0
  %v1160 = vpop.f32.mrf.mxu0
  %v1161 = vadd.f32 %v872, %v1160
  %v1162 = vpop.f32.mrf.mxu0
  %1163 = vmatprep.mubr.bf16.mxu0 0
  %1164 = vmatmul.mubr.bf16.gmra.mxu0 %v463
  %v1165 = vpop.f32.mrf.mxu0
  %v1166 = vadd.f32 %v877, %v1165
  %v1167 = vpop.f32.mrf.mxu0
  %v1168 = vpop.f32.mrf.mxu0
  %v1169 = vadd.f32 %v880, %v1168
  %v1170 = vpop.f32.mrf.mxu0
  %1171 = vmatprep.mubr.bf16.mxu0 0
  %1172 = vmatmul.mubr.bf16.gmra.mxu0 %v466
  %v1173 = vpop.f32.mrf.mxu0
  %v1174 = vadd.f32 %v885, %v1173
  %v1175 = vpop.f32.mrf.mxu0
  %v1176 = vpop.f32.mrf.mxu0
  %v1177 = vadd.f32 %v888, %v1176
  %v1178 = vpop.f32.mrf.mxu0
  %1179 = vmatprep.mubr.bf16.mxu0 0
  %1180 = vmatmul.mubr.bf16.gmra.mxu0 %v469
  %v1181 = vpop.f32.mrf.mxu0
  %v1182 = vadd.f32 %v893, %v1181
  %v1183 = vpop.f32.mrf.mxu0
  %v1184 = vpop.f32.mrf.mxu0
  %v1185 = vadd.f32 %v896, %v1184
  %v1186 = vpop.f32.mrf.mxu0
  %1187 = vmatprep.mubr.bf16.mxu0 0
  %1188 = vmatmul.mubr.bf16.gmra.mxu0 %v472
  %v1189 = vpop.f32.mrf.mxu0
  %v1190 = vadd.f32 %v901, %v1189
  %v1191 = vpop.f32.mrf.mxu0
  %v1192 = vpop.f32.mrf.mxu0
  %v1193 = vadd.f32 %v904, %v1192
  %v1194 = vpop.f32.mrf.mxu0
  %1195 = vmatprep.mubr.bf16.mxu0 0
  %1196 = vmatmul.mubr.bf16.gmra.mxu0 %v475
  %v1197 = vpop.f32.mrf.mxu0
  %v1198 = vadd.f32 %v909, %v1197
  %v1199 = vpop.f32.mrf.mxu0
  %v1200 = vpop.f32.mrf.mxu0
  %v1201 = vadd.f32 %v912, %v1200
  %v1202 = vpop.f32.mrf.mxu0
  %1203 = vmatprep.mubr.bf16.mxu0 0
  %1204 = vmatmul.mubr.bf16.gmra.mxu0 %v478
  %v1205 = vpop.f32.mrf.mxu0
  %v1206 = vadd.f32 %v917, %v1205
  %v1207 = vpop.f32.mrf.mxu0
  %v1208 = vpop.f32.mrf.mxu0
  %v1209 = vadd.f32 %v920, %v1208
  %v1210 = vpop.f32.mrf.mxu0
  %1211 = vmatprep.mubr.bf16.mxu0 0
  %1212 = vmatmul.mubr.bf16.gmra.mxu0 %v481
  %v1213 = vpop.f32.mrf.mxu0
  %v1214 = vadd.f32 %v925, %v1213
  %v1215 = vpop.f32.mrf.mxu0
  %v1216 = vpop.f32.mrf.mxu0
  %v1217 = vadd.f32 %v928, %v1216
  %v1218 = vpop.f32.mrf.mxu0
  %1219 = vmatprep.mubr.bf16.mxu0 0
  %1220 = vmatmul.mubr.bf16.gmra.mxu0 %v484
  %v1221 = vpop.f32.mrf.mxu0
  %v1222 = vadd.f32 %v933, %v1221
  %v1223 = vpop.f32.mrf.mxu0
  %v1224 = vpop.f32.mrf.mxu0
  %v1225 = vadd.f32 %v936, %v1224
  %v1226 = vpop.f32.mrf.mxu0
  %1227 = vmatprep.mubr.bf16.mxu0 0
  %1228 = vmatmul.mubr.bf16.gmra.mxu0 %v487
  %v1229 = vpop.f32.mrf.mxu0
  %v1230 = vadd.f32 %v941, %v1229
  %v1231 = vpop.f32.mrf.mxu0
  %v1232 = vpop.f32.mrf.mxu0
  %v1233 = vadd.f32 %v944, %v1232
  %v1234 = vpop.f32.mrf.mxu0
  %1235 = vmatprep.mubr.bf16.mxu0 0
  %1236 = vmatmul.mubr.bf16.gmra.mxu0 %v496
  %v1237 = vpop.f32.mrf.mxu0
  %v1238 = vadd.f32 %v949, %v1237
  %v1239 = vpop.f32.mrf.mxu0
  %v1240 = vpop.f32.mrf.mxu0
  %v1241 = vadd.f32 %v952, %v1240
  %v1242 = vpop.f32.mrf.mxu0
  %1243 = vmatprep.mubr.bf16.mxu0 0
  %1244 = vmatmul.mubr.bf16.gmra.mxu0 %v499
  %v1245 = vpop.f32.mrf.mxu0
  %v1246 = vadd.f32 %v957, %v1245
  %v1247 = vpop.f32.mrf.mxu0
  %v1248 = vpop.f32.mrf.mxu0
  %v1249 = vadd.f32 %v960, %v1248
  %v1250 = vpop.f32.mrf.mxu0
  %1251 = vmatprep.mubr.bf16.mxu0 0
  %1252 = vmatmul.mubr.bf16.gmra.mxu0 %v502
  %v1253 = vpop.f32.mrf.mxu0
  %v1254 = vadd.f32 %v965, %v1253
  %v1255 = vpop.f32.mrf.mxu0
  %v1256 = vpop.f32.mrf.mxu0
  %v1257 = vadd.f32 %v968, %v1256
  %v1258 = vpop.f32.mrf.mxu0
  %1259 = vmatprep.mubr.bf16.mxu0 0
  %1260 = vmatmul.mubr.bf16.gmra.mxu0 %v505
  %v1261 = vpop.f32.mrf.mxu0
  %v1262 = vadd.f32 %v973, %v1261
  %v1263 = vpop.f32.mrf.mxu0
  %v1264 = vpop.f32.mrf.mxu0
  %v1265 = vadd.f32 %v976, %v1264
  %v1266 = vpop.f32.mrf.mxu0
  %1267 = vmatprep.mubr.bf16.mxu0 0
  %1268 = vmatmul.mubr.bf16.gmra.mxu0 %v508
  %v1269 = vpop.f32.mrf.mxu0
  %v1270 = vadd.f32 %v981, %v1269
  %v1271 = vpop.f32.mrf.mxu0
  %v1272 = vpop.f32.mrf.mxu0
  %v1273 = vadd.f32 %v984, %v1272
  %v1274 = vpop.f32.mrf.mxu0
  %1275 = vmatprep.mubr.bf16.mxu0 0
  %1276 = vmatmul.mubr.bf16.gmra.mxu0 %v511
  %v1277 = vpop.f32.mrf.mxu0
  %v1278 = vadd.f32 %v989, %v1277
  %v1279 = vpop.f32.mrf.mxu0
  %v1280 = vpop.f32.mrf.mxu0
  %v1281 = vadd.f32 %v992, %v1280
  %v1282 = vpop.f32.mrf.mxu0
  %1283 = vmatprep.mubr.bf16.mxu0 0
  %1284 = vmatmul.mubr.bf16.gmra.mxu0 %v514
  %v1285 = vpop.f32.mrf.mxu0
  %v1286 = vadd.f32 %v997, %v1285
  %v1287 = vpop.f32.mrf.mxu0
  %v1288 = vpop.f32.mrf.mxu0
  %v1289 = vadd.f32 %v1000, %v1288
  %v1290 = vpop.f32.mrf.mxu0
  %1291 = vmatprep.mubr.bf16.mxu0 0
  %1292 = vmatmul.mubr.bf16.gmra.mxu0 %v517
  %v1293 = vpop.f32.mrf.mxu0
  %v1294 = vadd.f32 %v1005, %v1293
  %v1295 = vpop.f32.mrf.mxu0
  %v1296 = vpop.f32.mrf.mxu0
  %v1297 = vadd.f32 %v1008, %v1296
  %v1298 = vpop.f32.mrf.mxu0
  %1299 = vmatprep.mubr.bf16.mxu0 0
  %1300 = vmatmul.mubr.bf16.gmra.mxu0 %v520
  %v1301 = vpop.f32.mrf.mxu0
  %v1302 = vadd.f32 %v1013, %v1301
  %v1303 = vpop.f32.mrf.mxu0
  %v1304 = vpop.f32.mrf.mxu0
  %v1305 = vadd.f32 %v1016, %v1304
  %v1306 = vpop.f32.mrf.mxu0
  %1307 = vmatprep.mubr.bf16.mxu0 0
  %1308 = vmatmul.mubr.bf16.gmra.mxu0 %v523
  %v1309 = vpop.f32.mrf.mxu0
  %v1310 = vadd.f32 %v1021, %v1309
  %v1311 = vpop.f32.mrf.mxu0
  %v1312 = vpop.f32.mrf.mxu0
  %v1313 = vadd.f32 %v1024, %v1312
  %v1314 = vpop.f32.mrf.mxu0
  %1315 = vmatprep.mubr.bf16.mxu0 0
  %1316 = vmatmul.mubr.bf16.gmra.mxu0 %v526
  %v1317 = vpop.f32.mrf.mxu0
  %v1318 = vadd.f32 %v1029, %v1317
  %v1319 = vpop.f32.mrf.mxu0
  %v1320 = vpop.f32.mrf.mxu0
  %v1321 = vadd.f32 %v1032, %v1320
  %v1322 = vpop.f32.mrf.mxu0
  %1323 = vmatprep.mubr.bf16.mxu0 0
  %1324 = vmatmul.mubr.bf16.gmra.mxu0 %v529
  %v1325 = vpop.f32.mrf.mxu0
  %v1326 = vadd.f32 %v1037, %v1325
  %v1327 = vpop.f32.mrf.mxu0
  %v1328 = vpop.f32.mrf.mxu0
  %v1329 = vadd.f32 %v1040, %v1328
  %v1330 = vpop.f32.mrf.mxu0
  %1331 = vmatprep.mubr.bf16.mxu0 0
  %1332 = vmatmul.mubr.bf16.gmra.mxu0 %v532
  %v1333 = vpop.f32.mrf.mxu0
  %v1334 = vadd.f32 %v1045, %v1333
  %v1335 = vpop.f32.mrf.mxu0
  %v1336 = vpop.f32.mrf.mxu0
  %v1337 = vadd.f32 %v1048, %v1336
  %v1338 = vpop.f32.mrf.mxu0
  %1339 = vmatprep.mubr.bf16.mxu0 0
  %1340 = vmatmul.mubr.bf16.gmra.mxu0 %v535
  %v1341 = vpop.f32.mrf.mxu0
  %v1342 = vadd.f32 %v1053, %v1341
  %v1343 = vpop.f32.mrf.mxu0
  %v1344 = vpop.f32.mrf.mxu0
  %v1345 = vadd.f32 %v1056, %v1344
  %v1346 = vpop.f32.mrf.mxu0
  %1347 = vmatprep.mubr.bf16.mxu0 0
  %1348 = vmatmul.mubr.bf16.gmra.mxu0 %v538
  %v1349 = vpop.f32.mrf.mxu0
  %v1350 = vadd.f32 %v1061, %v1349
  %v1351 = vpop.f32.mrf.mxu0
  %v1352 = vpop.f32.mrf.mxu0
  %v1353 = vadd.f32 %v1064, %v1352
  %v1354 = vpop.f32.mrf.mxu0
  %1355 = vmatprep.mubr.bf16.mxu0 0
  %1356 = vmatmul.mubr.bf16.gmra.mxu0 %v541
  %v1357 = vpop.f32.mrf.mxu0
  %v1358 = vadd.f32 %v1069, %v1357
  %v1359 = vpop.f32.mrf.mxu0
  %v1360 = vpop.f32.mrf.mxu0
  %v1361 = vadd.f32 %v1072, %v1360
  %v1362 = vpop.f32.mrf.mxu0
  %1363 = vdwg.mxu0
  %v1412 = vunpack.c.l.b16 %v545
  %v1413 = vunpack.c.l.b16 %v546
  %v1414 = vunpack.c.l.b16 %v547
  %v1415 = vunpack.c.l.b16 %v548
  %v1416 = vunpack.c.l.b16 %v549
  %v1417 = vunpack.c.l.b16 %v550
  %v1418 = vunpack.c.l.b16 %v551
  %v1419 = vunpack.c.l.b16 %v552
  %v1420 = vunpack.c.l.b16 %v553
  %v1421 = vunpack.c.l.b16 %v554
  %v1422 = vunpack.c.l.b16 %v555
  %v1423 = vunpack.c.l.b16 %v556
  %v1424 = vunpack.c.l.b16 %v557
  %v1425 = vunpack.c.l.b16 %v558
  %v1426 = vunpack.c.l.b16 %v559
  %v1427 = vunpack.c.l.b16 %v560
  %v1428 = vunpack.c.l.b16 %v561
  %v1429 = vunpack.c.l.b16 %v562
  %v1430 = vunpack.c.l.b16 %v563
  %v1431 = vunpack.c.l.b16 %v564
  %v1432 = vunpack.c.l.b16 %v565
  %v1433 = vunpack.c.l.b16 %v566
  %v1434 = vunpack.c.l.b16 %v567
  %v1435 = vunpack.c.l.b16 %v568
  %v1436 = vunpack.c.l.b16 %v569
  %v1437 = vunpack.c.l.b16 %v570
  %v1438 = vunpack.c.l.b16 %v571
  %v1439 = vunpack.c.l.b16 %v572
  %v1440 = vunpack.c.l.b16 %v573
  %v1441 = vunpack.c.l.b16 %v574
  %v1442 = vunpack.c.l.b16 %v575
  %v1443 = vunpack.c.l.b16 %v576
  %v1444 = vunpack.c.l.b16 %v577
  %v1445 = vunpack.c.l.b16 %v578
  %v1446 = vunpack.c.l.b16 %v579
  %v1447 = vunpack.c.l.b16 %v580
  %v1448 = vunpack.c.l.b16 %v581
  %v1449 = vunpack.c.l.b16 %v582
  %v1450 = vunpack.c.l.b16 %v583
  %v1451 = vunpack.c.l.b16 %v584
  %v1452 = vunpack.c.l.b16 %v585
  %v1453 = vunpack.c.l.b16 %v586
  %v1454 = vunpack.c.l.b16 %v587
  %v1455 = vunpack.c.l.b16 %v588
  %v1456 = vunpack.c.l.b16 %v589
  %v1457 = vunpack.c.l.b16 %v590
  %v1458 = vunpack.c.l.b16 %v591
  %v1459 = vunpack.c.l.b16 %v592
  %v1460 = vpack.c.b16 %v1413, %v1412
  %v1461 = vpack.c.b16 %v1415, %v1414
  %v1462 = vpack.c.b16 %v1417, %v1416
  %v1463 = vpack.c.b16 %v1419, %v1418
  %v1464 = vpack.c.b16 %v1421, %v1420
  %v1465 = vpack.c.b16 %v1423, %v1422
  %v1466 = vpack.c.b16 %v1425, %v1424
  %v1467 = vpack.c.b16 %v1427, %v1426
  %v1468 = vpack.c.b16 %v1429, %v1428
  %v1469 = vpack.c.b16 %v1431, %v1430
  %v1470 = vpack.c.b16 %v1433, %v1432
  %v1471 = vpack.c.b16 %v1435, %v1434
  %v1472 = vpack.c.b16 %v1437, %v1436
  %v1473 = vpack.c.b16 %v1439, %v1438
  %v1474 = vpack.c.b16 %v1441, %v1440
  %v1475 = vpack.c.b16 %v1443, %v1442
  %v1476 = vpack.c.b16 %v1445, %v1444
  %v1477 = vpack.c.b16 %v1447, %v1446
  %v1478 = vpack.c.b16 %v1449, %v1448
  %v1479 = vpack.c.b16 %v1451, %v1450
  %v1480 = vpack.c.b16 %v1453, %v1452
  %v1481 = vpack.c.b16 %v1455, %v1454
  %v1482 = vpack.c.b16 %v1457, %v1456
  %v1483 = vpack.c.b16 %v1459, %v1458
  %1508 = vmatprep.subr.bf16.mxu0 0
  %1509 = vmatpush1.bf16.msra.mxu0 %v1467
  %1510 = vmatprep.subr.bf16.mxu0 0
  %1511 = vmatpush1.bf16.msra.mxu0 %v1466
  %1512 = vmatprep.subr.bf16.mxu0 0
  %1513 = vmatpush1.bf16.msra.mxu0 %v1465
  %1514 = vmatprep.subr.bf16.mxu0 0
  %1515 = vmatpush1.bf16.msra.mxu0 %v1464
  %1516 = vmatprep.subr.bf16.mxu0 0
  %1517 = vmatpush1.bf16.msra.mxu0 %v1463
  %1518 = vmatprep.subr.bf16.mxu0 0
  %1519 = vmatpush1.bf16.msra.mxu0 %v1462
  %1520 = vmatprep.subr.bf16.mxu0 0
  %1521 = vmatpush1.bf16.msra.mxu0 %v1461
  %1522 = vmatprep.subr.bf16.mxu0 0
  %1523 = vmatpush1.bf16.msra.mxu0 %v1460
  %1524 = vmatprep.subr.bf16.mxu0 0
  %1525 = vmatpush2.bf16.msra.mxu0 %v1475
  %1526 = vmatprep.subr.bf16.mxu0 0
  %1527 = vmatpush2.bf16.msra.mxu0 %v1474
  %1528 = vmatprep.subr.bf16.mxu0 0
  %1529 = vmatpush2.bf16.msra.mxu0 %v1473
  %1530 = vmatprep.subr.bf16.mxu0 0
  %1531 = vmatpush2.bf16.msra.mxu0 %v1472
  %1532 = vmatprep.subr.bf16.mxu0 0
  %1533 = vmatpush2.bf16.msra.mxu0 %v1471
  %1534 = vmatprep.subr.bf16.mxu0 0
  %1535 = vmatpush2.bf16.msra.mxu0 %v1470
  %1536 = vmatprep.subr.bf16.mxu0 0
  %1537 = vmatpush2.bf16.msra.mxu0 %v1469
  %1538 = vmatprep.subr.bf16.mxu0 0
  %1539 = vmatpush2.bf16.msra.mxu0 %v1468
  %1540 = vmatprep.mubr.bf16.mxu0 %v438
  %1541 = vmatmul.mubr.bf16.gmra.mxu0 %v437
  %v1542 = vpop.f32.mrf.mxu0
  %v1543 = vadd.f32 %v1110, %v1542
  %v1544 = vpop.f32.mrf.mxu0
  %v1545 = vpop.f32.mrf.mxu0
  %v1546 = vadd.f32 %v1113, %v1545
  %v1547 = vpop.f32.mrf.mxu0
  %1548 = vmatprep.mubr.bf16.mxu0 %v441
  %1549 = vmatmul.mubr.bf16.gmra.mxu0 %v440
  %v1550 = vpop.f32.mrf.mxu0
  %v1551 = vadd.f32 %v1118, %v1550
  %v1552 = vpop.f32.mrf.mxu0
  %v1553 = vpop.f32.mrf.mxu0
  %v1554 = vadd.f32 %v1121, %v1553
  %v1555 = vpop.f32.mrf.mxu0
  %1556 = vmatprep.mubr.bf16.mxu0 %v444
  %1557 = vmatmul.mubr.bf16.gmra.mxu0 %v443
  %v1558 = vpop.f32.mrf.mxu0
  %v1559 = vadd.f32 %v1126, %v1558
  %v1560 = vpop.f32.mrf.mxu0
  %v1561 = vpop.f32.mrf.mxu0
  %v1562 = vadd.f32 %v1129, %v1561
  %v1563 = vpop.f32.mrf.mxu0
  %1564 = vmatprep.mubr.bf16.mxu0 %v447
  %1565 = vmatmul.mubr.bf16.gmra.mxu0 %v446
  %v1566 = vpop.f32.mrf.mxu0
  %v1567 = vadd.f32 %v1134, %v1566
  %v1568 = vpop.f32.mrf.mxu0
  %v1569 = vpop.f32.mrf.mxu0
  %v1570 = vadd.f32 %v1137, %v1569
  %v1571 = vpop.f32.mrf.mxu0
  %1572 = vmatprep.mubr.bf16.mxu0 %v450
  %1573 = vmatmul.mubr.bf16.gmra.mxu0 %v449
  %v1574 = vpop.f32.mrf.mxu0
  %v1575 = vadd.f32 %v1142, %v1574
  %v1576 = vpop.f32.mrf.mxu0
  %v1577 = vpop.f32.mrf.mxu0
  %v1578 = vadd.f32 %v1145, %v1577
  %v1579 = vpop.f32.mrf.mxu0
  %1580 = vmatprep.mubr.bf16.mxu0 %v453
  %1581 = vmatmul.mubr.bf16.gmra.mxu0 %v452
  %v1582 = vpop.f32.mrf.mxu0
  %v1583 = vadd.f32 %v1150, %v1582
  %v1584 = vpop.f32.mrf.mxu0
  %v1585 = vpop.f32.mrf.mxu0
  %v1586 = vadd.f32 %v1153, %v1585
  %v1587 = vpop.f32.mrf.mxu0
  %1588 = vmatprep.mubr.bf16.mxu0 %v456
  %1589 = vmatmul.mubr.bf16.gmra.mxu0 %v455
  %v1590 = vpop.f32.mrf.mxu0
  %v1591 = vadd.f32 %v1158, %v1590
  %v1592 = vpop.f32.mrf.mxu0
  %v1593 = vpop.f32.mrf.mxu0
  %v1594 = vadd.f32 %v1161, %v1593
  %v1595 = vpop.f32.mrf.mxu0
  %1596 = vmatprep.mubr.bf16.mxu0 %v459
  %1597 = vmatmul.mubr.bf16.gmra.mxu0 %v458
  %v1598 = vpop.f32.mrf.mxu0
  %v1599 = vadd.f32 %v1166, %v1598
  %v1600 = vpop.f32.mrf.mxu0
  %v1601 = vpop.f32.mrf.mxu0
  %v1602 = vadd.f32 %v1169, %v1601
  %v1603 = vpop.f32.mrf.mxu0
  %1604 = vmatprep.mubr.bf16.mxu0 %v462
  %1605 = vmatmul.mubr.bf16.gmra.mxu0 %v461
  %v1606 = vpop.f32.mrf.mxu0
  %v1607 = vadd.f32 %v1174, %v1606
  %v1608 = vpop.f32.mrf.mxu0
  %v1609 = vpop.f32.mrf.mxu0
  %v1610 = vadd.f32 %v1177, %v1609
  %v1611 = vpop.f32.mrf.mxu0
  %1612 = vmatprep.mubr.bf16.mxu0 %v465
  %1613 = vmatmul.mubr.bf16.gmra.mxu0 %v464
  %v1614 = vpop.f32.mrf.mxu0
  %v1615 = vadd.f32 %v1182, %v1614
  %v1616 = vpop.f32.mrf.mxu0
  %v1617 = vpop.f32.mrf.mxu0
  %v1618 = vadd.f32 %v1185, %v1617
  %v1619 = vpop.f32.mrf.mxu0
  %1620 = vmatprep.mubr.bf16.mxu0 %v468
  %1621 = vmatmul.mubr.bf16.gmra.mxu0 %v467
  %v1622 = vpop.f32.mrf.mxu0
  %v1623 = vadd.f32 %v1190, %v1622
  %v1624 = vpop.f32.mrf.mxu0
  %v1625 = vpop.f32.mrf.mxu0
  %v1626 = vadd.f32 %v1193, %v1625
  %v1627 = vpop.f32.mrf.mxu0
  %1628 = vmatprep.mubr.bf16.mxu0 %v471
  %1629 = vmatmul.mubr.bf16.gmra.mxu0 %v470
  %v1630 = vpop.f32.mrf.mxu0
  %v1631 = vadd.f32 %v1198, %v1630
  %v1632 = vpop.f32.mrf.mxu0
  %v1633 = vpop.f32.mrf.mxu0
  %v1634 = vadd.f32 %v1201, %v1633
  %v1635 = vpop.f32.mrf.mxu0
  %1636 = vmatprep.mubr.bf16.mxu0 %v474
  %1637 = vmatmul.mubr.bf16.gmra.mxu0 %v473
  %v1638 = vpop.f32.mrf.mxu0
  %v1639 = vadd.f32 %v1206, %v1638
  %v1640 = vpop.f32.mrf.mxu0
  %v1641 = vpop.f32.mrf.mxu0
  %v1642 = vadd.f32 %v1209, %v1641
  %v1643 = vpop.f32.mrf.mxu0
  %1644 = vmatprep.mubr.bf16.mxu0 %v477
  %1645 = vmatmul.mubr.bf16.gmra.mxu0 %v476
  %v1646 = vpop.f32.mrf.mxu0
  %v1647 = vadd.f32 %v1214, %v1646
  %v1648 = vpop.f32.mrf.mxu0
  %v1649 = vpop.f32.mrf.mxu0
  %v1650 = vadd.f32 %v1217, %v1649
  %v1651 = vpop.f32.mrf.mxu0
  %1652 = vmatprep.mubr.bf16.mxu0 %v480
  %1653 = vmatmul.mubr.bf16.gmra.mxu0 %v479
  %v1654 = vpop.f32.mrf.mxu0
  %v1655 = vadd.f32 %v1222, %v1654
  %v1656 = vpop.f32.mrf.mxu0
  %v1657 = vpop.f32.mrf.mxu0
  %v1658 = vadd.f32 %v1225, %v1657
  %v1659 = vpop.f32.mrf.mxu0
  %1660 = vmatprep.mubr.bf16.mxu0 %v483
  %1661 = vmatmul.mubr.bf16.gmra.mxu0 %v482
  %v1662 = vpop.f32.mrf.mxu0
  %v1663 = vadd.f32 %v1230, %v1662
  %v1664 = vpop.f32.mrf.mxu0
  %v1665 = vpop.f32.mrf.mxu0
  %v1666 = vadd.f32 %v1233, %v1665
  %v1667 = vpop.f32.mrf.mxu0
  %1668 = vmatprep.mubr.bf16.mxu0 %v492
  %1669 = vmatmul.mubr.bf16.gmra.mxu0 %v491
  %v1670 = vpop.f32.mrf.mxu0
  %v1671 = vadd.f32 %v1238, %v1670
  %v1672 = vpop.f32.mrf.mxu0
  %v1673 = vpop.f32.mrf.mxu0
  %v1674 = vadd.f32 %v1241, %v1673
  %v1675 = vpop.f32.mrf.mxu0
  %1676 = vmatprep.mubr.bf16.mxu0 %v495
  %1677 = vmatmul.mubr.bf16.gmra.mxu0 %v494
  %v1678 = vpop.f32.mrf.mxu0
  %v1679 = vadd.f32 %v1246, %v1678
  %v1680 = vpop.f32.mrf.mxu0
  %v1681 = vpop.f32.mrf.mxu0
  %v1682 = vadd.f32 %v1249, %v1681
  %v1683 = vpop.f32.mrf.mxu0
  %1684 = vmatprep.mubr.bf16.mxu0 %v498
  %1685 = vmatmul.mubr.bf16.gmra.mxu0 %v497
  %v1686 = vpop.f32.mrf.mxu0
  %v1687 = vadd.f32 %v1254, %v1686
  %v1688 = vpop.f32.mrf.mxu0
  %v1689 = vpop.f32.mrf.mxu0
  %v1690 = vadd.f32 %v1257, %v1689
  %v1691 = vpop.f32.mrf.mxu0
  %1692 = vmatprep.mubr.bf16.mxu0 %v501
  %1693 = vmatmul.mubr.bf16.gmra.mxu0 %v500
  %v1694 = vpop.f32.mrf.mxu0
  %v1695 = vadd.f32 %v1262, %v1694
  %v1696 = vpop.f32.mrf.mxu0
  %v1697 = vpop.f32.mrf.mxu0
  %v1698 = vadd.f32 %v1265, %v1697
  %v1699 = vpop.f32.mrf.mxu0
  %1700 = vmatprep.mubr.bf16.mxu0 %v504
  %1701 = vmatmul.mubr.bf16.gmra.mxu0 %v503
  %v1702 = vpop.f32.mrf.mxu0
  %v1703 = vadd.f32 %v1270, %v1702
  %v1704 = vpop.f32.mrf.mxu0
  %v1705 = vpop.f32.mrf.mxu0
  %v1706 = vadd.f32 %v1273, %v1705
  %v1707 = vpop.f32.mrf.mxu0
  %1708 = vmatprep.mubr.bf16.mxu0 %v507
  %1709 = vmatmul.mubr.bf16.gmra.mxu0 %v506
  %v1710 = vpop.f32.mrf.mxu0
  %v1711 = vadd.f32 %v1278, %v1710
  %v1712 = vpop.f32.mrf.mxu0
  %v1713 = vpop.f32.mrf.mxu0
  %v1714 = vadd.f32 %v1281, %v1713
  %v1715 = vpop.f32.mrf.mxu0
  %1716 = vmatprep.mubr.bf16.mxu0 %v510
  %1717 = vmatmul.mubr.bf16.gmra.mxu0 %v509
  %v1718 = vpop.f32.mrf.mxu0
  %v1719 = vadd.f32 %v1286, %v1718
  %v1720 = vpop.f32.mrf.mxu0
  %v1721 = vpop.f32.mrf.mxu0
  %v1722 = vadd.f32 %v1289, %v1721
  %v1723 = vpop.f32.mrf.mxu0
  %1724 = vmatprep.mubr.bf16.mxu0 %v513
  %1725 = vmatmul.mubr.bf16.gmra.mxu0 %v512
  %v1726 = vpop.f32.mrf.mxu0
  %v1727 = vadd.f32 %v1294, %v1726
  %v1728 = vpop.f32.mrf.mxu0
  %v1729 = vpop.f32.mrf.mxu0
  %v1730 = vadd.f32 %v1297, %v1729
  %v1731 = vpop.f32.mrf.mxu0
  %1732 = vmatprep.mubr.bf16.mxu0 %v516
  %1733 = vmatmul.mubr.bf16.gmra.mxu0 %v515
  %v1734 = vpop.f32.mrf.mxu0
  %v1735 = vadd.f32 %v1302, %v1734
  %v1736 = vpop.f32.mrf.mxu0
  %v1737 = vpop.f32.mrf.mxu0
  %v1738 = vadd.f32 %v1305, %v1737
  %v1739 = vpop.f32.mrf.mxu0
  %1740 = vmatprep.mubr.bf16.mxu0 %v519
  %1741 = vmatmul.mubr.bf16.gmra.mxu0 %v518
  %v1742 = vpop.f32.mrf.mxu0
  %v1743 = vadd.f32 %v1310, %v1742
  %v1744 = vpop.f32.mrf.mxu0
  %v1745 = vpop.f32.mrf.mxu0
  %v1746 = vadd.f32 %v1313, %v1745
  %v1747 = vpop.f32.mrf.mxu0
  %1748 = vmatprep.mubr.bf16.mxu0 %v522
  %1749 = vmatmul.mubr.bf16.gmra.mxu0 %v521
  %v1750 = vpop.f32.mrf.mxu0
  %v1751 = vadd.f32 %v1318, %v1750
  %v1752 = vpop.f32.mrf.mxu0
  %v1753 = vpop.f32.mrf.mxu0
  %v1754 = vadd.f32 %v1321, %v1753
  %v1755 = vpop.f32.mrf.mxu0
  %1756 = vmatprep.mubr.bf16.mxu0 %v525
  %1757 = vmatmul.mubr.bf16.gmra.mxu0 %v524
  %v1758 = vpop.f32.mrf.mxu0
  %v1759 = vadd.f32 %v1326, %v1758
  %v1760 = vpop.f32.mrf.mxu0
  %v1761 = vpop.f32.mrf.mxu0
  %v1762 = vadd.f32 %v1329, %v1761
  %v1763 = vpop.f32.mrf.mxu0
  %1764 = vmatprep.mubr.bf16.mxu0 %v528
  %1765 = vmatmul.mubr.bf16.gmra.mxu0 %v527
  %v1766 = vpop.f32.mrf.mxu0
  %v1767 = vadd.f32 %v1334, %v1766
  %v1768 = vpop.f32.mrf.mxu0
  %v1769 = vpop.f32.mrf.mxu0
  %v1770 = vadd.f32 %v1337, %v1769
  %v1771 = vpop.f32.mrf.mxu0
  %1772 = vmatprep.mubr.bf16.mxu0 %v531
  %1773 = vmatmul.mubr.bf16.gmra.mxu0 %v530
  %v1774 = vpop.f32.mrf.mxu0
  %v1775 = vadd.f32 %v1342, %v1774
  %v1776 = vpop.f32.mrf.mxu0
  %v1777 = vpop.f32.mrf.mxu0
  %v1778 = vadd.f32 %v1345, %v1777
  %v1779 = vpop.f32.mrf.mxu0
  %1780 = vmatprep.mubr.bf16.mxu0 %v534
  %1781 = vmatmul.mubr.bf16.gmra.mxu0 %v533
  %v1782 = vpop.f32.mrf.mxu0
  %v1783 = vadd.f32 %v1350, %v1782
  %v1784 = vpop.f32.mrf.mxu0
  %v1785 = vpop.f32.mrf.mxu0
  %v1786 = vadd.f32 %v1353, %v1785
  %v1787 = vpop.f32.mrf.mxu0
  %1788 = vmatprep.mubr.bf16.mxu0 %v537
  %1789 = vmatmul.mubr.bf16.gmra.mxu0 %v536
  %v1790 = vpop.f32.mrf.mxu0
  %v1791 = vadd.f32 %v1358, %v1790
  %v1792 = vpop.f32.mrf.mxu0
  %v1793 = vpop.f32.mrf.mxu0
  %v1794 = vadd.f32 %v1361, %v1793
  %v1795 = vpop.f32.mrf.mxu0
  %1796 = vdwg.mxu0
  %1797 = vmatprep.subr.bf16.mxu0 0
  %1798 = vmatpush1.bf16.msra.mxu0 %v1483
  %1799 = vmatprep.subr.bf16.mxu0 0
  %1800 = vmatpush1.bf16.msra.mxu0 %v1482
  %1801 = vmatprep.subr.bf16.mxu0 0
  %1802 = vmatpush1.bf16.msra.mxu0 %v1481
  %1803 = vmatprep.subr.bf16.mxu0 0
  %1804 = vmatpush1.bf16.msra.mxu0 %v1480
  %1805 = vmatprep.subr.bf16.mxu0 0
  %1806 = vmatpush1.bf16.msra.mxu0 %v1479
  %1807 = vmatprep.subr.bf16.mxu0 0
  %1808 = vmatpush1.bf16.msra.mxu0 %v1478
  %1809 = vmatprep.subr.bf16.mxu0 0
  %1810 = vmatpush1.bf16.msra.mxu0 %v1477
  %1811 = vmatprep.subr.bf16.mxu0 0
  %1812 = vmatpush1.bf16.msra.mxu0 %v1476
  %1813 = vmatprep.subr.bf16.mxu0 0
  %1814 = vmatpush2.bf16.msra.mxu0 0
  %1815 = vmatprep.subr.bf16.mxu0 0
  %1816 = vmatpush2.bf16.msra.mxu0 0
  %1817 = vmatprep.subr.bf16.mxu0 0
  %1818 = vmatpush2.bf16.msra.mxu0 0
  %1819 = vmatprep.subr.bf16.mxu0 0
  %1820 = vmatpush2.bf16.msra.mxu0 0
  %1821 = vmatprep.subr.bf16.mxu0 0
  %1822 = vmatpush2.bf16.msra.mxu0 0
  %1823 = vmatprep.subr.bf16.mxu0 0
  %1824 = vmatpush2.bf16.msra.mxu0 0
  %1825 = vmatprep.subr.bf16.mxu0 0
  %1826 = vmatpush2.bf16.msra.mxu0 0
  %1827 = vmatprep.subr.bf16.mxu0 0
  %1828 = vmatpush2.bf16.msra.mxu0 0
  %1829 = vmatprep.mubr.bf16.mxu0 0
  %1830 = vmatmul.mubr.bf16.gmra.mxu0 %v439
  %v1831 = vpop.f32.mrf.mxu0
  %v1832 = vadd.f32 %v1543, %v1831
  %v1833 = vpop.f32.mrf.mxu0
  %v1834 = vpop.f32.mrf.mxu0
  %v1835 = vadd.f32 %v1546, %v1834
  %v1836 = vpop.f32.mrf.mxu0
  %1837 = vmatprep.mubr.bf16.mxu0 0
  %1838 = vmatmul.mubr.bf16.gmra.mxu0 %v442
  %v1839 = vpop.f32.mrf.mxu0
  %v1840 = vadd.f32 %v1551, %v1839
  %v1841 = vpop.f32.mrf.mxu0
  %v1842 = vpop.f32.mrf.mxu0
  %v1843 = vadd.f32 %v1554, %v1842
  %v1844 = vpop.f32.mrf.mxu0
  %1845 = vmatprep.mubr.bf16.mxu0 0
  %1846 = vmatmul.mubr.bf16.gmra.mxu0 %v445
  %v1847 = vpop.f32.mrf.mxu0
  %v1848 = vadd.f32 %v1559, %v1847
  %v1849 = vpop.f32.mrf.mxu0
  %v1850 = vpop.f32.mrf.mxu0
  %v1851 = vadd.f32 %v1562, %v1850
  %v1852 = vpop.f32.mrf.mxu0
  %1853 = vmatprep.mubr.bf16.mxu0 0
  %1854 = vmatmul.mubr.bf16.gmra.mxu0 %v448
  %v1855 = vpop.f32.mrf.mxu0
  %v1856 = vadd.f32 %v1567, %v1855
  %v1857 = vpop.f32.mrf.mxu0
  %v1858 = vpop.f32.mrf.mxu0
  %v1859 = vadd.f32 %v1570, %v1858
  %v1860 = vpop.f32.mrf.mxu0
  %1861 = vmatprep.mubr.bf16.mxu0 0
  %1862 = vmatmul.mubr.bf16.gmra.mxu0 %v451
  %v1863 = vpop.f32.mrf.mxu0
  %v1864 = vadd.f32 %v1575, %v1863
  %v1865 = vpop.f32.mrf.mxu0
  %v1866 = vpop.f32.mrf.mxu0
  %v1867 = vadd.f32 %v1578, %v1866
  %v1868 = vpop.f32.mrf.mxu0
  %1869 = vmatprep.mubr.bf16.mxu0 0
  %1870 = vmatmul.mubr.bf16.gmra.mxu0 %v454
  %v1871 = vpop.f32.mrf.mxu0
  %v1872 = vadd.f32 %v1583, %v1871
  %v1873 = vpop.f32.mrf.mxu0
  %v1874 = vpop.f32.mrf.mxu0
  %v1875 = vadd.f32 %v1586, %v1874
  %v1876 = vpop.f32.mrf.mxu0
  %1877 = vmatprep.mubr.bf16.mxu0 0
  %1878 = vmatmul.mubr.bf16.gmra.mxu0 %v457
  %v1879 = vpop.f32.mrf.mxu0
  %v1880 = vadd.f32 %v1591, %v1879
  %v1881 = vpop.f32.mrf.mxu0
  %v1882 = vpop.f32.mrf.mxu0
  %v1883 = vadd.f32 %v1594, %v1882
  %v1884 = vpop.f32.mrf.mxu0
  %1885 = vmatprep.mubr.bf16.mxu0 0
  %1886 = vmatmul.mubr.bf16.gmra.mxu0 %v460
  %v1887 = vpop.f32.mrf.mxu0
  %v1888 = vadd.f32 %v1599, %v1887
  %v1889 = vpop.f32.mrf.mxu0
  %v1890 = vpop.f32.mrf.mxu0
  %v1891 = vadd.f32 %v1602, %v1890
  %v1892 = vpop.f32.mrf.mxu0
  %1893 = vmatprep.mubr.bf16.mxu0 0
  %1894 = vmatmul.mubr.bf16.gmra.mxu0 %v463
  %v1895 = vpop.f32.mrf.mxu0
  %v1896 = vadd.f32 %v1607, %v1895
  %v1897 = vpop.f32.mrf.mxu0
  %v1898 = vpop.f32.mrf.mxu0
  %v1899 = vadd.f32 %v1610, %v1898
  %v1900 = vpop.f32.mrf.mxu0
  %1901 = vmatprep.mubr.bf16.mxu0 0
  %1902 = vmatmul.mubr.bf16.gmra.mxu0 %v466
  %v1903 = vpop.f32.mrf.mxu0
  %v1904 = vadd.f32 %v1615, %v1903
  %v1905 = vpop.f32.mrf.mxu0
  %v1906 = vpop.f32.mrf.mxu0
  %v1907 = vadd.f32 %v1618, %v1906
  %v1908 = vpop.f32.mrf.mxu0
  %1909 = vmatprep.mubr.bf16.mxu0 0
  %1910 = vmatmul.mubr.bf16.gmra.mxu0 %v469
  %v1911 = vpop.f32.mrf.mxu0
  %v1912 = vadd.f32 %v1623, %v1911
  %v1913 = vpop.f32.mrf.mxu0
  %v1914 = vpop.f32.mrf.mxu0
  %v1915 = vadd.f32 %v1626, %v1914
  %v1916 = vpop.f32.mrf.mxu0
  %1917 = vmatprep.mubr.bf16.mxu0 0
  %1918 = vmatmul.mubr.bf16.gmra.mxu0 %v472
  %v1919 = vpop.f32.mrf.mxu0
  %v1920 = vadd.f32 %v1631, %v1919
  %v1921 = vpop.f32.mrf.mxu0
  %v1922 = vpop.f32.mrf.mxu0
  %v1923 = vadd.f32 %v1634, %v1922
  %v1924 = vpop.f32.mrf.mxu0
  %1925 = vmatprep.mubr.bf16.mxu0 0
  %1926 = vmatmul.mubr.bf16.gmra.mxu0 %v475
  %v1927 = vpop.f32.mrf.mxu0
  %v1928 = vadd.f32 %v1639, %v1927
  %v1929 = vpop.f32.mrf.mxu0
  %v1930 = vpop.f32.mrf.mxu0
  %v1931 = vadd.f32 %v1642, %v1930
  %v1932 = vpop.f32.mrf.mxu0
  %1933 = vmatprep.mubr.bf16.mxu0 0
  %1934 = vmatmul.mubr.bf16.gmra.mxu0 %v478
  %v1935 = vpop.f32.mrf.mxu0
  %v1936 = vadd.f32 %v1647, %v1935
  %v1937 = vpop.f32.mrf.mxu0
  %v1938 = vpop.f32.mrf.mxu0
  %v1939 = vadd.f32 %v1650, %v1938
  %v1940 = vpop.f32.mrf.mxu0
  %1941 = vmatprep.mubr.bf16.mxu0 0
  %1942 = vmatmul.mubr.bf16.gmra.mxu0 %v481
  %v1943 = vpop.f32.mrf.mxu0
  %v1944 = vadd.f32 %v1655, %v1943
  %v1945 = vpop.f32.mrf.mxu0
  %v1946 = vpop.f32.mrf.mxu0
  %v1947 = vadd.f32 %v1658, %v1946
  %v1948 = vpop.f32.mrf.mxu0
  %1949 = vmatprep.mubr.bf16.mxu0 0
  %1950 = vmatmul.mubr.bf16.gmra.mxu0 %v484
  %v1951 = vpop.f32.mrf.mxu0
  %v1952 = vadd.f32 %v1663, %v1951
  %v1953 = vpop.f32.mrf.mxu0
  %v1954 = vpop.f32.mrf.mxu0
  %v1955 = vadd.f32 %v1666, %v1954
  %v1956 = vpop.f32.mrf.mxu0
  %1957 = vmatprep.mubr.bf16.mxu0 0
  %1958 = vmatmul.mubr.bf16.gmra.mxu0 %v493
  %v1959 = vpop.f32.mrf.mxu0
  %v1960 = vadd.f32 %v1671, %v1959
  %v1961 = vpop.f32.mrf.mxu0
  %v1962 = vpop.f32.mrf.mxu0
  %v1963 = vadd.f32 %v1674, %v1962
  %v1964 = vpop.f32.mrf.mxu0
  %1965 = vmatprep.mubr.bf16.mxu0 0
  %1966 = vmatmul.mubr.bf16.gmra.mxu0 %v496
  %v1967 = vpop.f32.mrf.mxu0
  %v1968 = vadd.f32 %v1679, %v1967
  %v1969 = vpop.f32.mrf.mxu0
  %v1970 = vpop.f32.mrf.mxu0
  %v1971 = vadd.f32 %v1682, %v1970
  %v1972 = vpop.f32.mrf.mxu0
  %1973 = vmatprep.mubr.bf16.mxu0 0
  %1974 = vmatmul.mubr.bf16.gmra.mxu0 %v499
  %v1975 = vpop.f32.mrf.mxu0
  %v1976 = vadd.f32 %v1687, %v1975
  %v1977 = vpop.f32.mrf.mxu0
  %v1978 = vpop.f32.mrf.mxu0
  %v1979 = vadd.f32 %v1690, %v1978
  %v1980 = vpop.f32.mrf.mxu0
  %1981 = vmatprep.mubr.bf16.mxu0 0
  %1982 = vmatmul.mubr.bf16.gmra.mxu0 %v502
  %v1983 = vpop.f32.mrf.mxu0
  %v1984 = vadd.f32 %v1695, %v1983
  %v1985 = vpop.f32.mrf.mxu0
  %v1986 = vpop.f32.mrf.mxu0
  %v1987 = vadd.f32 %v1698, %v1986
  %v1988 = vpop.f32.mrf.mxu0
  %1989 = vmatprep.mubr.bf16.mxu0 0
  %1990 = vmatmul.mubr.bf16.gmra.mxu0 %v505
  %v1991 = vpop.f32.mrf.mxu0
  %v1992 = vadd.f32 %v1703, %v1991
  %v1993 = vpop.f32.mrf.mxu0
  %v1994 = vpop.f32.mrf.mxu0
  %v1995 = vadd.f32 %v1706, %v1994
  %v1996 = vpop.f32.mrf.mxu0
  %1997 = vmatprep.mubr.bf16.mxu0 0
  %1998 = vmatmul.mubr.bf16.gmra.mxu0 %v508
  %v1999 = vpop.f32.mrf.mxu0
  %v2000 = vadd.f32 %v1711, %v1999
  %v2001 = vpop.f32.mrf.mxu0
  %v2002 = vpop.f32.mrf.mxu0
  %v2003 = vadd.f32 %v1714, %v2002
  %v2004 = vpop.f32.mrf.mxu0
  %2005 = vmatprep.mubr.bf16.mxu0 0
  %2006 = vmatmul.mubr.bf16.gmra.mxu0 %v511
  %v2007 = vpop.f32.mrf.mxu0
  %v2008 = vadd.f32 %v1719, %v2007
  %v2009 = vpop.f32.mrf.mxu0
  %v2010 = vpop.f32.mrf.mxu0
  %v2011 = vadd.f32 %v1722, %v2010
  %v2012 = vpop.f32.mrf.mxu0
  %2013 = vmatprep.mubr.bf16.mxu0 0
  %2014 = vmatmul.mubr.bf16.gmra.mxu0 %v514
  %v2015 = vpop.f32.mrf.mxu0
  %v2016 = vadd.f32 %v1727, %v2015
  %v2017 = vpop.f32.mrf.mxu0
  %v2018 = vpop.f32.mrf.mxu0
  %v2019 = vadd.f32 %v1730, %v2018
  %v2020 = vpop.f32.mrf.mxu0
  %2021 = vmatprep.mubr.bf16.mxu0 0
  %2022 = vmatmul.mubr.bf16.gmra.mxu0 %v517
  %v2023 = vpop.f32.mrf.mxu0
  %v2024 = vadd.f32 %v1735, %v2023
  %v2025 = vpop.f32.mrf.mxu0
  %v2026 = vpop.f32.mrf.mxu0
  %v2027 = vadd.f32 %v1738, %v2026
  %v2028 = vpop.f32.mrf.mxu0
  %2029 = vmatprep.mubr.bf16.mxu0 0
  %2030 = vmatmul.mubr.bf16.gmra.mxu0 %v520
  %v2031 = vpop.f32.mrf.mxu0
  %v2032 = vadd.f32 %v1743, %v2031
  %v2033 = vpop.f32.mrf.mxu0
  %v2034 = vpop.f32.mrf.mxu0
  %v2035 = vadd.f32 %v1746, %v2034
  %v2036 = vpop.f32.mrf.mxu0
  %2037 = vmatprep.mubr.bf16.mxu0 0
  %2038 = vmatmul.mubr.bf16.gmra.mxu0 %v523
  %v2039 = vpop.f32.mrf.mxu0
  %v2040 = vadd.f32 %v1751, %v2039
  %v2041 = vpop.f32.mrf.mxu0
  %v2042 = vpop.f32.mrf.mxu0
  %v2043 = vadd.f32 %v1754, %v2042
  %v2044 = vpop.f32.mrf.mxu0
  %2045 = vmatprep.mubr.bf16.mxu0 0
  %2046 = vmatmul.mubr.bf16.gmra.mxu0 %v526
  %v2047 = vpop.f32.mrf.mxu0
  %v2048 = vadd.f32 %v1759, %v2047
  %v2049 = vpop.f32.mrf.mxu0
  %v2050 = vpop.f32.mrf.mxu0
  %v2051 = vadd.f32 %v1762, %v2050
  %v2052 = vpop.f32.mrf.mxu0
  %2053 = vmatprep.mubr.bf16.mxu0 0
  %2054 = vmatmul.mubr.bf16.gmra.mxu0 %v529
  %v2055 = vpop.f32.mrf.mxu0
  %v2056 = vadd.f32 %v1767, %v2055
  %v2057 = vpop.f32.mrf.mxu0
  %v2058 = vpop.f32.mrf.mxu0
  %v2059 = vadd.f32 %v1770, %v2058
  %v2060 = vpop.f32.mrf.mxu0
  %2061 = vmatprep.mubr.bf16.mxu0 0
  %2062 = vmatmul.mubr.bf16.gmra.mxu0 %v532
  %v2063 = vpop.f32.mrf.mxu0
  %v2064 = vadd.f32 %v1775, %v2063
  %v2065 = vpop.f32.mrf.mxu0
  %v2066 = vpop.f32.mrf.mxu0
  %v2067 = vadd.f32 %v1778, %v2066
  %v2068 = vpop.f32.mrf.mxu0
  %2069 = vmatprep.mubr.bf16.mxu0 0
  %2070 = vmatmul.mubr.bf16.gmra.mxu0 %v535
  %v2071 = vpop.f32.mrf.mxu0
  %v2072 = vadd.f32 %v1783, %v2071
  %v2073 = vpop.f32.mrf.mxu0
  %v2074 = vpop.f32.mrf.mxu0
  %v2075 = vadd.f32 %v1786, %v2074
  %v2076 = vpop.f32.mrf.mxu0
  %2077 = vmatprep.mubr.bf16.mxu0 0
  %2078 = vmatmul.mubr.bf16.gmra.mxu0 %v538
  %v2079 = vpop.f32.mrf.mxu0
  %v2080 = vadd.f32 %v1791, %v2079
  %v2081 = vpop.f32.mrf.mxu0
  %v2082 = vpop.f32.mrf.mxu0
  %v2083 = vadd.f32 %v1794, %v2082
  %v2084 = vpop.f32.mrf.mxu0
  %2085 = vdwg.mxu0
  %s2086 = scalar_lea.vmem %s1, 384
  %v2087 = vld [vmem:[%s2086] sm:$0xf]
  %v2088 = vld [vmem:[%s2086 + $0x4] sm:$0xf]
  %v2089 = vld [vmem:[%s2086 + $0x8] sm:$0xf]
  %v2090 = vld [vmem:[%s2086 + $0xc] sm:$0xf]
  %v2091 = vld [vmem:[%s2086 + $0x10] sm:$0xf]
  %v2092 = vld [vmem:[%s2086 + $0x14] sm:$0xf]
  %v2093 = vld [vmem:[%s2086 + $0x18] sm:$0xf]
  %v2094 = vld [vmem:[%s2086 + $0x1c] sm:$0xf]
  %v2095 = vld [vmem:[%s2086 + $0x20] sm:$0xf]
  %v2096 = vld [vmem:[%s2086 + $0x24] sm:$0xf]
  %v2097 = vld [vmem:[%s2086 + $0x28] sm:$0xf]
  %v2098 = vld [vmem:[%s2086 + $0x2c] sm:$0xf]
  %v2099 = vld [vmem:[%s2086 + $0x30] sm:$0xf]
  %v2100 = vld [vmem:[%s2086 + $0x34] sm:$0xf]
  %v2101 = vld [vmem:[%s2086 + $0x38] sm:$0xf]
  %v2102 = vld [vmem:[%s2086 + $0x3c] sm:$0xf]
  %v2103 = vld [vmem:[%s2086 + $0x40] sm:$0xf]
  %v2104 = vld [vmem:[%s2086 + $0x44] sm:$0xf]
  %v2105 = vld [vmem:[%s2086 + $0x48] sm:$0xf]
  %v2106 = vld [vmem:[%s2086 + $0x4c] sm:$0xf]
  %v2107 = vld [vmem:[%s2086 + $0x50] sm:$0xf]
  %v2108 = vld [vmem:[%s2086 + $0x54] sm:$0xf]
  %v2109 = vld [vmem:[%s2086 + $0x58] sm:$0xf]
  %v2110 = vld [vmem:[%s2086 + $0x5c] sm:$0xf]
  %v2111 = vld [vmem:[%s2086 + $0x60] sm:$0xf]
  %v2112 = vld [vmem:[%s2086 + $0x64] sm:$0xf]
  %v2113 = vld [vmem:[%s2086 + $0x68] sm:$0xf]
  %v2114 = vld [vmem:[%s2086 + $0x6c] sm:$0xf]
  %v2115 = vld [vmem:[%s2086 + $0x70] sm:$0xf]
  %v2116 = vld [vmem:[%s2086 + $0x74] sm:$0xf]
  %v2117 = vld [vmem:[%s2086 + $0x78] sm:$0xf]
  %v2118 = vld [vmem:[%s2086 + $0x7c] sm:$0xf]
  %v2119 = vld [vmem:[%s2086 + $0x80] sm:$0xf]
  %v2120 = vld [vmem:[%s2086 + $0x84] sm:$0xf]
  %v2121 = vld [vmem:[%s2086 + $0x88] sm:$0xf]
  %v2122 = vld [vmem:[%s2086 + $0x8c] sm:$0xf]
  %v2123 = vld [vmem:[%s2086 + $0x90] sm:$0xf]
  %v2124 = vld [vmem:[%s2086 + $0x94] sm:$0xf]
  %v2125 = vld [vmem:[%s2086 + $0x98] sm:$0xf]
  %v2126 = vld [vmem:[%s2086 + $0x9c] sm:$0xf]
  %v2127 = vld [vmem:[%s2086 + $0xa0] sm:$0xf]
  %v2128 = vld [vmem:[%s2086 + $0xa4] sm:$0xf]
  %v2129 = vld [vmem:[%s2086 + $0xa8] sm:$0xf]
  %v2130 = vld [vmem:[%s2086 + $0xac] sm:$0xf]
  %v2131 = vld [vmem:[%s2086 + $0xb0] sm:$0xf]
  %v2132 = vld [vmem:[%s2086 + $0xb4] sm:$0xf]
  %v2133 = vld [vmem:[%s2086 + $0xb8] sm:$0xf]
  %v2134 = vld [vmem:[%s2086 + $0xbc] sm:$0xf]
  %v2183 = vunpack.c.l.b16 %v2087
  %v2184 = vunpack.c.l.b16 %v2088
  %v2185 = vunpack.c.l.b16 %v2089
  %v2186 = vunpack.c.l.b16 %v2090
  %v2187 = vunpack.c.l.b16 %v2091
  %v2188 = vunpack.c.l.b16 %v2092
  %v2189 = vunpack.c.l.b16 %v2093
  %v2190 = vunpack.c.l.b16 %v2094
  %v2191 = vunpack.c.l.b16 %v2095
  %v2192 = vunpack.c.l.b16 %v2096
  %v2193 = vunpack.c.l.b16 %v2097
  %v2194 = vunpack.c.l.b16 %v2098
  %v2195 = vunpack.c.l.b16 %v2099
  %v2196 = vunpack.c.l.b16 %v2100
  %v2197 = vunpack.c.l.b16 %v2101
  %v2198 = vunpack.c.l.b16 %v2102
  %v2199 = vunpack.c.l.b16 %v2103
  %v2200 = vunpack.c.l.b16 %v2104
  %v2201 = vunpack.c.l.b16 %v2105
  %v2202 = vunpack.c.l.b16 %v2106
  %v2203 = vunpack.c.l.b16 %v2107
  %v2204 = vunpack.c.l.b16 %v2108
  %v2205 = vunpack.c.l.b16 %v2109
  %v2206 = vunpack.c.l.b16 %v2110
  %v2207 = vunpack.c.l.b16 %v2111
  %v2208 = vunpack.c.l.b16 %v2112
  %v2209 = vunpack.c.l.b16 %v2113
  %v2210 = vunpack.c.l.b16 %v2114
  %v2211 = vunpack.c.l.b16 %v2115
  %v2212 = vunpack.c.l.b16 %v2116
  %v2213 = vunpack.c.l.b16 %v2117
  %v2214 = vunpack.c.l.b16 %v2118
  %v2215 = vunpack.c.l.b16 %v2119
  %v2216 = vunpack.c.l.b16 %v2120
  %v2217 = vunpack.c.l.b16 %v2121
  %v2218 = vunpack.c.l.b16 %v2122
  %v2219 = vunpack.c.l.b16 %v2123
  %v2220 = vunpack.c.l.b16 %v2124
  %v2221 = vunpack.c.l.b16 %v2125
  %v2222 = vunpack.c.l.b16 %v2126
  %v2223 = vunpack.c.l.b16 %v2127
  %v2224 = vunpack.c.l.b16 %v2128
  %v2225 = vunpack.c.l.b16 %v2129
  %v2226 = vunpack.c.l.b16 %v2130
  %v2227 = vunpack.c.l.b16 %v2131
  %v2228 = vunpack.c.l.b16 %v2132
  %v2229 = vunpack.c.l.b16 %v2133
  %v2230 = vunpack.c.l.b16 %v2134
  %v2231 = vpack.c.b16 %v2184, %v2183
  %v2232 = vpack.c.b16 %v2186, %v2185
  %v2233 = vpack.c.b16 %v2188, %v2187
  %v2234 = vpack.c.b16 %v2190, %v2189
  %v2235 = vpack.c.b16 %v2192, %v2191
  %v2236 = vpack.c.b16 %v2194, %v2193
  %v2237 = vpack.c.b16 %v2196, %v2195
  %v2238 = vpack.c.b16 %v2198, %v2197
  %v2239 = vpack.c.b16 %v2200, %v2199
  %v2240 = vpack.c.b16 %v2202, %v2201
  %v2241 = vpack.c.b16 %v2204, %v2203
  %v2242 = vpack.c.b16 %v2206, %v2205
  %v2243 = vpack.c.b16 %v2208, %v2207
  %v2244 = vpack.c.b16 %v2210, %v2209
  %v2245 = vpack.c.b16 %v2212, %v2211
  %v2246 = vpack.c.b16 %v2214, %v2213
  %v2247 = vpack.c.b16 %v2216, %v2215
  %v2248 = vpack.c.b16 %v2218, %v2217
  %v2249 = vpack.c.b16 %v2220, %v2219
  %v2250 = vpack.c.b16 %v2222, %v2221
  %v2251 = vpack.c.b16 %v2224, %v2223
  %v2252 = vpack.c.b16 %v2226, %v2225
  %v2253 = vpack.c.b16 %v2228, %v2227
  %v2254 = vpack.c.b16 %v2230, %v2229
  %2279 = vmatprep.subr.bf16.mxu0 0
  %2280 = vmatpush1.bf16.msra.mxu0 %v2238
  %2281 = vmatprep.subr.bf16.mxu0 0
  %2282 = vmatpush1.bf16.msra.mxu0 %v2237
  %2283 = vmatprep.subr.bf16.mxu0 0
  %2284 = vmatpush1.bf16.msra.mxu0 %v2236
  %2285 = vmatprep.subr.bf16.mxu0 0
  %2286 = vmatpush1.bf16.msra.mxu0 %v2235
  %2287 = vmatprep.subr.bf16.mxu0 0
  %2288 = vmatpush1.bf16.msra.mxu0 %v2234
  %2289 = vmatprep.subr.bf16.mxu0 0
  %2290 = vmatpush1.bf16.msra.mxu0 %v2233
  %2291 = vmatprep.subr.bf16.mxu0 0
  %2292 = vmatpush1.bf16.msra.mxu0 %v2232
  %2293 = vmatprep.subr.bf16.mxu0 0
  %2294 = vmatpush1.bf16.msra.mxu0 %v2231
  %2295 = vmatprep.subr.bf16.mxu0 0
  %2296 = vmatpush2.bf16.msra.mxu0 %v2246
  %2297 = vmatprep.subr.bf16.mxu0 0
  %2298 = vmatpush2.bf16.msra.mxu0 %v2245
  %2299 = vmatprep.subr.bf16.mxu0 0
  %2300 = vmatpush2.bf16.msra.mxu0 %v2244
  %2301 = vmatprep.subr.bf16.mxu0 0
  %2302 = vmatpush2.bf16.msra.mxu0 %v2243
  %2303 = vmatprep.subr.bf16.mxu0 0
  %2304 = vmatpush2.bf16.msra.mxu0 %v2242
  %2305 = vmatprep.subr.bf16.mxu0 0
  %2306 = vmatpush2.bf16.msra.mxu0 %v2241
  %2307 = vmatprep.subr.bf16.mxu0 0
  %2308 = vmatpush2.bf16.msra.mxu0 %v2240
  %2309 = vmatprep.subr.bf16.mxu0 0
  %2310 = vmatpush2.bf16.msra.mxu0 %v2239
  %2311 = vmatprep.mubr.bf16.mxu0 %v444
  %2312 = vmatmul.mubr.bf16.gmra.mxu0 %v443
  %v2313 = vpop.f32.mrf.mxu0
  %v2314 = vadd.f32 0.0, %v2313
  %v2315 = vpop.f32.mrf.mxu0
  %v2316 = vpop.f32.mrf.mxu0
  %v2317 = vadd.f32 0.0, %v2316
  %v2318 = vpop.f32.mrf.mxu0
  %2319 = vmatprep.mubr.bf16.mxu0 %v447
  %2320 = vmatmul.mubr.bf16.gmra.mxu0 %v446
  %v2321 = vpop.f32.mrf.mxu0
  %v2322 = vadd.f32 0.0, %v2321
  %v2323 = vpop.f32.mrf.mxu0
  %v2324 = vpop.f32.mrf.mxu0
  %v2325 = vadd.f32 0.0, %v2324
  %v2326 = vpop.f32.mrf.mxu0
  %2327 = vmatprep.mubr.bf16.mxu0 %v450
  %2328 = vmatmul.mubr.bf16.gmra.mxu0 %v449
  %v2329 = vpop.f32.mrf.mxu0
  %v2330 = vadd.f32 0.0, %v2329
  %v2331 = vpop.f32.mrf.mxu0
  %v2332 = vpop.f32.mrf.mxu0
  %v2333 = vadd.f32 0.0, %v2332
  %v2334 = vpop.f32.mrf.mxu0
  %2335 = vmatprep.mubr.bf16.mxu0 %v453
  %2336 = vmatmul.mubr.bf16.gmra.mxu0 %v452
  %v2337 = vpop.f32.mrf.mxu0
  %v2338 = vadd.f32 0.0, %v2337
  %v2339 = vpop.f32.mrf.mxu0
  %v2340 = vpop.f32.mrf.mxu0
  %v2341 = vadd.f32 0.0, %v2340
  %v2342 = vpop.f32.mrf.mxu0
  %2343 = vmatprep.mubr.bf16.mxu0 %v456
  %2344 = vmatmul.mubr.bf16.gmra.mxu0 %v455
  %v2345 = vpop.f32.mrf.mxu0
  %v2346 = vadd.f32 0.0, %v2345
  %v2347 = vpop.f32.mrf.mxu0
  %v2348 = vpop.f32.mrf.mxu0
  %v2349 = vadd.f32 0.0, %v2348
  %v2350 = vpop.f32.mrf.mxu0
  %2351 = vmatprep.mubr.bf16.mxu0 %v459
  %2352 = vmatmul.mubr.bf16.gmra.mxu0 %v458
  %v2353 = vpop.f32.mrf.mxu0
  %v2354 = vadd.f32 0.0, %v2353
  %v2355 = vpop.f32.mrf.mxu0
  %v2356 = vpop.f32.mrf.mxu0
  %v2357 = vadd.f32 0.0, %v2356
  %v2358 = vpop.f32.mrf.mxu0
  %2359 = vmatprep.mubr.bf16.mxu0 %v462
  %2360 = vmatmul.mubr.bf16.gmra.mxu0 %v461
  %v2361 = vpop.f32.mrf.mxu0
  %v2362 = vadd.f32 0.0, %v2361
  %v2363 = vpop.f32.mrf.mxu0
  %v2364 = vpop.f32.mrf.mxu0
  %v2365 = vadd.f32 0.0, %v2364
  %v2366 = vpop.f32.mrf.mxu0
  %2367 = vmatprep.mubr.bf16.mxu0 %v465
  %2368 = vmatmul.mubr.bf16.gmra.mxu0 %v464
  %v2369 = vpop.f32.mrf.mxu0
  %v2370 = vadd.f32 0.0, %v2369
  %v2371 = vpop.f32.mrf.mxu0
  %v2372 = vpop.f32.mrf.mxu0
  %v2373 = vadd.f32 0.0, %v2372
  %v2374 = vpop.f32.mrf.mxu0
  %2375 = vmatprep.mubr.bf16.mxu0 %v468
  %2376 = vmatmul.mubr.bf16.gmra.mxu0 %v467
  %v2377 = vpop.f32.mrf.mxu0
  %v2378 = vadd.f32 0.0, %v2377
  %v2379 = vpop.f32.mrf.mxu0
  %v2380 = vpop.f32.mrf.mxu0
  %v2381 = vadd.f32 0.0, %v2380
  %v2382 = vpop.f32.mrf.mxu0
  %2383 = vmatprep.mubr.bf16.mxu0 %v471
  %2384 = vmatmul.mubr.bf16.gmra.mxu0 %v470
  %v2385 = vpop.f32.mrf.mxu0
  %v2386 = vadd.f32 0.0, %v2385
  %v2387 = vpop.f32.mrf.mxu0
  %v2388 = vpop.f32.mrf.mxu0
  %v2389 = vadd.f32 0.0, %v2388
  %v2390 = vpop.f32.mrf.mxu0
  %2391 = vmatprep.mubr.bf16.mxu0 %v474
  %2392 = vmatmul.mubr.bf16.gmra.mxu0 %v473
  %v2393 = vpop.f32.mrf.mxu0
  %v2394 = vadd.f32 0.0, %v2393
  %v2395 = vpop.f32.mrf.mxu0
  %v2396 = vpop.f32.mrf.mxu0
  %v2397 = vadd.f32 0.0, %v2396
  %v2398 = vpop.f32.mrf.mxu0
  %2399 = vmatprep.mubr.bf16.mxu0 %v477
  %2400 = vmatmul.mubr.bf16.gmra.mxu0 %v476
  %v2401 = vpop.f32.mrf.mxu0
  %v2402 = vadd.f32 0.0, %v2401
  %v2403 = vpop.f32.mrf.mxu0
  %v2404 = vpop.f32.mrf.mxu0
  %v2405 = vadd.f32 0.0, %v2404
  %v2406 = vpop.f32.mrf.mxu0
  %2407 = vmatprep.mubr.bf16.mxu0 %v480
  %2408 = vmatmul.mubr.bf16.gmra.mxu0 %v479
  %v2409 = vpop.f32.mrf.mxu0
  %v2410 = vadd.f32 0.0, %v2409
  %v2411 = vpop.f32.mrf.mxu0
  %v2412 = vpop.f32.mrf.mxu0
  %v2413 = vadd.f32 0.0, %v2412
  %v2414 = vpop.f32.mrf.mxu0
  %2415 = vmatprep.mubr.bf16.mxu0 %v483
  %2416 = vmatmul.mubr.bf16.gmra.mxu0 %v482
  %v2417 = vpop.f32.mrf.mxu0
  %v2418 = vadd.f32 0.0, %v2417
  %v2419 = vpop.f32.mrf.mxu0
  %v2420 = vpop.f32.mrf.mxu0
  %v2421 = vadd.f32 0.0, %v2420
  %v2422 = vpop.f32.mrf.mxu0
  %2423 = vmatprep.mubr.bf16.mxu0 %v486
  %2424 = vmatmul.mubr.bf16.gmra.mxu0 %v485
  %v2425 = vpop.f32.mrf.mxu0
  %v2426 = vadd.f32 0.0, %v2425
  %v2427 = vpop.f32.mrf.mxu0
  %v2428 = vpop.f32.mrf.mxu0
  %v2429 = vadd.f32 0.0, %v2428
  %v2430 = vpop.f32.mrf.mxu0
  %2431 = vmatprep.mubr.bf16.mxu0 %v489
  %2432 = vmatmul.mubr.bf16.gmra.mxu0 %v488
  %v2433 = vpop.f32.mrf.mxu0
  %v2434 = vadd.f32 0.0, %v2433
  %v2435 = vpop.f32.mrf.mxu0
  %v2436 = vpop.f32.mrf.mxu0
  %v2437 = vadd.f32 0.0, %v2436
  %v2438 = vpop.f32.mrf.mxu0
  %2439 = vmatprep.mubr.bf16.mxu0 %v498
  %2440 = vmatmul.mubr.bf16.gmra.mxu0 %v497
  %v2441 = vpop.f32.mrf.mxu0
  %v2442 = vadd.f32 0.0, %v2441
  %v2443 = vpop.f32.mrf.mxu0
  %v2444 = vpop.f32.mrf.mxu0
  %v2445 = vadd.f32 0.0, %v2444
  %v2446 = vpop.f32.mrf.mxu0
  %2447 = vmatprep.mubr.bf16.mxu0 %v501
  %2448 = vmatmul.mubr.bf16.gmra.mxu0 %v500
  %v2449 = vpop.f32.mrf.mxu0
  %v2450 = vadd.f32 0.0, %v2449
  %v2451 = vpop.f32.mrf.mxu0
  %v2452 = vpop.f32.mrf.mxu0
  %v2453 = vadd.f32 0.0, %v2452
  %v2454 = vpop.f32.mrf.mxu0
  %2455 = vmatprep.mubr.bf16.mxu0 %v504
  %2456 = vmatmul.mubr.bf16.gmra.mxu0 %v503
  %v2457 = vpop.f32.mrf.mxu0
  %v2458 = vadd.f32 0.0, %v2457
  %v2459 = vpop.f32.mrf.mxu0
  %v2460 = vpop.f32.mrf.mxu0
  %v2461 = vadd.f32 0.0, %v2460
  %v2462 = vpop.f32.mrf.mxu0
  %2463 = vmatprep.mubr.bf16.mxu0 %v507
  %2464 = vmatmul.mubr.bf16.gmra.mxu0 %v506
  %v2465 = vpop.f32.mrf.mxu0
  %v2466 = vadd.f32 0.0, %v2465
  %v2467 = vpop.f32.mrf.mxu0
  %v2468 = vpop.f32.mrf.mxu0
  %v2469 = vadd.f32 0.0, %v2468
  %v2470 = vpop.f32.mrf.mxu0
  %2471 = vmatprep.mubr.bf16.mxu0 %v510
  %2472 = vmatmul.mubr.bf16.gmra.mxu0 %v509
  %v2473 = vpop.f32.mrf.mxu0
  %v2474 = vadd.f32 0.0, %v2473
  %v2475 = vpop.f32.mrf.mxu0
  %v2476 = vpop.f32.mrf.mxu0
  %v2477 = vadd.f32 0.0, %v2476
  %v2478 = vpop.f32.mrf.mxu0
  %2479 = vmatprep.mubr.bf16.mxu0 %v513
  %2480 = vmatmul.mubr.bf16.gmra.mxu0 %v512
  %v2481 = vpop.f32.mrf.mxu0
  %v2482 = vadd.f32 0.0, %v2481
  %v2483 = vpop.f32.mrf.mxu0
  %v2484 = vpop.f32.mrf.mxu0
  %v2485 = vadd.f32 0.0, %v2484
  %v2486 = vpop.f32.mrf.mxu0
  %2487 = vmatprep.mubr.bf16.mxu0 %v516
  %2488 = vmatmul.mubr.bf16.gmra.mxu0 %v515
  %v2489 = vpop.f32.mrf.mxu0
  %v2490 = vadd.f32 0.0, %v2489
  %v2491 = vpop.f32.mrf.mxu0
  %v2492 = vpop.f32.mrf.mxu0
  %v2493 = vadd.f32 0.0, %v2492
  %v2494 = vpop.f32.mrf.mxu0
  %2495 = vmatprep.mubr.bf16.mxu0 %v519
  %2496 = vmatmul.mubr.bf16.gmra.mxu0 %v518
  %v2497 = vpop.f32.mrf.mxu0
  %v2498 = vadd.f32 0.0, %v2497
  %v2499 = vpop.f32.mrf.mxu0
  %v2500 = vpop.f32.mrf.mxu0
  %v2501 = vadd.f32 0.0, %v2500
  %v2502 = vpop.f32.mrf.mxu0
  %2503 = vmatprep.mubr.bf16.mxu0 %v522
  %2504 = vmatmul.mubr.bf16.gmra.mxu0 %v521
  %v2505 = vpop.f32.mrf.mxu0
  %v2506 = vadd.f32 0.0, %v2505
  %v2507 = vpop.f32.mrf.mxu0
  %v2508 = vpop.f32.mrf.mxu0
  %v2509 = vadd.f32 0.0, %v2508
  %v2510 = vpop.f32.mrf.mxu0
  %2511 = vmatprep.mubr.bf16.mxu0 %v525
  %2512 = vmatmul.mubr.bf16.gmra.mxu0 %v524
  %v2513 = vpop.f32.mrf.mxu0
  %v2514 = vadd.f32 0.0, %v2513
  %v2515 = vpop.f32.mrf.mxu0
  %v2516 = vpop.f32.mrf.mxu0
  %v2517 = vadd.f32 0.0, %v2516
  %v2518 = vpop.f32.mrf.mxu0
  %2519 = vmatprep.mubr.bf16.mxu0 %v528
  %2520 = vmatmul.mubr.bf16.gmra.mxu0 %v527
  %v2521 = vpop.f32.mrf.mxu0
  %v2522 = vadd.f32 0.0, %v2521
  %v2523 = vpop.f32.mrf.mxu0
  %v2524 = vpop.f32.mrf.mxu0
  %v2525 = vadd.f32 0.0, %v2524
  %v2526 = vpop.f32.mrf.mxu0
  %2527 = vmatprep.mubr.bf16.mxu0 %v531
  %2528 = vmatmul.mubr.bf16.gmra.mxu0 %v530
  %v2529 = vpop.f32.mrf.mxu0
  %v2530 = vadd.f32 0.0, %v2529
  %v2531 = vpop.f32.mrf.mxu0
  %v2532 = vpop.f32.mrf.mxu0
  %v2533 = vadd.f32 0.0, %v2532
  %v2534 = vpop.f32.mrf.mxu0
  %2535 = vmatprep.mubr.bf16.mxu0 %v534
  %2536 = vmatmul.mubr.bf16.gmra.mxu0 %v533
  %v2537 = vpop.f32.mrf.mxu0
  %v2538 = vadd.f32 0.0, %v2537
  %v2539 = vpop.f32.mrf.mxu0
  %v2540 = vpop.f32.mrf.mxu0
  %v2541 = vadd.f32 0.0, %v2540
  %v2542 = vpop.f32.mrf.mxu0
  %2543 = vmatprep.mubr.bf16.mxu0 %v537
  %2544 = vmatmul.mubr.bf16.gmra.mxu0 %v536
  %v2545 = vpop.f32.mrf.mxu0
  %v2546 = vadd.f32 0.0, %v2545
  %v2547 = vpop.f32.mrf.mxu0
  %v2548 = vpop.f32.mrf.mxu0
  %v2549 = vadd.f32 0.0, %v2548
  %v2550 = vpop.f32.mrf.mxu0
  %2551 = vmatprep.mubr.bf16.mxu0 %v540
  %2552 = vmatmul.mubr.bf16.gmra.mxu0 %v539
  %v2553 = vpop.f32.mrf.mxu0
  %v2554 = vadd.f32 0.0, %v2553
  %v2555 = vpop.f32.mrf.mxu0
  %v2556 = vpop.f32.mrf.mxu0
  %v2557 = vadd.f32 0.0, %v2556
  %v2558 = vpop.f32.mrf.mxu0
  %2559 = vmatprep.mubr.bf16.mxu0 %v543
  %2560 = vmatmul.mubr.bf16.gmra.mxu0 %v542
  %v2561 = vpop.f32.mrf.mxu0
  %v2562 = vadd.f32 0.0, %v2561
  %v2563 = vpop.f32.mrf.mxu0
  %v2564 = vpop.f32.mrf.mxu0
  %v2565 = vadd.f32 0.0, %v2564
  %v2566 = vpop.f32.mrf.mxu0
  %2567 = vdwg.mxu0
  %2568 = vmatprep.subr.bf16.mxu0 0
  %2569 = vmatpush1.bf16.msra.mxu0 %v2254
  %2570 = vmatprep.subr.bf16.mxu0 0
  %2571 = vmatpush1.bf16.msra.mxu0 %v2253
  %2572 = vmatprep.subr.bf16.mxu0 0
  %2573 = vmatpush1.bf16.msra.mxu0 %v2252
  %2574 = vmatprep.subr.bf16.mxu0 0
  %2575 = vmatpush1.bf16.msra.mxu0 %v2251
  %2576 = vmatprep.subr.bf16.mxu0 0
  %2577 = vmatpush1.bf16.msra.mxu0 %v2250
  %2578 = vmatprep.subr.bf16.mxu0 0
  %2579 = vmatpush1.bf16.msra.mxu0 %v2249
  %2580 = vmatprep.subr.bf16.mxu0 0
  %2581 = vmatpush1.bf16.msra.mxu0 %v2248
  %2582 = vmatprep.subr.bf16.mxu0 0
  %2583 = vmatpush1.bf16.msra.mxu0 %v2247
  %2584 = vmatprep.subr.bf16.mxu0 0
  %2585 = vmatpush2.bf16.msra.mxu0 0
  %2586 = vmatprep.subr.bf16.mxu0 0
  %2587 = vmatpush2.bf16.msra.mxu0 0
  %2588 = vmatprep.subr.bf16.mxu0 0
  %2589 = vmatpush2.bf16.msra.mxu0 0
  %2590 = vmatprep.subr.bf16.mxu0 0
  %2591 = vmatpush2.bf16.msra.mxu0 0
  %2592 = vmatprep.subr.bf16.mxu0 0
  %2593 = vmatpush2.bf16.msra.mxu0 0
  %2594 = vmatprep.subr.bf16.mxu0 0
  %2595 = vmatpush2.bf16.msra.mxu0 0
  %2596 = vmatprep.subr.bf16.mxu0 0
  %2597 = vmatpush2.bf16.msra.mxu0 0
  %2598 = vmatprep.subr.bf16.mxu0 0
  %2599 = vmatpush2.bf16.msra.mxu0 0
  %2600 = vmatprep.mubr.bf16.mxu0 0
  %2601 = vmatmul.mubr.bf16.gmra.mxu0 %v445
  %v2602 = vpop.f32.mrf.mxu0
  %v2603 = vadd.f32 %v2314, %v2602
  %v2604 = vpop.f32.mrf.mxu0
  %v2605 = vpop.f32.mrf.mxu0
  %v2606 = vadd.f32 %v2317, %v2605
  %v2607 = vpop.f32.mrf.mxu0
  %2608 = vmatprep.mubr.bf16.mxu0 0
  %2609 = vmatmul.mubr.bf16.gmra.mxu0 %v448
  %v2610 = vpop.f32.mrf.mxu0
  %v2611 = vadd.f32 %v2322, %v2610
  %v2612 = vpop.f32.mrf.mxu0
  %v2613 = vpop.f32.mrf.mxu0
  %v2614 = vadd.f32 %v2325, %v2613
  %v2615 = vpop.f32.mrf.mxu0
  %2616 = vmatprep.mubr.bf16.mxu0 0
  %2617 = vmatmul.mubr.bf16.gmra.mxu0 %v451
  %v2618 = vpop.f32.mrf.mxu0
  %v2619 = vadd.f32 %v2330, %v2618
  %v2620 = vpop.f32.mrf.mxu0
  %v2621 = vpop.f32.mrf.mxu0
  %v2622 = vadd.f32 %v2333, %v2621
  %v2623 = vpop.f32.mrf.mxu0
  %2624 = vmatprep.mubr.bf16.mxu0 0
  %2625 = vmatmul.mubr.bf16.gmra.mxu0 %v454
  %v2626 = vpop.f32.mrf.mxu0
  %v2627 = vadd.f32 %v2338, %v2626
  %v2628 = vpop.f32.mrf.mxu0
  %v2629 = vpop.f32.mrf.mxu0
  %v2630 = vadd.f32 %v2341, %v2629
  %v2631 = vpop.f32.mrf.mxu0
  %2632 = vmatprep.mubr.bf16.mxu0 0
  %2633 = vmatmul.mubr.bf16.gmra.mxu0 %v457
  %v2634 = vpop.f32.mrf.mxu0
  %v2635 = vadd.f32 %v2346, %v2634
  %v2636 = vpop.f32.mrf.mxu0
  %v2637 = vpop.f32.mrf.mxu0
  %v2638 = vadd.f32 %v2349, %v2637
  %v2639 = vpop.f32.mrf.mxu0
  %2640 = vmatprep.mubr.bf16.mxu0 0
  %2641 = vmatmul.mubr.bf16.gmra.mxu0 %v460
  %v2642 = vpop.f32.mrf.mxu0
  %v2643 = vadd.f32 %v2354, %v2642
  %v2644 = vpop.f32.mrf.mxu0
  %v2645 = vpop.f32.mrf.mxu0
  %v2646 = vadd.f32 %v2357, %v2645
  %v2647 = vpop.f32.mrf.mxu0
  %2648 = vmatprep.mubr.bf16.mxu0 0
  %2649 = vmatmul.mubr.bf16.gmra.mxu0 %v463
  %v2650 = vpop.f32.mrf.mxu0
  %v2651 = vadd.f32 %v2362, %v2650
  %v2652 = vpop.f32.mrf.mxu0
  %v2653 = vpop.f32.mrf.mxu0
  %v2654 = vadd.f32 %v2365, %v2653
  %v2655 = vpop.f32.mrf.mxu0
  %2656 = vmatprep.mubr.bf16.mxu0 0
  %2657 = vmatmul.mubr.bf16.gmra.mxu0 %v466
  %v2658 = vpop.f32.mrf.mxu0
  %v2659 = vadd.f32 %v2370, %v2658
  %v2660 = vpop.f32.mrf.mxu0
  %v2661 = vpop.f32.mrf.mxu0
  %v2662 = vadd.f32 %v2373, %v2661
  %v2663 = vpop.f32.mrf.mxu0
  %2664 = vmatprep.mubr.bf16.mxu0 0
  %2665 = vmatmul.mubr.bf16.gmra.mxu0 %v469
  %v2666 = vpop.f32.mrf.mxu0
  %v2667 = vadd.f32 %v2378, %v2666
  %v2668 = vpop.f32.mrf.mxu0
  %v2669 = vpop.f32.mrf.mxu0
  %v2670 = vadd.f32 %v2381, %v2669
  %v2671 = vpop.f32.mrf.mxu0
  %2672 = vmatprep.mubr.bf16.mxu0 0
  %2673 = vmatmul.mubr.bf16.gmra.mxu0 %v472
  %v2674 = vpop.f32.mrf.mxu0
  %v2675 = vadd.f32 %v2386, %v2674
  %v2676 = vpop.f32.mrf.mxu0
  %v2677 = vpop.f32.mrf.mxu0
  %v2678 = vadd.f32 %v2389, %v2677
  %v2679 = vpop.f32.mrf.mxu0
  %2680 = vmatprep.mubr.bf16.mxu0 0
  %2681 = vmatmul.mubr.bf16.gmra.mxu0 %v475
  %v2682 = vpop.f32.mrf.mxu0
  %v2683 = vadd.f32 %v2394, %v2682
  %v2684 = vpop.f32.mrf.mxu0
  %v2685 = vpop.f32.mrf.mxu0
  %v2686 = vadd.f32 %v2397, %v2685
  %v2687 = vpop.f32.mrf.mxu0
  %2688 = vmatprep.mubr.bf16.mxu0 0
  %2689 = vmatmul.mubr.bf16.gmra.mxu0 %v478
  %v2690 = vpop.f32.mrf.mxu0
  %v2691 = vadd.f32 %v2402, %v2690
  %v2692 = vpop.f32.mrf.mxu0
  %v2693 = vpop.f32.mrf.mxu0
  %v2694 = vadd.f32 %v2405, %v2693
  %v2695 = vpop.f32.mrf.mxu0
  %2696 = vmatprep.mubr.bf16.mxu0 0
  %2697 = vmatmul.mubr.bf16.gmra.mxu0 %v481
  %v2698 = vpop.f32.mrf.mxu0
  %v2699 = vadd.f32 %v2410, %v2698
  %v2700 = vpop.f32.mrf.mxu0
  %v2701 = vpop.f32.mrf.mxu0
  %v2702 = vadd.f32 %v2413, %v2701
  %v2703 = vpop.f32.mrf.mxu0
  %2704 = vmatprep.mubr.bf16.mxu0 0
  %2705 = vmatmul.mubr.bf16.gmra.mxu0 %v484
  %v2706 = vpop.f32.mrf.mxu0
  %v2707 = vadd.f32 %v2418, %v2706
  %v2708 = vpop.f32.mrf.mxu0
  %v2709 = vpop.f32.mrf.mxu0
  %v2710 = vadd.f32 %v2421, %v2709
  %v2711 = vpop.f32.mrf.mxu0
  %2712 = vmatprep.mubr.bf16.mxu0 0
  %2713 = vmatmul.mubr.bf16.gmra.mxu0 %v487
  %v2714 = vpop.f32.mrf.mxu0
  %v2715 = vadd.f32 %v2426, %v2714
  %v2716 = vpop.f32.mrf.mxu0
  %v2717 = vpop.f32.mrf.mxu0
  %v2718 = vadd.f32 %v2429, %v2717
  %v2719 = vpop.f32.mrf.mxu0
  %2720 = vmatprep.mubr.bf16.mxu0 0
  %2721 = vmatmul.mubr.bf16.gmra.mxu0 %v490
  %v2722 = vpop.f32.mrf.mxu0
  %v2723 = vadd.f32 %v2434, %v2722
  %v2724 = vpop.f32.mrf.mxu0
  %v2725 = vpop.f32.mrf.mxu0
  %v2726 = vadd.f32 %v2437, %v2725
  %v2727 = vpop.f32.mrf.mxu0
  %2728 = vmatprep.mubr.bf16.mxu0 0
  %2729 = vmatmul.mubr.bf16.gmra.mxu0 %v499
  %v2730 = vpop.f32.mrf.mxu0
  %v2731 = vadd.f32 %v2442, %v2730
  %v2732 = vpop.f32.mrf.mxu0
  %v2733 = vpop.f32.mrf.mxu0
  %v2734 = vadd.f32 %v2445, %v2733
  %v2735 = vpop.f32.mrf.mxu0
  %2736 = vmatprep.mubr.bf16.mxu0 0
  %2737 = vmatmul.mubr.bf16.gmra.mxu0 %v502
  %v2738 = vpop.f32.mrf.mxu0
  %v2739 = vadd.f32 %v2450, %v2738
  %v2740 = vpop.f32.mrf.mxu0
  %v2741 = vpop.f32.mrf.mxu0
  %v2742 = vadd.f32 %v2453, %v2741
  %v2743 = vpop.f32.mrf.mxu0
  %2744 = vmatprep.mubr.bf16.mxu0 0
  %2745 = vmatmul.mubr.bf16.gmra.mxu0 %v505
  %v2746 = vpop.f32.mrf.mxu0
  %v2747 = vadd.f32 %v2458, %v2746
  %v2748 = vpop.f32.mrf.mxu0
  %v2749 = vpop.f32.mrf.mxu0
  %v2750 = vadd.f32 %v2461, %v2749
  %v2751 = vpop.f32.mrf.mxu0
  %2752 = vmatprep.mubr.bf16.mxu0 0
  %2753 = vmatmul.mubr.bf16.gmra.mxu0 %v508
  %v2754 = vpop.f32.mrf.mxu0
  %v2755 = vadd.f32 %v2466, %v2754
  %v2756 = vpop.f32.mrf.mxu0
  %v2757 = vpop.f32.mrf.mxu0
  %v2758 = vadd.f32 %v2469, %v2757
  %v2759 = vpop.f32.mrf.mxu0
  %2760 = vmatprep.mubr.bf16.mxu0 0
  %2761 = vmatmul.mubr.bf16.gmra.mxu0 %v511
  %v2762 = vpop.f32.mrf.mxu0
  %v2763 = vadd.f32 %v2474, %v2762
  %v2764 = vpop.f32.mrf.mxu0
  %v2765 = vpop.f32.mrf.mxu0
  %v2766 = vadd.f32 %v2477, %v2765
  %v2767 = vpop.f32.mrf.mxu0
  %2768 = vmatprep.mubr.bf16.mxu0 0
  %2769 = vmatmul.mubr.bf16.gmra.mxu0 %v514
  %v2770 = vpop.f32.mrf.mxu0
  %v2771 = vadd.f32 %v2482, %v2770
  %v2772 = vpop.f32.mrf.mxu0
  %v2773 = vpop.f32.mrf.mxu0
  %v2774 = vadd.f32 %v2485, %v2773
  %v2775 = vpop.f32.mrf.mxu0
  %2776 = vmatprep.mubr.bf16.mxu0 0
  %2777 = vmatmul.mubr.bf16.gmra.mxu0 %v517
  %v2778 = vpop.f32.mrf.mxu0
  %v2779 = vadd.f32 %v2490, %v2778
  %v2780 = vpop.f32.mrf.mxu0
  %v2781 = vpop.f32.mrf.mxu0
  %v2782 = vadd.f32 %v2493, %v2781
  %v2783 = vpop.f32.mrf.mxu0
  %2784 = vmatprep.mubr.bf16.mxu0 0
  %2785 = vmatmul.mubr.bf16.gmra.mxu0 %v520
  %v2786 = vpop.f32.mrf.mxu0
  %v2787 = vadd.f32 %v2498, %v2786
  %v2788 = vpop.f32.mrf.mxu0
  %v2789 = vpop.f32.mrf.mxu0
  %v2790 = vadd.f32 %v2501, %v2789
  %v2791 = vpop.f32.mrf.mxu0
  %2792 = vmatprep.mubr.bf16.mxu0 0
  %2793 = vmatmul.mubr.bf16.gmra.mxu0 %v523
  %v2794 = vpop.f32.mrf.mxu0
  %v2795 = vadd.f32 %v2506, %v2794
  %v2796 = vpop.f32.mrf.mxu0
  %v2797 = vpop.f32.mrf.mxu0
  %v2798 = vadd.f32 %v2509, %v2797
  %v2799 = vpop.f32.mrf.mxu0
  %2800 = vmatprep.mubr.bf16.mxu0 0
  %2801 = vmatmul.mubr.bf16.gmra.mxu0 %v526
  %v2802 = vpop.f32.mrf.mxu0
  %v2803 = vadd.f32 %v2514, %v2802
  %v2804 = vpop.f32.mrf.mxu0
  %v2805 = vpop.f32.mrf.mxu0
  %v2806 = vadd.f32 %v2517, %v2805
  %v2807 = vpop.f32.mrf.mxu0
  %2808 = vmatprep.mubr.bf16.mxu0 0
  %2809 = vmatmul.mubr.bf16.gmra.mxu0 %v529
  %v2810 = vpop.f32.mrf.mxu0
  %v2811 = vadd.f32 %v2522, %v2810
  %v2812 = vpop.f32.mrf.mxu0
  %v2813 = vpop.f32.mrf.mxu0
  %v2814 = vadd.f32 %v2525, %v2813
  %v2815 = vpop.f32.mrf.mxu0
  %2816 = vmatprep.mubr.bf16.mxu0 0
  %2817 = vmatmul.mubr.bf16.gmra.mxu0 %v532
  %v2818 = vpop.f32.mrf.mxu0
  %v2819 = vadd.f32 %v2530, %v2818
  %v2820 = vpop.f32.mrf.mxu0
  %v2821 = vpop.f32.mrf.mxu0
  %v2822 = vadd.f32 %v2533, %v2821
  %v2823 = vpop.f32.mrf.mxu0
  %2824 = vmatprep.mubr.bf16.mxu0 0
  %2825 = vmatmul.mubr.bf16.gmra.mxu0 %v535
  %v2826 = vpop.f32.mrf.mxu0
  %v2827 = vadd.f32 %v2538, %v2826
  %v2828 = vpop.f32.mrf.mxu0
  %v2829 = vpop.f32.mrf.mxu0
  %v2830 = vadd.f32 %v2541, %v2829
  %v2831 = vpop.f32.mrf.mxu0
  %2832 = vmatprep.mubr.bf16.mxu0 0
  %2833 = vmatmul.mubr.bf16.gmra.mxu0 %v538
  %v2834 = vpop.f32.mrf.mxu0
  %v2835 = vadd.f32 %v2546, %v2834
  %v2836 = vpop.f32.mrf.mxu0
  %v2837 = vpop.f32.mrf.mxu0
  %v2838 = vadd.f32 %v2549, %v2837
  %v2839 = vpop.f32.mrf.mxu0
  %2840 = vmatprep.mubr.bf16.mxu0 0
  %2841 = vmatmul.mubr.bf16.gmra.mxu0 %v541
  %v2842 = vpop.f32.mrf.mxu0
  %v2843 = vadd.f32 %v2554, %v2842
  %v2844 = vpop.f32.mrf.mxu0
  %v2845 = vpop.f32.mrf.mxu0
  %v2846 = vadd.f32 %v2557, %v2845
  %v2847 = vpop.f32.mrf.mxu0
  %2848 = vmatprep.mubr.bf16.mxu0 0
  %2849 = vmatmul.mubr.bf16.gmra.mxu0 %v544
  %v2850 = vpop.f32.mrf.mxu0
  %v2851 = vadd.f32 %v2562, %v2850
  %v2852 = vpop.f32.mrf.mxu0
  %v2853 = vpop.f32.mrf.mxu0
  %v2854 = vadd.f32 %v2565, %v2853
  %v2855 = vpop.f32.mrf.mxu0
  %2856 = vdwg.mxu0
  %v2857 = vadd.f32 %v1832, %v2603
  %v2858 = vadd.f32 %v1835, %v2606
  %v2859 = vadd.f32 %v1840, %v2611
  %v2860 = vadd.f32 %v1843, %v2614
  %v2861 = vadd.f32 %v1848, %v2619
  %v2862 = vadd.f32 %v1851, %v2622
  %v2863 = vadd.f32 %v1856, %v2627
  %v2864 = vadd.f32 %v1859, %v2630
  %v2865 = vadd.f32 %v1864, %v2635
  %v2866 = vadd.f32 %v1867, %v2638
  %v2867 = vadd.f32 %v1872, %v2643
  %v2868 = vadd.f32 %v1875, %v2646
  %v2869 = vadd.f32 %v1880, %v2651
  %v2870 = vadd.f32 %v1883, %v2654
  %v2871 = vadd.f32 %v1888, %v2659
  %v2872 = vadd.f32 %v1891, %v2662
  %v2873 = vadd.f32 %v1896, %v2667
  %v2874 = vadd.f32 %v1899, %v2670
  %v2875 = vadd.f32 %v1904, %v2675
  %v2876 = vadd.f32 %v1907, %v2678
  %v2877 = vadd.f32 %v1912, %v2683
  %v2878 = vadd.f32 %v1915, %v2686
  %v2879 = vadd.f32 %v1920, %v2691
  %v2880 = vadd.f32 %v1923, %v2694
  %v2881 = vadd.f32 %v1928, %v2699
  %v2882 = vadd.f32 %v1931, %v2702
  %v2883 = vadd.f32 %v1936, %v2707
  %v2884 = vadd.f32 %v1939, %v2710
  %v2885 = vadd.f32 %v1944, %v2715
  %v2886 = vadd.f32 %v1947, %v2718
  %v2887 = vadd.f32 %v1952, %v2723
  %v2888 = vadd.f32 %v1955, %v2726
  %v2889 = vadd.f32 %v1960, %v2731
  %v2890 = vadd.f32 %v1963, %v2734
  %v2891 = vadd.f32 %v1968, %v2739
  %v2892 = vadd.f32 %v1971, %v2742
  %v2893 = vadd.f32 %v1976, %v2747
  %v2894 = vadd.f32 %v1979, %v2750
  %v2895 = vadd.f32 %v1984, %v2755
  %v2896 = vadd.f32 %v1987, %v2758
  %v2897 = vadd.f32 %v1992, %v2763
  %v2898 = vadd.f32 %v1995, %v2766
  %v2899 = vadd.f32 %v2000, %v2771
  %v2900 = vadd.f32 %v2003, %v2774
  %v2901 = vadd.f32 %v2008, %v2779
  %v2902 = vadd.f32 %v2011, %v2782
  %v2903 = vadd.f32 %v2016, %v2787
  %v2904 = vadd.f32 %v2019, %v2790
  %v2905 = vadd.f32 %v2024, %v2795
  %v2906 = vadd.f32 %v2027, %v2798
  %v2907 = vadd.f32 %v2032, %v2803
  %v2908 = vadd.f32 %v2035, %v2806
  %v2909 = vadd.f32 %v2040, %v2811
  %v2910 = vadd.f32 %v2043, %v2814
  %v2911 = vadd.f32 %v2048, %v2819
  %v2912 = vadd.f32 %v2051, %v2822
  %v2913 = vadd.f32 %v2056, %v2827
  %v2914 = vadd.f32 %v2059, %v2830
  %v2915 = vadd.f32 %v2064, %v2835
  %v2916 = vadd.f32 %v2067, %v2838
  %v2917 = vadd.f32 %v2072, %v2843
  %v2918 = vadd.f32 %v2075, %v2846
  %v2919 = vadd.f32 %v2080, %v2851
  %v2920 = vadd.f32 %v2083, %v2854
  %v2921 = vpack.c.bf16 %v2858, %v2857
  %v2922 = vpack.c.bf16 %v2860, %v2859
  %v2923 = vpack.c.bf16 %v2862, %v2861
  %v2924 = vpack.c.bf16 %v2864, %v2863
  %v2925 = vpack.c.bf16 %v2866, %v2865
  %v2926 = vpack.c.bf16 %v2868, %v2867
  %v2927 = vpack.c.bf16 %v2870, %v2869
  %v2928 = vpack.c.bf16 %v2872, %v2871
  %v2929 = vpack.c.bf16 %v2874, %v2873
  %v2930 = vpack.c.bf16 %v2876, %v2875
  %v2931 = vpack.c.bf16 %v2878, %v2877
  %v2932 = vpack.c.bf16 %v2880, %v2879
  %v2933 = vpack.c.bf16 %v2882, %v2881
  %v2934 = vpack.c.bf16 %v2884, %v2883
  %v2935 = vpack.c.bf16 %v2886, %v2885
  %v2936 = vpack.c.bf16 %v2888, %v2887
  %v2937 = vpack.c.bf16 %v2890, %v2889
  %v2938 = vpack.c.bf16 %v2892, %v2891
  %v2939 = vpack.c.bf16 %v2894, %v2893
  %v2940 = vpack.c.bf16 %v2896, %v2895
  %v2941 = vpack.c.bf16 %v2898, %v2897
  %v2942 = vpack.c.bf16 %v2900, %v2899
  %v2943 = vpack.c.bf16 %v2902, %v2901
  %v2944 = vpack.c.bf16 %v2904, %v2903
  %v2945 = vpack.c.bf16 %v2906, %v2905
  %v2946 = vpack.c.bf16 %v2908, %v2907
  %v2947 = vpack.c.bf16 %v2910, %v2909
  %v2948 = vpack.c.bf16 %v2912, %v2911
  %v2949 = vpack.c.bf16 %v2914, %v2913
  %v2950 = vpack.c.bf16 %v2916, %v2915
  %v2951 = vpack.c.bf16 %v2918, %v2917
  %v2952 = vpack.c.bf16 %v2920, %v2919
  %v2985 = vunpack.c.l.b16 %v2921
  %v2986 = vunpack.c.h.b16 %v2921
  %v2987 = vunpack.c.l.b16 %v2922
  %v2988 = vunpack.c.h.b16 %v2922
  %v2989 = vunpack.c.l.b16 %v2923
  %v2990 = vunpack.c.h.b16 %v2923
  %v2991 = vunpack.c.l.b16 %v2924
  %v2992 = vunpack.c.h.b16 %v2924
  %v2993 = vunpack.c.l.b16 %v2925
  %v2994 = vunpack.c.h.b16 %v2925
  %v2995 = vunpack.c.l.b16 %v2926
  %v2996 = vunpack.c.h.b16 %v2926
  %v2997 = vunpack.c.l.b16 %v2927
  %v2998 = vunpack.c.h.b16 %v2927
  %v2999 = vunpack.c.l.b16 %v2928
  %v3000 = vunpack.c.h.b16 %v2928
  %v3001 = vunpack.c.l.b16 %v2929
  %v3002 = vunpack.c.h.b16 %v2929
  %v3003 = vunpack.c.l.b16 %v2930
  %v3004 = vunpack.c.h.b16 %v2930
  %v3005 = vunpack.c.l.b16 %v2931
  %v3006 = vunpack.c.h.b16 %v2931
  %v3007 = vunpack.c.l.b16 %v2932
  %v3008 = vunpack.c.h.b16 %v2932
  %v3009 = vunpack.c.l.b16 %v2933
  %v3010 = vunpack.c.h.b16 %v2933
  %v3011 = vunpack.c.l.b16 %v2934
  %v3012 = vunpack.c.h.b16 %v2934
  %v3013 = vunpack.c.l.b16 %v2935
  %v3014 = vunpack.c.h.b16 %v2935
  %v3015 = vunpack.c.l.b16 %v2936
  %v3016 = vunpack.c.h.b16 %v2936
  %v3017 = vunpack.c.l.b16 %v2937
  %v3018 = vunpack.c.h.b16 %v2937
  %v3019 = vunpack.c.l.b16 %v2938
  %v3020 = vunpack.c.h.b16 %v2938
  %v3021 = vunpack.c.l.b16 %v2939
  %v3022 = vunpack.c.h.b16 %v2939
  %v3023 = vunpack.c.l.b16 %v2940
  %v3024 = vunpack.c.h.b16 %v2940
  %v3025 = vunpack.c.l.b16 %v2941
  %v3026 = vunpack.c.h.b16 %v2941
  %v3027 = vunpack.c.l.b16 %v2942
  %v3028 = vunpack.c.h.b16 %v2942
  %v3029 = vunpack.c.l.b16 %v2943
  %v3030 = vunpack.c.h.b16 %v2943
  %v3031 = vunpack.c.l.b16 %v2944
  %v3032 = vunpack.c.h.b16 %v2944
  %v3033 = vunpack.c.l.b16 %v2945
  %v3034 = vunpack.c.h.b16 %v2945
  %v3035 = vunpack.c.l.b16 %v2946
  %v3036 = vunpack.c.h.b16 %v2946
  %v3037 = vunpack.c.l.b16 %v2947
  %v3038 = vunpack.c.h.b16 %v2947
  %v3039 = vunpack.c.l.b16 %v2948
  %v3040 = vunpack.c.h.b16 %v2948
  %v3041 = vunpack.c.l.b16 %v2949
  %v3042 = vunpack.c.h.b16 %v2949
  %v3043 = vunpack.c.l.b16 %v2950
  %v3044 = vunpack.c.h.b16 %v2950
  %v3045 = vunpack.c.l.b16 %v2951
  %v3046 = vunpack.c.h.b16 %v2951
  %v3047 = vunpack.c.l.b16 %v2952
  %v3048 = vunpack.c.h.b16 %v2952
  %v3049 = vpack.c.b16 %v2985, %v2985
  %v3050 = vpack.c.b16 %v2986, %v2986
  %v3051 = vpack.c.b16 %v2987, %v2987
  %v3052 = vpack.c.b16 %v2988, %v2988
  %v3053 = vpack.c.b16 %v2989, %v2989
  %v3054 = vpack.c.b16 %v2990, %v2990
  %v3055 = vpack.c.b16 %v2991, %v2991
  %v3056 = vpack.c.b16 %v2992, %v2992
  %v3057 = vpack.c.b16 %v2993, %v2993
  %v3058 = vpack.c.b16 %v2994, %v2994
  %v3059 = vpack.c.b16 %v2995, %v2995
  %v3060 = vpack.c.b16 %v2996, %v2996
  %v3061 = vpack.c.b16 %v2997, %v2997
  %v3062 = vpack.c.b16 %v2998, %v2998
  %v3063 = vpack.c.b16 %v2999, %v2999
  %v3064 = vpack.c.b16 %v3000, %v3000
  %v3065 = vpack.c.b16 %v3001, %v3001
  %v3066 = vpack.c.b16 %v3002, %v3002
  %v3067 = vpack.c.b16 %v3003, %v3003
  %v3068 = vpack.c.b16 %v3004, %v3004
  %v3069 = vpack.c.b16 %v3005, %v3005
  %v3070 = vpack.c.b16 %v3006, %v3006
  %v3071 = vpack.c.b16 %v3007, %v3007
  %v3072 = vpack.c.b16 %v3008, %v3008
  %v3073 = vpack.c.b16 %v3009, %v3009
  %v3074 = vpack.c.b16 %v3010, %v3010
  %v3075 = vpack.c.b16 %v3011, %v3011
  %v3076 = vpack.c.b16 %v3012, %v3012
  %v3077 = vpack.c.b16 %v3013, %v3013
  %v3078 = vpack.c.b16 %v3014, %v3014
  %v3079 = vpack.c.b16 %v3015, %v3015
  %v3080 = vpack.c.b16 %v3016, %v3016
  %v3081 = vpack.c.b16 %v3017, %v3017
  %v3082 = vpack.c.b16 %v3018, %v3018
  %v3083 = vpack.c.b16 %v3019, %v3019
  %v3084 = vpack.c.b16 %v3020, %v3020
  %v3085 = vpack.c.b16 %v3021, %v3021
  %v3086 = vpack.c.b16 %v3022, %v3022
  %v3087 = vpack.c.b16 %v3023, %v3023
  %v3088 = vpack.c.b16 %v3024, %v3024
  %v3089 = vpack.c.b16 %v3025, %v3025
  %v3090 = vpack.c.b16 %v3026, %v3026
  %v3091 = vpack.c.b16 %v3027, %v3027
  %v3092 = vpack.c.b16 %v3028, %v3028
  %v3093 = vpack.c.b16 %v3029, %v3029
  %v3094 = vpack.c.b16 %v3030, %v3030
  %v3095 = vpack.c.b16 %v3031, %v3031
  %v3096 = vpack.c.b16 %v3032, %v3032
  %v3097 = vpack.c.b16 %v3033, %v3033
  %v3098 = vpack.c.b16 %v3034, %v3034
  %v3099 = vpack.c.b16 %v3035, %v3035
  %v3100 = vpack.c.b16 %v3036, %v3036
  %v3101 = vpack.c.b16 %v3037, %v3037
  %v3102 = vpack.c.b16 %v3038, %v3038
  %v3103 = vpack.c.b16 %v3039, %v3039
  %v3104 = vpack.c.b16 %v3040, %v3040
  %v3105 = vpack.c.b16 %v3041, %v3041
  %v3106 = vpack.c.b16 %v3042, %v3042
  %v3107 = vpack.c.b16 %v3043, %v3043
  %v3108 = vpack.c.b16 %v3044, %v3044
  %v3109 = vpack.c.b16 %v3045, %v3045
  %v3110 = vpack.c.b16 %v3046, %v3046
  %v3111 = vpack.c.b16 %v3047, %v3047
  %v3112 = vpack.c.b16 %v3048, %v3048
  %3177 = vst [vmem:[%s2] sm:$0xf] %v3049
  %3178 = vst [vmem:[%s2 + $0x4] sm:$0xf] %v3050
  %3179 = vst [vmem:[%s2 + $0x8] sm:$0xf] %v3051
  %3180 = vst [vmem:[%s2 + $0xc] sm:$0xf] %v3052
  %3181 = vst [vmem:[%s2 + $0x10] sm:$0xf] %v3053
  %3182 = vst [vmem:[%s2 + $0x14] sm:$0xf] %v3054
  %3183 = vst [vmem:[%s2 + $0x18] sm:$0xf] %v3055
  %3184 = vst [vmem:[%s2 + $0x1c] sm:$0xf] %v3056
  %3185 = vst [vmem:[%s2 + $0x20] sm:$0xf] %v3057
  %3186 = vst [vmem:[%s2 + $0x24] sm:$0xf] %v3058
  %3187 = vst [vmem:[%s2 + $0x28] sm:$0xf] %v3059
  %3188 = vst [vmem:[%s2 + $0x2c] sm:$0xf] %v3060
  %3189 = vst [vmem:[%s2 + $0x30] sm:$0xf] %v3061
  %3190 = vst [vmem:[%s2 + $0x34] sm:$0xf] %v3062
  %3191 = vst [vmem:[%s2 + $0x38] sm:$0xf] %v3063
  %3192 = vst [vmem:[%s2 + $0x3c] sm:$0xf] %v3064
  %3193 = vst [vmem:[%s2 + $0x40] sm:$0xf] %v3065
  %3194 = vst [vmem:[%s2 + $0x44] sm:$0xf] %v3066
  %3195 = vst [vmem:[%s2 + $0x48] sm:$0xf] %v3067
  %3196 = vst [vmem:[%s2 + $0x4c] sm:$0xf] %v3068
  %3197 = vst [vmem:[%s2 + $0x50] sm:$0xf] %v3069
  %3198 = vst [vmem:[%s2 + $0x54] sm:$0xf] %v3070
  %3199 = vst [vmem:[%s2 + $0x58] sm:$0xf] %v3071
  %3200 = vst [vmem:[%s2 + $0x5c] sm:$0xf] %v3072
  %3201 = vst [vmem:[%s2 + $0x60] sm:$0xf] %v3073
  %3202 = vst [vmem:[%s2 + $0x64] sm:$0xf] %v3074
  %3203 = vst [vmem:[%s2 + $0x68] sm:$0xf] %v3075
  %3204 = vst [vmem:[%s2 + $0x6c] sm:$0xf] %v3076
  %3205 = vst [vmem:[%s2 + $0x70] sm:$0xf] %v3077
  %3206 = vst [vmem:[%s2 + $0x74] sm:$0xf] %v3078
  %3207 = vst [vmem:[%s2 + $0x78] sm:$0xf] %v3079
  %3208 = vst [vmem:[%s2 + $0x7c] sm:$0xf] %v3080
  %3209 = vst [vmem:[%s2 + $0x80] sm:$0xf] %v3081
  %3210 = vst [vmem:[%s2 + $0x84] sm:$0xf] %v3082
  %3211 = vst [vmem:[%s2 + $0x88] sm:$0xf] %v3083
  %3212 = vst [vmem:[%s2 + $0x8c] sm:$0xf] %v3084
  %3213 = vst [vmem:[%s2 + $0x90] sm:$0xf] %v3085
  %3214 = vst [vmem:[%s2 + $0x94] sm:$0xf] %v3086
  %3215 = vst [vmem:[%s2 + $0x98] sm:$0xf] %v3087
  %3216 = vst [vmem:[%s2 + $0x9c] sm:$0xf] %v3088
  %3217 = vst [vmem:[%s2 + $0xa0] sm:$0xf] %v3089
  %3218 = vst [vmem:[%s2 + $0xa4] sm:$0xf] %v3090
  %3219 = vst [vmem:[%s2 + $0xa8] sm:$0xf] %v3091
  %3220 = vst [vmem:[%s2 + $0xac] sm:$0xf] %v3092
  %3221 = vst [vmem:[%s2 + $0xb0] sm:$0xf] %v3093
  %3222 = vst [vmem:[%s2 + $0xb4] sm:$0xf] %v3094
  %3223 = vst [vmem:[%s2 + $0xb8] sm:$0xf] %v3095
  %3224 = vst [vmem:[%s2 + $0xbc] sm:$0xf] %v3096
  %3225 = vst [vmem:[%s2 + $0xc0] sm:$0xf] %v3097
  %3226 = vst [vmem:[%s2 + $0xc4] sm:$0xf] %v3098
  %3227 = vst [vmem:[%s2 + $0xc8] sm:$0xf] %v3099
  %3228 = vst [vmem:[%s2 + $0xcc] sm:$0xf] %v3100
  %3229 = vst [vmem:[%s2 + $0xd0] sm:$0xf] %v3101
  %3230 = vst [vmem:[%s2 + $0xd4] sm:$0xf] %v3102
  %3231 = vst [vmem:[%s2 + $0xd8] sm:$0xf] %v3103
  %3232 = vst [vmem:[%s2 + $0xdc] sm:$0xf] %v3104
  %3233 = vst [vmem:[%s2 + $0xe0] sm:$0xf] %v3105
  %3234 = vst [vmem:[%s2 + $0xe4] sm:$0xf] %v3106
  %3235 = vst [vmem:[%s2 + $0xe8] sm:$0xf] %v3107
  %3236 = vst [vmem:[%s2 + $0xec] sm:$0xf] %v3108
  %3237 = vst [vmem:[%s2 + $0xf0] sm:$0xf] %v3109
  %3238 = vst [vmem:[%s2 + $0xf4] sm:$0xf] %v3110
  %3239 = vst [vmem:[%s2 + $0xf8] sm:$0xf] %v3111
  %3240 = vst [vmem:[%s2 + $0xfc] sm:$0xf] %v3112
  %v3241 = vadd.f32 %v2857, %v2858
  %v3242 = vadd.f32 %v3241, %v2859
  %v3243 = vadd.f32 %v3242, %v2860
  %v3244 = vadd.f32 %v3243, %v2861
  %v3245 = vadd.f32 %v3244, %v2862
  %v3246 = vadd.f32 %v3245, %v2863
  %v3247 = vadd.f32 %v3246, %v2864
  %v3248 = vadd.f32 %v3247, %v2865
  %v3249 = vadd.f32 %v3248, %v2866
  %v3250 = vadd.f32 %v3249, %v2867
  %v3251 = vadd.f32 %v3250, %v2868
  %v3252 = vadd.f32 %v3251, %v2869
  %v3253 = vadd.f32 %v3252, %v2870
  %v3254 = vadd.f32 %v3253, %v2871
  %v3255 = vadd.f32 %v3254, %v2872
  %v3256 = vadd.f32 %v3255, %v2873
  %v3257 = vadd.f32 %v3256, %v2874
  %v3258 = vadd.f32 %v3257, %v2875
  %v3259 = vadd.f32 %v3258, %v2876
  %v3260 = vadd.f32 %v3259, %v2877
  %v3261 = vadd.f32 %v3260, %v2878
  %v3262 = vadd.f32 %v3261, %v2879
  %v3263 = vadd.f32 %v3262, %v2880
  %v3264 = vadd.f32 %v3263, %v2881
  %v3265 = vadd.f32 %v3264, %v2882
  %v3266 = vadd.f32 %v3265, %v2883
  %v3267 = vadd.f32 %v3266, %v2884
  %v3268 = vadd.f32 %v3267, %v2885
  %v3269 = vadd.f32 %v3268, %v2886
  %v3270 = vadd.f32 %v3269, %v2887
  %v3271 = vadd.f32 %v3270, %v2888
  %v3272 = vadd.f32 %v3271, %v2889
  %v3273 = vadd.f32 %v3272, %v2890
  %v3274 = vadd.f32 %v3273, %v2891
  %v3275 = vadd.f32 %v3274, %v2892
  %v3276 = vadd.f32 %v3275, %v2893
  %v3277 = vadd.f32 %v3276, %v2894
  %v3278 = vadd.f32 %v3277, %v2895
  %v3279 = vadd.f32 %v3278, %v2896
  %v3280 = vadd.f32 %v3279, %v2897
  %v3281 = vadd.f32 %v3280, %v2898
  %v3282 = vadd.f32 %v3281, %v2899
  %v3283 = vadd.f32 %v3282, %v2900
  %v3284 = vadd.f32 %v3283, %v2901
  %v3285 = vadd.f32 %v3284, %v2902
  %v3286 = vadd.f32 %v3285, %v2903
  %v3287 = vadd.f32 %v3286, %v2904
  %v3288 = vadd.f32 %v3287, %v2905
  %v3289 = vadd.f32 %v3288, %v2906
  %v3290 = vadd.f32 %v3289, %v2907
  %v3291 = vadd.f32 %v3290, %v2908
  %v3292 = vadd.f32 %v3291, %v2909
  %v3293 = vadd.f32 %v3292, %v2910
  %v3294 = vadd.f32 %v3293, %v2911
  %v3295 = vadd.f32 %v3294, %v2912
  %v3296 = vadd.f32 %v3295, %v2913
  %v3297 = vadd.f32 %v3296, %v2914
  %v3298 = vadd.f32 %v3297, %v2915
  %v3299 = vadd.f32 %v3298, %v2916
  %v3300 = vadd.f32 %v3299, %v2917
  %v3301 = vadd.f32 %v3300, %v2918
  %v3302 = vadd.f32 %v3301, %v2919
  %v3303 = vadd.f32 %v3302, %v2920
  %v3304 = vrot.slane %v3303, 4
  %v3305 = vadd.f32 %v3303, %v3304
  %v3306 = vrot.slane %v3305, 2
  %v3307 = vadd.f32 %v3305, %v3306
  %v3308 = vrot.slane %v3307, 1
  %v3309 = vadd.f32 %v3307, %v3308
  %v3310 = vmul.f32 %v3309, 0.001953125
  %v3311 = vsub.f32 %v2857, %v3310
  %v3312 = vsub.f32 %v2858, %v3310
  %v3313 = vsub.f32 %v2859, %v3310
  %v3314 = vsub.f32 %v2860, %v3310
  %v3315 = vsub.f32 %v2861, %v3310
  %v3316 = vsub.f32 %v2862, %v3310
  %v3317 = vsub.f32 %v2863, %v3310
  %v3318 = vsub.f32 %v2864, %v3310
  %v3319 = vsub.f32 %v2865, %v3310
  %v3320 = vsub.f32 %v2866, %v3310
  %v3321 = vsub.f32 %v2867, %v3310
  %v3322 = vsub.f32 %v2868, %v3310
  %v3323 = vsub.f32 %v2869, %v3310
  %v3324 = vsub.f32 %v2870, %v3310
  %v3325 = vsub.f32 %v2871, %v3310
  %v3326 = vsub.f32 %v2872, %v3310
  %v3327 = vsub.f32 %v2873, %v3310
  %v3328 = vsub.f32 %v2874, %v3310
  %v3329 = vsub.f32 %v2875, %v3310
  %v3330 = vsub.f32 %v2876, %v3310
  %v3331 = vsub.f32 %v2877, %v3310
  %v3332 = vsub.f32 %v2878, %v3310
  %v3333 = vsub.f32 %v2879, %v3310
  %v3334 = vsub.f32 %v2880, %v3310
  %v3335 = vsub.f32 %v2881, %v3310
  %v3336 = vsub.f32 %v2882, %v3310
  %v3337 = vsub.f32 %v2883, %v3310
  %v3338 = vsub.f32 %v2884, %v3310
  %v3339 = vsub.f32 %v2885, %v3310
  %v3340 = vsub.f32 %v2886, %v3310
  %v3341 = vsub.f32 %v2887, %v3310
  %v3342 = vsub.f32 %v2888, %v3310
  %v3343 = vsub.f32 %v2889, %v3310
  %v3344 = vsub.f32 %v2890, %v3310
  %v3345 = vsub.f32 %v2891, %v3310
  %v3346 = vsub.f32 %v2892, %v3310
  %v3347 = vsub.f32 %v2893, %v3310
  %v3348 = vsub.f32 %v2894, %v3310
  %v3349 = vsub.f32 %v2895, %v3310
  %v3350 = vsub.f32 %v2896, %v3310
  %v3351 = vsub.f32 %v2897, %v3310
  %v3352 = vsub.f32 %v2898, %v3310
  %v3353 = vsub.f32 %v2899, %v3310
  %v3354 = vsub.f32 %v2900, %v3310
  %v3355 = vsub.f32 %v2901, %v3310
  %v3356 = vsub.f32 %v2902, %v3310
  %v3357 = vsub.f32 %v2903, %v3310
  %v3358 = vsub.f32 %v2904, %v3310
  %v3359 = vsub.f32 %v2905, %v3310
  %v3360 = vsub.f32 %v2906, %v3310
  %v3361 = vsub.f32 %v2907, %v3310
  %v3362 = vsub.f32 %v2908, %v3310
  %v3363 = vsub.f32 %v2909, %v3310
  %v3364 = vsub.f32 %v2910, %v3310
  %v3365 = vsub.f32 %v2911, %v3310
  %v3366 = vsub.f32 %v2912, %v3310
  %v3367 = vsub.f32 %v2913, %v3310
  %v3368 = vsub.f32 %v2914, %v3310
  %v3369 = vsub.f32 %v2915, %v3310
  %v3370 = vsub.f32 %v2916, %v3310
  %v3371 = vsub.f32 %v2917, %v3310
  %v3372 = vsub.f32 %v2918, %v3310
  %v3373 = vsub.f32 %v2919, %v3310
  %v3374 = vsub.f32 %v2920, %v3310
  %v3375 = vmul.f32 %v3311, %v3311
  %v3376 = vmul.f32 %v3312, %v3312
  %v3377 = vmul.f32 %v3313, %v3313
  %v3378 = vmul.f32 %v3314, %v3314
  %v3379 = vmul.f32 %v3315, %v3315
  %v3380 = vmul.f32 %v3316, %v3316
  %v3381 = vmul.f32 %v3317, %v3317
  %v3382 = vmul.f32 %v3318, %v3318
  %v3383 = vmul.f32 %v3319, %v3319
  %v3384 = vmul.f32 %v3320, %v3320
  %v3385 = vmul.f32 %v3321, %v3321
  %v3386 = vmul.f32 %v3322, %v3322
  %v3387 = vmul.f32 %v3323, %v3323
  %v3388 = vmul.f32 %v3324, %v3324
  %v3389 = vmul.f32 %v3325, %v3325
  %v3390 = vmul.f32 %v3326, %v3326
  %v3391 = vmul.f32 %v3327, %v3327
  %v3392 = vmul.f32 %v3328, %v3328
  %v3393 = vmul.f32 %v3329, %v3329
  %v3394 = vmul.f32 %v3330, %v3330
  %v3395 = vmul.f32 %v3331, %v3331
  %v3396 = vmul.f32 %v3332, %v3332
  %v3397 = vmul.f32 %v3333, %v3333
  %v3398 = vmul.f32 %v3334, %v3334
  %v3399 = vmul.f32 %v3335, %v3335
  %v3400 = vmul.f32 %v3336, %v3336
  %v3401 = vmul.f32 %v3337, %v3337
  %v3402 = vmul.f32 %v3338, %v3338
  %v3403 = vmul.f32 %v3339, %v3339
  %v3404 = vmul.f32 %v3340, %v3340
  %v3405 = vmul.f32 %v3341, %v3341
  %v3406 = vmul.f32 %v3342, %v3342
  %v3407 = vmul.f32 %v3343, %v3343
  %v3408 = vmul.f32 %v3344, %v3344
  %v3409 = vmul.f32 %v3345, %v3345
  %v3410 = vmul.f32 %v3346, %v3346
  %v3411 = vmul.f32 %v3347, %v3347
  %v3412 = vmul.f32 %v3348, %v3348
  %v3413 = vmul.f32 %v3349, %v3349
  %v3414 = vmul.f32 %v3350, %v3350
  %v3415 = vmul.f32 %v3351, %v3351
  %v3416 = vmul.f32 %v3352, %v3352
  %v3417 = vmul.f32 %v3353, %v3353
  %v3418 = vmul.f32 %v3354, %v3354
  %v3419 = vmul.f32 %v3355, %v3355
  %v3420 = vmul.f32 %v3356, %v3356
  %v3421 = vmul.f32 %v3357, %v3357
  %v3422 = vmul.f32 %v3358, %v3358
  %v3423 = vmul.f32 %v3359, %v3359
  %v3424 = vmul.f32 %v3360, %v3360
  %v3425 = vmul.f32 %v3361, %v3361
  %v3426 = vmul.f32 %v3362, %v3362
  %v3427 = vmul.f32 %v3363, %v3363
  %v3428 = vmul.f32 %v3364, %v3364
  %v3429 = vmul.f32 %v3365, %v3365
  %v3430 = vmul.f32 %v3366, %v3366
  %v3431 = vmul.f32 %v3367, %v3367
  %v3432 = vmul.f32 %v3368, %v3368
  %v3433 = vmul.f32 %v3369, %v3369
  %v3434 = vmul.f32 %v3370, %v3370
  %v3435 = vmul.f32 %v3371, %v3371
  %v3436 = vmul.f32 %v3372, %v3372
  %v3437 = vmul.f32 %v3373, %v3373
  %v3438 = vmul.f32 %v3374, %v3374
  %v3439 = vadd.f32 %v3375, %v3376
  %v3440 = vadd.f32 %v3439, %v3377
  %v3441 = vadd.f32 %v3440, %v3378
  %v3442 = vadd.f32 %v3441, %v3379
  %v3443 = vadd.f32 %v3442, %v3380
  %v3444 = vadd.f32 %v3443, %v3381
  %v3445 = vadd.f32 %v3444, %v3382
  %v3446 = vadd.f32 %v3445, %v3383
  %v3447 = vadd.f32 %v3446, %v3384
  %v3448 = vadd.f32 %v3447, %v3385
  %v3449 = vadd.f32 %v3448, %v3386
  %v3450 = vadd.f32 %v3449, %v3387
  %v3451 = vadd.f32 %v3450, %v3388
  %v3452 = vadd.f32 %v3451, %v3389
  %v3453 = vadd.f32 %v3452, %v3390
  %v3454 = vadd.f32 %v3453, %v3391
  %v3455 = vadd.f32 %v3454, %v3392
  %v3456 = vadd.f32 %v3455, %v3393
  %v3457 = vadd.f32 %v3456, %v3394
  %v3458 = vadd.f32 %v3457, %v3395
  %v3459 = vadd.f32 %v3458, %v3396
  %v3460 = vadd.f32 %v3459, %v3397
  %v3461 = vadd.f32 %v3460, %v3398
  %v3462 = vadd.f32 %v3461, %v3399
  %v3463 = vadd.f32 %v3462, %v3400
  %v3464 = vadd.f32 %v3463, %v3401
  %v3465 = vadd.f32 %v3464, %v3402
  %v3466 = vadd.f32 %v3465, %v3403
  %v3467 = vadd.f32 %v3466, %v3404
  %v3468 = vadd.f32 %v3467, %v3405
  %v3469 = vadd.f32 %v3468, %v3406
  %v3470 = vadd.f32 %v3469, %v3407
  %v3471 = vadd.f32 %v3470, %v3408
  %v3472 = vadd.f32 %v3471, %v3409
  %v3473 = vadd.f32 %v3472, %v3410
  %v3474 = vadd.f32 %v3473, %v3411
  %v3475 = vadd.f32 %v3474, %v3412
  %v3476 = vadd.f32 %v3475, %v3413
  %v3477 = vadd.f32 %v3476, %v3414
  %v3478 = vadd.f32 %v3477, %v3415
  %v3479 = vadd.f32 %v3478, %v3416
  %v3480 = vadd.f32 %v3479, %v3417
  %v3481 = vadd.f32 %v3480, %v3418
  %v3482 = vadd.f32 %v3481, %v3419
  %v3483 = vadd.f32 %v3482, %v3420
  %v3484 = vadd.f32 %v3483, %v3421
  %v3485 = vadd.f32 %v3484, %v3422
  %v3486 = vadd.f32 %v3485, %v3423
  %v3487 = vadd.f32 %v3486, %v3424
  %v3488 = vadd.f32 %v3487, %v3425
  %v3489 = vadd.f32 %v3488, %v3426
  %v3490 = vadd.f32 %v3489, %v3427
  %v3491 = vadd.f32 %v3490, %v3428
  %v3492 = vadd.f32 %v3491, %v3429
  %v3493 = vadd.f32 %v3492, %v3430
  %v3494 = vadd.f32 %v3493, %v3431
  %v3495 = vadd.f32 %v3494, %v3432
  %v3496 = vadd.f32 %v3495, %v3433
  %v3497 = vadd.f32 %v3496, %v3434
  %v3498 = vadd.f32 %v3497, %v3435
  %v3499 = vadd.f32 %v3498, %v3436
  %v3500 = vadd.f32 %v3499, %v3437
  %v3501 = vadd.f32 %v3500, %v3438
  %v3502 = vrot.slane %v3501, 4
  %v3503 = vadd.f32 %v3501, %v3502
  %v3504 = vrot.slane %v3503, 2
  %v3505 = vadd.f32 %v3503, %v3504
  %v3506 = vrot.slane %v3505, 1
  %v3507 = vadd.f32 %v3505, %v3506
  %3508 = vst [vmem:[%s3] sm:$0x1] %v3309
  %3509 = vst [vmem:[%s4] sm:$0x1] %v3507
  // Predicated region
  $region10: #{residual_block_pallas.3} parent=0 // pred_check
    _
  $region11: #{residual_block_pallas.3} parent=0 // pred_check_branch
    %3511 = sbr.rel (0) target = $region13
  $region12: #{residual_block_pallas.3} parent=0 // pred_region
    _
  $region13: #{residual_block_pallas.3} parent=0 // pred_fallthru
    _
  // Predicated region
  $region14: #{residual_block_pallas.3} parent=0 // pred_check
    _
  $region15: #{residual_block_pallas.3} parent=0 // pred_check_branch
    %3513 = sbr.rel (0) target = $region17
  $region16: #{residual_block_pallas.3} parent=0 // pred_region
    _
  $region17: #{residual_block_pallas.3} parent=0 // pred_fallthru
    _
  // Predicated region
  $region18: #{residual_block_pallas.3} parent=0 // pred_check
    _
  $region19: #{residual_block_pallas.3} parent=0 // pred_check_branch
    %3515 = sbr.rel (0) target = $region21
  $region20: #{residual_block_pallas.3} parent=0 // pred_region
    _
  $region21: #{residual_block_pallas.3} parent=0 // pred_fallthru
    _
  // Predicated region
  $region22: #{residual_block_pallas.3} parent=0 // pred_check
    _
  $region23: #{residual_block_pallas.3} parent=0 // pred_check_branch
    %3517 = sbr.rel (0) target = $region25
  $region24: #{residual_block_pallas.3} parent=0 // pred_region
    _
  $region25: #{residual_block_pallas.3} parent=0 // pred_fallthru
    _
  // Predicated region
  $region26: #{residual_block_pallas.3} parent=0 // pred_check
    _
  $region27: #{residual_block_pallas.3} parent=0 // pred_check_branch
    %3519 = sbr.rel (0) target = $region29
  $region28: #{residual_block_pallas.3} parent=0 // pred_region
    _
  $region29: #{residual_block_pallas.3} parent=0 // pred_fallthru
    _
  // Predicated region
  $region30: #{residual_block_pallas.3} parent=0 // pred_check
    _
  $region31: #{residual_block_pallas.3} parent=0 // pred_check_branch
    %3521 = sbr.rel (0) target = $region33
  $region32: #{residual_block_pallas.3} parent=0 // pred_region
    _
  $region33: #{residual_block_pallas.3} parent=0 // pred_fallthru
    _

// kernel: residual_block_pallas.4
$region0: #{residual_block_pallas.4}
  #allocation0 [shape = 'u32[]', space=smem, size = 0x4, offset = 0x4, fixed_abs, tag = 'smem constant byte address 0x4 - core index']
  #allocation1 [shape = 'u32[144,128]{1,0:T(1,128)}', space=vmem, size = 0x12000, scoped, tag = 'internal scratch']
  #allocation2 [shape = 'f32[2,18,18,128]{3,2,1,0:T(8,128)}', space=vmem, size = 0x6c000, scoped, tag = 'scratch operand']
  %s0 = inlined_call_operand.vmem [shape: bf16[2,16,16,128], index: 0, kind: input, shape index: {}]
  %s1 = inlined_call_operand.vmem [shape: bf16[3,384,128], index: 1, kind: input, shape index: {}]
  %s2 = inlined_call_operand.vmem [shape: f32[5,128], index: 2, kind: input, shape index: {}]
  %s3 = inlined_call_operand.vmem [shape: bf16[2,16,16,128], index: 3, kind: output, shape index: {0}]
  %s4 = inlined_call_operand.vmem [shape: f32[1,1,128], index: 4, kind: output, shape index: {1}]
  %s5 = inlined_call_operand.vmem [shape: f32[1,1,128], index: 5, kind: output, shape index: {2}]
  %6 = xla_tuple %s3, %s4, %s5
  %s7 = sld [smem:[#allocation0]]
  $region38: #{residual_block_pallas.4} parent=0
    _
  %s9 = ssub.s32 1, %s7
  %s10 = scalar_select 0, %s9, %s7
  // Predicated region
  $region2: #{residual_block_pallas.4} parent=0 // pred_check
    _
  $region3: #{residual_block_pallas.4} parent=0 // pred_check_branch
    %12 = sbr.rel (0) target = $region5
  $region4: #{residual_block_pallas.4} parent=0 // pred_region
    _
  $region5: #{residual_block_pallas.4} parent=0 // pred_fallthru
    _
  // Predicated region
  $region6: #{residual_block_pallas.4} parent=0 // pred_check
    _
  $region7: #{residual_block_pallas.4} parent=0 // pred_check_branch
    %14 = sbr.rel (0) target = $region9
  $region8: #{residual_block_pallas.4} parent=0 // pred_region
    _
  $region9: #{residual_block_pallas.4} parent=0 // pred_fallthru
    _
  // Predicated region
  $region10: #{residual_block_pallas.4} parent=0 // pred_check
    _
  $region11: #{residual_block_pallas.4} parent=0 // pred_check_branch
    %16 = sbr.rel (0) target = $region13
  $region12: #{residual_block_pallas.4} parent=0 // pred_region
    _
  $region13: #{residual_block_pallas.4} parent=0 // pred_fallthru
    _
  %v18 = vld [vmem:[%s2] sm:$0x1]
  %v19 = vld [vmem:[%s2 + $0x1] sm:$0x1]
  %v20 = vld [vmem:[%s2 + $0x2] sm:$0x1]
  %v21 = vld [vmem:[%s2 + $0x3] sm:$0x1]
  %v22 = vld [vmem:[%s2 + $0x4] sm:$0x1]
  %v23 = vld [vmem:[%s0] sm:$0xf]
  %v24 = vld [vmem:[%s0 + $0x4] sm:$0xf]
  %v25 = vld [vmem:[%s0 + $0x8] sm:$0xf]
  %v26 = vld [vmem:[%s0 + $0xc] sm:$0xf]
  %v27 = vld [vmem:[%s0 + $0x10] sm:$0xf]
  %v28 = vld [vmem:[%s0 + $0x14] sm:$0xf]
  %v29 = vld [vmem:[%s0 + $0x18] sm:$0xf]
  %v30 = vld [vmem:[%s0 + $0x1c] sm:$0xf]
  %v31 = vld [vmem:[%s0 + $0x20] sm:$0xf]
  %v32 = vld [vmem:[%s0 + $0x24] sm:$0xf]
  %v33 = vld [vmem:[%s0 + $0x28] sm:$0xf]
  %v34 = vld [vmem:[%s0 + $0x2c] sm:$0xf]
  %v35 = vld [vmem:[%s0 + $0x30] sm:$0xf]
  %v36 = vld [vmem:[%s0 + $0x34] sm:$0xf]
  %v37 = vld [vmem:[%s0 + $0x38] sm:$0xf]
  %v38 = vld [vmem:[%s0 + $0x3c] sm:$0xf]
  %v39 = vld [vmem:[%s0 + $0x40] sm:$0xf]
  %v40 = vld [vmem:[%s0 + $0x44] sm:$0xf]
  %v41 = vld [vmem:[%s0 + $0x48] sm:$0xf]
  %v42 = vld [vmem:[%s0 + $0x4c] sm:$0xf]
  %v43 = vld [vmem:[%s0 + $0x50] sm:$0xf]
  %v44 = vld [vmem:[%s0 + $0x54] sm:$0xf]
  %v45 = vld [vmem:[%s0 + $0x58] sm:$0xf]
  %v46 = vld [vmem:[%s0 + $0x5c] sm:$0xf]
  %v47 = vld [vmem:[%s0 + $0x60] sm:$0xf]
  %v48 = vld [vmem:[%s0 + $0x64] sm:$0xf]
  %v49 = vld [vmem:[%s0 + $0x68] sm:$0xf]
  %v50 = vld [vmem:[%s0 + $0x6c] sm:$0xf]
  %v51 = vld [vmem:[%s0 + $0x70] sm:$0xf]
  %v52 = vld [vmem:[%s0 + $0x74] sm:$0xf]
  %v53 = vld [vmem:[%s0 + $0x78] sm:$0xf]
  %v54 = vld [vmem:[%s0 + $0x7c] sm:$0xf]
  %v55 = vld [vmem:[%s0 + $0x80] sm:$0xf]
  %v56 = vld [vmem:[%s0 + $0x84] sm:$0xf]
  %v57 = vld [vmem:[%s0 + $0x88] sm:$0xf]
  %v58 = vld [vmem:[%s0 + $0x8c] sm:$0xf]
  %v59 = vld [vmem:[%s0 + $0x90] sm:$0xf]
  %v60 = vld [vmem:[%s0 + $0x94] sm:$0xf]
  %v61 = vld [vmem:[%s0 + $0x98] sm:$0xf]
  %v62 = vld [vmem:[%s0 + $0x9c] sm:$0xf]
  %v63 = vld [vmem:[%s0 + $0xa0] sm:$0xf]
  %v64 = vld [vmem:[%s0 + $0xa4] sm:$0xf]
  %v65 = vld [vmem:[%s0 + $0xa8] sm:$0xf]
  %v66 = vld [vmem:[%s0 + $0xac] sm:$0xf]
  %v67 = vld [vmem:[%s0 + $0xb0] sm:$0xf]
  %v68 = vld [vmem:[%s0 + $0xb4] sm:$0xf]
  %v69 = vld [vmem:[%s0 + $0xb8] sm:$0xf]
  %v70 = vld [vmem:[%s0 + $0xbc] sm:$0xf]
  %v71 = vld [vmem:[%s0 + $0xc0] sm:$0xf]
  %v72 = vld [vmem:[%s0 + $0xc4] sm:$0xf]
  %v73 = vld [vmem:[%s0 + $0xc8] sm:$0xf]
  %v74 = vld [vmem:[%s0 + $0xcc] sm:$0xf]
  %v75 = vld [vmem:[%s0 + $0xd0] sm:$0xf]
  %v76 = vld [vmem:[%s0 + $0xd4] sm:$0xf]
  %v77 = vld [vmem:[%s0 + $0xd8] sm:$0xf]
  %v78 = vld [vmem:[%s0 + $0xdc] sm:$0xf]
  %v79 = vld [vmem:[%s0 + $0xe0] sm:$0xf]
  %v80 = vld [vmem:[%s0 + $0xe4] sm:$0xf]
  %v81 = vld [vmem:[%s0 + $0xe8] sm:$0xf]
  %v82 = vld [vmem:[%s0 + $0xec] sm:$0xf]
  %v83 = vld [vmem:[%s0 + $0xf0] sm:$0xf]
  %v84 = vld [vmem:[%s0 + $0xf4] sm:$0xf]
  %v85 = vld [vmem:[%s0 + $0xf8] sm:$0xf]
  %v86 = vld [vmem:[%s0 + $0xfc] sm:$0xf]
  %v87 = vunpack.c.l.bf16 %v23
  %v88 = vunpack.c.l.bf16 %v24
  %v89 = vunpack.c.l.bf16 %v25
  %v90 = vunpack.c.l.bf16 %v26
  %v91 = vunpack.c.l.bf16 %v27
  %v92 = vunpack.c.l.bf16 %v28
  %v93 = vunpack.c.l.bf16 %v29
  %v94 = vunpack.c.l.bf16 %v30
  %v95 = vunpack.c.l.bf16 %v31
  %v96 = vunpack.c.l.bf16 %v32
  %v97 = vunpack.c.l.bf16 %v33
  %v98 = vunpack.c.l.bf16 %v34
  %v99 = vunpack.c.l.bf16 %v35
  %v100 = vunpack.c.l.bf16 %v36
  %v101 = vunpack.c.l.bf16 %v37
  %v102 = vunpack.c.l.bf16 %v38
  %v103 = vunpack.c.l.bf16 %v39
  %v104 = vunpack.c.l.bf16 %v40
  %v105 = vunpack.c.l.bf16 %v41
  %v106 = vunpack.c.l.bf16 %v42
  %v107 = vunpack.c.l.bf16 %v43
  %v108 = vunpack.c.l.bf16 %v44
  %v109 = vunpack.c.l.bf16 %v45
  %v110 = vunpack.c.l.bf16 %v46
  %v111 = vunpack.c.l.bf16 %v47
  %v112 = vunpack.c.l.bf16 %v48
  %v113 = vunpack.c.l.bf16 %v49
  %v114 = vunpack.c.l.bf16 %v50
  %v115 = vunpack.c.l.bf16 %v51
  %v116 = vunpack.c.l.bf16 %v52
  %v117 = vunpack.c.l.bf16 %v53
  %v118 = vunpack.c.l.bf16 %v54
  %v119 = vunpack.c.l.bf16 %v55
  %v120 = vunpack.c.l.bf16 %v56
  %v121 = vunpack.c.l.bf16 %v57
  %v122 = vunpack.c.l.bf16 %v58
  %v123 = vunpack.c.l.bf16 %v59
  %v124 = vunpack.c.l.bf16 %v60
  %v125 = vunpack.c.l.bf16 %v61
  %v126 = vunpack.c.l.bf16 %v62
  %v127 = vunpack.c.l.bf16 %v63
  %v128 = vunpack.c.l.bf16 %v64
  %v129 = vunpack.c.l.bf16 %v65
  %v130 = vunpack.c.l.bf16 %v66
  %v131 = vunpack.c.l.bf16 %v67
  %v132 = vunpack.c.l.bf16 %v68
  %v133 = vunpack.c.l.bf16 %v69
  %v134 = vunpack.c.l.bf16 %v70
  %v135 = vunpack.c.l.bf16 %v71
  %v136 = vunpack.c.l.bf16 %v72
  %v137 = vunpack.c.l.bf16 %v73
  %v138 = vunpack.c.l.bf16 %v74
  %v139 = vunpack.c.l.bf16 %v75
  %v140 = vunpack.c.l.bf16 %v76
  %v141 = vunpack.c.l.bf16 %v77
  %v142 = vunpack.c.l.bf16 %v78
  %v143 = vunpack.c.l.bf16 %v79
  %v144 = vunpack.c.l.bf16 %v80
  %v145 = vunpack.c.l.bf16 %v81
  %v146 = vunpack.c.l.bf16 %v82
  %v147 = vunpack.c.l.bf16 %v83
  %v148 = vunpack.c.l.bf16 %v84
  %v149 = vunpack.c.l.bf16 %v85
  %v150 = vunpack.c.l.bf16 %v86
  %v151 = vlaneseq
  %v152 = vshrl.u32 %v151, 7
  %v153 = vsub.s32 0, %v152
  %v154 = vrot.slane %v18, %v153
  %v155 = vsub.f32 %v87, %v154
  %v156 = vsub.f32 %v88, %v154
  %v157 = vsub.f32 %v89, %v154
  %v158 = vsub.f32 %v90, %v154
  %v159 = vsub.f32 %v91, %v154
  %v160 = vsub.f32 %v92, %v154
  %v161 = vsub.f32 %v93, %v154
  %v162 = vsub.f32 %v94, %v154
  %v163 = vsub.f32 %v95, %v154
  %v164 = vsub.f32 %v96, %v154
  %v165 = vsub.f32 %v97, %v154
  %v166 = vsub.f32 %v98, %v154
  %v167 = vsub.f32 %v99, %v154
  %v168 = vsub.f32 %v100, %v154
  %v169 = vsub.f32 %v101, %v154
  %v170 = vsub.f32 %v102, %v154
  %v171 = vsub.f32 %v103, %v154
  %v172 = vsub.f32 %v104, %v154
  %v173 = vsub.f32 %v105, %v154
  %v174 = vsub.f32 %v106, %v154
  %v175 = vsub.f32 %v107, %v154
  %v176 = vsub.f32 %v108, %v154
  %v177 = vsub.f32 %v109, %v154
  %v178 = vsub.f32 %v110, %v154
  %v179 = vsub.f32 %v111, %v154
  %v180 = vsub.f32 %v112, %v154
  %v181 = vsub.f32 %v113, %v154
  %v182 = vsub.f32 %v114, %v154
  %v183 = vsub.f32 %v115, %v154
  %v184 = vsub.f32 %v116, %v154
  %v185 = vsub.f32 %v117, %v154
  %v186 = vsub.f32 %v118, %v154
  %v187 = vsub.f32 %v119, %v154
  %v188 = vsub.f32 %v120, %v154
  %v189 = vsub.f32 %v121, %v154
  %v190 = vsub.f32 %v122, %v154
  %v191 = vsub.f32 %v123, %v154
  %v192 = vsub.f32 %v124, %v154
  %v193 = vsub.f32 %v125, %v154
  %v194 = vsub.f32 %v126, %v154
  %v195 = vsub.f32 %v127, %v154
  %v196 = vsub.f32 %v128, %v154
  %v197 = vsub.f32 %v129, %v154
  %v198 = vsub.f32 %v130, %v154
  %v199 = vsub.f32 %v131, %v154
  %v200 = vsub.f32 %v132, %v154
  %v201 = vsub.f32 %v133, %v154
  %v202 = vsub.f32 %v134, %v154
  %v203 = vsub.f32 %v135, %v154
  %v204 = vsub.f32 %v136, %v154
  %v205 = vsub.f32 %v137, %v154
  %v206 = vsub.f32 %v138, %v154
  %v207 = vsub.f32 %v139, %v154
  %v208 = vsub.f32 %v140, %v154
  %v209 = vsub.f32 %v141, %v154
  %v210 = vsub.f32 %v142, %v154
  %v211 = vsub.f32 %v143, %v154
  %v212 = vsub.f32 %v144, %v154
  %v213 = vsub.f32 %v145, %v154
  %v214 = vsub.f32 %v146, %v154
  %v215 = vsub.f32 %v147, %v154
  %v216 = vsub.f32 %v148, %v154
  %v217 = vsub.f32 %v149, %v154
  %v218 = vsub.f32 %v150, %v154
  %v219 = vlaneseq
  %v220 = vshrl.u32 %v219, 7
  %v221 = vsub.s32 0, %v220
  %v222 = vrot.slane %v19, %v221
  %v223 = vmul.f32 %v155, %v222
  %v224 = vmul.f32 %v156, %v222
  %v225 = vmul.f32 %v157, %v222
  %v226 = vmul.f32 %v158, %v222
  %v227 = vmul.f32 %v159, %v222
  %v228 = vmul.f32 %v160, %v222
  %v229 = vmul.f32 %v161, %v222
  %v230 = vmul.f32 %v162, %v222
  %v231 = vmul.f32 %v163, %v222
  %v232 = vmul.f32 %v164, %v222
  %v233 = vmul.f32 %v165, %v222
  %v234 = vmul.f32 %v166, %v222
  %v235 = vmul.f32 %v167, %v222
  %v236 = vmul.f32 %v168, %v222
  %v237 = vmul.f32 %v169, %v222
  %v238 = vmul.f32 %v170, %v222
  %v239 = vmul.f32 %v171, %v222
  %v240 = vmul.f32 %v172, %v222
  %v241 = vmul.f32 %v173, %v222
  %v242 = vmul.f32 %v174, %v222
  %v243 = vmul.f32 %v175, %v222
  %v244 = vmul.f32 %v176, %v222
  %v245 = vmul.f32 %v177, %v222
  %v246 = vmul.f32 %v178, %v222
  %v247 = vmul.f32 %v179, %v222
  %v248 = vmul.f32 %v180, %v222
  %v249 = vmul.f32 %v181, %v222
  %v250 = vmul.f32 %v182, %v222
  %v251 = vmul.f32 %v183, %v222
  %v252 = vmul.f32 %v184, %v222
  %v253 = vmul.f32 %v185, %v222
  %v254 = vmul.f32 %v186, %v222
  %v255 = vmul.f32 %v187, %v222
  %v256 = vmul.f32 %v188, %v222
  %v257 = vmul.f32 %v189, %v222
  %v258 = vmul.f32 %v190, %v222
  %v259 = vmul.f32 %v191, %v222
  %v260 = vmul.f32 %v192, %v222
  %v261 = vmul.f32 %v193, %v222
  %v262 = vmul.f32 %v194, %v222
  %v263 = vmul.f32 %v195, %v222
  %v264 = vmul.f32 %v196, %v222
  %v265 = vmul.f32 %v197, %v222
  %v266 = vmul.f32 %v198, %v222
  %v267 = vmul.f32 %v199, %v222
  %v268 = vmul.f32 %v200, %v222
  %v269 = vmul.f32 %v201, %v222
  %v270 = vmul.f32 %v202, %v222
  %v271 = vmul.f32 %v203, %v222
  %v272 = vmul.f32 %v204, %v222
  %v273 = vmul.f32 %v205, %v222
  %v274 = vmul.f32 %v206, %v222
  %v275 = vmul.f32 %v207, %v222
  %v276 = vmul.f32 %v208, %v222
  %v277 = vmul.f32 %v209, %v222
  %v278 = vmul.f32 %v210, %v222
  %v279 = vmul.f32 %v211, %v222
  %v280 = vmul.f32 %v212, %v222
  %v281 = vmul.f32 %v213, %v222
  %v282 = vmul.f32 %v214, %v222
  %v283 = vmul.f32 %v215, %v222
  %v284 = vmul.f32 %v216, %v222
  %v285 = vmul.f32 %v217, %v222
  %v286 = vmul.f32 %v218, %v222
  %v287 = vlaneseq
  %v288 = vshrl.u32 %v287, 7
  %v289 = vsub.s32 0, %v288
  %v290 = vrot.slane %v20, %v289
  %v291 = vmul.f32 %v223, %v290
  %v292 = vmul.f32 %v224, %v290
  %v293 = vmul.f32 %v225, %v290
  %v294 = vmul.f32 %v226, %v290
  %v295 = vmul.f32 %v227, %v290
  %v296 = vmul.f32 %v228, %v290
  %v297 = vmul.f32 %v229, %v290
  %v298 = vmul.f32 %v230, %v290
  %v299 = vmul.f32 %v231, %v290
  %v300 = vmul.f32 %v232, %v290
  %v301 = vmul.f32 %v233, %v290
  %v302 = vmul.f32 %v234, %v290
  %v303 = vmul.f32 %v235, %v290
  %v304 = vmul.f32 %v236, %v290
  %v305 = vmul.f32 %v237, %v290
  %v306 = vmul.f32 %v238, %v290
  %v307 = vmul.f32 %v239, %v290
  %v308 = vmul.f32 %v240, %v290
  %v309 = vmul.f32 %v241, %v290
  %v310 = vmul.f32 %v242, %v290
  %v311 = vmul.f32 %v243, %v290
  %v312 = vmul.f32 %v244, %v290
  %v313 = vmul.f32 %v245, %v290
  %v314 = vmul.f32 %v246, %v290
  %v315 = vmul.f32 %v247, %v290
  %v316 = vmul.f32 %v248, %v290
  %v317 = vmul.f32 %v249, %v290
  %v318 = vmul.f32 %v250, %v290
  %v319 = vmul.f32 %v251, %v290
  %v320 = vmul.f32 %v252, %v290
  %v321 = vmul.f32 %v253, %v290
  %v322 = vmul.f32 %v254, %v290
  %v323 = vmul.f32 %v255, %v290
  %v324 = vmul.f32 %v256, %v290
  %v325 = vmul.f32 %v257, %v290
  %v326 = vmul.f32 %v258, %v290
  %v327 = vmul.f32 %v259, %v290
  %v328 = vmul.f32 %v260, %v290
  %v329 = vmul.f32 %v261, %v290
  %v330 = vmul.f32 %v262, %v290
  %v331 = vmul.f32 %v263, %v290
  %v332 = vmul.f32 %v264, %v290
  %v333 = vmul.f32 %v265, %v290
  %v334 = vmul.f32 %v266, %v290
  %v335 = vmul.f32 %v267, %v290
  %v336 = vmul.f32 %v268, %v290
  %v337 = vmul.f32 %v269, %v290
  %v338 = vmul.f32 %v270, %v290
  %v339 = vmul.f32 %v271, %v290
  %v340 = vmul.f32 %v272, %v290
  %v341 = vmul.f32 %v273, %v290
  %v342 = vmul.f32 %v274, %v290
  %v343 = vmul.f32 %v275, %v290
  %v344 = vmul.f32 %v276, %v290
  %v345 = vmul.f32 %v277, %v290
  %v346 = vmul.f32 %v278, %v290
  %v347 = vmul.f32 %v279, %v290
  %v348 = vmul.f32 %v280, %v290
  %v349 = vmul.f32 %v281, %v290
  %v350 = vmul.f32 %v282, %v290
  %v351 = vmul.f32 %v283, %v290
  %v352 = vmul.f32 %v284, %v290
  %v353 = vmul.f32 %v285, %v290
  %v354 = vmul.f32 %v286, %v290
  %v355 = vlaneseq
  %v356 = vshrl.u32 %v355, 7
  %v357 = vsub.s32 0, %v356
  %v358 = vrot.slane %v21, %v357
  %v359 = vadd.f32 %v291, %v358
  %v360 = vadd.f32 %v292, %v358
  %v361 = vadd.f32 %v293, %v358
  %v362 = vadd.f32 %v294, %v358
  %v363 = vadd.f32 %v295, %v358
  %v364 = vadd.f32 %v296, %v358
  %v365 = vadd.f32 %v297, %v358
  %v366 = vadd.f32 %v298, %v358
  %v367 = vadd.f32 %v299, %v358
  %v368 = vadd.f32 %v300, %v358
  %v369 = vadd.f32 %v301, %v358
  %v370 = vadd.f32 %v302, %v358
  %v371 = vadd.f32 %v303, %v358
  %v372 = vadd.f32 %v304, %v358
  %v373 = vadd.f32 %v305, %v358
  %v374 = vadd.f32 %v306, %v358
  %v375 = vadd.f32 %v307, %v358
  %v376 = vadd.f32 %v308, %v358
  %v377 = vadd.f32 %v309, %v358
  %v378 = vadd.f32 %v310, %v358
  %v379 = vadd.f32 %v311, %v358
  %v380 = vadd.f32 %v312, %v358
  %v381 = vadd.f32 %v313, %v358
  %v382 = vadd.f32 %v314, %v358
  %v383 = vadd.f32 %v315, %v358
  %v384 = vadd.f32 %v316, %v358
  %v385 = vadd.f32 %v317, %v358
  %v386 = vadd.f32 %v318, %v358
  %v387 = vadd.f32 %v319, %v358
  %v388 = vadd.f32 %v320, %v358
  %v389 = vadd.f32 %v321, %v358
  %v390 = vadd.f32 %v322, %v358
  %v391 = vadd.f32 %v323, %v358
  %v392 = vadd.f32 %v324, %v358
  %v393 = vadd.f32 %v325, %v358
  %v394 = vadd.f32 %v326, %v358
  %v395 = vadd.f32 %v327, %v358
  %v396 = vadd.f32 %v328, %v358
  %v397 = vadd.f32 %v329, %v358
  %v398 = vadd.f32 %v330, %v358
  %v399 = vadd.f32 %v331, %v358
  %v400 = vadd.f32 %v332, %v358
  %v401 = vadd.f32 %v333, %v358
  %v402 = vadd.f32 %v334, %v358
  %v403 = vadd.f32 %v335, %v358
  %v404 = vadd.f32 %v336, %v358
  %v405 = vadd.f32 %v337, %v358
  %v406 = vadd.f32 %v338, %v358
  %v407 = vadd.f32 %v339, %v358
  %v408 = vadd.f32 %v340, %v358
  %v409 = vadd.f32 %v341, %v358
  %v410 = vadd.f32 %v342, %v358
  %v411 = vadd.f32 %v343, %v358
  %v412 = vadd.f32 %v344, %v358
  %v413 = vadd.f32 %v345, %v358
  %v414 = vadd.f32 %v346, %v358
  %v415 = vadd.f32 %v347, %v358
  %v416 = vadd.f32 %v348, %v358
  %v417 = vadd.f32 %v349, %v358
  %v418 = vadd.f32 %v350, %v358
  %v419 = vadd.f32 %v351, %v358
  %v420 = vadd.f32 %v352, %v358
  %v421 = vadd.f32 %v353, %v358
  %v422 = vadd.f32 %v354, %v358
  %vm423 = vcmp.gt.f32.partialorder %v359, 0.0
  %vm424 = vcmp.gt.f32.partialorder %v360, 0.0
  %vm425 = vcmp.gt.f32.partialorder %v361, 0.0
  %vm426 = vcmp.gt.f32.partialorder %v362, 0.0
  %vm427 = vcmp.gt.f32.partialorder %v363, 0.0
  %vm428 = vcmp.gt.f32.partialorder %v364, 0.0
  %vm429 = vcmp.gt.f32.partialorder %v365, 0.0
  %vm430 = vcmp.gt.f32.partialorder %v366, 0.0
  %vm431 = vcmp.gt.f32.partialorder %v367, 0.0
  %vm432 = vcmp.gt.f32.partialorder %v368, 0.0
  %vm433 = vcmp.gt.f32.partialorder %v369, 0.0
  %vm434 = vcmp.gt.f32.partialorder %v370, 0.0
  %vm435 = vcmp.gt.f32.partialorder %v371, 0.0
  %vm436 = vcmp.gt.f32.partialorder %v372, 0.0
  %vm437 = vcmp.gt.f32.partialorder %v373, 0.0
  %vm438 = vcmp.gt.f32.partialorder %v374, 0.0
  %vm439 = vcmp.gt.f32.partialorder %v375, 0.0
  %vm440 = vcmp.gt.f32.partialorder %v376, 0.0
  %vm441 = vcmp.gt.f32.partialorder %v377, 0.0
  %vm442 = vcmp.gt.f32.partialorder %v378, 0.0
  %vm443 = vcmp.gt.f32.partialorder %v379, 0.0
  %vm444 = vcmp.gt.f32.partialorder %v380, 0.0
  %vm445 = vcmp.gt.f32.partialorder %v381, 0.0
  %vm446 = vcmp.gt.f32.partialorder %v382, 0.0
  %vm447 = vcmp.gt.f32.partialorder %v383, 0.0
  %vm448 = vcmp.gt.f32.partialorder %v384, 0.0
  %vm449 = vcmp.gt.f32.partialorder %v385, 0.0
  %vm450 = vcmp.gt.f32.partialorder %v386, 0.0
  %vm451 = vcmp.gt.f32.partialorder %v387, 0.0
  %vm452 = vcmp.gt.f32.partialorder %v388, 0.0
  %vm453 = vcmp.gt.f32.partialorder %v389, 0.0
  %vm454 = vcmp.gt.f32.partialorder %v390, 0.0
  %vm455 = vcmp.gt.f32.partialorder %v391, 0.0
  %vm456 = vcmp.gt.f32.partialorder %v392, 0.0
  %vm457 = vcmp.gt.f32.partialorder %v393, 0.0
  %vm458 = vcmp.gt.f32.partialorder %v394, 0.0
  %vm459 = vcmp.gt.f32.partialorder %v395, 0.0
  %vm460 = vcmp.gt.f32.partialorder %v396, 0.0
  %vm461 = vcmp.gt.f32.partialorder %v397, 0.0
  %vm462 = vcmp.gt.f32.partialorder %v398, 0.0
  %vm463 = vcmp.gt.f32.partialorder %v399, 0.0
  %vm464 = vcmp.gt.f32.partialorder %v400, 0.0
  %vm465 = vcmp.gt.f32.partialorder %v401, 0.0
  %vm466 = vcmp.gt.f32.partialorder %v402, 0.0
  %vm467 = vcmp.gt.f32.partialorder %v403, 0.0
  %vm468 = vcmp.gt.f32.partialorder %v404, 0.0
  %vm469 = vcmp.gt.f32.partialorder %v405, 0.0
  %vm470 = vcmp.gt.f32.partialorder %v406, 0.0
  %vm471 = vcmp.gt.f32.partialorder %v407, 0.0
  %vm472 = vcmp.gt.f32.partialorder %v408, 0.0
  %vm473 = vcmp.gt.f32.partialorder %v409, 0.0
  %vm474 = vcmp.gt.f32.partialorder %v410, 0.0
  %vm475 = vcmp.gt.f32.partialorder %v411, 0.0
  %vm476 = vcmp.gt.f32.partialorder %v412, 0.0
  %vm477 = vcmp.gt.f32.partialorder %v413, 0.0
  %vm478 = vcmp.gt.f32.partialorder %v414, 0.0
  %vm479 = vcmp.gt.f32.partialorder %v415, 0.0
  %vm480 = vcmp.gt.f32.partialorder %v416, 0.0
  %vm481 = vcmp.gt.f32.partialorder %v417, 0.0
  %vm482 = vcmp.gt.f32.partialorder %v418, 0.0
  %vm483 = vcmp.gt.f32.partialorder %v419, 0.0
  %vm484 = vcmp.gt.f32.partialorder %v420, 0.0
  %vm485 = vcmp.gt.f32.partialorder %v421, 0.0
  %vm486 = vcmp.gt.f32.partialorder %v422, 0.0
  %v487 = vlaneseq
  %v488 = vshrl.u32 %v487, 7
  %v489 = vsub.s32 0, %v488
  %v490 = vrot.slane %v22, %v489
  %v491 = vmul.f32 %v490, %v359
  %v492 = vmul.f32 %v490, %v360
  %v493 = vmul.f32 %v490, %v361
  %v494 = vmul.f32 %v490, %v362
  %v495 = vmul.f32 %v490, %v363
  %v496 = vmul.f32 %v490, %v364
  %v497 = vmul.f32 %v490, %v365
  %v498 = vmul.f32 %v490, %v366
  %v499 = vmul.f32 %v490, %v367
  %v500 = vmul.f32 %v490, %v368
  %v501 = vmul.f32 %v490, %v369
  %v502 = vmul.f32 %v490, %v370
  %v503 = vmul.f32 %v490, %v371
  %v504 = vmul.f32 %v490, %v372
  %v505 = vmul.f32 %v490, %v373
  %v506 = vmul.f32 %v490, %v374
  %v507 = vmul.f32 %v490, %v375
  %v508 = vmul.f32 %v490, %v376
  %v509 = vmul.f32 %v490, %v377
  %v510 = vmul.f32 %v490, %v378
  %v511 = vmul.f32 %v490, %v379
  %v512 = vmul.f32 %v490, %v380
  %v513 = vmul.f32 %v490, %v381
  %v514 = vmul.f32 %v490, %v382
  %v515 = vmul.f32 %v490, %v383
  %v516 = vmul.f32 %v490, %v384
  %v517 = vmul.f32 %v490, %v385
  %v518 = vmul.f32 %v490, %v386
  %v519 = vmul.f32 %v490, %v387
  %v520 = vmul.f32 %v490, %v388
  %v521 = vmul.f32 %v490, %v389
  %v522 = vmul.f32 %v490, %v390
  %v523 = vmul.f32 %v490, %v391
  %v524 = vmul.f32 %v490, %v392
  %v525 = vmul.f32 %v490, %v393
  %v526 = vmul.f32 %v490, %v394
  %v527 = vmul.f32 %v490, %v395
  %v528 = vmul.f32 %v490, %v396
  %v529 = vmul.f32 %v490, %v397
  %v530 = vmul.f32 %v490, %v398
  %v531 = vmul.f32 %v490, %v399
  %v532 = vmul.f32 %v490, %v400
  %v533 = vmul.f32 %v490, %v401
  %v534 = vmul.f32 %v490, %v402
  %v535 = vmul.f32 %v490, %v403
  %v536 = vmul.f32 %v490, %v404
  %v537 = vmul.f32 %v490, %v405
  %v538 = vmul.f32 %v490, %v406
  %v539 = vmul.f32 %v490, %v407
  %v540 = vmul.f32 %v490, %v408
  %v541 = vmul.f32 %v490, %v409
  %v542 = vmul.f32 %v490, %v410
  %v543 = vmul.f32 %v490, %v411
  %v544 = vmul.f32 %v490, %v412
  %v545 = vmul.f32 %v490, %v413
  %v546 = vmul.f32 %v490, %v414
  %v547 = vmul.f32 %v490, %v415
  %v548 = vmul.f32 %v490, %v416
  %v549 = vmul.f32 %v490, %v417
  %v550 = vmul.f32 %v490, %v418
  %v551 = vmul.f32 %v490, %v419
  %v552 = vmul.f32 %v490, %v420
  %v553 = vmul.f32 %v490, %v421
  %v554 = vmul.f32 %v490, %v422
  %v555 = vsel %vm423, %v359, %v491
  %v556 = vsel %vm424, %v360, %v492
  %v557 = vsel %vm425, %v361, %v493
  %v558 = vsel %vm426, %v362, %v494
  %v559 = vsel %vm427, %v363, %v495
  %v560 = vsel %vm428, %v364, %v496
  %v561 = vsel %vm429, %v365, %v497
  %v562 = vsel %vm430, %v366, %v498
  %v563 = vsel %vm431, %v367, %v499
  %v564 = vsel %vm432, %v368, %v500
  %v565 = vsel %vm433, %v369, %v501
  %v566 = vsel %vm434, %v370, %v502
  %v567 = vsel %vm435, %v371, %v503
  %v568 = vsel %vm436, %v372, %v504
  %v569 = vsel %vm437, %v373, %v505
  %v570 = vsel %vm438, %v374, %v506
  %v571 = vsel %vm439, %v375, %v507
  %v572 = vsel %vm440, %v376, %v508
  %v573 = vsel %vm441, %v377, %v509
  %v574 = vsel %vm442, %v378, %v510
  %v575 = vsel %vm443, %v379, %v511
  %v576 = vsel %vm444, %v380, %v512
  %v577 = vsel %vm445, %v381, %v513
  %v578 = vsel %vm446, %v382, %v514
  %v579 = vsel %vm447, %v383, %v515
  %v580 = vsel %vm448, %v384, %v516
  %v581 = vsel %vm449, %v385, %v517
  %v582 = vsel %vm450, %v386, %v518
  %v583 = vsel %vm451, %v387, %v519
  %v584 = vsel %vm452, %v388, %v520
  %v585 = vsel %vm453, %v389, %v521
  %v586 = vsel %vm454, %v390, %v522
  %v587 = vsel %vm455, %v391, %v523
  %v588 = vsel %vm456, %v392, %v524
  %v589 = vsel %vm457, %v393, %v525
  %v590 = vsel %vm458, %v394, %v526
  %v591 = vsel %vm459, %v395, %v527
  %v592 = vsel %vm460, %v396, %v528
  %v593 = vsel %vm461, %v397, %v529
  %v594 = vsel %vm462, %v398, %v530
  %v595 = vsel %vm463, %v399, %v531
  %v596 = vsel %vm464, %v400, %v532
  %v597 = vsel %vm465, %v401, %v533
  %v598 = vsel %vm466, %v402, %v534
  %v599 = vsel %vm467, %v403, %v535
  %v600 = vsel %vm468, %v404, %v536
  %v601 = vsel %vm469, %v405, %v537
  %v602 = vsel %vm470, %v406, %v538
  %v603 = vsel %vm471, %v407, %v539
  %v604 = vsel %vm472, %v408, %v540
  %v605 = vsel %vm473, %v409, %v541
  %v606 = vsel %vm474, %v410, %v542
  %v607 = vsel %vm475, %v411, %v543
  %v608 = vsel %vm476, %v412, %v544
  %v609 = vsel %vm477, %v413, %v545
  %v610 = vsel %vm478, %v414, %v546
  %v611 = vsel %vm479, %v415, %v547
  %v612 = vsel %vm480, %v416, %v548
  %v613 = vsel %vm481, %v417, %v549
  %v614 = vsel %vm482, %v418, %v550
  %v615 = vsel %vm483, %v419, %v551
  %v616 = vsel %vm484, %v420, %v552
  %v617 = vsel %vm485, %v421, %v553
  %v618 = vsel %vm486, %v422, %v554
  %619 = vst [vmem:[#allocation2] sm:$0xff] 0.0
  %620 = vst [vmem:[#allocation2 + $0x8] sm:$0xff] 0.0
  %621 = vst [vmem:[#allocation2 + $0x10] sm:$0x3] 0.0
  %622 = vst [vmem:[#allocation2 + $0x1b0] sm:$0xff] 0.0
  %623 = vst [vmem:[#allocation2 + $0x1b8] sm:$0xff] 0.0
  %624 = vst [vmem:[#allocation2 + $0x1c0] sm:$0x3] 0.0
  %s625 = scalar_lea.vmem [#allocation2], 408
  %626 = vst [vmem:[%s625] sm:$0xff] 0.0
  %627 = vst [vmem:[%s625 + $0x8] sm:$0xff] 0.0
  %628 = vst [vmem:[%s625 + $0x10] sm:$0x3] 0.0
  %629 = vst [vmem:[%s625 + $0x1b0] sm:$0xff] 0.0
  %630 = vst [vmem:[%s625 + $0x1b8] sm:$0xff] 0.0
  %631 = vst [vmem:[%s625 + $0x1c0] sm:$0x3] 0.0
  %s632 = scalar_lea.vmem [#allocation2], 24
  %633 = vst [vmem:[%s632] sm:$0x1] 0.0
  %634 = vst [vmem:[%s632 + $0x18] sm:$0x1] 0.0
  %635 = vst [vmem:[%s632 + $0x30] sm:$0x1] 0.0
  %636 = vst [vmem:[%s632 + $0x48] sm:$0x1] 0.0
  %637 = vst [vmem:[%s632 + $0x60] sm:$0x1] 0.0
  %638 = vst [vmem:[%s632 + $0x78] sm:$0x1] 0.0
  %639 = vst [vmem:[%s632 + $0x90] sm:$0x1] 0.0
  %640 = vst [vmem:[%s632 + $0xa8] sm:$0x1] 0.0
  %641 = vst [vmem:[%s632 + $0xc0] sm:$0x1] 0.0
  %642 = vst [vmem:[%s632 + $0xd8] sm:$0x1] 0.0
  %643 = vst [vmem:[%s632 + $0xf0] sm:$0x1] 0.0
  %644 = vst [vmem:[%s632 + $0x108] sm:$0x1] 0.0
  %645 = vst [vmem:[%s632 + $0x120] sm:$0x1] 0.0
  %646 = vst [vmem:[%s632 + $0x138] sm:$0x1] 0.0
  %647 = vst [vmem:[%s632 + $0x150] sm:$0x1] 0.0
  %648 = vst [vmem:[%s632 + $0x168] sm:$0x1] 0.0
  %649 = vst [vmem:[%s632 + $0x1b0] sm:$0x1] 0.0
  %650 = vst [vmem:[%s632 + $0x1c8] sm:$0x1] 0.0
  %651 = vst [vmem:[%s632 + $0x1e0] sm:$0x1] 0.0
  %652 = vst [vmem:[%s632 + $0x1f8] sm:$0x1] 0.0
  %653 = vst [vmem:[%s632 + $0x210] sm:$0x1] 0.0
  %654 = vst [vmem:[%s632 + $0x228] sm:$0x1] 0.0
  %655 = vst [vmem:[%s632 + $0x240] sm:$0x1] 0.0
  %656 = vst [vmem:[%s632 + $0x258] sm:$0x1] 0.0
  %657 = vst [vmem:[%s632 + $0x270] sm:$0x1] 0.0
  %658 = vst [vmem:[%s632 + $0x288] sm:$0x1] 0.0
  %659 = vst [vmem:[%s632 + $0x2a0] sm:$0x1] 0.0
  %660 = vst [vmem:[%s632 + $0x2b8] sm:$0x1] 0.0
  %661 = vst [vmem:[%s632 + $0x2d0] sm:$0x1] 0.0
  %662 = vst [vmem:[%s632 + $0x2e8] sm:$0x1] 0.0
  %663 = vst [vmem:[%s632 + $0x300] sm:$0x1] 0.0
  %664 = vst [vmem:[%s632 + $0x318] sm:$0x1] 0.0
  %665 = vst [vmem:[%s632 + $0x11] sm:$0x1] 0.0
  %666 = vst [vmem:[%s632 + $0x29] sm:$0x1] 0.0
  %667 = vst [vmem:[%s632 + $0x41] sm:$0x1] 0.0
  %668 = vst [vmem:[%s632 + $0x59] sm:$0x1] 0.0
  %669 = vst [vmem:[%s632 + $0x71] sm:$0x1] 0.0
  %670 = vst [vmem:[%s632 + $0x89] sm:$0x1] 0.0
  %671 = vst [vmem:[%s632 + $0xa1] sm:$0x1] 0.0
  %672 = vst [vmem:[%s632 + $0xb9] sm:$0x1] 0.0
  %673 = vst [vmem:[%s632 + $0xd1] sm:$0x1] 0.0
  %674 = vst [vmem:[%s632 + $0xe9] sm:$0x1] 0.0
  %675 = vst [vmem:[%s632 + $0x101] sm:$0x1] 0.0
  %676 = vst [vmem:[%s632 + $0x119] sm:$0x1] 0.0
  %677 = vst [vmem:[%s632 + $0x131] sm:$0x1] 0.0
  %678 = vst [vmem:[%s632 + $0x149] sm:$0x1] 0.0
  %679 = vst [vmem:[%s632 + $0x161] sm:$0x1] 0.0
  %680 = vst [vmem:[%s632 + $0x179] sm:$0x1] 0.0
  %681 = vst [vmem:[%s632 + $0x1c1] sm:$0x1] 0.0
  %682 = vst [vmem:[%s632 + $0x1d9] sm:$0x1] 0.0
  %683 = vst [vmem:[%s632 + $0x1f1] sm:$0x1] 0.0
  %684 = vst [vmem:[%s632 + $0x209] sm:$0x1] 0.0
  %685 = vst [vmem:[%s632 + $0x221] sm:$0x1] 0.0
  %686 = vst [vmem:[%s632 + $0x239] sm:$0x1] 0.0
  %687 = vst [vmem:[%s632 + $0x251] sm:$0x1] 0.0
  %688 = vst [vmem:[%s632 + $0x269] sm:$0x1] 0.0
  %689 = vst [vmem:[%s632 + $0x281] sm:$0x1] 0.0
  %690 = vst [vmem:[%s632 + $0x299] sm:$0x1] 0.0
  %691 = vst [vmem:[%s632 + $0x2b1] sm:$0x1] 0.0
  %692 = vst [vmem:[%s632 + $0x2c9] sm:$0x1] 0.0
  %693 = vst [vmem:[%s632 + $0x2e1] sm:$0x1] 0.0
  %694 = vst [vmem:[%s632 + $0x2f9] sm:$0x1] 0.0
  %695 = vst [vmem:[%s632 + $0x311] sm:$0x1] 0.0
  %696 = vst [vmem:[%s632 + $0x329] sm:$0x1] 0.0
  %697 = vst [vmem:[%s632 + $0x1] sm:$0xff] %v555
  %698 = vst [vmem:[%s632 + $0x9] sm:$0xff] %v556
  %699 = vst [vmem:[%s632 + $0x19] sm:$0xff] %v557
  %700 = vst [vmem:[%s632 + $0x21] sm:$0xff] %v558
  %701 = vst [vmem:[%s632 + $0x31] sm:$0xff] %v559
  %702 = vst [vmem:[%s632 + $0x39] sm:$0xff] %v560
  %703 = vst [vmem:[%s632 + $0x49] sm:$0xff] %v561
  %704 = vst [vmem:[%s632 + $0x51] sm:$0xff] %v562
  %705 = vst [vmem:[%s632 + $0x61] sm:$0xff] %v563
  %706 = vst [vmem:[%s632 + $0x69] sm:$0xff] %v564
  %707 = vst [vmem:[%s632 + $0x79] sm:$0xff] %v565
  %708 = vst [vmem:[%s632 + $0x81] sm:$0xff] %v566
  %709 = vst [vmem:[%s632 + $0x91] sm:$0xff] %v567
  %710 = vst [vmem:[%s632 + $0x99] sm:$0xff] %v568
  %711 = vst [vmem:[%s632 + $0xa9] sm:$0xff] %v569
  %712 = vst [vmem:[%s632 + $0xb1] sm:$0xff] %v570
  %713 = vst [vmem:[%s632 + $0xc1] sm:$0xff] %v571
  %714 = vst [vmem:[%s632 + $0xc9] sm:$0xff] %v572
  %715 = vst [vmem:[%s632 + $0xd9] sm:$0xff] %v573
  %716 = vst [vmem:[%s632 + $0xe1] sm:$0xff] %v574
  %717 = vst [vmem:[%s632 + $0xf1] sm:$0xff] %v575
  %718 = vst [vmem:[%s632 + $0xf9] sm:$0xff] %v576
  %719 = vst [vmem:[%s632 + $0x109] sm:$0xff] %v577
  %720 = vst [vmem:[%s632 + $0x111] sm:$0xff] %v578
  %721 = vst [vmem:[%s632 + $0x121] sm:$0xff] %v579
  %722 = vst [vmem:[%s632 + $0x129] sm:$0xff] %v580
  %723 = vst [vmem:[%s632 + $0x139] sm:$0xff] %v581
  %724 = vst [vmem:[%s632 + $0x141] sm:$0xff] %v582
  %725 = vst [vmem:[%s632 + $0x151] sm:$0xff] %v583
  %726 = vst [vmem:[%s632 + $0x159] sm:$0xff] %v584
  %727 = vst [vmem:[%s632 + $0x169] sm:$0xff] %v585
  %728 = vst [vmem:[%s632 + $0x171] sm:$0xff] %v586
  %729 = vst [vmem:[%s632 + $0x1b1] sm:$0xff] %v587
  %730 = vst [vmem:[%s632 + $0x1b9] sm:$0xff] %v588
  %731 = vst [vmem:[%s632 + $0x1c9] sm:$0xff] %v589
  %732 = vst [vmem:[%s632 + $0x1d1] sm:$0xff] %v590
  %733 = vst [vmem:[%s632 + $0x1e1] sm:$0xff] %v591
  %734 = vst [vmem:[%s632 + $0x1e9] sm:$0xff] %v592
  %735 = vst [vmem:[%s632 + $0x1f9] sm:$0xff] %v593
  %736 = vst [vmem:[%s632 + $0x201] sm:$0xff] %v594
  %737 = vst [vmem:[%s632 + $0x211] sm:$0xff] %v595
  %738 = vst [vmem:[%s632 + $0x219] sm:$0xff] %v596
  %739 = vst [vmem:[%s632 + $0x229] sm:$0xff] %v597
  %740 = vst [vmem:[%s632 + $0x231] sm:$0xff] %v598
  %741 = vst [vmem:[%s632 + $0x241] sm:$0xff] %v599
  %742 = vst [vmem:[%s632 + $0x249] sm:$0xff] %v600
  %743 = vst [vmem:[%s632 + $0x259] sm:$0xff] %v601
  %744 = vst [vmem:[%s632 + $0x261] sm:$0xff] %v602
  %745 = vst [vmem:[%s632 + $0x271] sm:$0xff] %v603
  %746 = vst [vmem:[%s632 + $0x279] sm:$0xff] %v604
  %747 = vst [vmem:[%s632 + $0x289] sm:$0xff] %v605
  %748 = vst [vmem:[%s632 + $0x291] sm:$0xff] %v606
  %749 = vst [vmem:[%s632 + $0x2a1] sm:$0xff] %v607
  %750 = vst [vmem:[%s632 + $0x2a9] sm:$0xff] %v608
  %751 = vst [vmem:[%s632 + $0x2b9] sm:$0xff] %v609
  %752 = vst [vmem:[%s632 + $0x2c1] sm:$0xff] %v610
  %753 = vst [vmem:[%s632 + $0x2d1] sm:$0xff] %v611
  %754 = vst [vmem:[%s632 + $0x2d9] sm:$0xff] %v612
  %755 = vst [vmem:[%s632 + $0x2e9] sm:$0xff] %v613
  %756 = vst [vmem:[%s632 + $0x2f1] sm:$0xff] %v614
  %757 = vst [vmem:[%s632 + $0x301] sm:$0xff] %v615
  %758 = vst [vmem:[%s632 + $0x309] sm:$0xff] %v616
  %759 = vst [vmem:[%s632 + $0x319] sm:$0xff] %v617
  %760 = vst [vmem:[%s632 + $0x321] sm:$0xff] %v618
  %v761 = vld [vmem:[#allocation2] sm:$0xff]
  %v762 = vld [vmem:[#allocation2 + $0x8] sm:$0xff]
  %v763 = vld [vmem:[#allocation2 + $0x18] sm:$0xff]
  %v764 = vld [vmem:[#allocation2 + $0x20] sm:$0xff]
  %v765 = vld [vmem:[#allocation2 + $0x30] sm:$0xff]
  %v766 = vld [vmem:[#allocation2 + $0x38] sm:$0xff]
  %v767 = vld [vmem:[#allocation2 + $0x48] sm:$0xff]
  %v768 = vld [vmem:[#allocation2 + $0x50] sm:$0xff]
  %v769 = vld [vmem:[#allocation2 + $0x60] sm:$0xff]
  %v770 = vld [vmem:[#allocation2 + $0x68] sm:$0xff]
  %v771 = vld [vmem:[#allocation2 + $0x78] sm:$0xff]
  %v772 = vld [vmem:[#allocation2 + $0x80] sm:$0xff]
  %v773 = vld [vmem:[#allocation2 + $0x90] sm:$0xff]
  %v774 = vld [vmem:[#allocation2 + $0x98] sm:$0xff]
  %v775 = vld [vmem:[#allocation2 + $0xa8] sm:$0xff]
  %v776 = vld [vmem:[#allocation2 + $0xb0] sm:$0xff]
  %v777 = vld [vmem:[#allocation2 + $0xc0] sm:$0xff]
  %v778 = vld [vmem:[#allocation2 + $0xc8] sm:$0xff]
  %v779 = vld [vmem:[#allocation2 + $0xd8] sm:$0xff]
  %v780 = vld [vmem:[#allocation2 + $0xe0] sm:$0xff]
  %v781 = vld [vmem:[#allocation2 + $0xf0] sm:$0xff]
  %v782 = vld [vmem:[#allocation2 + $0xf8] sm:$0xff]
  %v783 = vld [vmem:[#allocation2 + $0x108] sm:$0xff]
  %v784 = vld [vmem:[#allocation2 + $0x110] sm:$0xff]
  %v785 = vld [vmem:[#allocation2 + $0x120] sm:$0xff]
  %v786 = vld [vmem:[#allocation2 + $0x128] sm:$0xff]
  %v787 = vld [vmem:[#allocation2 + $0x138] sm:$0xff]
  %v788 = vld [vmem:[#allocation2 + $0x140] sm:$0xff]
  %v789 = vld [vmem:[#allocation2 + $0x150] sm:$0xff]
  %v790 = vld [vmem:[#allocation2 + $0x158] sm:$0xff]
  %v791 = vld [vmem:[#allocation2 + $0x168] sm:$0xff]
  %v792 = vld [vmem:[#allocation2 + $0x170] sm:$0xff]
  %v793 = vld [vmem:[#allocation2 + $0x180] sm:$0xff]
  %v794 = vld [vmem:[#allocation2 + $0x188] sm:$0xff]
  %v795 = vld [vmem:[#allocation2 + $0x198] sm:$0xff]
  %v796 = vld [vmem:[#allocation2 + $0x1a0] sm:$0xff]
  %v797 = vld [vmem:[#allocation2 + $0x1b0] sm:$0xff]
  %v798 = vld [vmem:[#allocation2 + $0x1b8] sm:$0xff]
  %v799 = vld [vmem:[#allocation2 + $0x1c8] sm:$0xff]
  %v800 = vld [vmem:[#allocation2 + $0x1d0] sm:$0xff]
  %v801 = vld [vmem:[#allocation2 + $0x1e0] sm:$0xff]
  %v802 = vld [vmem:[#allocation2 + $0x1e8] sm:$0xff]
  %v803 = vld [vmem:[#allocation2 + $0x1f8] sm:$0xff]
  %v804 = vld [vmem:[#allocation2 + $0x200] sm:$0xff]
  %v805 = vld [vmem:[#allocation2 + $0x210] sm:$0xff]
  %v806 = vld [vmem:[#allocation2 + $0x218] sm:$0xff]
  %v807 = vld [vmem:[#allocation2 + $0x228] sm:$0xff]
  %v808 = vld [vmem:[#allocation2 + $0x230] sm:$0xff]
  %v809 = vld [vmem:[#allocation2 + $0x240] sm:$0xff]
  %v810 = vld [vmem:[#allocation2 + $0x248] sm:$0xff]
  %v811 = vld [vmem:[#allocation2 + $0x258] sm:$0xff]
  %v812 = vld [vmem:[#allocation2 + $0x260] sm:$0xff]
  %v813 = vld [vmem:[#allocation2 + $0x270] sm:$0xff]
  %v814 = vld [vmem:[#allocation2 + $0x278] sm:$0xff]
  %v815 = vld [vmem:[#allocation2 + $0x288] sm:$0xff]
  %v816 = vld [vmem:[#allocation2 + $0x290] sm:$0xff]
  %v817 = vld [vmem:[#allocation2 + $0x2a0] sm:$0xff]
  %v818 = vld [vmem:[#allocation2 + $0x2a8] sm:$0xff]
  %v819 = vld [vmem:[#allocation2 + $0x2b8] sm:$0xff]
  %v820 = vld [vmem:[#allocation2 + $0x2c0] sm:$0xff]
  %v821 = vld [vmem:[#allocation2 + $0x2d0] sm:$0xff]
  %v822 = vld [vmem:[#allocation2 + $0x2d8] sm:$0xff]
  %v823 = vld [vmem:[#allocation2 + $0x2e8] sm:$0xff]
  %v824 = vld [vmem:[#allocation2 + $0x2f0] sm:$0xff]
  %v825 = vld [vmem:[#allocation2 + $0x300] sm:$0xff]
  %v826 = vld [vmem:[#allocation2 + $0x308] sm:$0xff]
  %v827 = vld [vmem:[#allocation2 + $0x318] sm:$0xff]
  %v828 = vld [vmem:[#allocation2 + $0x320] sm:$0xff]
  %v829 = vld [vmem:[#allocation2 + $0x330] sm:$0xff]
  %v830 = vld [vmem:[#allocation2 + $0x338] sm:$0xff]
  %v831 = vld [vmem:[#allocation2 + $0x348] sm:$0xff]
  %v832 = vld [vmem:[#allocation2 + $0x350] sm:$0xff]
  %v833 = vld [vmem:[#allocation2 + $0x1] sm:$0xff]
  %v834 = vld [vmem:[#allocation2 + $0x9] sm:$0xff]
  %v835 = vld [vmem:[#allocation2 + $0x19] sm:$0xff]
  %v836 = vld [vmem:[#allocation2 + $0x21] sm:$0xff]
  %v837 = vld [vmem:[#allocation2 + $0x31] sm:$0xff]
  %v838 = vld [vmem:[#allocation2 + $0x39] sm:$0xff]
  %v839 = vld [vmem:[#allocation2 + $0x49] sm:$0xff]
  %v840 = vld [vmem:[#allocation2 + $0x51] sm:$0xff]
  %v841 = vld [vmem:[#allocation2 + $0x61] sm:$0xff]
  %v842 = vld [vmem:[#allocation2 + $0x69] sm:$0xff]
  %v843 = vld [vmem:[#allocation2 + $0x79] sm:$0xff]
  %v844 = vld [vmem:[#allocation2 + $0x81] sm:$0xff]
  %v845 = vld [vmem:[#allocation2 + $0x91] sm:$0xff]
  %v846 = vld [vmem:[#allocation2 + $0x99] sm:$0xff]
  %v847 = vld [vmem:[#allocation2 + $0xa9] sm:$0xff]
  %v848 = vld [vmem:[#allocation2 + $0xb1] sm:$0xff]
  %v849 = vld [vmem:[#allocation2 + $0xc1] sm:$0xff]
  %v850 = vld [vmem:[#allocation2 + $0xc9] sm:$0xff]
  %v851 = vld [vmem:[#allocation2 + $0xd9] sm:$0xff]
  %v852 = vld [vmem:[#allocation2 + $0xe1] sm:$0xff]
  %v853 = vld [vmem:[#allocation2 + $0xf1] sm:$0xff]
  %v854 = vld [vmem:[#allocation2 + $0xf9] sm:$0xff]
  %v855 = vld [vmem:[#allocation2 + $0x109] sm:$0xff]
  %v856 = vld [vmem:[#allocation2 + $0x111] sm:$0xff]
  %v857 = vld [vmem:[#allocation2 + $0x121] sm:$0xff]
  %v858 = vld [vmem:[#allocation2 + $0x129] sm:$0xff]
  %v859 = vld [vmem:[#allocation2 + $0x139] sm:$0xff]
  %v860 = vld [vmem:[#allocation2 + $0x141] sm:$0xff]
  %v861 = vld [vmem:[#allocation2 + $0x151] sm:$0xff]
  %v862 = vld [vmem:[#allocation2 + $0x159] sm:$0xff]
  %v863 = vld [vmem:[#allocation2 + $0x169] sm:$0xff]
  %v864 = vld [vmem:[#allocation2 + $0x171] sm:$0xff]
  %v865 = vld [vmem:[#allocation2 + $0x181] sm:$0xff]
  %v866 = vld [vmem:[#allocation2 + $0x189] sm:$0xff]
  %v867 = vld [vmem:[#allocation2 + $0x199] sm:$0xff]
  %v868 = vld [vmem:[#allocation2 + $0x1a1] sm:$0xff]
  %v869 = vld [vmem:[#allocation2 + $0x1b1] sm:$0xff]
  %v870 = vld [vmem:[#allocation2 + $0x1b9] sm:$0xff]
  %v871 = vld [vmem:[#allocation2 + $0x1c9] sm:$0xff]
  %v872 = vld [vmem:[#allocation2 + $0x1d1] sm:$0xff]
  %v873 = vld [vmem:[#allocation2 + $0x1e1] sm:$0xff]
  %v874 = vld [vmem:[#allocation2 + $0x1e9] sm:$0xff]
  %v875 = vld [vmem:[#allocation2 + $0x1f9] sm:$0xff]
  %v876 = vld [vmem:[#allocation2 + $0x201] sm:$0xff]
  %v877 = vld [vmem:[#allocation2 + $0x211] sm:$0xff]
  %v878 = vld [vmem:[#allocation2 + $0x219] sm:$0xff]
  %v879 = vld [vmem:[#allocation2 + $0x229] sm:$0xff]
  %v880 = vld [vmem:[#allocation2 + $0x231] sm:$0xff]
  %v881 = vld [vmem:[#allocation2 + $0x241] sm:$0xff]
  %v882 = vld [vmem:[#allocation2 + $0x249] sm:$0xff]
  %v883 = vld [vmem:[#allocation2 + $0x259] sm:$0xff]
  %v884 = vld [vmem:[#allocation2 + $0x261] sm:$0xff]
  %v885 = vld [vmem:[#allocation2 + $0x271] sm:$0xff]
  %v886 = vld [vmem:[#allocation2 + $0x279] sm:$0xff]
  %v887 = vld [vmem:[#allocation2 + $0x289] sm:$0xff]
  %v888 = vld [vmem:[#allocation2 + $0x291] sm:$0xff]
  %v889 = vld [vmem:[#allocation2 + $0x2a1] sm:$0xff]
  %v890 = vld [vmem:[#allocation2 + $0x2a9] sm:$0xff]
  %v891 = vld [vmem:[#allocation2 + $0x2b9] sm:$0xff]
  %v892 = vld [vmem:[#allocation2 + $0x2c1] sm:$0xff]
  %v893 = vld [vmem:[#allocation2 + $0x2d1] sm:$0xff]
  %v894 = vld [vmem:[#allocation2 + $0x2d9] sm:$0xff]
  %v895 = vld [vmem:[#allocation2 + $0x2e9] sm:$0xff]
  %v896 = vld [vmem:[#allocation2 + $0x2f1] sm:$0xff]
  %v897 = vld [vmem:[#allocation2 + $0x301] sm:$0xff]
  %v898 = vld [vmem:[#allocation2 + $0x309] sm:$0xff]
  %v899 = vld [vmem:[#allocation2 + $0x319] sm:$0xff]
  %v900 = vld [vmem:[#allocation2 + $0x321] sm:$0xff]
  %v901 = vld [vmem:[#allocation2 + $0x331] sm:$0xff]
  %v902 = vld [vmem:[#allocation2 + $0x339] sm:$0xff]
  %v903 = vld [vmem:[#allocation2 + $0x349] sm:$0xff]
  %v904 = vld [vmem:[#allocation2 + $0x351] sm:$0xff]
  %v905 = vld [vmem:[#allocation2 + $0x2] sm:$0xff]
  %v906 = vld [vmem:[#allocation2 + $0xa] sm:$0xff]
  %v907 = vld [vmem:[#allocation2 + $0x1a] sm:$0xff]
  %v908 = vld [vmem:[#allocation2 + $0x22] sm:$0xff]
  %v909 = vld [vmem:[#allocation2 + $0x32] sm:$0xff]
  %v910 = vld [vmem:[#allocation2 + $0x3a] sm:$0xff]
  %v911 = vld [vmem:[#allocation2 + $0x4a] sm:$0xff]
  %v912 = vld [vmem:[#allocation2 + $0x52] sm:$0xff]
  %v913 = vld [vmem:[#allocation2 + $0x62] sm:$0xff]
  %v914 = vld [vmem:[#allocation2 + $0x6a] sm:$0xff]
  %v915 = vld [vmem:[#allocation2 + $0x7a] sm:$0xff]
  %v916 = vld [vmem:[#allocation2 + $0x82] sm:$0xff]
  %v917 = vld [vmem:[#allocation2 + $0x92] sm:$0xff]
  %v918 = vld [vmem:[#allocation2 + $0x9a] sm:$0xff]
  %v919 = vld [vmem:[#allocation2 + $0xaa] sm:$0xff]
  %v920 = vld [vmem:[#allocation2 + $0xb2] sm:$0xff]
  %v921 = vld [vmem:[#allocation2 + $0xc2] sm:$0xff]
  %v922 = vld [vmem:[#allocation2 + $0xca] sm:$0xff]
  %v923 = vld [vmem:[#allocation2 + $0xda] sm:$0xff]
  %v924 = vld [vmem:[#allocation2 + $0xe2] sm:$0xff]
  %v925 = vld [vmem:[#allocation2 + $0xf2] sm:$0xff]
  %v926 = vld [vmem:[#allocation2 + $0xfa] sm:$0xff]
  %v927 = vld [vmem:[#allocation2 + $0x10a] sm:$0xff]
  %v928 = vld [vmem:[#allocation2 + $0x112] sm:$0xff]
  %v929 = vld [vmem:[#allocation2 + $0x122] sm:$0xff]
  %v930 = vld [vmem:[#allocation2 + $0x12a] sm:$0xff]
  %v931 = vld [vmem:[#allocation2 + $0x13a] sm:$0xff]
  %v932 = vld [vmem:[#allocation2 + $0x142] sm:$0xff]
  %v933 = vld [vmem:[#allocation2 + $0x152] sm:$0xff]
  %v934 = vld [vmem:[#allocation2 + $0x15a] sm:$0xff]
  %v935 = vld [vmem:[#allocation2 + $0x16a] sm:$0xff]
  %v936 = vld [vmem:[#allocation2 + $0x172] sm:$0xff]
  %v937 = vld [vmem:[#allocation2 + $0x182] sm:$0xff]
  %v938 = vld [vmem:[#allocation2 + $0x18a] sm:$0xff]
  %v939 = vld [vmem:[#allocation2 + $0x19a] sm:$0xff]
  %v940 = vld [vmem:[#allocation2 + $0x1a2] sm:$0xff]
  %v941 = vld [vmem:[#allocation2 + $0x1b2] sm:$0xff]
  %v942 = vld [vmem:[#allocation2 + $0x1ba] sm:$0xff]
  %v943 = vld [vmem:[#allocation2 + $0x1ca] sm:$0xff]
  %v944 = vld [vmem:[#allocation2 + $0x1d2] sm:$0xff]
  %v945 = vld [vmem:[#allocation2 + $0x1e2] sm:$0xff]
  %v946 = vld [vmem:[#allocation2 + $0x1ea] sm:$0xff]
  %v947 = vld [vmem:[#allocation2 + $0x1fa] sm:$0xff]
  %v948 = vld [vmem:[#allocation2 + $0x202] sm:$0xff]
  %v949 = vld [vmem:[#allocation2 + $0x212] sm:$0xff]
  %v950 = vld [vmem:[#allocation2 + $0x21a] sm:$0xff]
  %v951 = vld [vmem:[#allocation2 + $0x22a] sm:$0xff]
  %v952 = vld [vmem:[#allocation2 + $0x232] sm:$0xff]
  %v953 = vld [vmem:[#allocation2 + $0x242] sm:$0xff]
  %v954 = vld [vmem:[#allocation2 + $0x24a] sm:$0xff]
  %v955 = vld [vmem:[#allocation2 + $0x25a] sm:$0xff]
  %v956 = vld [vmem:[#allocation2 + $0x262] sm:$0xff]
  %v957 = vld [vmem:[#allocation2 + $0x272] sm:$0xff]
  %v958 = vld [vmem:[#allocation2 + $0x27a] sm:$0xff]
  %v959 = vld [vmem:[#allocation2 + $0x28a] sm:$0xff]
  %v960 = vld [vmem:[#allocation2 + $0x292] sm:$0xff]
  %v961 = vld [vmem:[#allocation2 + $0x2a2] sm:$0xff]
  %v962 = vld [vmem:[#allocation2 + $0x2aa] sm:$0xff]
  %v963 = vld [vmem:[#allocation2 + $0x2ba] sm:$0xff]
  %v964 = vld [vmem:[#allocation2 + $0x2c2] sm:$0xff]
  %v965 = vld [vmem:[#allocation2 + $0x2d2] sm:$0xff]
  %v966 = vld [vmem:[#allocation2 + $0x2da] sm:$0xff]
  %v967 = vld [vmem:[#allocation2 + $0x2ea] sm:$0xff]
  %v968 = vld [vmem:[#allocation2 + $0x2f2] sm:$0xff]
  %v969 = vld [vmem:[#allocation2 + $0x302] sm:$0xff]
  %v970 = vld [vmem:[#allocation2 + $0x30a] sm:$0xff]
  %v971 = vld [vmem:[#allocation2 + $0x31a] sm:$0xff]
  %v972 = vld [vmem:[#allocation2 + $0x322] sm:$0xff]
  %v973 = vld [vmem:[#allocation2 + $0x332] sm:$0xff]
  %v974 = vld [vmem:[#allocation2 + $0x33a] sm:$0xff]
  %v975 = vld [vmem:[#allocation2 + $0x34a] sm:$0xff]
  %v976 = vld [vmem:[#allocation2 + $0x352] sm:$0xff]
  %v977 = vpack.c.bf16 %v762, %v761
  %v978 = vpack.c.bf16 %v834, %v833
  %v979 = vpack.c.bf16 %v906, %v905
  %v980 = vpack.c.bf16 %v764, %v763
  %v981 = vpack.c.bf16 %v836, %v835
  %v982 = vpack.c.bf16 %v908, %v907
  %v983 = vpack.c.bf16 %v766, %v765
  %v984 = vpack.c.bf16 %v838, %v837
  %v985 = vpack.c.bf16 %v910, %v909
  %v986 = vpack.c.bf16 %v768, %v767
  %v987 = vpack.c.bf16 %v840, %v839
  %v988 = vpack.c.bf16 %v912, %v911
  %v989 = vpack.c.bf16 %v770, %v769
  %v990 = vpack.c.bf16 %v842, %v841
  %v991 = vpack.c.bf16 %v914, %v913
  %v992 = vpack.c.bf16 %v772, %v771
  %v993 = vpack.c.bf16 %v844, %v843
  %v994 = vpack.c.bf16 %v916, %v915
  %v995 = vpack.c.bf16 %v774, %v773
  %v996 = vpack.c.bf16 %v846, %v845
  %v997 = vpack.c.bf16 %v918, %v917
  %v998 = vpack.c.bf16 %v776, %v775
  %v999 = vpack.c.bf16 %v848, %v847
  %v1000 = vpack.c.bf16 %v920, %v919
  %v1001 = vpack.c.bf16 %v778, %v777
  %v1002 = vpack.c.bf16 %v850, %v849
  %v1003 = vpack.c.bf16 %v922, %v921
  %v1004 = vpack.c.bf16 %v780, %v779
  %v1005 = vpack.c.bf16 %v852, %v851
  %v1006 = vpack.c.bf16 %v924, %v923
  %v1007 = vpack.c.bf16 %v782, %v781
  %v1008 = vpack.c.bf16 %v854, %v853
  %v1009 = vpack.c.bf16 %v926, %v925
  %v1010 = vpack.c.bf16 %v784, %v783
  %v1011 = vpack.c.bf16 %v856, %v855
  %v1012 = vpack.c.bf16 %v928, %v927
  %v1013 = vpack.c.bf16 %v786, %v785
  %v1014 = vpack.c.bf16 %v858, %v857
  %v1015 = vpack.c.bf16 %v930, %v929
  %v1016 = vpack.c.bf16 %v788, %v787
  %v1017 = vpack.c.bf16 %v860, %v859
  %v1018 = vpack.c.bf16 %v932, %v931
  %v1019 = vpack.c.bf16 %v790, %v789
  %v1020 = vpack.c.bf16 %v862, %v861
  %v1021 = vpack.c.bf16 %v934, %v933
  %v1022 = vpack.c.bf16 %v792, %v791
  %v1023 = vpack.c.bf16 %v864, %v863
  %v1024 = vpack.c.bf16 %v936, %v935
  %v1025 = vpack.c.bf16 %v794, %v793
  %v1026 = vpack.c.bf16 %v866, %v865
  %v1027 = vpack.c.bf16 %v938, %v937
  %v1028 = vpack.c.bf16 %v796, %v795
  %v1029 = vpack.c.bf16 %v868, %v867
  %v1030 = vpack.c.bf16 %v940, %v939
  %v1031 = vpack.c.bf16 %v798, %v797
  %v1032 = vpack.c.bf16 %v870, %v869
  %v1033 = vpack.c.bf16 %v942, %v941
  %v1034 = vpack.c.bf16 %v800, %v799
  %v1035 = vpack.c.bf16 %v872, %v871
  %v1036 = vpack.c.bf16 %v944, %v943
  %v1037 = vpack.c.bf16 %v802, %v801
  %v1038 = vpack.c.bf16 %v874, %v873
  %v1039 = vpack.c.bf16 %v946, %v945
  %v1040 = vpack.c.bf16 %v804, %v803
  %v1041 = vpack.c.bf16 %v876, %v875
  %v1042 = vpack.c.bf16 %v948, %v947
  %v1043 = vpack.c.bf16 %v806, %v805
  %v1044 = vpack.c.bf16 %v878, %v877
  %v1045 = vpack.c.bf16 %v950, %v949
  %v1046 = vpack.c.bf16 %v808, %v807
  %v1047 = vpack.c.bf16 %v880, %v879
  %v1048 = vpack.c.bf16 %v952, %v951
  %v1049 = vpack.c.bf16 %v810, %v809
  %v1050 = vpack.c.bf16 %v882, %v881
  %v1051 = vpack.c.bf16 %v954, %v953
  %v1052 = vpack.c.bf16 %v812, %v811
  %v1053 = vpack.c.bf16 %v884, %v883
  %v1054 = vpack.c.bf16 %v956, %v955
  %v1055 = vpack.c.bf16 %v814, %v813
  %v1056 = vpack.c.bf16 %v886, %v885
  %v1057 = vpack.c.bf16 %v958, %v957
  %v1058 = vpack.c.bf16 %v816, %v815
  %v1059 = vpack.c.bf16 %v888, %v887
  %v1060 = vpack.c.bf16 %v960, %v959
  %v1061 = vpack.c.bf16 %v818, %v817
  %v1062 = vpack.c.bf16 %v890, %v889
  %v1063 = vpack.c.bf16 %v962, %v961
  %v1064 = vpack.c.bf16 %v820, %v819
  %v1065 = vpack.c.bf16 %v892, %v891
  %v1066 = vpack.c.bf16 %v964, %v963
  %v1067 = vpack.c.bf16 %v822, %v821
  %v1068 = vpack.c.bf16 %v894, %v893
  %v1069 = vpack.c.bf16 %v966, %v965
  %v1070 = vpack.c.bf16 %v824, %v823
  %v1071 = vpack.c.bf16 %v896, %v895
  %v1072 = vpack.c.bf16 %v968, %v967
  %v1073 = vpack.c.bf16 %v826, %v825
  %v1074 = vpack.c.bf16 %v898, %v897
  %v1075 = vpack.c.bf16 %v970, %v969
  %v1076 = vpack.c.bf16 %v828, %v827
  %v1077 = vpack.c.bf16 %v900, %v899
  %v1078 = vpack.c.bf16 %v972, %v971
  %v1079 = vpack.c.bf16 %v830, %v829
  %v1080 = vpack.c.bf16 %v902, %v901
  %v1081 = vpack.c.bf16 %v974, %v973
  %v1082 = vpack.c.bf16 %v832, %v831
  %v1083 = vpack.c.bf16 %v904, %v903
  %v1084 = vpack.c.bf16 %v976, %v975
  %v1085 = vld [vmem:[%s1] sm:$0xf]
  %v1086 = vld [vmem:[%s1 + $0x4] sm:$0xf]
  %v1087 = vld [vmem:[%s1 + $0x8] sm:$0xf]
  %v1088 = vld [vmem:[%s1 + $0xc] sm:$0xf]
  %v1089 = vld [vmem:[%s1 + $0x10] sm:$0xf]
  %v1090 = vld [vmem:[%s1 + $0x14] sm:$0xf]
  %v1091 = vld [vmem:[%s1 + $0x18] sm:$0xf]
  %v1092 = vld [vmem:[%s1 + $0x1c] sm:$0xf]
  %v1093 = vld [vmem:[%s1 + $0x20] sm:$0xf]
  %v1094 = vld [vmem:[%s1 + $0x24] sm:$0xf]
  %v1095 = vld [vmem:[%s1 + $0x28] sm:$0xf]
  %v1096 = vld [vmem:[%s1 + $0x2c] sm:$0xf]
  %v1097 = vld [vmem:[%s1 + $0x30] sm:$0xf]
  %v1098 = vld [vmem:[%s1 + $0x34] sm:$0xf]
  %v1099 = vld [vmem:[%s1 + $0x38] sm:$0xf]
  %v1100 = vld [vmem:[%s1 + $0x3c] sm:$0xf]
  %v1101 = vld [vmem:[%s1 + $0x40] sm:$0xf]
  %v1102 = vld [vmem:[%s1 + $0x44] sm:$0xf]
  %v1103 = vld [vmem:[%s1 + $0x48] sm:$0xf]
  %v1104 = vld [vmem:[%s1 + $0x4c] sm:$0xf]
  %v1105 = vld [vmem:[%s1 + $0x50] sm:$0xf]
  %v1106 = vld [vmem:[%s1 + $0x54] sm:$0xf]
  %v1107 = vld [vmem:[%s1 + $0x58] sm:$0xf]
  %v1108 = vld [vmem:[%s1 + $0x5c] sm:$0xf]
  %v1109 = vld [vmem:[%s1 + $0x60] sm:$0xf]
  %v1110 = vld [vmem:[%s1 + $0x64] sm:$0xf]
  %v1111 = vld [vmem:[%s1 + $0x68] sm:$0xf]
  %v1112 = vld [vmem:[%s1 + $0x6c] sm:$0xf]
  %v1113 = vld [vmem:[%s1 + $0x70] sm:$0xf]
  %v1114 = vld [vmem:[%s1 + $0x74] sm:$0xf]
  %v1115 = vld [vmem:[%s1 + $0x78] sm:$0xf]
  %v1116 = vld [vmem:[%s1 + $0x7c] sm:$0xf]
  %v1117 = vld [vmem:[%s1 + $0x80] sm:$0xf]
  %v1118 = vld [vmem:[%s1 + $0x84] sm:$0xf]
  %v1119 = vld [vmem:[%s1 + $0x88] sm:$0xf]
  %v1120 = vld [vmem:[%s1 + $0x8c] sm:$0xf]
  %v1121 = vld [vmem:[%s1 + $0x90] sm:$0xf]
  %v1122 = vld [vmem:[%s1 + $0x94] sm:$0xf]
  %v1123 = vld [vmem:[%s1 + $0x98] sm:$0xf]
  %v1124 = vld [vmem:[%s1 + $0x9c] sm:$0xf]
  %v1125 = vld [vmem:[%s1 + $0xa0] sm:$0xf]
  %v1126 = vld [vmem:[%s1 + $0xa4] sm:$0xf]
  %v1127 = vld [vmem:[%s1 + $0xa8] sm:$0xf]
  %v1128 = vld [vmem:[%s1 + $0xac] sm:$0xf]
  %v1129 = vld [vmem:[%s1 + $0xb0] sm:$0xf]
  %v1130 = vld [vmem:[%s1 + $0xb4] sm:$0xf]
  %v1131 = vld [vmem:[%s1 + $0xb8] sm:$0xf]
  %v1132 = vld [vmem:[%s1 + $0xbc] sm:$0xf]
  %s1133 = scalar_lea.vmem %s1, 192
  %v1134 = vld [vmem:[%s1133] sm:$0xf]
  %v1135 = vld [vmem:[%s1133 + $0x4] sm:$0xf]
  %v1136 = vld [vmem:[%s1133 + $0x8] sm:$0xf]
  %v1137 = vld [vmem:[%s1133 + $0xc] sm:$0xf]
  %v1138 = vld [vmem:[%s1133 + $0x10] sm:$0xf]
  %v1139 = vld [vmem:[%s1133 + $0x14] sm:$0xf]
  %v1140 = vld [vmem:[%s1133 + $0x18] sm:$0xf]
  %v1141 = vld [vmem:[%s1133 + $0x1c] sm:$0xf]
  %v1142 = vld [vmem:[%s1133 + $0x20] sm:$0xf]
  %v1143 = vld [vmem:[%s1133 + $0x24] sm:$0xf]
  %v1144 = vld [vmem:[%s1133 + $0x28] sm:$0xf]
  %v1145 = vld [vmem:[%s1133 + $0x2c] sm:$0xf]
  %v1146 = vld [vmem:[%s1133 + $0x30] sm:$0xf]
  %v1147 = vld [vmem:[%s1133 + $0x34] sm:$0xf]
  %v1148 = vld [vmem:[%s1133 + $0x38] sm:$0xf]
  %v1149 = vld [vmem:[%s1133 + $0x3c] sm:$0xf]
  %v1150 = vld [vmem:[%s1133 + $0x40] sm:$0xf]
  %v1151 = vld [vmem:[%s1133 + $0x44] sm:$0xf]
  %v1152 = vld [vmem:[%s1133 + $0x48] sm:$0xf]
  %v1153 = vld [vmem:[%s1133 + $0x4c] sm:$0xf]
  %v1154 = vld [vmem:[%s1133 + $0x50] sm:$0xf]
  %v1155 = vld [vmem:[%s1133 + $0x54] sm:$0xf]
  %v1156 = vld [vmem:[%s1133 + $0x58] sm:$0xf]
  %v1157 = vld [vmem:[%s1133 + $0x5c] sm:$0xf]
  %v1158 = vld [vmem:[%s1133 + $0x60] sm:$0xf]
  %v1159 = vld [vmem:[%s1133 + $0x64] sm:$0xf]
  %v1160 = vld [vmem:[%s1133 + $0x68] sm:$0xf]
  %v1161 = vld [vmem:[%s1133 + $0x6c] sm:$0xf]
  %v1162 = vld [vmem:[%s1133 + $0x70] sm:$0xf]
  %v1163 = vld [vmem:[%s1133 + $0x74] sm:$0xf]
  %v1164 = vld [vmem:[%s1133 + $0x78] sm:$0xf]
  %v1165 = vld [vmem:[%s1133 + $0x7c] sm:$0xf]
  %v1166 = vld [vmem:[%s1133 + $0x80] sm:$0xf]
  %v1167 = vld [vmem:[%s1133 + $0x84] sm:$0xf]
  %v1168 = vld [vmem:[%s1133 + $0x88] sm:$0xf]
  %v1169 = vld [vmem:[%s1133 + $0x8c] sm:$0xf]
  %v1170 = vld [vmem:[%s1133 + $0x90] sm:$0xf]
  %v1171 = vld [vmem:[%s1133 + $0x94] sm:$0xf]
  %v1172 = vld [vmem:[%s1133 + $0x98] sm:$0xf]
  %v1173 = vld [vmem:[%s1133 + $0x9c] sm:$0xf]
  %v1174 = vld [vmem:[%s1133 + $0xa0] sm:$0xf]
  %v1175 = vld [vmem:[%s1133 + $0xa4] sm:$0xf]
  %v1176 = vld [vmem:[%s1133 + $0xa8] sm:$0xf]
  %v1177 = vld [vmem:[%s1133 + $0xac] sm:$0xf]
  %v1178 = vld [vmem:[%s1133 + $0xb0] sm:$0xf]
  %v1179 = vld [vmem:[%s1133 + $0xb4] sm:$0xf]
  %v1180 = vld [vmem:[%s1133 + $0xb8] sm:$0xf]
  %v1181 = vld [vmem:[%s1133 + $0xbc] sm:$0xf]
  %v1230 = vunpack.c.l.b16 %v1134
  %v1231 = vunpack.c.l.b16 %v1135
  %v1232 = vunpack.c.l.b16 %v1136
  %v1233 = vunpack.c.l.b16 %v1137
  %v1234 = vunpack.c.l.b16 %v1138
  %v1235 = vunpack.c.l.b16 %v1139
  %v1236 = vunpack.c.l.b16 %v1140
  %v1237 = vunpack.c.l.b16 %v1141
  %v1238 = vunpack.c.l.b16 %v1142
  %v1239 = vunpack.c.l.b16 %v1143
  %v1240 = vunpack.c.l.b16 %v1144
  %v1241 = vunpack.c.l.b16 %v1145
  %v1242 = vunpack.c.l.b16 %v1146
  %v1243 = vunpack.c.l.b16 %v1147
  %v1244 = vunpack.c.l.b16 %v1148
  %v1245 = vunpack.c.l.b16 %v1149
  %v1246 = vunpack.c.l.b16 %v1150
  %v1247 = vunpack.c.l.b16 %v1151
  %v1248 = vunpack.c.l.b16 %v1152
  %v1249 = vunpack.c.l.b16 %v1153
  %v1250 = vunpack.c.l.b16 %v1154
  %v1251 = vunpack.c.l.b16 %v1155
  %v1252 = vunpack.c.l.b16 %v1156
  %v1253 = vunpack.c.l.b16 %v1157
  %v1254 = vunpack.c.l.b16 %v1158
  %v1255 = vunpack.c.l.b16 %v1159
  %v1256 = vunpack.c.l.b16 %v1160
  %v1257 = vunpack.c.l.b16 %v1161
  %v1258 = vunpack.c.l.b16 %v1162
  %v1259 = vunpack.c.l.b16 %v1163
  %v1260 = vunpack.c.l.b16 %v1164
  %v1261 = vunpack.c.l.b16 %v1165
  %v1262 = vunpack.c.l.b16 %v1166
  %v1263 = vunpack.c.l.b16 %v1167
  %v1264 = vunpack.c.l.b16 %v1168
  %v1265 = vunpack.c.l.b16 %v1169
  %v1266 = vunpack.c.l.b16 %v1170
  %v1267 = vunpack.c.l.b16 %v1171
  %v1268 = vunpack.c.l.b16 %v1172
  %v1269 = vunpack.c.l.b16 %v1173
  %v1270 = vunpack.c.l.b16 %v1174
  %v1271 = vunpack.c.l.b16 %v1175
  %v1272 = vunpack.c.l.b16 %v1176
  %v1273 = vunpack.c.l.b16 %v1177
  %v1274 = vunpack.c.l.b16 %v1178
  %v1275 = vunpack.c.l.b16 %v1179
  %v1276 = vunpack.c.l.b16 %v1180
  %v1277 = vunpack.c.l.b16 %v1181
  %v1278 = vpack.c.b16 %v1231, %v1230
  %v1279 = vpack.c.b16 %v1233, %v1232
  %v1280 = vpack.c.b16 %v1235, %v1234
  %v1281 = vpack.c.b16 %v1237, %v1236
  %v1282 = vpack.c.b16 %v1239, %v1238
  %v1283 = vpack.c.b16 %v1241, %v1240
  %v1284 = vpack.c.b16 %v1243, %v1242
  %v1285 = vpack.c.b16 %v1245, %v1244
  %v1286 = vpack.c.b16 %v1247, %v1246
  %v1287 = vpack.c.b16 %v1249, %v1248
  %v1288 = vpack.c.b16 %v1251, %v1250
  %v1289 = vpack.c.b16 %v1253, %v1252
  %v1290 = vpack.c.b16 %v1255, %v1254
  %v1291 = vpack.c.b16 %v1257, %v1256
  %v1292 = vpack.c.b16 %v1259, %v1258
  %v1293 = vpack.c.b16 %v1261, %v1260
  %v1294 = vpack.c.b16 %v1263, %v1262
  %v1295 = vpack.c.b16 %v1265, %v1264
  %v1296 = vpack.c.b16 %v1267, %v1266
  %v1297 = vpack.c.b16 %v1269, %v1268
  %v1298 = vpack.c.b16 %v1271, %v1270
  %v1299 = vpack.c.b16 %v1273, %v1272
  %v1300 = vpack.c.b16 %v1275, %v1274
  %v1301 = vpack.c.b16 %v1277, %v1276
  %1326 = vmatprep.subr.bf16.mxu0 0
  %1327 = vmatpush1.bf16.msra.mxu0 %v1285
  %1328 = vmatprep.subr.bf16.mxu0 0
  %1329 = vmatpush1.bf16.msra.mxu0 %v1284
  %1330 = vmatprep.subr.bf16.mxu0 0
  %1331 = vmatpush1.bf16.msra.mxu0 %v1283
  %1332 = vmatprep.subr.bf16.mxu0 0
  %1333 = vmatpush1.bf16.msra.mxu0 %v1282
  %1334 = vmatprep.subr.bf16.mxu0 0
  %1335 = vmatpush1.bf16.msra.mxu0 %v1281
  %1336 = vmatprep.subr.bf16.mxu0 0
  %1337 = vmatpush1.bf16.msra.mxu0 %v1280
  %1338 = vmatprep.subr.bf16.mxu0 0
  %1339 = vmatpush1.bf16.msra.mxu0 %v1279
  %1340 = vmatprep.subr.bf16.mxu0 0
  %1341 = vmatpush1.bf16.msra.mxu0 %v1278
  %1342 = vmatprep.subr.bf16.mxu0 0
  %1343 = vmatpush2.bf16.msra.mxu0 %v1293
  %1344 = vmatprep.subr.bf16.mxu0 0
  %1345 = vmatpush2.bf16.msra.mxu0 %v1292
  %1346 = vmatprep.subr.bf16.mxu0 0
  %1347 = vmatpush2.bf16.msra.mxu0 %v1291
  %1348 = vmatprep.subr.bf16.mxu0 0
  %1349 = vmatpush2.bf16.msra.mxu0 %v1290
  %1350 = vmatprep.subr.bf16.mxu0 0
  %1351 = vmatpush2.bf16.msra.mxu0 %v1289
  %1352 = vmatprep.subr.bf16.mxu0 0
  %1353 = vmatpush2.bf16.msra.mxu0 %v1288
  %1354 = vmatprep.subr.bf16.mxu0 0
  %1355 = vmatpush2.bf16.msra.mxu0 %v1287
  %1356 = vmatprep.subr.bf16.mxu0 0
  %1357 = vmatpush2.bf16.msra.mxu0 %v1286
  %1358 = vmatprep.mubr.bf16.mxu0 %v981
  %1359 = vmatmul.mubr.bf16.gmra.mxu0 %v980
  %v1360 = vpop.f32.mrf.mxu0
  %v1361 = vadd.f32 0.0, %v1360
  %v1362 = vpop.f32.mrf.mxu0
  %v1363 = vpop.f32.mrf.mxu0
  %v1364 = vadd.f32 0.0, %v1363
  %v1365 = vpop.f32.mrf.mxu0
  %1366 = vmatprep.mubr.bf16.mxu0 %v984
  %1367 = vmatmul.mubr.bf16.gmra.mxu0 %v983
  %v1368 = vpop.f32.mrf.mxu0
  %v1369 = vadd.f32 0.0, %v1368
  %v1370 = vpop.f32.mrf.mxu0
  %v1371 = vpop.f32.mrf.mxu0
  %v1372 = vadd.f32 0.0, %v1371
  %v1373 = vpop.f32.mrf.mxu0
  %1374 = vmatprep.mubr.bf16.mxu0 %v987
  %1375 = vmatmul.mubr.bf16.gmra.mxu0 %v986
  %v1376 = vpop.f32.mrf.mxu0
  %v1377 = vadd.f32 0.0, %v1376
  %v1378 = vpop.f32.mrf.mxu0
  %v1379 = vpop.f32.mrf.mxu0
  %v1380 = vadd.f32 0.0, %v1379
  %v1381 = vpop.f32.mrf.mxu0
  %1382 = vmatprep.mubr.bf16.mxu0 %v990
  %1383 = vmatmul.mubr.bf16.gmra.mxu0 %v989
  %v1384 = vpop.f32.mrf.mxu0
  %v1385 = vadd.f32 0.0, %v1384
  %v1386 = vpop.f32.mrf.mxu0
  %v1387 = vpop.f32.mrf.mxu0
  %v1388 = vadd.f32 0.0, %v1387
  %v1389 = vpop.f32.mrf.mxu0
  %1390 = vmatprep.mubr.bf16.mxu0 %v993
  %1391 = vmatmul.mubr.bf16.gmra.mxu0 %v992
  %v1392 = vpop.f32.mrf.mxu0
  %v1393 = vadd.f32 0.0, %v1392
  %v1394 = vpop.f32.mrf.mxu0
  %v1395 = vpop.f32.mrf.mxu0
  %v1396 = vadd.f32 0.0, %v1395
  %v1397 = vpop.f32.mrf.mxu0
  %1398 = vmatprep.mubr.bf16.mxu0 %v996
  %1399 = vmatmul.mubr.bf16.gmra.mxu0 %v995
  %v1400 = vpop.f32.mrf.mxu0
  %v1401 = vadd.f32 0.0, %v1400
  %v1402 = vpop.f32.mrf.mxu0
  %v1403 = vpop.f32.mrf.mxu0
  %v1404 = vadd.f32 0.0, %v1403
  %v1405 = vpop.f32.mrf.mxu0
  %1406 = vmatprep.mubr.bf16.mxu0 %v999
  %1407 = vmatmul.mubr.bf16.gmra.mxu0 %v998
  %v1408 = vpop.f32.mrf.mxu0
  %v1409 = vadd.f32 0.0, %v1408
  %v1410 = vpop.f32.mrf.mxu0
  %v1411 = vpop.f32.mrf.mxu0
  %v1412 = vadd.f32 0.0, %v1411
  %v1413 = vpop.f32.mrf.mxu0
  %1414 = vmatprep.mubr.bf16.mxu0 %v1002
  %1415 = vmatmul.mubr.bf16.gmra.mxu0 %v1001
  %v1416 = vpop.f32.mrf.mxu0
  %v1417 = vadd.f32 0.0, %v1416
  %v1418 = vpop.f32.mrf.mxu0
  %v1419 = vpop.f32.mrf.mxu0
  %v1420 = vadd.f32 0.0, %v1419
  %v1421 = vpop.f32.mrf.mxu0
  %1422 = vmatprep.mubr.bf16.mxu0 %v1005
  %1423 = vmatmul.mubr.bf16.gmra.mxu0 %v1004
  %v1424 = vpop.f32.mrf.mxu0
  %v1425 = vadd.f32 0.0, %v1424
  %v1426 = vpop.f32.mrf.mxu0
  %v1427 = vpop.f32.mrf.mxu0
  %v1428 = vadd.f32 0.0, %v1427
  %v1429 = vpop.f32.mrf.mxu0
  %1430 = vmatprep.mubr.bf16.mxu0 %v1008
  %1431 = vmatmul.mubr.bf16.gmra.mxu0 %v1007
  %v1432 = vpop.f32.mrf.mxu0
  %v1433 = vadd.f32 0.0, %v1432
  %v1434 = vpop.f32.mrf.mxu0
  %v1435 = vpop.f32.mrf.mxu0
  %v1436 = vadd.f32 0.0, %v1435
  %v1437 = vpop.f32.mrf.mxu0
  %1438 = vmatprep.mubr.bf16.mxu0 %v1011
  %1439 = vmatmul.mubr.bf16.gmra.mxu0 %v1010
  %v1440 = vpop.f32.mrf.mxu0
  %v1441 = vadd.f32 0.0, %v1440
  %v1442 = vpop.f32.mrf.mxu0
  %v1443 = vpop.f32.mrf.mxu0
  %v1444 = vadd.f32 0.0, %v1443
  %v1445 = vpop.f32.mrf.mxu0
  %1446 = vmatprep.mubr.bf16.mxu0 %v1014
  %1447 = vmatmul.mubr.bf16.gmra.mxu0 %v1013
  %v1448 = vpop.f32.mrf.mxu0
  %v1449 = vadd.f32 0.0, %v1448
  %v1450 = vpop.f32.mrf.mxu0
  %v1451 = vpop.f32.mrf.mxu0
  %v1452 = vadd.f32 0.0, %v1451
  %v1453 = vpop.f32.mrf.mxu0
  %1454 = vmatprep.mubr.bf16.mxu0 %v1017
  %1455 = vmatmul.mubr.bf16.gmra.mxu0 %v1016
  %v1456 = vpop.f32.mrf.mxu0
  %v1457 = vadd.f32 0.0, %v1456
  %v1458 = vpop.f32.mrf.mxu0
  %v1459 = vpop.f32.mrf.mxu0
  %v1460 = vadd.f32 0.0, %v1459
  %v1461 = vpop.f32.mrf.mxu0
  %1462 = vmatprep.mubr.bf16.mxu0 %v1020
  %1463 = vmatmul.mubr.bf16.gmra.mxu0 %v1019
  %v1464 = vpop.f32.mrf.mxu0
  %v1465 = vadd.f32 0.0, %v1464
  %v1466 = vpop.f32.mrf.mxu0
  %v1467 = vpop.f32.mrf.mxu0
  %v1468 = vadd.f32 0.0, %v1467
  %v1469 = vpop.f32.mrf.mxu0
  %1470 = vmatprep.mubr.bf16.mxu0 %v1023
  %1471 = vmatmul.mubr.bf16.gmra.mxu0 %v1022
  %v1472 = vpop.f32.mrf.mxu0
  %v1473 = vadd.f32 0.0, %v1472
  %v1474 = vpop.f32.mrf.mxu0
  %v1475 = vpop.f32.mrf.mxu0
  %v1476 = vadd.f32 0.0, %v1475
  %v1477 = vpop.f32.mrf.mxu0
  %1478 = vmatprep.mubr.bf16.mxu0 %v1026
  %1479 = vmatmul.mubr.bf16.gmra.mxu0 %v1025
  %v1480 = vpop.f32.mrf.mxu0
  %v1481 = vadd.f32 0.0, %v1480
  %v1482 = vpop.f32.mrf.mxu0
  %v1483 = vpop.f32.mrf.mxu0
  %v1484 = vadd.f32 0.0, %v1483
  %v1485 = vpop.f32.mrf.mxu0
  %1486 = vmatprep.mubr.bf16.mxu0 %v1035
  %1487 = vmatmul.mubr.bf16.gmra.mxu0 %v1034
  %v1488 = vpop.f32.mrf.mxu0
  %v1489 = vadd.f32 0.0, %v1488
  %v1490 = vpop.f32.mrf.mxu0
  %v1491 = vpop.f32.mrf.mxu0
  %v1492 = vadd.f32 0.0, %v1491
  %v1493 = vpop.f32.mrf.mxu0
  %1494 = vmatprep.mubr.bf16.mxu0 %v1038
  %1495 = vmatmul.mubr.bf16.gmra.mxu0 %v1037
  %v1496 = vpop.f32.mrf.mxu0
  %v1497 = vadd.f32 0.0, %v1496
  %v1498 = vpop.f32.mrf.mxu0
  %v1499 = vpop.f32.mrf.mxu0
  %v1500 = vadd.f32 0.0, %v1499
  %v1501 = vpop.f32.mrf.mxu0
  %1502 = vmatprep.mubr.bf16.mxu0 %v1041
  %1503 = vmatmul.mubr.bf16.gmra.mxu0 %v1040
  %v1504 = vpop.f32.mrf.mxu0
  %v1505 = vadd.f32 0.0, %v1504
  %v1506 = vpop.f32.mrf.mxu0
  %v1507 = vpop.f32.mrf.mxu0
  %v1508 = vadd.f32 0.0, %v1507
  %v1509 = vpop.f32.mrf.mxu0
  %1510 = vmatprep.mubr.bf16.mxu0 %v1044
  %1511 = vmatmul.mubr.bf16.gmra.mxu0 %v1043
  %v1512 = vpop.f32.mrf.mxu0
  %v1513 = vadd.f32 0.0, %v1512
  %v1514 = vpop.f32.mrf.mxu0
  %v1515 = vpop.f32.mrf.mxu0
  %v1516 = vadd.f32 0.0, %v1515
  %v1517 = vpop.f32.mrf.mxu0
  %1518 = vmatprep.mubr.bf16.mxu0 %v1047
  %1519 = vmatmul.mubr.bf16.gmra.mxu0 %v1046
  %v1520 = vpop.f32.mrf.mxu0
  %v1521 = vadd.f32 0.0, %v1520
  %v1522 = vpop.f32.mrf.mxu0
  %v1523 = vpop.f32.mrf.mxu0
  %v1524 = vadd.f32 0.0, %v1523
  %v1525 = vpop.f32.mrf.mxu0
  %1526 = vmatprep.mubr.bf16.mxu0 %v1050
  %1527 = vmatmul.mubr.bf16.gmra.mxu0 %v1049
  %v1528 = vpop.f32.mrf.mxu0
  %v1529 = vadd.f32 0.0, %v1528
  %v1530 = vpop.f32.mrf.mxu0
  %v1531 = vpop.f32.mrf.mxu0
  %v1532 = vadd.f32 0.0, %v1531
  %v1533 = vpop.f32.mrf.mxu0
  %1534 = vmatprep.mubr.bf16.mxu0 %v1053
  %1535 = vmatmul.mubr.bf16.gmra.mxu0 %v1052
  %v1536 = vpop.f32.mrf.mxu0
  %v1537 = vadd.f32 0.0, %v1536
  %v1538 = vpop.f32.mrf.mxu0
  %v1539 = vpop.f32.mrf.mxu0
  %v1540 = vadd.f32 0.0, %v1539
  %v1541 = vpop.f32.mrf.mxu0
  %1542 = vmatprep.mubr.bf16.mxu0 %v1056
  %1543 = vmatmul.mubr.bf16.gmra.mxu0 %v1055
  %v1544 = vpop.f32.mrf.mxu0
  %v1545 = vadd.f32 0.0, %v1544
  %v1546 = vpop.f32.mrf.mxu0
  %v1547 = vpop.f32.mrf.mxu0
  %v1548 = vadd.f32 0.0, %v1547
  %v1549 = vpop.f32.mrf.mxu0
  %1550 = vmatprep.mubr.bf16.mxu0 %v1059
  %1551 = vmatmul.mubr.bf16.gmra.mxu0 %v1058
  %v1552 = vpop.f32.mrf.mxu0
  %v1553 = vadd.f32 0.0, %v1552
  %v1554 = vpop.f32.mrf.mxu0
  %v1555 = vpop.f32.mrf.mxu0
  %v1556 = vadd.f32 0.0, %v1555
  %v1557 = vpop.f32.mrf.mxu0
  %1558 = vmatprep.mubr.bf16.mxu0 %v1062
  %1559 = vmatmul.mubr.bf16.gmra.mxu0 %v1061
  %v1560 = vpop.f32.mrf.mxu0
  %v1561 = vadd.f32 0.0, %v1560
  %v1562 = vpop.f32.mrf.mxu0
  %v1563 = vpop.f32.mrf.mxu0
  %v1564 = vadd.f32 0.0, %v1563
  %v1565 = vpop.f32.mrf.mxu0
  %1566 = vmatprep.mubr.bf16.mxu0 %v1065
  %1567 = vmatmul.mubr.bf16.gmra.mxu0 %v1064
  %v1568 = vpop.f32.mrf.mxu0
  %v1569 = vadd.f32 0.0, %v1568
  %v1570 = vpop.f32.mrf.mxu0
  %v1571 = vpop.f32.mrf.mxu0
  %v1572 = vadd.f32 0.0, %v1571
  %v1573 = vpop.f32.mrf.mxu0
  %1574 = vmatprep.mubr.bf16.mxu0 %v1068
  %1575 = vmatmul.mubr.bf16.gmra.mxu0 %v1067
  %v1576 = vpop.f32.mrf.mxu0
  %v1577 = vadd.f32 0.0, %v1576
  %v1578 = vpop.f32.mrf.mxu0
  %v1579 = vpop.f32.mrf.mxu0
  %v1580 = vadd.f32 0.0, %v1579
  %v1581 = vpop.f32.mrf.mxu0
  %1582 = vmatprep.mubr.bf16.mxu0 %v1071
  %1583 = vmatmul.mubr.bf16.gmra.mxu0 %v1070
  %v1584 = vpop.f32.mrf.mxu0
  %v1585 = vadd.f32 0.0, %v1584
  %v1586 = vpop.f32.mrf.mxu0
  %v1587 = vpop.f32.mrf.mxu0
  %v1588 = vadd.f32 0.0, %v1587
  %v1589 = vpop.f32.mrf.mxu0
  %1590 = vmatprep.mubr.bf16.mxu0 %v1074
  %1591 = vmatmul.mubr.bf16.gmra.mxu0 %v1073
  %v1592 = vpop.f32.mrf.mxu0
  %v1593 = vadd.f32 0.0, %v1592
  %v1594 = vpop.f32.mrf.mxu0
  %v1595 = vpop.f32.mrf.mxu0
  %v1596 = vadd.f32 0.0, %v1595
  %v1597 = vpop.f32.mrf.mxu0
  %1598 = vmatprep.mubr.bf16.mxu0 %v1077
  %1599 = vmatmul.mubr.bf16.gmra.mxu0 %v1076
  %v1600 = vpop.f32.mrf.mxu0
  %v1601 = vadd.f32 0.0, %v1600
  %v1602 = vpop.f32.mrf.mxu0
  %v1603 = vpop.f32.mrf.mxu0
  %v1604 = vadd.f32 0.0, %v1603
  %v1605 = vpop.f32.mrf.mxu0
  %1606 = vmatprep.mubr.bf16.mxu0 %v1080
  %1607 = vmatmul.mubr.bf16.gmra.mxu0 %v1079
  %v1608 = vpop.f32.mrf.mxu0
  %v1609 = vadd.f32 0.0, %v1608
  %v1610 = vpop.f32.mrf.mxu0
  %v1611 = vpop.f32.mrf.mxu0
  %v1612 = vadd.f32 0.0, %v1611
  %v1613 = vpop.f32.mrf.mxu0
  %1614 = vdwg.mxu0
  %1615 = vmatprep.subr.bf16.mxu0 0
  %1616 = vmatpush1.bf16.msra.mxu0 %v1301
  %1617 = vmatprep.subr.bf16.mxu0 0
  %1618 = vmatpush1.bf16.msra.mxu0 %v1300
  %1619 = vmatprep.subr.bf16.mxu0 0
  %1620 = vmatpush1.bf16.msra.mxu0 %v1299
  %1621 = vmatprep.subr.bf16.mxu0 0
  %1622 = vmatpush1.bf16.msra.mxu0 %v1298
  %1623 = vmatprep.subr.bf16.mxu0 0
  %1624 = vmatpush1.bf16.msra.mxu0 %v1297
  %1625 = vmatprep.subr.bf16.mxu0 0
  %1626 = vmatpush1.bf16.msra.mxu0 %v1296
  %1627 = vmatprep.subr.bf16.mxu0 0
  %1628 = vmatpush1.bf16.msra.mxu0 %v1295
  %1629 = vmatprep.subr.bf16.mxu0 0
  %1630 = vmatpush1.bf16.msra.mxu0 %v1294
  %1631 = vmatprep.subr.bf16.mxu0 0
  %1632 = vmatpush2.bf16.msra.mxu0 0
  %1633 = vmatprep.subr.bf16.mxu0 0
  %1634 = vmatpush2.bf16.msra.mxu0 0
  %1635 = vmatprep.subr.bf16.mxu0 0
  %1636 = vmatpush2.bf16.msra.mxu0 0
  %1637 = vmatprep.subr.bf16.mxu0 0
  %1638 = vmatpush2.bf16.msra.mxu0 0
  %1639 = vmatprep.subr.bf16.mxu0 0
  %1640 = vmatpush2.bf16.msra.mxu0 0
  %1641 = vmatprep.subr.bf16.mxu0 0
  %1642 = vmatpush2.bf16.msra.mxu0 0
  %1643 = vmatprep.subr.bf16.mxu0 0
  %1644 = vmatpush2.bf16.msra.mxu0 0
  %1645 = vmatprep.subr.bf16.mxu0 0
  %1646 = vmatpush2.bf16.msra.mxu0 0
  %1647 = vmatprep.mubr.bf16.mxu0 0
  %1648 = vmatmul.mubr.bf16.gmra.mxu0 %v982
  %v1649 = vpop.f32.mrf.mxu0
  %v1650 = vadd.f32 %v1361, %v1649
  %v1651 = vpop.f32.mrf.mxu0
  %v1652 = vpop.f32.mrf.mxu0
  %v1653 = vadd.f32 %v1364, %v1652
  %v1654 = vpop.f32.mrf.mxu0
  %1655 = vmatprep.mubr.bf16.mxu0 0
  %1656 = vmatmul.mubr.bf16.gmra.mxu0 %v985
  %v1657 = vpop.f32.mrf.mxu0
  %v1658 = vadd.f32 %v1369, %v1657
  %v1659 = vpop.f32.mrf.mxu0
  %v1660 = vpop.f32.mrf.mxu0
  %v1661 = vadd.f32 %v1372, %v1660
  %v1662 = vpop.f32.mrf.mxu0
  %1663 = vmatprep.mubr.bf16.mxu0 0
  %1664 = vmatmul.mubr.bf16.gmra.mxu0 %v988
  %v1665 = vpop.f32.mrf.mxu0
  %v1666 = vadd.f32 %v1377, %v1665
  %v1667 = vpop.f32.mrf.mxu0
  %v1668 = vpop.f32.mrf.mxu0
  %v1669 = vadd.f32 %v1380, %v1668
  %v1670 = vpop.f32.mrf.mxu0
  %1671 = vmatprep.mubr.bf16.mxu0 0
  %1672 = vmatmul.mubr.bf16.gmra.mxu0 %v991
  %v1673 = vpop.f32.mrf.mxu0
  %v1674 = vadd.f32 %v1385, %v1673
  %v1675 = vpop.f32.mrf.mxu0
  %v1676 = vpop.f32.mrf.mxu0
  %v1677 = vadd.f32 %v1388, %v1676
  %v1678 = vpop.f32.mrf.mxu0
  %1679 = vmatprep.mubr.bf16.mxu0 0
  %1680 = vmatmul.mubr.bf16.gmra.mxu0 %v994
  %v1681 = vpop.f32.mrf.mxu0
  %v1682 = vadd.f32 %v1393, %v1681
  %v1683 = vpop.f32.mrf.mxu0
  %v1684 = vpop.f32.mrf.mxu0
  %v1685 = vadd.f32 %v1396, %v1684
  %v1686 = vpop.f32.mrf.mxu0
  %1687 = vmatprep.mubr.bf16.mxu0 0
  %1688 = vmatmul.mubr.bf16.gmra.mxu0 %v997
  %v1689 = vpop.f32.mrf.mxu0
  %v1690 = vadd.f32 %v1401, %v1689
  %v1691 = vpop.f32.mrf.mxu0
  %v1692 = vpop.f32.mrf.mxu0
  %v1693 = vadd.f32 %v1404, %v1692
  %v1694 = vpop.f32.mrf.mxu0
  %1695 = vmatprep.mubr.bf16.mxu0 0
  %1696 = vmatmul.mubr.bf16.gmra.mxu0 %v1000
  %v1697 = vpop.f32.mrf.mxu0
  %v1698 = vadd.f32 %v1409, %v1697
  %v1699 = vpop.f32.mrf.mxu0
  %v1700 = vpop.f32.mrf.mxu0
  %v1701 = vadd.f32 %v1412, %v1700
  %v1702 = vpop.f32.mrf.mxu0
  %1703 = vmatprep.mubr.bf16.mxu0 0
  %1704 = vmatmul.mubr.bf16.gmra.mxu0 %v1003
  %v1705 = vpop.f32.mrf.mxu0
  %v1706 = vadd.f32 %v1417, %v1705
  %v1707 = vpop.f32.mrf.mxu0
  %v1708 = vpop.f32.mrf.mxu0
  %v1709 = vadd.f32 %v1420, %v1708
  %v1710 = vpop.f32.mrf.mxu0
  %1711 = vmatprep.mubr.bf16.mxu0 0
  %1712 = vmatmul.mubr.bf16.gmra.mxu0 %v1006
  %v1713 = vpop.f32.mrf.mxu0
  %v1714 = vadd.f32 %v1425, %v1713
  %v1715 = vpop.f32.mrf.mxu0
  %v1716 = vpop.f32.mrf.mxu0
  %v1717 = vadd.f32 %v1428, %v1716
  %v1718 = vpop.f32.mrf.mxu0
  %1719 = vmatprep.mubr.bf16.mxu0 0
  %1720 = vmatmul.mubr.bf16.gmra.mxu0 %v1009
  %v1721 = vpop.f32.mrf.mxu0
  %v1722 = vadd.f32 %v1433, %v1721
  %v1723 = vpop.f32.mrf.mxu0
  %v1724 = vpop.f32.mrf.mxu0
  %v1725 = vadd.f32 %v1436, %v1724
  %v1726 = vpop.f32.mrf.mxu0
  %1727 = vmatprep.mubr.bf16.mxu0 0
  %1728 = vmatmul.mubr.bf16.gmra.mxu0 %v1012
  %v1729 = vpop.f32.mrf.mxu0
  %v1730 = vadd.f32 %v1441, %v1729
  %v1731 = vpop.f32.mrf.mxu0
  %v1732 = vpop.f32.mrf.mxu0
  %v1733 = vadd.f32 %v1444, %v1732
  %v1734 = vpop.f32.mrf.mxu0
  %1735 = vmatprep.mubr.bf16.mxu0 0
  %1736 = vmatmul.mubr.bf16.gmra.mxu0 %v1015
  %v1737 = vpop.f32.mrf.mxu0
  %v1738 = vadd.f32 %v1449, %v1737
  %v1739 = vpop.f32.mrf.mxu0
  %v1740 = vpop.f32.mrf.mxu0
  %v1741 = vadd.f32 %v1452, %v1740
  %v1742 = vpop.f32.mrf.mxu0
  %1743 = vmatprep.mubr.bf16.mxu0 0
  %1744 = vmatmul.mubr.bf16.gmra.mxu0 %v1018
  %v1745 = vpop.f32.mrf.mxu0
  %v1746 = vadd.f32 %v1457, %v1745
  %v1747 = vpop.f32.mrf.mxu0
  %v1748 = vpop.f32.mrf.mxu0
  %v1749 = vadd.f32 %v1460, %v1748
  %v1750 = vpop.f32.mrf.mxu0
  %1751 = vmatprep.mubr.bf16.mxu0 0
  %1752 = vmatmul.mubr.bf16.gmra.mxu0 %v1021
  %v1753 = vpop.f32.mrf.mxu0
  %v1754 = vadd.f32 %v1465, %v1753
  %v1755 = vpop.f32.mrf.mxu0
  %v1756 = vpop.f32.mrf.mxu0
  %v1757 = vadd.f32 %v1468, %v1756
  %v1758 = vpop.f32.mrf.mxu0
  %1759 = vmatprep.mubr.bf16.mxu0 0
  %1760 = vmatmul.mubr.bf16.gmra.mxu0 %v1024
  %v1761 = vpop.f32.mrf.mxu0
  %v1762 = vadd.f32 %v1473, %v1761
  %v1763 = vpop.f32.mrf.mxu0
  %v1764 = vpop.f32.mrf.mxu0
  %v1765 = vadd.f32 %v1476, %v1764
  %v1766 = vpop.f32.mrf.mxu0
  %1767 = vmatprep.mubr.bf16.mxu0 0
  %1768 = vmatmul.mubr.bf16.gmra.mxu0 %v1027
  %v1769 = vpop.f32.mrf.mxu0
  %v1770 = vadd.f32 %v1481, %v1769
  %v1771 = vpop.f32.mrf.mxu0
  %v1772 = vpop.f32.mrf.mxu0
  %v1773 = vadd.f32 %v1484, %v1772
  %v1774 = vpop.f32.mrf.mxu0
  %1775 = vmatprep.mubr.bf16.mxu0 0
  %1776 = vmatmul.mubr.bf16.gmra.mxu0 %v1036
  %v1777 = vpop.f32.mrf.mxu0
  %v1778 = vadd.f32 %v1489, %v1777
  %v1779 = vpop.f32.mrf.mxu0
  %v1780 = vpop.f32.mrf.mxu0
  %v1781 = vadd.f32 %v1492, %v1780
  %v1782 = vpop.f32.mrf.mxu0
  %1783 = vmatprep.mubr.bf16.mxu0 0
  %1784 = vmatmul.mubr.bf16.gmra.mxu0 %v1039
  %v1785 = vpop.f32.mrf.mxu0
  %v1786 = vadd.f32 %v1497, %v1785
  %v1787 = vpop.f32.mrf.mxu0
  %v1788 = vpop.f32.mrf.mxu0
  %v1789 = vadd.f32 %v1500, %v1788
  %v1790 = vpop.f32.mrf.mxu0
  %1791 = vmatprep.mubr.bf16.mxu0 0
  %1792 = vmatmul.mubr.bf16.gmra.mxu0 %v1042
  %v1793 = vpop.f32.mrf.mxu0
  %v1794 = vadd.f32 %v1505, %v1793
  %v1795 = vpop.f32.mrf.mxu0
  %v1796 = vpop.f32.mrf.mxu0
  %v1797 = vadd.f32 %v1508, %v1796
  %v1798 = vpop.f32.mrf.mxu0
  %1799 = vmatprep.mubr.bf16.mxu0 0
  %1800 = vmatmul.mubr.bf16.gmra.mxu0 %v1045
  %v1801 = vpop.f32.mrf.mxu0
  %v1802 = vadd.f32 %v1513, %v1801
  %v1803 = vpop.f32.mrf.mxu0
  %v1804 = vpop.f32.mrf.mxu0
  %v1805 = vadd.f32 %v1516, %v1804
  %v1806 = vpop.f32.mrf.mxu0
  %1807 = vmatprep.mubr.bf16.mxu0 0
  %1808 = vmatmul.mubr.bf16.gmra.mxu0 %v1048
  %v1809 = vpop.f32.mrf.mxu0
  %v1810 = vadd.f32 %v1521, %v1809
  %v1811 = vpop.f32.mrf.mxu0
  %v1812 = vpop.f32.mrf.mxu0
  %v1813 = vadd.f32 %v1524, %v1812
  %v1814 = vpop.f32.mrf.mxu0
  %1815 = vmatprep.mubr.bf16.mxu0 0
  %1816 = vmatmul.mubr.bf16.gmra.mxu0 %v1051
  %v1817 = vpop.f32.mrf.mxu0
  %v1818 = vadd.f32 %v1529, %v1817
  %v1819 = vpop.f32.mrf.mxu0
  %v1820 = vpop.f32.mrf.mxu0
  %v1821 = vadd.f32 %v1532, %v1820
  %v1822 = vpop.f32.mrf.mxu0
  %1823 = vmatprep.mubr.bf16.mxu0 0
  %1824 = vmatmul.mubr.bf16.gmra.mxu0 %v1054
  %v1825 = vpop.f32.mrf.mxu0
  %v1826 = vadd.f32 %v1537, %v1825
  %v1827 = vpop.f32.mrf.mxu0
  %v1828 = vpop.f32.mrf.mxu0
  %v1829 = vadd.f32 %v1540, %v1828
  %v1830 = vpop.f32.mrf.mxu0
  %1831 = vmatprep.mubr.bf16.mxu0 0
  %1832 = vmatmul.mubr.bf16.gmra.mxu0 %v1057
  %v1833 = vpop.f32.mrf.mxu0
  %v1834 = vadd.f32 %v1545, %v1833
  %v1835 = vpop.f32.mrf.mxu0
  %v1836 = vpop.f32.mrf.mxu0
  %v1837 = vadd.f32 %v1548, %v1836
  %v1838 = vpop.f32.mrf.mxu0
  %1839 = vmatprep.mubr.bf16.mxu0 0
  %1840 = vmatmul.mubr.bf16.gmra.mxu0 %v1060
  %v1841 = vpop.f32.mrf.mxu0
  %v1842 = vadd.f32 %v1553, %v1841
  %v1843 = vpop.f32.mrf.mxu0
  %v1844 = vpop.f32.mrf.mxu0
  %v1845 = vadd.f32 %v1556, %v1844
  %v1846 = vpop.f32.mrf.mxu0
  %1847 = vmatprep.mubr.bf16.mxu0 0
  %1848 = vmatmul.mubr.bf16.gmra.mxu0 %v1063
  %v1849 = vpop.f32.mrf.mxu0
  %v1850 = vadd.f32 %v1561, %v1849
  %v1851 = vpop.f32.mrf.mxu0
  %v1852 = vpop.f32.mrf.mxu0
  %v1853 = vadd.f32 %v1564, %v1852
  %v1854 = vpop.f32.mrf.mxu0
  %1855 = vmatprep.mubr.bf16.mxu0 0
  %1856 = vmatmul.mubr.bf16.gmra.mxu0 %v1066
  %v1857 = vpop.f32.mrf.mxu0
  %v1858 = vadd.f32 %v1569, %v1857
  %v1859 = vpop.f32.mrf.mxu0
  %v1860 = vpop.f32.mrf.mxu0
  %v1861 = vadd.f32 %v1572, %v1860
  %v1862 = vpop.f32.mrf.mxu0
  %1863 = vmatprep.mubr.bf16.mxu0 0
  %1864 = vmatmul.mubr.bf16.gmra.mxu0 %v1069
  %v1865 = vpop.f32.mrf.mxu0
  %v1866 = vadd.f32 %v1577, %v1865
  %v1867 = vpop.f32.mrf.mxu0
  %v1868 = vpop.f32.mrf.mxu0
  %v1869 = vadd.f32 %v1580, %v1868
  %v1870 = vpop.f32.mrf.mxu0
  %1871 = vmatprep.mubr.bf16.mxu0 0
  %1872 = vmatmul.mubr.bf16.gmra.mxu0 %v1072
  %v1873 = vpop.f32.mrf.mxu0
  %v1874 = vadd.f32 %v1585, %v1873
  %v1875 = vpop.f32.mrf.mxu0
  %v1876 = vpop.f32.mrf.mxu0
  %v1877 = vadd.f32 %v1588, %v1876
  %v1878 = vpop.f32.mrf.mxu0
  %1879 = vmatprep.mubr.bf16.mxu0 0
  %1880 = vmatmul.mubr.bf16.gmra.mxu0 %v1075
  %v1881 = vpop.f32.mrf.mxu0
  %v1882 = vadd.f32 %v1593, %v1881
  %v1883 = vpop.f32.mrf.mxu0
  %v1884 = vpop.f32.mrf.mxu0
  %v1885 = vadd.f32 %v1596, %v1884
  %v1886 = vpop.f32.mrf.mxu0
  %1887 = vmatprep.mubr.bf16.mxu0 0
  %1888 = vmatmul.mubr.bf16.gmra.mxu0 %v1078
  %v1889 = vpop.f32.mrf.mxu0
  %v1890 = vadd.f32 %v1601, %v1889
  %v1891 = vpop.f32.mrf.mxu0
  %v1892 = vpop.f32.mrf.mxu0
  %v1893 = vadd.f32 %v1604, %v1892
  %v1894 = vpop.f32.mrf.mxu0
  %1895 = vmatprep.mubr.bf16.mxu0 0
  %1896 = vmatmul.mubr.bf16.gmra.mxu0 %v1081
  %v1897 = vpop.f32.mrf.mxu0
  %v1898 = vadd.f32 %v1609, %v1897
  %v1899 = vpop.f32.mrf.mxu0
  %v1900 = vpop.f32.mrf.mxu0
  %v1901 = vadd.f32 %v1612, %v1900
  %v1902 = vpop.f32.mrf.mxu0
  %1903 = vdwg.mxu0
  %v1952 = vunpack.c.l.b16 %v1085
  %v1953 = vunpack.c.l.b16 %v1086
  %v1954 = vunpack.c.l.b16 %v1087
  %v1955 = vunpack.c.l.b16 %v1088
  %v1956 = vunpack.c.l.b16 %v1089
  %v1957 = vunpack.c.l.b16 %v1090
  %v1958 = vunpack.c.l.b16 %v1091
  %v1959 = vunpack.c.l.b16 %v1092
  %v1960 = vunpack.c.l.b16 %v1093
  %v1961 = vunpack.c.l.b16 %v1094
  %v1962 = vunpack.c.l.b16 %v1095
  %v1963 = vunpack.c.l.b16 %v1096
  %v1964 = vunpack.c.l.b16 %v1097
  %v1965 = vunpack.c.l.b16 %v1098
  %v1966 = vunpack.c.l.b16 %v1099
  %v1967 = vunpack.c.l.b16 %v1100
  %v1968 = vunpack.c.l.b16 %v1101
  %v1969 = vunpack.c.l.b16 %v1102
  %v1970 = vunpack.c.l.b16 %v1103
  %v1971 = vunpack.c.l.b16 %v1104
  %v1972 = vunpack.c.l.b16 %v1105
  %v1973 = vunpack.c.l.b16 %v1106
  %v1974 = vunpack.c.l.b16 %v1107
  %v1975 = vunpack.c.l.b16 %v1108
  %v1976 = vunpack.c.l.b16 %v1109
  %v1977 = vunpack.c.l.b16 %v1110
  %v1978 = vunpack.c.l.b16 %v1111
  %v1979 = vunpack.c.l.b16 %v1112
  %v1980 = vunpack.c.l.b16 %v1113
  %v1981 = vunpack.c.l.b16 %v1114
  %v1982 = vunpack.c.l.b16 %v1115
  %v1983 = vunpack.c.l.b16 %v1116
  %v1984 = vunpack.c.l.b16 %v1117
  %v1985 = vunpack.c.l.b16 %v1118
  %v1986 = vunpack.c.l.b16 %v1119
  %v1987 = vunpack.c.l.b16 %v1120
  %v1988 = vunpack.c.l.b16 %v1121
  %v1989 = vunpack.c.l.b16 %v1122
  %v1990 = vunpack.c.l.b16 %v1123
  %v1991 = vunpack.c.l.b16 %v1124
  %v1992 = vunpack.c.l.b16 %v1125
  %v1993 = vunpack.c.l.b16 %v1126
  %v1994 = vunpack.c.l.b16 %v1127
  %v1995 = vunpack.c.l.b16 %v1128
  %v1996 = vunpack.c.l.b16 %v1129
  %v1997 = vunpack.c.l.b16 %v1130
  %v1998 = vunpack.c.l.b16 %v1131
  %v1999 = vunpack.c.l.b16 %v1132
  %v2000 = vpack.c.b16 %v1953, %v1952
  %v2001 = vpack.c.b16 %v1955, %v1954
  %v2002 = vpack.c.b16 %v1957, %v1956
  %v2003 = vpack.c.b16 %v1959, %v1958
  %v2004 = vpack.c.b16 %v1961, %v1960
  %v2005 = vpack.c.b16 %v1963, %v1962
  %v2006 = vpack.c.b16 %v1965, %v1964
  %v2007 = vpack.c.b16 %v1967, %v1966
  %v2008 = vpack.c.b16 %v1969, %v1968
  %v2009 = vpack.c.b16 %v1971, %v1970
  %v2010 = vpack.c.b16 %v1973, %v1972
  %v2011 = vpack.c.b16 %v1975, %v1974
  %v2012 = vpack.c.b16 %v1977, %v1976
  %v2013 = vpack.c.b16 %v1979, %v1978
  %v2014 = vpack.c.b16 %v1981, %v1980
  %v2015 = vpack.c.b16 %v1983, %v1982
  %v2016 = vpack.c.b16 %v1985, %v1984
  %v2017 = vpack.c.b16 %v1987, %v1986
  %v2018 = vpack.c.b16 %v1989, %v1988
  %v2019 = vpack.c.b16 %v1991, %v1990
  %v2020 = vpack.c.b16 %v1993, %v1992
  %v2021 = vpack.c.b16 %v1995, %v1994
  %v2022 = vpack.c.b16 %v1997, %v1996
  %v2023 = vpack.c.b16 %v1999, %v1998
  %2048 = vmatprep.subr.bf16.mxu0 0
  %2049 = vmatpush1.bf16.msra.mxu0 %v2007
  %2050 = vmatprep.subr.bf16.mxu0 0
  %2051 = vmatpush1.bf16.msra.mxu0 %v2006
  %2052 = vmatprep.subr.bf16.mxu0 0
  %2053 = vmatpush1.bf16.msra.mxu0 %v2005
  %2054 = vmatprep.subr.bf16.mxu0 0
  %2055 = vmatpush1.bf16.msra.mxu0 %v2004
  %2056 = vmatprep.subr.bf16.mxu0 0
  %2057 = vmatpush1.bf16.msra.mxu0 %v2003
  %2058 = vmatprep.subr.bf16.mxu0 0
  %2059 = vmatpush1.bf16.msra.mxu0 %v2002
  %2060 = vmatprep.subr.bf16.mxu0 0
  %2061 = vmatpush1.bf16.msra.mxu0 %v2001
  %2062 = vmatprep.subr.bf16.mxu0 0
  %2063 = vmatpush1.bf16.msra.mxu0 %v2000
  %2064 = vmatprep.subr.bf16.mxu0 0
  %2065 = vmatpush2.bf16.msra.mxu0 %v2015
  %2066 = vmatprep.subr.bf16.mxu0 0
  %2067 = vmatpush2.bf16.msra.mxu0 %v2014
  %2068 = vmatprep.subr.bf16.mxu0 0
  %2069 = vmatpush2.bf16.msra.mxu0 %v2013
  %2070 = vmatprep.subr.bf16.mxu0 0
  %2071 = vmatpush2.bf16.msra.mxu0 %v2012
  %2072 = vmatprep.subr.bf16.mxu0 0
  %2073 = vmatpush2.bf16.msra.mxu0 %v2011
  %2074 = vmatprep.subr.bf16.mxu0 0
  %2075 = vmatpush2.bf16.msra.mxu0 %v2010
  %2076 = vmatprep.subr.bf16.mxu0 0
  %2077 = vmatpush2.bf16.msra.mxu0 %v2009
  %2078 = vmatprep.subr.bf16.mxu0 0
  %2079 = vmatpush2.bf16.msra.mxu0 %v2008
  %2080 = vmatprep.mubr.bf16.mxu0 %v978
  %2081 = vmatmul.mubr.bf16.gmra.mxu0 %v977
  %v2082 = vpop.f32.mrf.mxu0
  %v2083 = vadd.f32 %v1650, %v2082
  %v2084 = vpop.f32.mrf.mxu0
  %v2085 = vpop.f32.mrf.mxu0
  %v2086 = vadd.f32 %v1653, %v2085
  %v2087 = vpop.f32.mrf.mxu0
  %2088 = vmatprep.mubr.bf16.mxu0 %v981
  %2089 = vmatmul.mubr.bf16.gmra.mxu0 %v980
  %v2090 = vpop.f32.mrf.mxu0
  %v2091 = vadd.f32 %v1658, %v2090
  %v2092 = vpop.f32.mrf.mxu0
  %v2093 = vpop.f32.mrf.mxu0
  %v2094 = vadd.f32 %v1661, %v2093
  %v2095 = vpop.f32.mrf.mxu0
  %2096 = vmatprep.mubr.bf16.mxu0 %v984
  %2097 = vmatmul.mubr.bf16.gmra.mxu0 %v983
  %v2098 = vpop.f32.mrf.mxu0
  %v2099 = vadd.f32 %v1666, %v2098
  %v2100 = vpop.f32.mrf.mxu0
  %v2101 = vpop.f32.mrf.mxu0
  %v2102 = vadd.f32 %v1669, %v2101
  %v2103 = vpop.f32.mrf.mxu0
  %2104 = vmatprep.mubr.bf16.mxu0 %v987
  %2105 = vmatmul.mubr.bf16.gmra.mxu0 %v986
  %v2106 = vpop.f32.mrf.mxu0
  %v2107 = vadd.f32 %v1674, %v2106
  %v2108 = vpop.f32.mrf.mxu0
  %v2109 = vpop.f32.mrf.mxu0
  %v2110 = vadd.f32 %v1677, %v2109
  %v2111 = vpop.f32.mrf.mxu0
  %2112 = vmatprep.mubr.bf16.mxu0 %v990
  %2113 = vmatmul.mubr.bf16.gmra.mxu0 %v989
  %v2114 = vpop.f32.mrf.mxu0
  %v2115 = vadd.f32 %v1682, %v2114
  %v2116 = vpop.f32.mrf.mxu0
  %v2117 = vpop.f32.mrf.mxu0
  %v2118 = vadd.f32 %v1685, %v2117
  %v2119 = vpop.f32.mrf.mxu0
  %2120 = vmatprep.mubr.bf16.mxu0 %v993
  %2121 = vmatmul.mubr.bf16.gmra.mxu0 %v992
  %v2122 = vpop.f32.mrf.mxu0
  %v2123 = vadd.f32 %v1690, %v2122
  %v2124 = vpop.f32.mrf.mxu0
  %v2125 = vpop.f32.mrf.mxu0
  %v2126 = vadd.f32 %v1693, %v2125
  %v2127 = vpop.f32.mrf.mxu0
  %2128 = vmatprep.mubr.bf16.mxu0 %v996
  %2129 = vmatmul.mubr.bf16.gmra.mxu0 %v995
  %v2130 = vpop.f32.mrf.mxu0
  %v2131 = vadd.f32 %v1698, %v2130
  %v2132 = vpop.f32.mrf.mxu0
  %v2133 = vpop.f32.mrf.mxu0
  %v2134 = vadd.f32 %v1701, %v2133
  %v2135 = vpop.f32.mrf.mxu0
  %2136 = vmatprep.mubr.bf16.mxu0 %v999
  %2137 = vmatmul.mubr.bf16.gmra.mxu0 %v998
  %v2138 = vpop.f32.mrf.mxu0
  %v2139 = vadd.f32 %v1706, %v2138
  %v2140 = vpop.f32.mrf.mxu0
  %v2141 = vpop.f32.mrf.mxu0
  %v2142 = vadd.f32 %v1709, %v2141
  %v2143 = vpop.f32.mrf.mxu0
  %2144 = vmatprep.mubr.bf16.mxu0 %v1002
  %2145 = vmatmul.mubr.bf16.gmra.mxu0 %v1001
  %v2146 = vpop.f32.mrf.mxu0
  %v2147 = vadd.f32 %v1714, %v2146
  %v2148 = vpop.f32.mrf.mxu0
  %v2149 = vpop.f32.mrf.mxu0
  %v2150 = vadd.f32 %v1717, %v2149
  %v2151 = vpop.f32.mrf.mxu0
  %2152 = vmatprep.mubr.bf16.mxu0 %v1005
  %2153 = vmatmul.mubr.bf16.gmra.mxu0 %v1004
  %v2154 = vpop.f32.mrf.mxu0
  %v2155 = vadd.f32 %v1722, %v2154
  %v2156 = vpop.f32.mrf.mxu0
  %v2157 = vpop.f32.mrf.mxu0
  %v2158 = vadd.f32 %v1725, %v2157
  %v2159 = vpop.f32.mrf.mxu0
  %2160 = vmatprep.mubr.bf16.mxu0 %v1008
  %2161 = vmatmul.mubr.bf16.gmra.mxu0 %v1007
  %v2162 = vpop.f32.mrf.mxu0
  %v2163 = vadd.f32 %v1730, %v2162
  %v2164 = vpop.f32.mrf.mxu0
  %v2165 = vpop.f32.mrf.mxu0
  %v2166 = vadd.f32 %v1733, %v2165
  %v2167 = vpop.f32.mrf.mxu0
  %2168 = vmatprep.mubr.bf16.mxu0 %v1011
  %2169 = vmatmul.mubr.bf16.gmra.mxu0 %v1010
  %v2170 = vpop.f32.mrf.mxu0
  %v2171 = vadd.f32 %v1738, %v2170
  %v2172 = vpop.f32.mrf.mxu0
  %v2173 = vpop.f32.mrf.mxu0
  %v2174 = vadd.f32 %v1741, %v2173
  %v2175 = vpop.f32.mrf.mxu0
  %2176 = vmatprep.mubr.bf16.mxu0 %v1014
  %2177 = vmatmul.mubr.bf16.gmra.mxu0 %v1013
  %v2178 = vpop.f32.mrf.mxu0
  %v2179 = vadd.f32 %v1746, %v2178
  %v2180 = vpop.f32.mrf.mxu0
  %v2181 = vpop.f32.mrf.mxu0
  %v2182 = vadd.f32 %v1749, %v2181
  %v2183 = vpop.f32.mrf.mxu0
  %2184 = vmatprep.mubr.bf16.mxu0 %v1017
  %2185 = vmatmul.mubr.bf16.gmra.mxu0 %v1016
  %v2186 = vpop.f32.mrf.mxu0
  %v2187 = vadd.f32 %v1754, %v2186
  %v2188 = vpop.f32.mrf.mxu0
  %v2189 = vpop.f32.mrf.mxu0
  %v2190 = vadd.f32 %v1757, %v2189
  %v2191 = vpop.f32.mrf.mxu0
  %2192 = vmatprep.mubr.bf16.mxu0 %v1020
  %2193 = vmatmul.mubr.bf16.gmra.mxu0 %v1019
  %v2194 = vpop.f32.mrf.mxu0
  %v2195 = vadd.f32 %v1762, %v2194
  %v2196 = vpop.f32.mrf.mxu0
  %v2197 = vpop.f32.mrf.mxu0
  %v2198 = vadd.f32 %v1765, %v2197
  %v2199 = vpop.f32.mrf.mxu0
  %2200 = vmatprep.mubr.bf16.mxu0 %v1023
  %2201 = vmatmul.mubr.bf16.gmra.mxu0 %v1022
  %v2202 = vpop.f32.mrf.mxu0
  %v2203 = vadd.f32 %v1770, %v2202
  %v2204 = vpop.f32.mrf.mxu0
  %v2205 = vpop.f32.mrf.mxu0
  %v2206 = vadd.f32 %v1773, %v2205
  %v2207 = vpop.f32.mrf.mxu0
  %2208 = vmatprep.mubr.bf16.mxu0 %v1032
  %2209 = vmatmul.mubr.bf16.gmra.mxu0 %v1031
  %v2210 = vpop.f32.mrf.mxu0
  %v2211 = vadd.f32 %v1778, %v2210
  %v2212 = vpop.f32.mrf.mxu0
  %v2213 = vpop.f32.mrf.mxu0
  %v2214 = vadd.f32 %v1781, %v2213
  %v2215 = vpop.f32.mrf.mxu0
  %2216 = vmatprep.mubr.bf16.mxu0 %v1035
  %2217 = vmatmul.mubr.bf16.gmra.mxu0 %v1034
  %v2218 = vpop.f32.mrf.mxu0
  %v2219 = vadd.f32 %v1786, %v2218
  %v2220 = vpop.f32.mrf.mxu0
  %v2221 = vpop.f32.mrf.mxu0
  %v2222 = vadd.f32 %v1789, %v2221
  %v2223 = vpop.f32.mrf.mxu0
  %2224 = vmatprep.mubr.bf16.mxu0 %v1038
  %2225 = vmatmul.mubr.bf16.gmra.mxu0 %v1037
  %v2226 = vpop.f32.mrf.mxu0
  %v2227 = vadd.f32 %v1794, %v2226
  %v2228 = vpop.f32.mrf.mxu0
  %v2229 = vpop.f32.mrf.mxu0
  %v2230 = vadd.f32 %v1797, %v2229
  %v2231 = vpop.f32.mrf.mxu0
  %2232 = vmatprep.mubr.bf16.mxu0 %v1041
  %2233 = vmatmul.mubr.bf16.gmra.mxu0 %v1040
  %v2234 = vpop.f32.mrf.mxu0
  %v2235 = vadd.f32 %v1802, %v2234
  %v2236 = vpop.f32.mrf.mxu0
  %v2237 = vpop.f32.mrf.mxu0
  %v2238 = vadd.f32 %v1805, %v2237
  %v2239 = vpop.f32.mrf.mxu0
  %2240 = vmatprep.mubr.bf16.mxu0 %v1044
  %2241 = vmatmul.mubr.bf16.gmra.mxu0 %v1043
  %v2242 = vpop.f32.mrf.mxu0
  %v2243 = vadd.f32 %v1810, %v2242
  %v2244 = vpop.f32.mrf.mxu0
  %v2245 = vpop.f32.mrf.mxu0
  %v2246 = vadd.f32 %v1813, %v2245
  %v2247 = vpop.f32.mrf.mxu0
  %2248 = vmatprep.mubr.bf16.mxu0 %v1047
  %2249 = vmatmul.mubr.bf16.gmra.mxu0 %v1046
  %v2250 = vpop.f32.mrf.mxu0
  %v2251 = vadd.f32 %v1818, %v2250
  %v2252 = vpop.f32.mrf.mxu0
  %v2253 = vpop.f32.mrf.mxu0
  %v2254 = vadd.f32 %v1821, %v2253
  %v2255 = vpop.f32.mrf.mxu0
  %2256 = vmatprep.mubr.bf16.mxu0 %v1050
  %2257 = vmatmul.mubr.bf16.gmra.mxu0 %v1049
  %v2258 = vpop.f32.mrf.mxu0
  %v2259 = vadd.f32 %v1826, %v2258
  %v2260 = vpop.f32.mrf.mxu0
  %v2261 = vpop.f32.mrf.mxu0
  %v2262 = vadd.f32 %v1829, %v2261
  %v2263 = vpop.f32.mrf.mxu0
  %2264 = vmatprep.mubr.bf16.mxu0 %v1053
  %2265 = vmatmul.mubr.bf16.gmra.mxu0 %v1052
  %v2266 = vpop.f32.mrf.mxu0
  %v2267 = vadd.f32 %v1834, %v2266
  %v2268 = vpop.f32.mrf.mxu0
  %v2269 = vpop.f32.mrf.mxu0
  %v2270 = vadd.f32 %v1837, %v2269
  %v2271 = vpop.f32.mrf.mxu0
  %2272 = vmatprep.mubr.bf16.mxu0 %v1056
  %2273 = vmatmul.mubr.bf16.gmra.mxu0 %v1055
  %v2274 = vpop.f32.mrf.mxu0
  %v2275 = vadd.f32 %v1842, %v2274
  %v2276 = vpop.f32.mrf.mxu0
  %v2277 = vpop.f32.mrf.mxu0
  %v2278 = vadd.f32 %v1845, %v2277
  %v2279 = vpop.f32.mrf.mxu0
  %2280 = vmatprep.mubr.bf16.mxu0 %v1059
  %2281 = vmatmul.mubr.bf16.gmra.mxu0 %v1058
  %v2282 = vpop.f32.mrf.mxu0
  %v2283 = vadd.f32 %v1850, %v2282
  %v2284 = vpop.f32.mrf.mxu0
  %v2285 = vpop.f32.mrf.mxu0
  %v2286 = vadd.f32 %v1853, %v2285
  %v2287 = vpop.f32.mrf.mxu0
  %2288 = vmatprep.mubr.bf16.mxu0 %v1062
  %2289 = vmatmul.mubr.bf16.gmra.mxu0 %v1061
  %v2290 = vpop.f32.mrf.mxu0
  %v2291 = vadd.f32 %v1858, %v2290
  %v2292 = vpop.f32.mrf.mxu0
  %v2293 = vpop.f32.mrf.mxu0
  %v2294 = vadd.f32 %v1861, %v2293
  %v2295 = vpop.f32.mrf.mxu0
  %2296 = vmatprep.mubr.bf16.mxu0 %v1065
  %2297 = vmatmul.mubr.bf16.gmra.mxu0 %v1064
  %v2298 = vpop.f32.mrf.mxu0
  %v2299 = vadd.f32 %v1866, %v2298
  %v2300 = vpop.f32.mrf.mxu0
  %v2301 = vpop.f32.mrf.mxu0
  %v2302 = vadd.f32 %v1869, %v2301
  %v2303 = vpop.f32.mrf.mxu0
  %2304 = vmatprep.mubr.bf16.mxu0 %v1068
  %2305 = vmatmul.mubr.bf16.gmra.mxu0 %v1067
  %v2306 = vpop.f32.mrf.mxu0
  %v2307 = vadd.f32 %v1874, %v2306
  %v2308 = vpop.f32.mrf.mxu0
  %v2309 = vpop.f32.mrf.mxu0
  %v2310 = vadd.f32 %v1877, %v2309
  %v2311 = vpop.f32.mrf.mxu0
  %2312 = vmatprep.mubr.bf16.mxu0 %v1071
  %2313 = vmatmul.mubr.bf16.gmra.mxu0 %v1070
  %v2314 = vpop.f32.mrf.mxu0
  %v2315 = vadd.f32 %v1882, %v2314
  %v2316 = vpop.f32.mrf.mxu0
  %v2317 = vpop.f32.mrf.mxu0
  %v2318 = vadd.f32 %v1885, %v2317
  %v2319 = vpop.f32.mrf.mxu0
  %2320 = vmatprep.mubr.bf16.mxu0 %v1074
  %2321 = vmatmul.mubr.bf16.gmra.mxu0 %v1073
  %v2322 = vpop.f32.mrf.mxu0
  %v2323 = vadd.f32 %v1890, %v2322
  %v2324 = vpop.f32.mrf.mxu0
  %v2325 = vpop.f32.mrf.mxu0
  %v2326 = vadd.f32 %v1893, %v2325
  %v2327 = vpop.f32.mrf.mxu0
  %2328 = vmatprep.mubr.bf16.mxu0 %v1077
  %2329 = vmatmul.mubr.bf16.gmra.mxu0 %v1076
  %v2330 = vpop.f32.mrf.mxu0
  %v2331 = vadd.f32 %v1898, %v2330
  %v2332 = vpop.f32.mrf.mxu0
  %v2333 = vpop.f32.mrf.mxu0
  %v2334 = vadd.f32 %v1901, %v2333
  %v2335 = vpop.f32.mrf.mxu0
  %2336 = vdwg.mxu0
  %2337 = vmatprep.subr.bf16.mxu0 0
  %2338 = vmatpush1.bf16.msra.mxu0 %v2023
  %2339 = vmatprep.subr.bf16.mxu0 0
  %2340 = vmatpush1.bf16.msra.mxu0 %v2022
  %2341 = vmatprep.subr.bf16.mxu0 0
  %2342 = vmatpush1.bf16.msra.mxu0 %v2021
  %2343 = vmatprep.subr.bf16.mxu0 0
  %2344 = vmatpush1.bf16.msra.mxu0 %v2020
  %2345 = vmatprep.subr.bf16.mxu0 0
  %2346 = vmatpush1.bf16.msra.mxu0 %v2019
  %2347 = vmatprep.subr.bf16.mxu0 0
  %2348 = vmatpush1.bf16.msra.mxu0 %v2018
  %2349 = vmatprep.subr.bf16.mxu0 0
  %2350 = vmatpush1.bf16.msra.mxu0 %v2017
  %2351 = vmatprep.subr.bf16.mxu0 0
  %2352 = vmatpush1.bf16.msra.mxu0 %v2016
  %2353 = vmatprep.subr.bf16.mxu0 0
  %2354 = vmatpush2.bf16.msra.mxu0 0
  %2355 = vmatprep.subr.bf16.mxu0 0
  %2356 = vmatpush2.bf16.msra.mxu0 0
  %2357 = vmatprep.subr.bf16.mxu0 0
  %2358 = vmatpush2.bf16.msra.mxu0 0
  %2359 = vmatprep.subr.bf16.mxu0 0
  %2360 = vmatpush2.bf16.msra.mxu0 0
  %2361 = vmatprep.subr.bf16.mxu0 0
  %2362 = vmatpush2.bf16.msra.mxu0 0
  %2363 = vmatprep.subr.bf16.mxu0 0
  %2364 = vmatpush2.bf16.msra.mxu0 0
  %2365 = vmatprep.subr.bf16.mxu0 0
  %2366 = vmatpush2.bf16.msra.mxu0 0
  %2367 = vmatprep.subr.bf16.mxu0 0
  %2368 = vmatpush2.bf16.msra.mxu0 0
  %2369 = vmatprep.mubr.bf16.mxu0 0
  %2370 = vmatmul.mubr.bf16.gmra.mxu0 %v979
  %v2371 = vpop.f32.mrf.mxu0
  %v2372 = vadd.f32 %v2083, %v2371
  %v2373 = vpop.f32.mrf.mxu0
  %v2374 = vpop.f32.mrf.mxu0
  %v2375 = vadd.f32 %v2086, %v2374
  %v2376 = vpop.f32.mrf.mxu0
  %2377 = vmatprep.mubr.bf16.mxu0 0
  %2378 = vmatmul.mubr.bf16.gmra.mxu0 %v982
  %v2379 = vpop.f32.mrf.mxu0
  %v2380 = vadd.f32 %v2091, %v2379
  %v2381 = vpop.f32.mrf.mxu0
  %v2382 = vpop.f32.mrf.mxu0
  %v2383 = vadd.f32 %v2094, %v2382
  %v2384 = vpop.f32.mrf.mxu0
  %2385 = vmatprep.mubr.bf16.mxu0 0
  %2386 = vmatmul.mubr.bf16.gmra.mxu0 %v985
  %v2387 = vpop.f32.mrf.mxu0
  %v2388 = vadd.f32 %v2099, %v2387
  %v2389 = vpop.f32.mrf.mxu0
  %v2390 = vpop.f32.mrf.mxu0
  %v2391 = vadd.f32 %v2102, %v2390
  %v2392 = vpop.f32.mrf.mxu0
  %2393 = vmatprep.mubr.bf16.mxu0 0
  %2394 = vmatmul.mubr.bf16.gmra.mxu0 %v988
  %v2395 = vpop.f32.mrf.mxu0
  %v2396 = vadd.f32 %v2107, %v2395
  %v2397 = vpop.f32.mrf.mxu0
  %v2398 = vpop.f32.mrf.mxu0
  %v2399 = vadd.f32 %v2110, %v2398
  %v2400 = vpop.f32.mrf.mxu0
  %2401 = vmatprep.mubr.bf16.mxu0 0
  %2402 = vmatmul.mubr.bf16.gmra.mxu0 %v991
  %v2403 = vpop.f32.mrf.mxu0
  %v2404 = vadd.f32 %v2115, %v2403
  %v2405 = vpop.f32.mrf.mxu0
  %v2406 = vpop.f32.mrf.mxu0
  %v2407 = vadd.f32 %v2118, %v2406
  %v2408 = vpop.f32.mrf.mxu0
  %2409 = vmatprep.mubr.bf16.mxu0 0
  %2410 = vmatmul.mubr.bf16.gmra.mxu0 %v994
  %v2411 = vpop.f32.mrf.mxu0
  %v2412 = vadd.f32 %v2123, %v2411
  %v2413 = vpop.f32.mrf.mxu0
  %v2414 = vpop.f32.mrf.mxu0
  %v2415 = vadd.f32 %v2126, %v2414
  %v2416 = vpop.f32.mrf.mxu0
  %2417 = vmatprep.mubr.bf16.mxu0 0
  %2418 = vmatmul.mubr.bf16.gmra.mxu0 %v997
  %v2419 = vpop.f32.mrf.mxu0
  %v2420 = vadd.f32 %v2131, %v2419
  %v2421 = vpop.f32.mrf.mxu0
  %v2422 = vpop.f32.mrf.mxu0
  %v2423 = vadd.f32 %v2134, %v2422
  %v2424 = vpop.f32.mrf.mxu0
  %2425 = vmatprep.mubr.bf16.mxu0 0
  %2426 = vmatmul.mubr.bf16.gmra.mxu0 %v1000
  %v2427 = vpop.f32.mrf.mxu0
  %v2428 = vadd.f32 %v2139, %v2427
  %v2429 = vpop.f32.mrf.mxu0
  %v2430 = vpop.f32.mrf.mxu0
  %v2431 = vadd.f32 %v2142, %v2430
  %v2432 = vpop.f32.mrf.mxu0
  %2433 = vmatprep.mubr.bf16.mxu0 0
  %2434 = vmatmul.mubr.bf16.gmra.mxu0 %v1003
  %v2435 = vpop.f32.mrf.mxu0
  %v2436 = vadd.f32 %v2147, %v2435
  %v2437 = vpop.f32.mrf.mxu0
  %v2438 = vpop.f32.mrf.mxu0
  %v2439 = vadd.f32 %v2150, %v2438
  %v2440 = vpop.f32.mrf.mxu0
  %2441 = vmatprep.mubr.bf16.mxu0 0
  %2442 = vmatmul.mubr.bf16.gmra.mxu0 %v1006
  %v2443 = vpop.f32.mrf.mxu0
  %v2444 = vadd.f32 %v2155, %v2443
  %v2445 = vpop.f32.mrf.mxu0
  %v2446 = vpop.f32.mrf.mxu0
  %v2447 = vadd.f32 %v2158, %v2446
  %v2448 = vpop.f32.mrf.mxu0
  %2449 = vmatprep.mubr.bf16.mxu0 0
  %2450 = vmatmul.mubr.bf16.gmra.mxu0 %v1009
  %v2451 = vpop.f32.mrf.mxu0
  %v2452 = vadd.f32 %v2163, %v2451
  %v2453 = vpop.f32.mrf.mxu0
  %v2454 = vpop.f32.mrf.mxu0
  %v2455 = vadd.f32 %v2166, %v2454
  %v2456 = vpop.f32.mrf.mxu0
  %2457 = vmatprep.mubr.bf16.mxu0 0
  %2458 = vmatmul.mubr.bf16.gmra.mxu0 %v1012
  %v2459 = vpop.f32.mrf.mxu0
  %v2460 = vadd.f32 %v2171, %v2459
  %v2461 = vpop.f32.mrf.mxu0
  %v2462 = vpop.f32.mrf.mxu0
  %v2463 = vadd.f32 %v2174, %v2462
  %v2464 = vpop.f32.mrf.mxu0
  %2465 = vmatprep.mubr.bf16.mxu0 0
  %2466 = vmatmul.mubr.bf16.gmra.mxu0 %v1015
  %v2467 = vpop.f32.mrf.mxu0
  %v2468 = vadd.f32 %v2179, %v2467
  %v2469 = vpop.f32.mrf.mxu0
  %v2470 = vpop.f32.mrf.mxu0
  %v2471 = vadd.f32 %v2182, %v2470
  %v2472 = vpop.f32.mrf.mxu0
  %2473 = vmatprep.mubr.bf16.mxu0 0
  %2474 = vmatmul.mubr.bf16.gmra.mxu0 %v1018
  %v2475 = vpop.f32.mrf.mxu0
  %v2476 = vadd.f32 %v2187, %v2475
  %v2477 = vpop.f32.mrf.mxu0
  %v2478 = vpop.f32.mrf.mxu0
  %v2479 = vadd.f32 %v2190, %v2478
  %v2480 = vpop.f32.mrf.mxu0
  %2481 = vmatprep.mubr.bf16.mxu0 0
  %2482 = vmatmul.mubr.bf16.gmra.mxu0 %v1021
  %v2483 = vpop.f32.mrf.mxu0
  %v2484 = vadd.f32 %v2195, %v2483
  %v2485 = vpop.f32.mrf.mxu0
  %v2486 = vpop.f32.mrf.mxu0
  %v2487 = vadd.f32 %v2198, %v2486
  %v2488 = vpop.f32.mrf.mxu0
  %2489 = vmatprep.mubr.bf16.mxu0 0
  %2490 = vmatmul.mubr.bf16.gmra.mxu0 %v1024
  %v2491 = vpop.f32.mrf.mxu0
  %v2492 = vadd.f32 %v2203, %v2491
  %v2493 = vpop.f32.mrf.mxu0
  %v2494 = vpop.f32.mrf.mxu0
  %v2495 = vadd.f32 %v2206, %v2494
  %v2496 = vpop.f32.mrf.mxu0
  %2497 = vmatprep.mubr.bf16.mxu0 0
  %2498 = vmatmul.mubr.bf16.gmra.mxu0 %v1033
  %v2499 = vpop.f32.mrf.mxu0
  %v2500 = vadd.f32 %v2211, %v2499
  %v2501 = vpop.f32.mrf.mxu0
  %v2502 = vpop.f32.mrf.mxu0
  %v2503 = vadd.f32 %v2214, %v2502
  %v2504 = vpop.f32.mrf.mxu0
  %2505 = vmatprep.mubr.bf16.mxu0 0
  %2506 = vmatmul.mubr.bf16.gmra.mxu0 %v1036
  %v2507 = vpop.f32.mrf.mxu0
  %v2508 = vadd.f32 %v2219, %v2507
  %v2509 = vpop.f32.mrf.mxu0
  %v2510 = vpop.f32.mrf.mxu0
  %v2511 = vadd.f32 %v2222, %v2510
  %v2512 = vpop.f32.mrf.mxu0
  %2513 = vmatprep.mubr.bf16.mxu0 0
  %2514 = vmatmul.mubr.bf16.gmra.mxu0 %v1039
  %v2515 = vpop.f32.mrf.mxu0
  %v2516 = vadd.f32 %v2227, %v2515
  %v2517 = vpop.f32.mrf.mxu0
  %v2518 = vpop.f32.mrf.mxu0
  %v2519 = vadd.f32 %v2230, %v2518
  %v2520 = vpop.f32.mrf.mxu0
  %2521 = vmatprep.mubr.bf16.mxu0 0
  %2522 = vmatmul.mubr.bf16.gmra.mxu0 %v1042
  %v2523 = vpop.f32.mrf.mxu0
  %v2524 = vadd.f32 %v2235, %v2523
  %v2525 = vpop.f32.mrf.mxu0
  %v2526 = vpop.f32.mrf.mxu0
  %v2527 = vadd.f32 %v2238, %v2526
  %v2528 = vpop.f32.mrf.mxu0
  %2529 = vmatprep.mubr.bf16.mxu0 0
  %2530 = vmatmul.mubr.bf16.gmra.mxu0 %v1045
  %v2531 = vpop.f32.mrf.mxu0
  %v2532 = vadd.f32 %v2243, %v2531
  %v2533 = vpop.f32.mrf.mxu0
  %v2534 = vpop.f32.mrf.mxu0
  %v2535 = vadd.f32 %v2246, %v2534
  %v2536 = vpop.f32.mrf.mxu0
  %2537 = vmatprep.mubr.bf16.mxu0 0
  %2538 = vmatmul.mubr.bf16.gmra.mxu0 %v1048
  %v2539 = vpop.f32.mrf.mxu0
  %v2540 = vadd.f32 %v2251, %v2539
  %v2541 = vpop.f32.mrf.mxu0
  %v2542 = vpop.f32.mrf.mxu0
  %v2543 = vadd.f32 %v2254, %v2542
  %v2544 = vpop.f32.mrf.mxu0
  %2545 = vmatprep.mubr.bf16.mxu0 0
  %2546 = vmatmul.mubr.bf16.gmra.mxu0 %v1051
  %v2547 = vpop.f32.mrf.mxu0
  %v2548 = vadd.f32 %v2259, %v2547
  %v2549 = vpop.f32.mrf.mxu0
  %v2550 = vpop.f32.mrf.mxu0
  %v2551 = vadd.f32 %v2262, %v2550
  %v2552 = vpop.f32.mrf.mxu0
  %2553 = vmatprep.mubr.bf16.mxu0 0
  %2554 = vmatmul.mubr.bf16.gmra.mxu0 %v1054
  %v2555 = vpop.f32.mrf.mxu0
  %v2556 = vadd.f32 %v2267, %v2555
  %v2557 = vpop.f32.mrf.mxu0
  %v2558 = vpop.f32.mrf.mxu0
  %v2559 = vadd.f32 %v2270, %v2558
  %v2560 = vpop.f32.mrf.mxu0
  %2561 = vmatprep.mubr.bf16.mxu0 0
  %2562 = vmatmul.mubr.bf16.gmra.mxu0 %v1057
  %v2563 = vpop.f32.mrf.mxu0
  %v2564 = vadd.f32 %v2275, %v2563
  %v2565 = vpop.f32.mrf.mxu0
  %v2566 = vpop.f32.mrf.mxu0
  %v2567 = vadd.f32 %v2278, %v2566
  %v2568 = vpop.f32.mrf.mxu0
  %2569 = vmatprep.mubr.bf16.mxu0 0
  %2570 = vmatmul.mubr.bf16.gmra.mxu0 %v1060
  %v2571 = vpop.f32.mrf.mxu0
  %v2572 = vadd.f32 %v2283, %v2571
  %v2573 = vpop.f32.mrf.mxu0
  %v2574 = vpop.f32.mrf.mxu0
  %v2575 = vadd.f32 %v2286, %v2574
  %v2576 = vpop.f32.mrf.mxu0
  %2577 = vmatprep.mubr.bf16.mxu0 0
  %2578 = vmatmul.mubr.bf16.gmra.mxu0 %v1063
  %v2579 = vpop.f32.mrf.mxu0
  %v2580 = vadd.f32 %v2291, %v2579
  %v2581 = vpop.f32.mrf.mxu0
  %v2582 = vpop.f32.mrf.mxu0
  %v2583 = vadd.f32 %v2294, %v2582
  %v2584 = vpop.f32.mrf.mxu0
  %2585 = vmatprep.mubr.bf16.mxu0 0
  %2586 = vmatmul.mubr.bf16.gmra.mxu0 %v1066
  %v2587 = vpop.f32.mrf.mxu0
  %v2588 = vadd.f32 %v2299, %v2587
  %v2589 = vpop.f32.mrf.mxu0
  %v2590 = vpop.f32.mrf.mxu0
  %v2591 = vadd.f32 %v2302, %v2590
  %v2592 = vpop.f32.mrf.mxu0
  %2593 = vmatprep.mubr.bf16.mxu0 0
  %2594 = vmatmul.mubr.bf16.gmra.mxu0 %v1069
  %v2595 = vpop.f32.mrf.mxu0
  %v2596 = vadd.f32 %v2307, %v2595
  %v2597 = vpop.f32.mrf.mxu0
  %v2598 = vpop.f32.mrf.mxu0
  %v2599 = vadd.f32 %v2310, %v2598
  %v2600 = vpop.f32.mrf.mxu0
  %2601 = vmatprep.mubr.bf16.mxu0 0
  %2602 = vmatmul.mubr.bf16.gmra.mxu0 %v1072
  %v2603 = vpop.f32.mrf.mxu0
  %v2604 = vadd.f32 %v2315, %v2603
  %v2605 = vpop.f32.mrf.mxu0
  %v2606 = vpop.f32.mrf.mxu0
  %v2607 = vadd.f32 %v2318, %v2606
  %v2608 = vpop.f32.mrf.mxu0
  %2609 = vmatprep.mubr.bf16.mxu0 0
  %2610 = vmatmul.mubr.bf16.gmra.mxu0 %v1075
  %v2611 = vpop.f32.mrf.mxu0
  %v2612 = vadd.f32 %v2323, %v2611
  %v2613 = vpop.f32.mrf.mxu0
  %v2614 = vpop.f32.mrf.mxu0
  %v2615 = vadd.f32 %v2326, %v2614
  %v2616 = vpop.f32.mrf.mxu0
  %2617 = vmatprep.mubr.bf16.mxu0 0
  %2618 = vmatmul.mubr.bf16.gmra.mxu0 %v1078
  %v2619 = vpop.f32.mrf.mxu0
  %v2620 = vadd.f32 %v2331, %v2619
  %v2621 = vpop.f32.mrf.mxu0
  %v2622 = vpop.f32.mrf.mxu0
  %v2623 = vadd.f32 %v2334, %v2622
  %v2624 = vpop.f32.mrf.mxu0
  %2625 = vdwg.mxu0
  %s2626 = scalar_lea.vmem %s1, 384
  %v2627 = vld [vmem:[%s2626] sm:$0xf]
  %v2628 = vld [vmem:[%s2626 + $0x4] sm:$0xf]
  %v2629 = vld [vmem:[%s2626 + $0x8] sm:$0xf]
  %v2630 = vld [vmem:[%s2626 + $0xc] sm:$0xf]
  %v2631 = vld [vmem:[%s2626 + $0x10] sm:$0xf]
  %v2632 = vld [vmem:[%s2626 + $0x14] sm:$0xf]
  %v2633 = vld [vmem:[%s2626 + $0x18] sm:$0xf]
  %v2634 = vld [vmem:[%s2626 + $0x1c] sm:$0xf]
  %v2635 = vld [vmem:[%s2626 + $0x20] sm:$0xf]
  %v2636 = vld [vmem:[%s2626 + $0x24] sm:$0xf]
  %v2637 = vld [vmem:[%s2626 + $0x28] sm:$0xf]
  %v2638 = vld [vmem:[%s2626 + $0x2c] sm:$0xf]
  %v2639 = vld [vmem:[%s2626 + $0x30] sm:$0xf]
  %v2640 = vld [vmem:[%s2626 + $0x34] sm:$0xf]
  %v2641 = vld [vmem:[%s2626 + $0x38] sm:$0xf]
  %v2642 = vld [vmem:[%s2626 + $0x3c] sm:$0xf]
  %v2643 = vld [vmem:[%s2626 + $0x40] sm:$0xf]
  %v2644 = vld [vmem:[%s2626 + $0x44] sm:$0xf]
  %v2645 = vld [vmem:[%s2626 + $0x48] sm:$0xf]
  %v2646 = vld [vmem:[%s2626 + $0x4c] sm:$0xf]
  %v2647 = vld [vmem:[%s2626 + $0x50] sm:$0xf]
  %v2648 = vld [vmem:[%s2626 + $0x54] sm:$0xf]
  %v2649 = vld [vmem:[%s2626 + $0x58] sm:$0xf]
  %v2650 = vld [vmem:[%s2626 + $0x5c] sm:$0xf]
  %v2651 = vld [vmem:[%s2626 + $0x60] sm:$0xf]
  %v2652 = vld [vmem:[%s2626 + $0x64] sm:$0xf]
  %v2653 = vld [vmem:[%s2626 + $0x68] sm:$0xf]
  %v2654 = vld [vmem:[%s2626 + $0x6c] sm:$0xf]
  %v2655 = vld [vmem:[%s2626 + $0x70] sm:$0xf]
  %v2656 = vld [vmem:[%s2626 + $0x74] sm:$0xf]
  %v2657 = vld [vmem:[%s2626 + $0x78] sm:$0xf]
  %v2658 = vld [vmem:[%s2626 + $0x7c] sm:$0xf]
  %v2659 = vld [vmem:[%s2626 + $0x80] sm:$0xf]
  %v2660 = vld [vmem:[%s2626 + $0x84] sm:$0xf]
  %v2661 = vld [vmem:[%s2626 + $0x88] sm:$0xf]
  %v2662 = vld [vmem:[%s2626 + $0x8c] sm:$0xf]
  %v2663 = vld [vmem:[%s2626 + $0x90] sm:$0xf]
  %v2664 = vld [vmem:[%s2626 + $0x94] sm:$0xf]
  %v2665 = vld [vmem:[%s2626 + $0x98] sm:$0xf]
  %v2666 = vld [vmem:[%s2626 + $0x9c] sm:$0xf]
  %v2667 = vld [vmem:[%s2626 + $0xa0] sm:$0xf]
  %v2668 = vld [vmem:[%s2626 + $0xa4] sm:$0xf]
  %v2669 = vld [vmem:[%s2626 + $0xa8] sm:$0xf]
  %v2670 = vld [vmem:[%s2626 + $0xac] sm:$0xf]
  %v2671 = vld [vmem:[%s2626 + $0xb0] sm:$0xf]
  %v2672 = vld [vmem:[%s2626 + $0xb4] sm:$0xf]
  %v2673 = vld [vmem:[%s2626 + $0xb8] sm:$0xf]
  %v2674 = vld [vmem:[%s2626 + $0xbc] sm:$0xf]
  %v2723 = vunpack.c.l.b16 %v2627
  %v2724 = vunpack.c.l.b16 %v2628
  %v2725 = vunpack.c.l.b16 %v2629
  %v2726 = vunpack.c.l.b16 %v2630
  %v2727 = vunpack.c.l.b16 %v2631
  %v2728 = vunpack.c.l.b16 %v2632
  %v2729 = vunpack.c.l.b16 %v2633
  %v2730 = vunpack.c.l.b16 %v2634
  %v2731 = vunpack.c.l.b16 %v2635
  %v2732 = vunpack.c.l.b16 %v2636
  %v2733 = vunpack.c.l.b16 %v2637
  %v2734 = vunpack.c.l.b16 %v2638
  %v2735 = vunpack.c.l.b16 %v2639
  %v2736 = vunpack.c.l.b16 %v2640
  %v2737 = vunpack.c.l.b16 %v2641
  %v2738 = vunpack.c.l.b16 %v2642
  %v2739 = vunpack.c.l.b16 %v2643
  %v2740 = vunpack.c.l.b16 %v2644
  %v2741 = vunpack.c.l.b16 %v2645
  %v2742 = vunpack.c.l.b16 %v2646
  %v2743 = vunpack.c.l.b16 %v2647
  %v2744 = vunpack.c.l.b16 %v2648
  %v2745 = vunpack.c.l.b16 %v2649
  %v2746 = vunpack.c.l.b16 %v2650
  %v2747 = vunpack.c.l.b16 %v2651
  %v2748 = vunpack.c.l.b16 %v2652
  %v2749 = vunpack.c.l.b16 %v2653
  %v2750 = vunpack.c.l.b16 %v2654
  %v2751 = vunpack.c.l.b16 %v2655
  %v2752 = vunpack.c.l.b16 %v2656
  %v2753 = vunpack.c.l.b16 %v2657
  %v2754 = vunpack.c.l.b16 %v2658
  %v2755 = vunpack.c.l.b16 %v2659
  %v2756 = vunpack.c.l.b16 %v2660
  %v2757 = vunpack.c.l.b16 %v2661
  %v2758 = vunpack.c.l.b16 %v2662
  %v2759 = vunpack.c.l.b16 %v2663
  %v2760 = vunpack.c.l.b16 %v2664
  %v2761 = vunpack.c.l.b16 %v2665
  %v2762 = vunpack.c.l.b16 %v2666
  %v2763 = vunpack.c.l.b16 %v2667
  %v2764 = vunpack.c.l.b16 %v2668
  %v2765 = vunpack.c.l.b16 %v2669
  %v2766 = vunpack.c.l.b16 %v2670
  %v2767 = vunpack.c.l.b16 %v2671
  %v2768 = vunpack.c.l.b16 %v2672
  %v2769 = vunpack.c.l.b16 %v2673
  %v2770 = vunpack.c.l.b16 %v2674
  %v2771 = vpack.c.b16 %v2724, %v2723
  %v2772 = vpack.c.b16 %v2726, %v2725
  %v2773 = vpack.c.b16 %v2728, %v2727
  %v2774 = vpack.c.b16 %v2730, %v2729
  %v2775 = vpack.c.b16 %v2732, %v2731
  %v2776 = vpack.c.b16 %v2734, %v2733
  %v2777 = vpack.c.b16 %v2736, %v2735
  %v2778 = vpack.c.b16 %v2738, %v2737
  %v2779 = vpack.c.b16 %v2740, %v2739
  %v2780 = vpack.c.b16 %v2742, %v2741
  %v2781 = vpack.c.b16 %v2744, %v2743
  %v2782 = vpack.c.b16 %v2746, %v2745
  %v2783 = vpack.c.b16 %v2748, %v2747
  %v2784 = vpack.c.b16 %v2750, %v2749
  %v2785 = vpack.c.b16 %v2752, %v2751
  %v2786 = vpack.c.b16 %v2754, %v2753
  %v2787 = vpack.c.b16 %v2756, %v2755
  %v2788 = vpack.c.b16 %v2758, %v2757
  %v2789 = vpack.c.b16 %v2760, %v2759
  %v2790 = vpack.c.b16 %v2762, %v2761
  %v2791 = vpack.c.b16 %v2764, %v2763
  %v2792 = vpack.c.b16 %v2766, %v2765
  %v2793 = vpack.c.b16 %v2768, %v2767
  %v2794 = vpack.c.b16 %v2770, %v2769
  %2819 = vmatprep.subr.bf16.mxu0 0
  %2820 = vmatpush1.bf16.msra.mxu0 %v2778
  %2821 = vmatprep.subr.bf16.mxu0 0
  %2822 = vmatpush1.bf16.msra.mxu0 %v2777
  %2823 = vmatprep.subr.bf16.mxu0 0
  %2824 = vmatpush1.bf16.msra.mxu0 %v2776
  %2825 = vmatprep.subr.bf16.mxu0 0
  %2826 = vmatpush1.bf16.msra.mxu0 %v2775
  %2827 = vmatprep.subr.bf16.mxu0 0
  %2828 = vmatpush1.bf16.msra.mxu0 %v2774
  %2829 = vmatprep.subr.bf16.mxu0 0
  %2830 = vmatpush1.bf16.msra.mxu0 %v2773
  %2831 = vmatprep.subr.bf16.mxu0 0
  %2832 = vmatpush1.bf16.msra.mxu0 %v2772
  %2833 = vmatprep.subr.bf16.mxu0 0
  %2834 = vmatpush1.bf16.msra.mxu0 %v2771
  %2835 = vmatprep.subr.bf16.mxu0 0
  %2836 = vmatpush2.bf16.msra.mxu0 %v2786
  %2837 = vmatprep.subr.bf16.mxu0 0
  %2838 = vmatpush2.bf16.msra.mxu0 %v2785
  %2839 = vmatprep.subr.bf16.mxu0 0
  %2840 = vmatpush2.bf16.msra.mxu0 %v2784
  %2841 = vmatprep.subr.bf16.mxu0 0
  %2842 = vmatpush2.bf16.msra.mxu0 %v2783
  %2843 = vmatprep.subr.bf16.mxu0 0
  %2844 = vmatpush2.bf16.msra.mxu0 %v2782
  %2845 = vmatprep.subr.bf16.mxu0 0
  %2846 = vmatpush2.bf16.msra.mxu0 %v2781
  %2847 = vmatprep.subr.bf16.mxu0 0
  %2848 = vmatpush2.bf16.msra.mxu0 %v2780
  %2849 = vmatprep.subr.bf16.mxu0 0
  %2850 = vmatpush2.bf16.msra.mxu0 %v2779
  %2851 = vmatprep.mubr.bf16.mxu0 %v984
  %2852 = vmatmul.mubr.bf16.gmra.mxu0 %v983
  %v2853 = vpop.f32.mrf.mxu0
  %v2854 = vadd.f32 0.0, %v2853
  %v2855 = vpop.f32.mrf.mxu0
  %v2856 = vpop.f32.mrf.mxu0
  %v2857 = vadd.f32 0.0, %v2856
  %v2858 = vpop.f32.mrf.mxu0
  %2859 = vmatprep.mubr.bf16.mxu0 %v987
  %2860 = vmatmul.mubr.bf16.gmra.mxu0 %v986
  %v2861 = vpop.f32.mrf.mxu0
  %v2862 = vadd.f32 0.0, %v2861
  %v2863 = vpop.f32.mrf.mxu0
  %v2864 = vpop.f32.mrf.mxu0
  %v2865 = vadd.f32 0.0, %v2864
  %v2866 = vpop.f32.mrf.mxu0
  %2867 = vmatprep.mubr.bf16.mxu0 %v990
  %2868 = vmatmul.mubr.bf16.gmra.mxu0 %v989
  %v2869 = vpop.f32.mrf.mxu0
  %v2870 = vadd.f32 0.0, %v2869
  %v2871 = vpop.f32.mrf.mxu0
  %v2872 = vpop.f32.mrf.mxu0
  %v2873 = vadd.f32 0.0, %v2872
  %v2874 = vpop.f32.mrf.mxu0
  %2875 = vmatprep.mubr.bf16.mxu0 %v993
  %2876 = vmatmul.mubr.bf16.gmra.mxu0 %v992
  %v2877 = vpop.f32.mrf.mxu0
  %v2878 = vadd.f32 0.0, %v2877
  %v2879 = vpop.f32.mrf.mxu0
  %v2880 = vpop.f32.mrf.mxu0
  %v2881 = vadd.f32 0.0, %v2880
  %v2882 = vpop.f32.mrf.mxu0
  %2883 = vmatprep.mubr.bf16.mxu0 %v996
  %2884 = vmatmul.mubr.bf16.gmra.mxu0 %v995
  %v2885 = vpop.f32.mrf.mxu0
  %v2886 = vadd.f32 0.0, %v2885
  %v2887 = vpop.f32.mrf.mxu0
  %v2888 = vpop.f32.mrf.mxu0
  %v2889 = vadd.f32 0.0, %v2888
  %v2890 = vpop.f32.mrf.mxu0
  %2891 = vmatprep.mubr.bf16.mxu0 %v999
  %2892 = vmatmul.mubr.bf16.gmra.mxu0 %v998
  %v2893 = vpop.f32.mrf.mxu0
  %v2894 = vadd.f32 0.0, %v2893
  %v2895 = vpop.f32.mrf.mxu0
  %v2896 = vpop.f32.mrf.mxu0
  %v2897 = vadd.f32 0.0, %v2896
  %v2898 = vpop.f32.mrf.mxu0
  %2899 = vmatprep.mubr.bf16.mxu0 %v1002
  %2900 = vmatmul.mubr.bf16.gmra.mxu0 %v1001
  %v2901 = vpop.f32.mrf.mxu0
  %v2902 = vadd.f32 0.0, %v2901
  %v2903 = vpop.f32.mrf.mxu0
  %v2904 = vpop.f32.mrf.mxu0
  %v2905 = vadd.f32 0.0, %v2904
  %v2906 = vpop.f32.mrf.mxu0
  %2907 = vmatprep.mubr.bf16.mxu0 %v1005
  %2908 = vmatmul.mubr.bf16.gmra.mxu0 %v1004
  %v2909 = vpop.f32.mrf.mxu0
  %v2910 = vadd.f32 0.0, %v2909
  %v2911 = vpop.f32.mrf.mxu0
  %v2912 = vpop.f32.mrf.mxu0
  %v2913 = vadd.f32 0.0, %v2912
  %v2914 = vpop.f32.mrf.mxu0
  %2915 = vmatprep.mubr.bf16.mxu0 %v1008
  %2916 = vmatmul.mubr.bf16.gmra.mxu0 %v1007
  %v2917 = vpop.f32.mrf.mxu0
  %v2918 = vadd.f32 0.0, %v2917
  %v2919 = vpop.f32.mrf.mxu0
  %v2920 = vpop.f32.mrf.mxu0
  %v2921 = vadd.f32 0.0, %v2920
  %v2922 = vpop.f32.mrf.mxu0
  %2923 = vmatprep.mubr.bf16.mxu0 %v1011
  %2924 = vmatmul.mubr.bf16.gmra.mxu0 %v1010
  %v2925 = vpop.f32.mrf.mxu0
  %v2926 = vadd.f32 0.0, %v2925
  %v2927 = vpop.f32.mrf.mxu0
  %v2928 = vpop.f32.mrf.mxu0
  %v2929 = vadd.f32 0.0, %v2928
  %v2930 = vpop.f32.mrf.mxu0
  %2931 = vmatprep.mubr.bf16.mxu0 %v1014
  %2932 = vmatmul.mubr.bf16.gmra.mxu0 %v1013
  %v2933 = vpop.f32.mrf.mxu0
  %v2934 = vadd.f32 0.0, %v2933
  %v2935 = vpop.f32.mrf.mxu0
  %v2936 = vpop.f32.mrf.mxu0
  %v2937 = vadd.f32 0.0, %v2936
  %v2938 = vpop.f32.mrf.mxu0
  %2939 = vmatprep.mubr.bf16.mxu0 %v1017
  %2940 = vmatmul.mubr.bf16.gmra.mxu0 %v1016
  %v2941 = vpop.f32.mrf.mxu0
  %v2942 = vadd.f32 0.0, %v2941
  %v2943 = vpop.f32.mrf.mxu0
  %v2944 = vpop.f32.mrf.mxu0
  %v2945 = vadd.f32 0.0, %v2944
  %v2946 = vpop.f32.mrf.mxu0
  %2947 = vmatprep.mubr.bf16.mxu0 %v1020
  %2948 = vmatmul.mubr.bf16.gmra.mxu0 %v1019
  %v2949 = vpop.f32.mrf.mxu0
  %v2950 = vadd.f32 0.0, %v2949
  %v2951 = vpop.f32.mrf.mxu0
  %v2952 = vpop.f32.mrf.mxu0
  %v2953 = vadd.f32 0.0, %v2952
  %v2954 = vpop.f32.mrf.mxu0
  %2955 = vmatprep.mubr.bf16.mxu0 %v1023
  %2956 = vmatmul.mubr.bf16.gmra.mxu0 %v1022
  %v2957 = vpop.f32.mrf.mxu0
  %v2958 = vadd.f32 0.0, %v2957
  %v2959 = vpop.f32.mrf.mxu0
  %v2960 = vpop.f32.mrf.mxu0
  %v2961 = vadd.f32 0.0, %v2960
  %v2962 = vpop.f32.mrf.mxu0
  %2963 = vmatprep.mubr.bf16.mxu0 %v1026
  %2964 = vmatmul.mubr.bf16.gmra.mxu0 %v1025
  %v2965 = vpop.f32.mrf.mxu0
  %v2966 = vadd.f32 0.0, %v2965
  %v2967 = vpop.f32.mrf.mxu0
  %v2968 = vpop.f32.mrf.mxu0
  %v2969 = vadd.f32 0.0, %v2968
  %v2970 = vpop.f32.mrf.mxu0
  %2971 = vmatprep.mubr.bf16.mxu0 %v1029
  %2972 = vmatmul.mubr.bf16.gmra.mxu0 %v1028
  %v2973 = vpop.f32.mrf.mxu0
  %v2974 = vadd.f32 0.0, %v2973
  %v2975 = vpop.f32.mrf.mxu0
  %v2976 = vpop.f32.mrf.mxu0
  %v2977 = vadd.f32 0.0, %v2976
  %v2978 = vpop.f32.mrf.mxu0
  %2979 = vmatprep.mubr.bf16.mxu0 %v1038
  %2980 = vmatmul.mubr.bf16.gmra.mxu0 %v1037
  %v2981 = vpop.f32.mrf.mxu0
  %v2982 = vadd.f32 0.0, %v2981
  %v2983 = vpop.f32.mrf.mxu0
  %v2984 = vpop.f32.mrf.mxu0
  %v2985 = vadd.f32 0.0, %v2984
  %v2986 = vpop.f32.mrf.mxu0
  %2987 = vmatprep.mubr.bf16.mxu0 %v1041
  %2988 = vmatmul.mubr.bf16.gmra.mxu0 %v1040
  %v2989 = vpop.f32.mrf.mxu0
  %v2990 = vadd.f32 0.0, %v2989
  %v2991 = vpop.f32.mrf.mxu0
  %v2992 = vpop.f32.mrf.mxu0
  %v2993 = vadd.f32 0.0, %v2992
  %v2994 = vpop.f32.mrf.mxu0
  %2995 = vmatprep.mubr.bf16.mxu0 %v1044
  %2996 = vmatmul.mubr.bf16.gmra.mxu0 %v1043
  %v2997 = vpop.f32.mrf.mxu0
  %v2998 = vadd.f32 0.0, %v2997
  %v2999 = vpop.f32.mrf.mxu0
  %v3000 = vpop.f32.mrf.mxu0
  %v3001 = vadd.f32 0.0, %v3000
  %v3002 = vpop.f32.mrf.mxu0
  %3003 = vmatprep.mubr.bf16.mxu0 %v1047
  %3004 = vmatmul.mubr.bf16.gmra.mxu0 %v1046
  %v3005 = vpop.f32.mrf.mxu0
  %v3006 = vadd.f32 0.0, %v3005
  %v3007 = vpop.f32.mrf.mxu0
  %v3008 = vpop.f32.mrf.mxu0
  %v3009 = vadd.f32 0.0, %v3008
  %v3010 = vpop.f32.mrf.mxu0
  %3011 = vmatprep.mubr.bf16.mxu0 %v1050
  %3012 = vmatmul.mubr.bf16.gmra.mxu0 %v1049
  %v3013 = vpop.f32.mrf.mxu0
  %v3014 = vadd.f32 0.0, %v3013
  %v3015 = vpop.f32.mrf.mxu0
  %v3016 = vpop.f32.mrf.mxu0
  %v3017 = vadd.f32 0.0, %v3016
  %v3018 = vpop.f32.mrf.mxu0
  %3019 = vmatprep.mubr.bf16.mxu0 %v1053
  %3020 = vmatmul.mubr.bf16.gmra.mxu0 %v1052
  %v3021 = vpop.f32.mrf.mxu0
  %v3022 = vadd.f32 0.0, %v3021
  %v3023 = vpop.f32.mrf.mxu0
  %v3024 = vpop.f32.mrf.mxu0
  %v3025 = vadd.f32 0.0, %v3024
  %v3026 = vpop.f32.mrf.mxu0
  %3027 = vmatprep.mubr.bf16.mxu0 %v1056
  %3028 = vmatmul.mubr.bf16.gmra.mxu0 %v1055
  %v3029 = vpop.f32.mrf.mxu0
  %v3030 = vadd.f32 0.0, %v3029
  %v3031 = vpop.f32.mrf.mxu0
  %v3032 = vpop.f32.mrf.mxu0
  %v3033 = vadd.f32 0.0, %v3032
  %v3034 = vpop.f32.mrf.mxu0
  %3035 = vmatprep.mubr.bf16.mxu0 %v1059
  %3036 = vmatmul.mubr.bf16.gmra.mxu0 %v1058
  %v3037 = vpop.f32.mrf.mxu0
  %v3038 = vadd.f32 0.0, %v3037
  %v3039 = vpop.f32.mrf.mxu0
  %v3040 = vpop.f32.mrf.mxu0
  %v3041 = vadd.f32 0.0, %v3040
  %v3042 = vpop.f32.mrf.mxu0
  %3043 = vmatprep.mubr.bf16.mxu0 %v1062
  %3044 = vmatmul.mubr.bf16.gmra.mxu0 %v1061
  %v3045 = vpop.f32.mrf.mxu0
  %v3046 = vadd.f32 0.0, %v3045
  %v3047 = vpop.f32.mrf.mxu0
  %v3048 = vpop.f32.mrf.mxu0
  %v3049 = vadd.f32 0.0, %v3048
  %v3050 = vpop.f32.mrf.mxu0
  %3051 = vmatprep.mubr.bf16.mxu0 %v1065
  %3052 = vmatmul.mubr.bf16.gmra.mxu0 %v1064
  %v3053 = vpop.f32.mrf.mxu0
  %v3054 = vadd.f32 0.0, %v3053
  %v3055 = vpop.f32.mrf.mxu0
  %v3056 = vpop.f32.mrf.mxu0
  %v3057 = vadd.f32 0.0, %v3056
  %v3058 = vpop.f32.mrf.mxu0
  %3059 = vmatprep.mubr.bf16.mxu0 %v1068
  %3060 = vmatmul.mubr.bf16.gmra.mxu0 %v1067
  %v3061 = vpop.f32.mrf.mxu0
  %v3062 = vadd.f32 0.0, %v3061
  %v3063 = vpop.f32.mrf.mxu0
  %v3064 = vpop.f32.mrf.mxu0
  %v3065 = vadd.f32 0.0, %v3064
  %v3066 = vpop.f32.mrf.mxu0
  %3067 = vmatprep.mubr.bf16.mxu0 %v1071
  %3068 = vmatmul.mubr.bf16.gmra.mxu0 %v1070
  %v3069 = vpop.f32.mrf.mxu0
  %v3070 = vadd.f32 0.0, %v3069
  %v3071 = vpop.f32.mrf.mxu0
  %v3072 = vpop.f32.mrf.mxu0
  %v3073 = vadd.f32 0.0, %v3072
  %v3074 = vpop.f32.mrf.mxu0
  %3075 = vmatprep.mubr.bf16.mxu0 %v1074
  %3076 = vmatmul.mubr.bf16.gmra.mxu0 %v1073
  %v3077 = vpop.f32.mrf.mxu0
  %v3078 = vadd.f32 0.0, %v3077
  %v3079 = vpop.f32.mrf.mxu0
  %v3080 = vpop.f32.mrf.mxu0
  %v3081 = vadd.f32 0.0, %v3080
  %v3082 = vpop.f32.mrf.mxu0
  %3083 = vmatprep.mubr.bf16.mxu0 %v1077
  %3084 = vmatmul.mubr.bf16.gmra.mxu0 %v1076
  %v3085 = vpop.f32.mrf.mxu0
  %v3086 = vadd.f32 0.0, %v3085
  %v3087 = vpop.f32.mrf.mxu0
  %v3088 = vpop.f32.mrf.mxu0
  %v3089 = vadd.f32 0.0, %v3088
  %v3090 = vpop.f32.mrf.mxu0
  %3091 = vmatprep.mubr.bf16.mxu0 %v1080
  %3092 = vmatmul.mubr.bf16.gmra.mxu0 %v1079
  %v3093 = vpop.f32.mrf.mxu0
  %v3094 = vadd.f32 0.0, %v3093
  %v3095 = vpop.f32.mrf.mxu0
  %v3096 = vpop.f32.mrf.mxu0
  %v3097 = vadd.f32 0.0, %v3096
  %v3098 = vpop.f32.mrf.mxu0
  %3099 = vmatprep.mubr.bf16.mxu0 %v1083
  %3100 = vmatmul.mubr.bf16.gmra.mxu0 %v1082
  %v3101 = vpop.f32.mrf.mxu0
  %v3102 = vadd.f32 0.0, %v3101
  %v3103 = vpop.f32.mrf.mxu0
  %v3104 = vpop.f32.mrf.mxu0
  %v3105 = vadd.f32 0.0, %v3104
  %v3106 = vpop.f32.mrf.mxu0
  %3107 = vdwg.mxu0
  %3108 = vmatprep.subr.bf16.mxu0 0
  %3109 = vmatpush1.bf16.msra.mxu0 %v2794
  %3110 = vmatprep.subr.bf16.mxu0 0
  %3111 = vmatpush1.bf16.msra.mxu0 %v2793
  %3112 = vmatprep.subr.bf16.mxu0 0
  %3113 = vmatpush1.bf16.msra.mxu0 %v2792
  %3114 = vmatprep.subr.bf16.mxu0 0
  %3115 = vmatpush1.bf16.msra.mxu0 %v2791
  %3116 = vmatprep.subr.bf16.mxu0 0
  %3117 = vmatpush1.bf16.msra.mxu0 %v2790
  %3118 = vmatprep.subr.bf16.mxu0 0
  %3119 = vmatpush1.bf16.msra.mxu0 %v2789
  %3120 = vmatprep.subr.bf16.mxu0 0
  %3121 = vmatpush1.bf16.msra.mxu0 %v2788
  %3122 = vmatprep.subr.bf16.mxu0 0
  %3123 = vmatpush1.bf16.msra.mxu0 %v2787
  %3124 = vmatprep.subr.bf16.mxu0 0
  %3125 = vmatpush2.bf16.msra.mxu0 0
  %3126 = vmatprep.subr.bf16.mxu0 0
  %3127 = vmatpush2.bf16.msra.mxu0 0
  %3128 = vmatprep.subr.bf16.mxu0 0
  %3129 = vmatpush2.bf16.msra.mxu0 0
  %3130 = vmatprep.subr.bf16.mxu0 0
  %3131 = vmatpush2.bf16.msra.mxu0 0
  %3132 = vmatprep.subr.bf16.mxu0 0
  %3133 = vmatpush2.bf16.msra.mxu0 0
  %3134 = vmatprep.subr.bf16.mxu0 0
  %3135 = vmatpush2.bf16.msra.mxu0 0
  %3136 = vmatprep.subr.bf16.mxu0 0
  %3137 = vmatpush2.bf16.msra.mxu0 0
  %3138 = vmatprep.subr.bf16.mxu0 0
  %3139 = vmatpush2.bf16.msra.mxu0 0
  %3140 = vmatprep.mubr.bf16.mxu0 0
  %3141 = vmatmul.mubr.bf16.gmra.mxu0 %v985
  %v3142 = vpop.f32.mrf.mxu0
  %v3143 = vadd.f32 %v2854, %v3142
  %v3144 = vpop.f32.mrf.mxu0
  %v3145 = vpop.f32.mrf.mxu0
  %v3146 = vadd.f32 %v2857, %v3145
  %v3147 = vpop.f32.mrf.mxu0
  %3148 = vmatprep.mubr.bf16.mxu0 0
  %3149 = vmatmul.mubr.bf16.gmra.mxu0 %v988
  %v3150 = vpop.f32.mrf.mxu0
  %v3151 = vadd.f32 %v2862, %v3150
  %v3152 = vpop.f32.mrf.mxu0
  %v3153 = vpop.f32.mrf.mxu0
  %v3154 = vadd.f32 %v2865, %v3153
  %v3155 = vpop.f32.mrf.mxu0
  %3156 = vmatprep.mubr.bf16.mxu0 0
  %3157 = vmatmul.mubr.bf16.gmra.mxu0 %v991
  %v3158 = vpop.f32.mrf.mxu0
  %v3159 = vadd.f32 %v2870, %v3158
  %v3160 = vpop.f32.mrf.mxu0
  %v3161 = vpop.f32.mrf.mxu0
  %v3162 = vadd.f32 %v2873, %v3161
  %v3163 = vpop.f32.mrf.mxu0
  %3164 = vmatprep.mubr.bf16.mxu0 0
  %3165 = vmatmul.mubr.bf16.gmra.mxu0 %v994
  %v3166 = vpop.f32.mrf.mxu0
  %v3167 = vadd.f32 %v2878, %v3166
  %v3168 = vpop.f32.mrf.mxu0
  %v3169 = vpop.f32.mrf.mxu0
  %v3170 = vadd.f32 %v2881, %v3169
  %v3171 = vpop.f32.mrf.mxu0
  %3172 = vmatprep.mubr.bf16.mxu0 0
  %3173 = vmatmul.mubr.bf16.gmra.mxu0 %v997
  %v3174 = vpop.f32.mrf.mxu0
  %v3175 = vadd.f32 %v2886, %v3174
  %v3176 = vpop.f32.mrf.mxu0
  %v3177 = vpop.f32.mrf.mxu0
  %v3178 = vadd.f32 %v2889, %v3177
  %v3179 = vpop.f32.mrf.mxu0
  %3180 = vmatprep.mubr.bf16.mxu0 0
  %3181 = vmatmul.mubr.bf16.gmra.mxu0 %v1000
  %v3182 = vpop.f32.mrf.mxu0
  %v3183 = vadd.f32 %v2894, %v3182
  %v3184 = vpop.f32.mrf.mxu0
  %v3185 = vpop.f32.mrf.mxu0
  %v3186 = vadd.f32 %v2897, %v3185
  %v3187 = vpop.f32.mrf.mxu0
  %3188 = vmatprep.mubr.bf16.mxu0 0
  %3189 = vmatmul.mubr.bf16.gmra.mxu0 %v1003
  %v3190 = vpop.f32.mrf.mxu0
  %v3191 = vadd.f32 %v2902, %v3190
  %v3192 = vpop.f32.mrf.mxu0
  %v3193 = vpop.f32.mrf.mxu0
  %v3194 = vadd.f32 %v2905, %v3193
  %v3195 = vpop.f32.mrf.mxu0
  %3196 = vmatprep.mubr.bf16.mxu0 0
  %3197 = vmatmul.mubr.bf16.gmra.mxu0 %v1006
  %v3198 = vpop.f32.mrf.mxu0
  %v3199 = vadd.f32 %v2910, %v3198
  %v3200 = vpop.f32.mrf.mxu0
  %v3201 = vpop.f32.mrf.mxu0
  %v3202 = vadd.f32 %v2913, %v3201
  %v3203 = vpop.f32.mrf.mxu0
  %3204 = vmatprep.mubr.bf16.mxu0 0
  %3205 = vmatmul.mubr.bf16.gmra.mxu0 %v1009
  %v3206 = vpop.f32.mrf.mxu0
  %v3207 = vadd.f32 %v2918, %v3206
  %v3208 = vpop.f32.mrf.mxu0
  %v3209 = vpop.f32.mrf.mxu0
  %v3210 = vadd.f32 %v2921, %v3209
  %v3211 = vpop.f32.mrf.mxu0
  %3212 = vmatprep.mubr.bf16.mxu0 0
  %3213 = vmatmul.mubr.bf16.gmra.mxu0 %v1012
  %v3214 = vpop.f32.mrf.mxu0
  %v3215 = vadd.f32 %v2926, %v3214
  %v3216 = vpop.f32.mrf.mxu0
  %v3217 = vpop.f32.mrf.mxu0
  %v3218 = vadd.f32 %v2929, %v3217
  %v3219 = vpop.f32.mrf.mxu0
  %3220 = vmatprep.mubr.bf16.mxu0 0
  %3221 = vmatmul.mubr.bf16.gmra.mxu0 %v1015
  %v3222 = vpop.f32.mrf.mxu0
  %v3223 = vadd.f32 %v2934, %v3222
  %v3224 = vpop.f32.mrf.mxu0
  %v3225 = vpop.f32.mrf.mxu0
  %v3226 = vadd.f32 %v2937, %v3225
  %v3227 = vpop.f32.mrf.mxu0
  %3228 = vmatprep.mubr.bf16.mxu0 0
  %3229 = vmatmul.mubr.bf16.gmra.mxu0 %v1018
  %v3230 = vpop.f32.mrf.mxu0
  %v3231 = vadd.f32 %v2942, %v3230
  %v3232 = vpop.f32.mrf.mxu0
  %v3233 = vpop.f32.mrf.mxu0
  %v3234 = vadd.f32 %v2945, %v3233
  %v3235 = vpop.f32.mrf.mxu0
  %3236 = vmatprep.mubr.bf16.mxu0 0
  %3237 = vmatmul.mubr.bf16.gmra.mxu0 %v1021
  %v3238 = vpop.f32.mrf.mxu0
  %v3239 = vadd.f32 %v2950, %v3238
  %v3240 = vpop.f32.mrf.mxu0
  %v3241 = vpop.f32.mrf.mxu0
  %v3242 = vadd.f32 %v2953, %v3241
  %v3243 = vpop.f32.mrf.mxu0
  %3244 = vmatprep.mubr.bf16.mxu0 0
  %3245 = vmatmul.mubr.bf16.gmra.mxu0 %v1024
  %v3246 = vpop.f32.mrf.mxu0
  %v3247 = vadd.f32 %v2958, %v3246
  %v3248 = vpop.f32.mrf.mxu0
  %v3249 = vpop.f32.mrf.mxu0
  %v3250 = vadd.f32 %v2961, %v3249
  %v3251 = vpop.f32.mrf.mxu0
  %3252 = vmatprep.mubr.bf16.mxu0 0
  %3253 = vmatmul.mubr.bf16.gmra.mxu0 %v1027
  %v3254 = vpop.f32.mrf.mxu0
  %v3255 = vadd.f32 %v2966, %v3254
  %v3256 = vpop.f32.mrf.mxu0
  %v3257 = vpop.f32.mrf.mxu0
  %v3258 = vadd.f32 %v2969, %v3257
  %v3259 = vpop.f32.mrf.mxu0
  %3260 = vmatprep.mubr.bf16.mxu0 0
  %3261 = vmatmul.mubr.bf16.gmra.mxu0 %v1030
  %v3262 = vpop.f32.mrf.mxu0
  %v3263 = vadd.f32 %v2974, %v3262
  %v3264 = vpop.f32.mrf.mxu0
  %v3265 = vpop.f32.mrf.mxu0
  %v3266 = vadd.f32 %v2977, %v3265
  %v3267 = vpop.f32.mrf.mxu0
  %3268 = vmatprep.mubr.bf16.mxu0 0
  %3269 = vmatmul.mubr.bf16.gmra.mxu0 %v1039
  %v3270 = vpop.f32.mrf.mxu0
  %v3271 = vadd.f32 %v2982, %v3270
  %v3272 = vpop.f32.mrf.mxu0
  %v3273 = vpop.f32.mrf.mxu0
  %v3274 = vadd.f32 %v2985, %v3273
  %v3275 = vpop.f32.mrf.mxu0
  %3276 = vmatprep.mubr.bf16.mxu0 0
  %3277 = vmatmul.mubr.bf16.gmra.mxu0 %v1042
  %v3278 = vpop.f32.mrf.mxu0
  %v3279 = vadd.f32 %v2990, %v3278
  %v3280 = vpop.f32.mrf.mxu0
  %v3281 = vpop.f32.mrf.mxu0
  %v3282 = vadd.f32 %v2993, %v3281
  %v3283 = vpop.f32.mrf.mxu0
  %3284 = vmatprep.mubr.bf16.mxu0 0
  %3285 = vmatmul.mubr.bf16.gmra.mxu0 %v1045
  %v3286 = vpop.f32.mrf.mxu0
  %v3287 = vadd.f32 %v2998, %v3286
  %v3288 = vpop.f32.mrf.mxu0
  %v3289 = vpop.f32.mrf.mxu0
  %v3290 = vadd.f32 %v3001, %v3289
  %v3291 = vpop.f32.mrf.mxu0
  %3292 = vmatprep.mubr.bf16.mxu0 0
  %3293 = vmatmul.mubr.bf16.gmra.mxu0 %v1048
  %v3294 = vpop.f32.mrf.mxu0
  %v3295 = vadd.f32 %v3006, %v3294
  %v3296 = vpop.f32.mrf.mxu0
  %v3297 = vpop.f32.mrf.mxu0
  %v3298 = vadd.f32 %v3009, %v3297
  %v3299 = vpop.f32.mrf.mxu0
  %3300 = vmatprep.mubr.bf16.mxu0 0
  %3301 = vmatmul.mubr.bf16.gmra.mxu0 %v1051
  %v3302 = vpop.f32.mrf.mxu0
  %v3303 = vadd.f32 %v3014, %v3302
  %v3304 = vpop.f32.mrf.mxu0
  %v3305 = vpop.f32.mrf.mxu0
  %v3306 = vadd.f32 %v3017, %v3305
  %v3307 = vpop.f32.mrf.mxu0
  %3308 = vmatprep.mubr.bf16.mxu0 0
  %3309 = vmatmul.mubr.bf16.gmra.mxu0 %v1054
  %v3310 = vpop.f32.mrf.mxu0
  %v3311 = vadd.f32 %v3022, %v3310
  %v3312 = vpop.f32.mrf.mxu0
  %v3313 = vpop.f32.mrf.mxu0
  %v3314 = vadd.f32 %v3025, %v3313
  %v3315 = vpop.f32.mrf.mxu0
  %3316 = vmatprep.mubr.bf16.mxu0 0
  %3317 = vmatmul.mubr.bf16.gmra.mxu0 %v1057
  %v3318 = vpop.f32.mrf.mxu0
  %v3319 = vadd.f32 %v3030, %v3318
  %v3320 = vpop.f32.mrf.mxu0
  %v3321 = vpop.f32.mrf.mxu0
  %v3322 = vadd.f32 %v3033, %v3321
  %v3323 = vpop.f32.mrf.mxu0
  %3324 = vmatprep.mubr.bf16.mxu0 0
  %3325 = vmatmul.mubr.bf16.gmra.mxu0 %v1060
  %v3326 = vpop.f32.mrf.mxu0
  %v3327 = vadd.f32 %v3038, %v3326
  %v3328 = vpop.f32.mrf.mxu0
  %v3329 = vpop.f32.mrf.mxu0
  %v3330 = vadd.f32 %v3041, %v3329
  %v3331 = vpop.f32.mrf.mxu0
  %3332 = vmatprep.mubr.bf16.mxu0 0
  %3333 = vmatmul.mubr.bf16.gmra.mxu0 %v1063
  %v3334 = vpop.f32.mrf.mxu0
  %v3335 = vadd.f32 %v3046, %v3334
  %v3336 = vpop.f32.mrf.mxu0
  %v3337 = vpop.f32.mrf.mxu0
  %v3338 = vadd.f32 %v3049, %v3337
  %v3339 = vpop.f32.mrf.mxu0
  %3340 = vmatprep.mubr.bf16.mxu0 0
  %3341 = vmatmul.mubr.bf16.gmra.mxu0 %v1066
  %v3342 = vpop.f32.mrf.mxu0
  %v3343 = vadd.f32 %v3054, %v3342
  %v3344 = vpop.f32.mrf.mxu0
  %v3345 = vpop.f32.mrf.mxu0
  %v3346 = vadd.f32 %v3057, %v3345
  %v3347 = vpop.f32.mrf.mxu0
  %3348 = vmatprep.mubr.bf16.mxu0 0
  %3349 = vmatmul.mubr.bf16.gmra.mxu0 %v1069
  %v3350 = vpop.f32.mrf.mxu0
  %v3351 = vadd.f32 %v3062, %v3350
  %v3352 = vpop.f32.mrf.mxu0
  %v3353 = vpop.f32.mrf.mxu0
  %v3354 = vadd.f32 %v3065, %v3353
  %v3355 = vpop.f32.mrf.mxu0
  %3356 = vmatprep.mubr.bf16.mxu0 0
  %3357 = vmatmul.mubr.bf16.gmra.mxu0 %v1072
  %v3358 = vpop.f32.mrf.mxu0
  %v3359 = vadd.f32 %v3070, %v3358
  %v3360 = vpop.f32.mrf.mxu0
  %v3361 = vpop.f32.mrf.mxu0
  %v3362 = vadd.f32 %v3073, %v3361
  %v3363 = vpop.f32.mrf.mxu0
  %3364 = vmatprep.mubr.bf16.mxu0 0
  %3365 = vmatmul.mubr.bf16.gmra.mxu0 %v1075
  %v3366 = vpop.f32.mrf.mxu0
  %v3367 = vadd.f32 %v3078, %v3366
  %v3368 = vpop.f32.mrf.mxu0
  %v3369 = vpop.f32.mrf.mxu0
  %v3370 = vadd.f32 %v3081, %v3369
  %v3371 = vpop.f32.mrf.mxu0
  %3372 = vmatprep.mubr.bf16.mxu0 0
  %3373 = vmatmul.mubr.bf16.gmra.mxu0 %v1078
  %v3374 = vpop.f32.mrf.mxu0
  %v3375 = vadd.f32 %v3086, %v3374
  %v3376 = vpop.f32.mrf.mxu0
  %v3377 = vpop.f32.mrf.mxu0
  %v3378 = vadd.f32 %v3089, %v3377
  %v3379 = vpop.f32.mrf.mxu0
  %3380 = vmatprep.mubr.bf16.mxu0 0
  %3381 = vmatmul.mubr.bf16.gmra.mxu0 %v1081
  %v3382 = vpop.f32.mrf.mxu0
  %v3383 = vadd.f32 %v3094, %v3382
  %v3384 = vpop.f32.mrf.mxu0
  %v3385 = vpop.f32.mrf.mxu0
  %v3386 = vadd.f32 %v3097, %v3385
  %v3387 = vpop.f32.mrf.mxu0
  %3388 = vmatprep.mubr.bf16.mxu0 0
  %3389 = vmatmul.mubr.bf16.gmra.mxu0 %v1084
  %v3390 = vpop.f32.mrf.mxu0
  %v3391 = vadd.f32 %v3102, %v3390
  %v3392 = vpop.f32.mrf.mxu0
  %v3393 = vpop.f32.mrf.mxu0
  %v3394 = vadd.f32 %v3105, %v3393
  %v3395 = vpop.f32.mrf.mxu0
  %3396 = vdwg.mxu0
  %v3397 = vadd.f32 %v2372, %v3143
  %v3398 = vadd.f32 %v2375, %v3146
  %v3399 = vadd.f32 %v2380, %v3151
  %v3400 = vadd.f32 %v2383, %v3154
  %v3401 = vadd.f32 %v2388, %v3159
  %v3402 = vadd.f32 %v2391, %v3162
  %v3403 = vadd.f32 %v2396, %v3167
  %v3404 = vadd.f32 %v2399, %v3170
  %v3405 = vadd.f32 %v2404, %v3175
  %v3406 = vadd.f32 %v2407, %v3178
  %v3407 = vadd.f32 %v2412, %v3183
  %v3408 = vadd.f32 %v2415, %v3186
  %v3409 = vadd.f32 %v2420, %v3191
  %v3410 = vadd.f32 %v2423, %v3194
  %v3411 = vadd.f32 %v2428, %v3199
  %v3412 = vadd.f32 %v2431, %v3202
  %v3413 = vadd.f32 %v2436, %v3207
  %v3414 = vadd.f32 %v2439, %v3210
  %v3415 = vadd.f32 %v2444, %v3215
  %v3416 = vadd.f32 %v2447, %v3218
  %v3417 = vadd.f32 %v2452, %v3223
  %v3418 = vadd.f32 %v2455, %v3226
  %v3419 = vadd.f32 %v2460, %v3231
  %v3420 = vadd.f32 %v2463, %v3234
  %v3421 = vadd.f32 %v2468, %v3239
  %v3422 = vadd.f32 %v2471, %v3242
  %v3423 = vadd.f32 %v2476, %v3247
  %v3424 = vadd.f32 %v2479, %v3250
  %v3425 = vadd.f32 %v2484, %v3255
  %v3426 = vadd.f32 %v2487, %v3258
  %v3427 = vadd.f32 %v2492, %v3263
  %v3428 = vadd.f32 %v2495, %v3266
  %v3429 = vadd.f32 %v2500, %v3271
  %v3430 = vadd.f32 %v2503, %v3274
  %v3431 = vadd.f32 %v2508, %v3279
  %v3432 = vadd.f32 %v2511, %v3282
  %v3433 = vadd.f32 %v2516, %v3287
  %v3434 = vadd.f32 %v2519, %v3290
  %v3435 = vadd.f32 %v2524, %v3295
  %v3436 = vadd.f32 %v2527, %v3298
  %v3437 = vadd.f32 %v2532, %v3303
  %v3438 = vadd.f32 %v2535, %v3306
  %v3439 = vadd.f32 %v2540, %v3311
  %v3440 = vadd.f32 %v2543, %v3314
  %v3441 = vadd.f32 %v2548, %v3319
  %v3442 = vadd.f32 %v2551, %v3322
  %v3443 = vadd.f32 %v2556, %v3327
  %v3444 = vadd.f32 %v2559, %v3330
  %v3445 = vadd.f32 %v2564, %v3335
  %v3446 = vadd.f32 %v2567, %v3338
  %v3447 = vadd.f32 %v2572, %v3343
  %v3448 = vadd.f32 %v2575, %v3346
  %v3449 = vadd.f32 %v2580, %v3351
  %v3450 = vadd.f32 %v2583, %v3354
  %v3451 = vadd.f32 %v2588, %v3359
  %v3452 = vadd.f32 %v2591, %v3362
  %v3453 = vadd.f32 %v2596, %v3367
  %v3454 = vadd.f32 %v2599, %v3370
  %v3455 = vadd.f32 %v2604, %v3375
  %v3456 = vadd.f32 %v2607, %v3378
  %v3457 = vadd.f32 %v2612, %v3383
  %v3458 = vadd.f32 %v2615, %v3386
  %v3459 = vadd.f32 %v2620, %v3391
  %v3460 = vadd.f32 %v2623, %v3394
  %v3461 = vpack.c.bf16 %v3398, %v3397
  %v3462 = vpack.c.bf16 %v3400, %v3399
  %v3463 = vpack.c.bf16 %v3402, %v3401
  %v3464 = vpack.c.bf16 %v3404, %v3403
  %v3465 = vpack.c.bf16 %v3406, %v3405
  %v3466 = vpack.c.bf16 %v3408, %v3407
  %v3467 = vpack.c.bf16 %v3410, %v3409
  %v3468 = vpack.c.bf16 %v3412, %v3411
  %v3469 = vpack.c.bf16 %v3414, %v3413
  %v3470 = vpack.c.bf16 %v3416, %v3415
  %v3471 = vpack.c.bf16 %v3418, %v3417
  %v3472 = vpack.c.bf16 %v3420, %v3419
  %v3473 = vpack.c.bf16 %v3422, %v3421
  %v3474 = vpack.c.bf16 %v3424, %v3423
  %v3475 = vpack.c.bf16 %v3426, %v3425
  %v3476 = vpack.c.bf16 %v3428, %v3427
  %v3477 = vpack.c.bf16 %v3430, %v3429
  %v3478 = vpack.c.bf16 %v3432, %v3431
  %v3479 = vpack.c.bf16 %v3434, %v3433
  %v3480 = vpack.c.bf16 %v3436, %v3435
  %v3481 = vpack.c.bf16 %v3438, %v3437
  %v3482 = vpack.c.bf16 %v3440, %v3439
  %v3483 = vpack.c.bf16 %v3442, %v3441
  %v3484 = vpack.c.bf16 %v3444, %v3443
  %v3485 = vpack.c.bf16 %v3446, %v3445
  %v3486 = vpack.c.bf16 %v3448, %v3447
  %v3487 = vpack.c.bf16 %v3450, %v3449
  %v3488 = vpack.c.bf16 %v3452, %v3451
  %v3489 = vpack.c.bf16 %v3454, %v3453
  %v3490 = vpack.c.bf16 %v3456, %v3455
  %v3491 = vpack.c.bf16 %v3458, %v3457
  %v3492 = vpack.c.bf16 %v3460, %v3459
  %v3525 = vunpack.c.l.b16 %v3461
  %v3526 = vunpack.c.h.b16 %v3461
  %v3527 = vunpack.c.l.b16 %v3462
  %v3528 = vunpack.c.h.b16 %v3462
  %v3529 = vunpack.c.l.b16 %v3463
  %v3530 = vunpack.c.h.b16 %v3463
  %v3531 = vunpack.c.l.b16 %v3464
  %v3532 = vunpack.c.h.b16 %v3464
  %v3533 = vunpack.c.l.b16 %v3465
  %v3534 = vunpack.c.h.b16 %v3465
  %v3535 = vunpack.c.l.b16 %v3466
  %v3536 = vunpack.c.h.b16 %v3466
  %v3537 = vunpack.c.l.b16 %v3467
  %v3538 = vunpack.c.h.b16 %v3467
  %v3539 = vunpack.c.l.b16 %v3468
  %v3540 = vunpack.c.h.b16 %v3468
  %v3541 = vunpack.c.l.b16 %v3469
  %v3542 = vunpack.c.h.b16 %v3469
  %v3543 = vunpack.c.l.b16 %v3470
  %v3544 = vunpack.c.h.b16 %v3470
  %v3545 = vunpack.c.l.b16 %v3471
  %v3546 = vunpack.c.h.b16 %v3471
  %v3547 = vunpack.c.l.b16 %v3472
  %v3548 = vunpack.c.h.b16 %v3472
  %v3549 = vunpack.c.l.b16 %v3473
  %v3550 = vunpack.c.h.b16 %v3473
  %v3551 = vunpack.c.l.b16 %v3474
  %v3552 = vunpack.c.h.b16 %v3474
  %v3553 = vunpack.c.l.b16 %v3475
  %v3554 = vunpack.c.h.b16 %v3475
  %v3555 = vunpack.c.l.b16 %v3476
  %v3556 = vunpack.c.h.b16 %v3476
  %v3557 = vunpack.c.l.b16 %v3477
  %v3558 = vunpack.c.h.b16 %v3477
  %v3559 = vunpack.c.l.b16 %v3478
  %v3560 = vunpack.c.h.b16 %v3478
  %v3561 = vunpack.c.l.b16 %v3479
  %v3562 = vunpack.c.h.b16 %v3479
  %v3563 = vunpack.c.l.b16 %v3480
  %v3564 = vunpack.c.h.b16 %v3480
  %v3565 = vunpack.c.l.b16 %v3481
  %v3566 = vunpack.c.h.b16 %v3481
  %v3567 = vunpack.c.l.b16 %v3482
  %v3568 = vunpack.c.h.b16 %v3482
  %v3569 = vunpack.c.l.b16 %v3483
  %v3570 = vunpack.c.h.b16 %v3483
  %v3571 = vunpack.c.l.b16 %v3484
  %v3572 = vunpack.c.h.b16 %v3484
  %v3573 = vunpack.c.l.b16 %v3485
  %v3574 = vunpack.c.h.b16 %v3485
  %v3575 = vunpack.c.l.b16 %v3486
  %v3576 = vunpack.c.h.b16 %v3486
  %v3577 = vunpack.c.l.b16 %v3487
  %v3578 = vunpack.c.h.b16 %v3487
  %v3579 = vunpack.c.l.b16 %v3488
  %v3580 = vunpack.c.h.b16 %v3488
  %v3581 = vunpack.c.l.b16 %v3489
  %v3582 = vunpack.c.h.b16 %v3489
  %v3583 = vunpack.c.l.b16 %v3490
  %v3584 = vunpack.c.h.b16 %v3490
  %v3585 = vunpack.c.l.b16 %v3491
  %v3586 = vunpack.c.h.b16 %v3491
  %v3587 = vunpack.c.l.b16 %v3492
  %v3588 = vunpack.c.h.b16 %v3492
  %v3589 = vpack.c.b16 %v3525, %v3525
  %v3590 = vpack.c.b16 %v3526, %v3526
  %v3591 = vpack.c.b16 %v3527, %v3527
  %v3592 = vpack.c.b16 %v3528, %v3528
  %v3593 = vpack.c.b16 %v3529, %v3529
  %v3594 = vpack.c.b16 %v3530, %v3530
  %v3595 = vpack.c.b16 %v3531, %v3531
  %v3596 = vpack.c.b16 %v3532, %v3532
  %v3597 = vpack.c.b16 %v3533, %v3533
  %v3598 = vpack.c.b16 %v3534, %v3534
  %v3599 = vpack.c.b16 %v3535, %v3535
  %v3600 = vpack.c.b16 %v3536, %v3536
  %v3601 = vpack.c.b16 %v3537, %v3537
  %v3602 = vpack.c.b16 %v3538, %v3538
  %v3603 = vpack.c.b16 %v3539, %v3539
  %v3604 = vpack.c.b16 %v3540, %v3540
  %v3605 = vpack.c.b16 %v3541, %v3541
  %v3606 = vpack.c.b16 %v3542, %v3542
  %v3607 = vpack.c.b16 %v3543, %v3543
  %v3608 = vpack.c.b16 %v3544, %v3544
  %v3609 = vpack.c.b16 %v3545, %v3545
  %v3610 = vpack.c.b16 %v3546, %v3546
  %v3611 = vpack.c.b16 %v3547, %v3547
  %v3612 = vpack.c.b16 %v3548, %v3548
  %v3613 = vpack.c.b16 %v3549, %v3549
  %v3614 = vpack.c.b16 %v3550, %v3550
  %v3615 = vpack.c.b16 %v3551, %v3551
  %v3616 = vpack.c.b16 %v3552, %v3552
  %v3617 = vpack.c.b16 %v3553, %v3553
  %v3618 = vpack.c.b16 %v3554, %v3554
  %v3619 = vpack.c.b16 %v3555, %v3555
  %v3620 = vpack.c.b16 %v3556, %v3556
  %v3621 = vpack.c.b16 %v3557, %v3557
  %v3622 = vpack.c.b16 %v3558, %v3558
  %v3623 = vpack.c.b16 %v3559, %v3559
  %v3624 = vpack.c.b16 %v3560, %v3560
  %v3625 = vpack.c.b16 %v3561, %v3561
  %v3626 = vpack.c.b16 %v3562, %v3562
  %v3627 = vpack.c.b16 %v3563, %v3563
  %v3628 = vpack.c.b16 %v3564, %v3564
  %v3629 = vpack.c.b16 %v3565, %v3565
  %v3630 = vpack.c.b16 %v3566, %v3566
  %v3631 = vpack.c.b16 %v3567, %v3567
  %v3632 = vpack.c.b16 %v3568, %v3568
  %v3633 = vpack.c.b16 %v3569, %v3569
  %v3634 = vpack.c.b16 %v3570, %v3570
  %v3635 = vpack.c.b16 %v3571, %v3571
  %v3636 = vpack.c.b16 %v3572, %v3572
  %v3637 = vpack.c.b16 %v3573, %v3573
  %v3638 = vpack.c.b16 %v3574, %v3574
  %v3639 = vpack.c.b16 %v3575, %v3575
  %v3640 = vpack.c.b16 %v3576, %v3576
  %v3641 = vpack.c.b16 %v3577, %v3577
  %v3642 = vpack.c.b16 %v3578, %v3578
  %v3643 = vpack.c.b16 %v3579, %v3579
  %v3644 = vpack.c.b16 %v3580, %v3580
  %v3645 = vpack.c.b16 %v3581, %v3581
  %v3646 = vpack.c.b16 %v3582, %v3582
  %v3647 = vpack.c.b16 %v3583, %v3583
  %v3648 = vpack.c.b16 %v3584, %v3584
  %v3649 = vpack.c.b16 %v3585, %v3585
  %v3650 = vpack.c.b16 %v3586, %v3586
  %v3651 = vpack.c.b16 %v3587, %v3587
  %v3652 = vpack.c.b16 %v3588, %v3588
  %3717 = vst [vmem:[%s3] sm:$0xf] %v3589
  %3718 = vst [vmem:[%s3 + $0x4] sm:$0xf] %v3590
  %3719 = vst [vmem:[%s3 + $0x8] sm:$0xf] %v3591
  %3720 = vst [vmem:[%s3 + $0xc] sm:$0xf] %v3592
  %3721 = vst [vmem:[%s3 + $0x10] sm:$0xf] %v3593
  %3722 = vst [vmem:[%s3 + $0x14] sm:$0xf] %v3594
  %3723 = vst [vmem:[%s3 + $0x18] sm:$0xf] %v3595
  %3724 = vst [vmem:[%s3 + $0x1c] sm:$0xf] %v3596
  %3725 = vst [vmem:[%s3 + $0x20] sm:$0xf] %v3597
  %3726 = vst [vmem:[%s3 + $0x24] sm:$0xf] %v3598
  %3727 = vst [vmem:[%s3 + $0x28] sm:$0xf] %v3599
  %3728 = vst [vmem:[%s3 + $0x2c] sm:$0xf] %v3600
  %3729 = vst [vmem:[%s3 + $0x30] sm:$0xf] %v3601
  %3730 = vst [vmem:[%s3 + $0x34] sm:$0xf] %v3602
  %3731 = vst [vmem:[%s3 + $0x38] sm:$0xf] %v3603
  %3732 = vst [vmem:[%s3 + $0x3c] sm:$0xf] %v3604
  %3733 = vst [vmem:[%s3 + $0x40] sm:$0xf] %v3605
  %3734 = vst [vmem:[%s3 + $0x44] sm:$0xf] %v3606
  %3735 = vst [vmem:[%s3 + $0x48] sm:$0xf] %v3607
  %3736 = vst [vmem:[%s3 + $0x4c] sm:$0xf] %v3608
  %3737 = vst [vmem:[%s3 + $0x50] sm:$0xf] %v3609
  %3738 = vst [vmem:[%s3 + $0x54] sm:$0xf] %v3610
  %3739 = vst [vmem:[%s3 + $0x58] sm:$0xf] %v3611
  %3740 = vst [vmem:[%s3 + $0x5c] sm:$0xf] %v3612
  %3741 = vst [vmem:[%s3 + $0x60] sm:$0xf] %v3613
  %3742 = vst [vmem:[%s3 + $0x64] sm:$0xf] %v3614
  %3743 = vst [vmem:[%s3 + $0x68] sm:$0xf] %v3615
  %3744 = vst [vmem:[%s3 + $0x6c] sm:$0xf] %v3616
  %3745 = vst [vmem:[%s3 + $0x70] sm:$0xf] %v3617
  %3746 = vst [vmem:[%s3 + $0x74] sm:$0xf] %v3618
  %3747 = vst [vmem:[%s3 + $0x78] sm:$0xf] %v3619
  %3748 = vst [vmem:[%s3 + $0x7c] sm:$0xf] %v3620
  %3749 = vst [vmem:[%s3 + $0x80] sm:$0xf] %v3621
  %3750 = vst [vmem:[%s3 + $0x84] sm:$0xf] %v3622
  %3751 = vst [vmem:[%s3 + $0x88] sm:$0xf] %v3623
  %3752 = vst [vmem:[%s3 + $0x8c] sm:$0xf] %v3624
  %3753 = vst [vmem:[%s3 + $0x90] sm:$0xf] %v3625
  %3754 = vst [vmem:[%s3 + $0x94] sm:$0xf] %v3626
  %3755 = vst [vmem:[%s3 + $0x98] sm:$0xf] %v3627
  %3756 = vst [vmem:[%s3 + $0x9c] sm:$0xf] %v3628
  %3757 = vst [vmem:[%s3 + $0xa0] sm:$0xf] %v3629
  %3758 = vst [vmem:[%s3 + $0xa4] sm:$0xf] %v3630
  %3759 = vst [vmem:[%s3 + $0xa8] sm:$0xf] %v3631
  %3760 = vst [vmem:[%s3 + $0xac] sm:$0xf] %v3632
  %3761 = vst [vmem:[%s3 + $0xb0] sm:$0xf] %v3633
  %3762 = vst [vmem:[%s3 + $0xb4] sm:$0xf] %v3634
  %3763 = vst [vmem:[%s3 + $0xb8] sm:$0xf] %v3635
  %3764 = vst [vmem:[%s3 + $0xbc] sm:$0xf] %v3636
  %3765 = vst [vmem:[%s3 + $0xc0] sm:$0xf] %v3637
  %3766 = vst [vmem:[%s3 + $0xc4] sm:$0xf] %v3638
  %3767 = vst [vmem:[%s3 + $0xc8] sm:$0xf] %v3639
  %3768 = vst [vmem:[%s3 + $0xcc] sm:$0xf] %v3640
  %3769 = vst [vmem:[%s3 + $0xd0] sm:$0xf] %v3641
  %3770 = vst [vmem:[%s3 + $0xd4] sm:$0xf] %v3642
  %3771 = vst [vmem:[%s3 + $0xd8] sm:$0xf] %v3643
  %3772 = vst [vmem:[%s3 + $0xdc] sm:$0xf] %v3644
  %3773 = vst [vmem:[%s3 + $0xe0] sm:$0xf] %v3645
  %3774 = vst [vmem:[%s3 + $0xe4] sm:$0xf] %v3646
  %3775 = vst [vmem:[%s3 + $0xe8] sm:$0xf] %v3647
  %3776 = vst [vmem:[%s3 + $0xec] sm:$0xf] %v3648
  %3777 = vst [vmem:[%s3 + $0xf0] sm:$0xf] %v3649
  %3778 = vst [vmem:[%s3 + $0xf4] sm:$0xf] %v3650
  %3779 = vst [vmem:[%s3 + $0xf8] sm:$0xf] %v3651
  %3780 = vst [vmem:[%s3 + $0xfc] sm:$0xf] %v3652
  %v3781 = vadd.f32 %v3397, %v3398
  %v3782 = vadd.f32 %v3781, %v3399
  %v3783 = vadd.f32 %v3782, %v3400
  %v3784 = vadd.f32 %v3783, %v3401
  %v3785 = vadd.f32 %v3784, %v3402
  %v3786 = vadd.f32 %v3785, %v3403
  %v3787 = vadd.f32 %v3786, %v3404
  %v3788 = vadd.f32 %v3787, %v3405
  %v3789 = vadd.f32 %v3788, %v3406
  %v3790 = vadd.f32 %v3789, %v3407
  %v3791 = vadd.f32 %v3790, %v3408
  %v3792 = vadd.f32 %v3791, %v3409
  %v3793 = vadd.f32 %v3792, %v3410
  %v3794 = vadd.f32 %v3793, %v3411
  %v3795 = vadd.f32 %v3794, %v3412
  %v3796 = vadd.f32 %v3795, %v3413
  %v3797 = vadd.f32 %v3796, %v3414
  %v3798 = vadd.f32 %v3797, %v3415
  %v3799 = vadd.f32 %v3798, %v3416
  %v3800 = vadd.f32 %v3799, %v3417
  %v3801 = vadd.f32 %v3800, %v3418
  %v3802 = vadd.f32 %v3801, %v3419
  %v3803 = vadd.f32 %v3802, %v3420
  %v3804 = vadd.f32 %v3803, %v3421
  %v3805 = vadd.f32 %v3804, %v3422
  %v3806 = vadd.f32 %v3805, %v3423
  %v3807 = vadd.f32 %v3806, %v3424
  %v3808 = vadd.f32 %v3807, %v3425
  %v3809 = vadd.f32 %v3808, %v3426
  %v3810 = vadd.f32 %v3809, %v3427
  %v3811 = vadd.f32 %v3810, %v3428
  %v3812 = vadd.f32 %v3811, %v3429
  %v3813 = vadd.f32 %v3812, %v3430
  %v3814 = vadd.f32 %v3813, %v3431
  %v3815 = vadd.f32 %v3814, %v3432
  %v3816 = vadd.f32 %v3815, %v3433
  %v3817 = vadd.f32 %v3816, %v3434
  %v3818 = vadd.f32 %v3817, %v3435
  %v3819 = vadd.f32 %v3818, %v3436
  %v3820 = vadd.f32 %v3819, %v3437
  %v3821 = vadd.f32 %v3820, %v3438
  %v3822 = vadd.f32 %v3821, %v3439
  %v3823 = vadd.f32 %v3822, %v3440
  %v3824 = vadd.f32 %v3823, %v3441
  %v3825 = vadd.f32 %v3824, %v3442
  %v3826 = vadd.f32 %v3825, %v3443
  %v3827 = vadd.f32 %v3826, %v3444
  %v3828 = vadd.f32 %v3827, %v3445
  %v3829 = vadd.f32 %v3828, %v3446
  %v3830 = vadd.f32 %v3829, %v3447
  %v3831 = vadd.f32 %v3830, %v3448
  %v3832 = vadd.f32 %v3831, %v3449
  %v3833 = vadd.f32 %v3832, %v3450
  %v3834 = vadd.f32 %v3833, %v3451
  %v3835 = vadd.f32 %v3834, %v3452
  %v3836 = vadd.f32 %v3835, %v3453
  %v3837 = vadd.f32 %v3836, %v3454
  %v3838 = vadd.f32 %v3837, %v3455
  %v3839 = vadd.f32 %v3838, %v3456
  %v3840 = vadd.f32 %v3839, %v3457
  %v3841 = vadd.f32 %v3840, %v3458
  %v3842 = vadd.f32 %v3841, %v3459
  %v3843 = vadd.f32 %v3842, %v3460
  %v3844 = vrot.slane %v3843, 4
  %v3845 = vadd.f32 %v3843, %v3844
  %v3846 = vrot.slane %v3845, 2
  %v3847 = vadd.f32 %v3845, %v3846
  %v3848 = vrot.slane %v3847, 1
  %v3849 = vadd.f32 %v3847, %v3848
  %v3850 = vmul.f32 %v3849, 0.001953125
  %v3851 = vsub.f32 %v3397, %v3850
  %v3852 = vsub.f32 %v3398, %v3850
  %v3853 = vsub.f32 %v3399, %v3850
  %v3854 = vsub.f32 %v3400, %v3850
  %v3855 = vsub.f32 %v3401, %v3850
  %v3856 = vsub.f32 %v3402, %v3850
  %v3857 = vsub.f32 %v3403, %v3850
  %v3858 = vsub.f32 %v3404, %v3850
  %v3859 = vsub.f32 %v3405, %v3850
  %v3860 = vsub.f32 %v3406, %v3850
  %v3861 = vsub.f32 %v3407, %v3850
  %v3862 = vsub.f32 %v3408, %v3850
  %v3863 = vsub.f32 %v3409, %v3850
  %v3864 = vsub.f32 %v3410, %v3850
  %v3865 = vsub.f32 %v3411, %v3850
  %v3866 = vsub.f32 %v3412, %v3850
  %v3867 = vsub.f32 %v3413, %v3850
  %v3868 = vsub.f32 %v3414, %v3850
  %v3869 = vsub.f32 %v3415, %v3850
  %v3870 = vsub.f32 %v3416, %v3850
  %v3871 = vsub.f32 %v3417, %v3850
  %v3872 = vsub.f32 %v3418, %v3850
  %v3873 = vsub.f32 %v3419, %v3850
  %v3874 = vsub.f32 %v3420, %v3850
  %v3875 = vsub.f32 %v3421, %v3850
  %v3876 = vsub.f32 %v3422, %v3850
  %v3877 = vsub.f32 %v3423, %v3850
  %v3878 = vsub.f32 %v3424, %v3850
  %v3879 = vsub.f32 %v3425, %v3850
  %v3880 = vsub.f32 %v3426, %v3850
  %v3881 = vsub.f32 %v3427, %v3850
  %v3882 = vsub.f32 %v3428, %v3850
  %v3883 = vsub.f32 %v3429, %v3850
  %v3884 = vsub.f32 %v3430, %v3850
  %v3885 = vsub.f32 %v3431, %v3850
  %v3886 = vsub.f32 %v3432, %v3850
  %v3887 = vsub.f32 %v3433, %v3850
  %v3888 = vsub.f32 %v3434, %v3850
  %v3889 = vsub.f32 %v3435, %v3850
  %v3890 = vsub.f32 %v3436, %v3850
  %v3891 = vsub.f32 %v3437, %v3850
  %v3892 = vsub.f32 %v3438, %v3850
  %v3893 = vsub.f32 %v3439, %v3850
  %v3894 = vsub.f32 %v3440, %v3850
  %v3895 = vsub.f32 %v3441, %v3850
  %v3896 = vsub.f32 %v3442, %v3850
  %v3897 = vsub.f32 %v3443, %v3850
  %v3898 = vsub.f32 %v3444, %v3850
  %v3899 = vsub.f32 %v3445, %v3850
  %v3900 = vsub.f32 %v3446, %v3850
  %v3901 = vsub.f32 %v3447, %v3850
  %v3902 = vsub.f32 %v3448, %v3850
  %v3903 = vsub.f32 %v3449, %v3850
  %v3904 = vsub.f32 %v3450, %v3850
  %v3905 = vsub.f32 %v3451, %v3850
  %v3906 = vsub.f32 %v3452, %v3850
  %v3907 = vsub.f32 %v3453, %v3850
  %v3908 = vsub.f32 %v3454, %v3850
  %v3909 = vsub.f32 %v3455, %v3850
  %v3910 = vsub.f32 %v3456, %v3850
  %v3911 = vsub.f32 %v3457, %v3850
  %v3912 = vsub.f32 %v3458, %v3850
  %v3913 = vsub.f32 %v3459, %v3850
  %v3914 = vsub.f32 %v3460, %v3850
  %v3915 = vmul.f32 %v3851, %v3851
  %v3916 = vmul.f32 %v3852, %v3852
  %v3917 = vmul.f32 %v3853, %v3853
  %v3918 = vmul.f32 %v3854, %v3854
  %v3919 = vmul.f32 %v3855, %v3855
  %v3920 = vmul.f32 %v3856, %v3856
  %v3921 = vmul.f32 %v3857, %v3857
  %v3922 = vmul.f32 %v3858, %v3858
  %v3923 = vmul.f32 %v3859, %v3859
  %v3924 = vmul.f32 %v3860, %v3860
  %v3925 = vmul.f32 %v3861, %v3861
  %v3926 = vmul.f32 %v3862, %v3862
  %v3927 = vmul.f32 %v3863, %v3863
  %v3928 = vmul.f32 %v3864, %v3864
  %v3929 = vmul.f32 %v3865, %v3865
  %v3930 = vmul.f32 %v3866, %v3866
  %v3931 = vmul.f32 %v3867, %v3867
  %v3932 = vmul.f32 %v3868, %v3868
  %v3933 = vmul.f32 %v3869, %v3869
  %v3934 = vmul.f32 %v3870, %v3870
  %v3935 = vmul.f32 %v3871, %v3871
  %v3936 = vmul.f32 %v3872, %v3872
  %v3937 = vmul.f32 %v3873, %v3873
  %v3938 = vmul.f32 %v3874, %v3874
  %v3939 = vmul.f32 %v3875, %v3875
  %v3940 = vmul.f32 %v3876, %v3876
  %v3941 = vmul.f32 %v3877, %v3877
  %v3942 = vmul.f32 %v3878, %v3878
  %v3943 = vmul.f32 %v3879, %v3879
  %v3944 = vmul.f32 %v3880, %v3880
  %v3945 = vmul.f32 %v3881, %v3881
  %v3946 = vmul.f32 %v3882, %v3882
  %v3947 = vmul.f32 %v3883, %v3883
  %v3948 = vmul.f32 %v3884, %v3884
  %v3949 = vmul.f32 %v3885, %v3885
  %v3950 = vmul.f32 %v3886, %v3886
  %v3951 = vmul.f32 %v3887, %v3887
  %v3952 = vmul.f32 %v3888, %v3888
  %v3953 = vmul.f32 %v3889, %v3889
  %v3954 = vmul.f32 %v3890, %v3890
  %v3955 = vmul.f32 %v3891, %v3891
  %v3956 = vmul.f32 %v3892, %v3892
  %v3957 = vmul.f32 %v3893, %v3893
  %v3958 = vmul.f32 %v3894, %v3894
  %v3959 = vmul.f32 %v3895, %v3895
  %v3960 = vmul.f32 %v3896, %v3896
  %v3961 = vmul.f32 %v3897, %v3897
  %v3962 = vmul.f32 %v3898, %v3898
  %v3963 = vmul.f32 %v3899, %v3899
  %v3964 = vmul.f32 %v3900, %v3900
  %v3965 = vmul.f32 %v3901, %v3901
  %v3966 = vmul.f32 %v3902, %v3902
  %v3967 = vmul.f32 %v3903, %v3903
  %v3968 = vmul.f32 %v3904, %v3904
  %v3969 = vmul.f32 %v3905, %v3905
  %v3970 = vmul.f32 %v3906, %v3906
  %v3971 = vmul.f32 %v3907, %v3907
  %v3972 = vmul.f32 %v3908, %v3908
  %v3973 = vmul.f32 %v3909, %v3909
  %v3974 = vmul.f32 %v3910, %v3910
  %v3975 = vmul.f32 %v3911, %v3911
  %v3976 = vmul.f32 %v3912, %v3912
  %v3977 = vmul.f32 %v3913, %v3913
  %v3978 = vmul.f32 %v3914, %v3914
  %v3979 = vadd.f32 %v3915, %v3916
  %v3980 = vadd.f32 %v3979, %v3917
  %v3981 = vadd.f32 %v3980, %v3918
  %v3982 = vadd.f32 %v3981, %v3919
  %v3983 = vadd.f32 %v3982, %v3920
  %v3984 = vadd.f32 %v3983, %v3921
  %v3985 = vadd.f32 %v3984, %v3922
  %v3986 = vadd.f32 %v3985, %v3923
  %v3987 = vadd.f32 %v3986, %v3924
  %v3988 = vadd.f32 %v3987, %v3925
  %v3989 = vadd.f32 %v3988, %v3926
  %v3990 = vadd.f32 %v3989, %v3927
  %v3991 = vadd.f32 %v3990, %v3928
  %v3992 = vadd.f32 %v3991, %v3929
  %v3993 = vadd.f32 %v3992, %v3930
  %v3994 = vadd.f32 %v3993, %v3931
  %v3995 = vadd.f32 %v3994, %v3932
  %v3996 = vadd.f32 %v3995, %v3933
  %v3997 = vadd.f32 %v3996, %v3934
  %v3998 = vadd.f32 %v3997, %v3935
  %v3999 = vadd.f32 %v3998, %v3936
  %v4000 = vadd.f32 %v3999, %v3937
  %v4001 = vadd.f32 %v4000, %v3938
  %v4002 = vadd.f32 %v4001, %v3939
  %v4003 = vadd.f32 %v4002, %v3940
  %v4004 = vadd.f32 %v4003, %v3941
  %v4005 = vadd.f32 %v4004, %v3942
  %v4006 = vadd.f32 %v4005, %v3943
  %v4007 = vadd.f32 %v4006, %v3944
  %v4008 = vadd.f32 %v4007, %v3945
  %v4009 = vadd.f32 %v4008, %v3946
  %v4010 = vadd.f32 %v4009, %v3947
  %v4011 = vadd.f32 %v4010, %v3948
  %v4012 = vadd.f32 %v4011, %v3949
  %v4013 = vadd.f32 %v4012, %v3950
  %v4014 = vadd.f32 %v4013, %v3951
  %v4015 = vadd.f32 %v4014, %v3952
  %v4016 = vadd.f32 %v4015, %v3953
  %v4017 = vadd.f32 %v4016, %v3954
  %v4018 = vadd.f32 %v4017, %v3955
  %v4019 = vadd.f32 %v4018, %v3956
  %v4020 = vadd.f32 %v4019, %v3957
  %v4021 = vadd.f32 %v4020, %v3958
  %v4022 = vadd.f32 %v4021, %v3959
  %v4023 = vadd.f32 %v4022, %v3960
  %v4024 = vadd.f32 %v4023, %v3961
  %v4025 = vadd.f32 %v4024, %v3962
  %v4026 = vadd.f32 %v4025, %v3963
  %v4027 = vadd.f32 %v4026, %v3964
  %v4028 = vadd.f32 %v4027, %v3965
  %v4029 = vadd.f32 %v4028, %v3966
  %v4030 = vadd.f32 %v4029, %v3967
  %v4031 = vadd.f32 %v4030, %v3968
  %v4032 = vadd.f32 %v4031, %v3969
  %v4033 = vadd.f32 %v4032, %v3970
  %v4034 = vadd.f32 %v4033, %v3971
  %v4035 = vadd.f32 %v4034, %v3972
  %v4036 = vadd.f32 %v4035, %v3973
  %v4037 = vadd.f32 %v4036, %v3974
  %v4038 = vadd.f32 %v4037, %v3975
  %v4039 = vadd.f32 %v4038, %v3976
  %v4040 = vadd.f32 %v4039, %v3977
  %v4041 = vadd.f32 %v4040, %v3978
  %v4042 = vrot.slane %v4041, 4
  %v4043 = vadd.f32 %v4041, %v4042
  %v4044 = vrot.slane %v4043, 2
  %v4045 = vadd.f32 %v4043, %v4044
  %v4046 = vrot.slane %v4045, 1
  %v4047 = vadd.f32 %v4045, %v4046
  %4048 = vst [vmem:[%s4] sm:$0x1] %v3849
  %4049 = vst [vmem:[%s5] sm:$0x1] %v4047
  // Predicated region
  $region14: #{residual_block_pallas.4} parent=0 // pred_check
    _
  $region15: #{residual_block_pallas.4} parent=0 // pred_check_branch
    %4051 = sbr.rel (0) target = $region17
  $region16: #{residual_block_pallas.4} parent=0 // pred_region
    _
  $region17: #{residual_block_pallas.4} parent=0 // pred_fallthru
    _
  // Predicated region
  $region18: #{residual_block_pallas.4} parent=0 // pred_check
    _
  $region19: #{residual_block_pallas.4} parent=0 // pred_check_branch
    %4053 = sbr.rel (0) target = $region21
  $region20: #{residual_block_pallas.4} parent=0 // pred_region
    _
  $region21: #{residual_block_pallas.4} parent=0 // pred_fallthru
    _
  // Predicated region
  $region22: #{residual_block_pallas.4} parent=0 // pred_check
    _
  $region23: #{residual_block_pallas.4} parent=0 // pred_check_branch
    %4055 = sbr.rel (0) target = $region25
  $region24: #{residual_block_pallas.4} parent=0 // pred_region
    _
  $region25: #{residual_block_pallas.4} parent=0 // pred_fallthru
    _
  // Predicated region
  $region26: #{residual_block_pallas.4} parent=0 // pred_check
    _
  $region27: #{residual_block_pallas.4} parent=0 // pred_check_branch
    %4057 = sbr.rel (0) target = $region29
  $region28: #{residual_block_pallas.4} parent=0 // pred_region
    _
  $region29: #{residual_block_pallas.4} parent=0 // pred_fallthru
    _
  // Predicated region
  $region30: #{residual_block_pallas.4} parent=0 // pred_check
    _
  $region31: #{residual_block_pallas.4} parent=0 // pred_check_branch
    %4059 = sbr.rel (0) target = $region33
  $region32: #{residual_block_pallas.4} parent=0 // pred_region
    _
  $region33: #{residual_block_pallas.4} parent=0 // pred_fallthru
    _
  // Predicated region
  $region34: #{residual_block_pallas.4} parent=0 // pred_check
    _
  $region35: #{residual_block_pallas.4} parent=0 // pred_check_branch
    %4061 = sbr.rel (0) target = $region37
  $region36: #{residual_block_pallas.4} parent=0 // pred_region
    _
  $region37: #{residual_block_pallas.4} parent=0 // pred_fallthru
    _

</llo_original>
